<compile_context>
chip_gen: v6e
topology: v6e:2x2x1
jax: 0.10.0
libtpu: 0.0.40
codegen_flags: <defaults>
</compile_context>

<pallas_src>
import jax
import jax.numpy as jnp
from jax.experimental import pallas as pl
from jax.experimental.pallas import tpu as pltpu

DIM = 10
LAYER_CNN = 3
LAYER_GNN = 3
LAYER_OUT = 3
N_FINGERPRINT = 2000
N_WORD = 7000
SIDE = 5
WINDOW = 2 * SIDE + 1      # 11  (conv padding)
KSIZE = 23                 # conv kernel size
HALO = 16                  # zero halo rows (>= WINDOW, multiple of 8)

# Row offsets inside the packed small-weight table (200 rows x 20 cols).
# Every block starts on a multiple-of-8 row so weight slices are aligned.
_R_WG = 0          # 3 x 16-row blocks : W_gnn[i].T in rows [16i, 16i+10)
_R_BG = 48         # 3 x 8-row blocks  : GNN biases at rows 48, 56, 64
_R_WA = 72         # W_attention.T in rows [72, 82)
_R_BA = 88         # attention bias at row 88
_R_WO = 96         # 3 x 24-row blocks : W_out[j].T in rows [96+24j, 96+24j+20)
_R_BO = 168        # 3 x 8-row blocks  : output biases at rows 168, 176, 184
_R_WI = 192        # W_interaction row at 192
_N_SMALL_ROWS = 200


def _round_up(n, m):
    return ((int(n) + m - 1) // m) * m


def _cyp_kernel(meta_i_ref, meta_f_ref, scal_ref, fp_ref, adj_ref, wv_ref,
                wcnn_ref, wsmall_ref, out_ref, xh_ref, xcol_ref):
    f32 = jnp.float32
    a_pad = fp_ref.shape[0]            # padded atom count   (multiple of 64)
    r_pad = wv_ref.shape[0]            # padded word count   (multiple of 128)

    n_words = meta_i_ref[0]            # runtime sequence length
    n_atoms = meta_i_ref[1]            # runtime atom count
    inv_n_atoms = meta_f_ref[0]        # 1 / n_atoms

    W = wsmall_ref[...]                # (200, 20) packed small weights

    # ---------------- GNN over the compound graph ----------------
    # Padded atom rows are masked to zero; padded adjacency rows/cols are zero
    # (wrapper invariant), so masked rows stay exactly zero through every layer
    # and the plain row-sum * 1/n_atoms is the mean over real atoms.
    atom_rows = jax.lax.broadcasted_iota(jnp.int32, (a_pad, DIM), 0)
    xs = jnp.where(atom_rows < n_atoms, fp_ref[...], 0.0)
    adj = adj_ref[...]
    for i in range(LAYER_GNN):
        wg = W[_R_WG + 16 * i:_R_WG + 16 * i + DIM, 0:DIM]
        bg = W[_R_BG + 8 * i:_R_BG + 8 * i + 1, 0:DIM]
        hs = jnp.maximum(jnp.dot(xs, wg, preferred_element_type=f32) + bg, 0.0)
        xs = xs + jnp.dot(adj, hs, preferred_element_type=f32)
    compound = jnp.sum(xs, axis=0, keepdims=True) * inv_n_atoms   # (1, DIM)

    # ---------------- 3-layer "same" CNN over the protein (im2col) ----------
    # Per layer: store x into the haloed scratch, build
    #   X_col[m, a*DIM + j] = x[m + a - WINDOW, j]   (zeros outside the seq)
    # via 23 sublane-shifted copies, then ONE (r_pad,230)@(230,DIM) matmul so
    # the MXU accumulates all 23 taps (K = 230).
    seq_rows = jax.lax.broadcasted_iota(jnp.int32, (r_pad, DIM), 0)
    seq_mask = seq_rows < n_words

    xh_ref[0:HALO, :] = jnp.zeros((HALO, DIM), f32)                # zero halos once
    xh_ref[HALO + r_pad:HALO + r_pad + HALO, :] = jnp.zeros((HALO, DIM), f32)

    x = jnp.where(seq_mask, wv_ref[...], 0.0)                      # (r_pad, DIM)
    for l in range(LAYER_CNN):
        xh_ref[HALO:HALO + r_pad, :] = x                           # aligned store
        for a in range(KSIZE):
            xcol_ref[:, a * DIM:(a + 1) * DIM] = (
                xh_ref[HALO - WINDOW + a:HALO - WINDOW + a + r_pad, :])
        y = jnp.dot(xcol_ref[...], wcnn_ref[l], preferred_element_type=f32)
        bcnn = scal_ref[l]                                         # SMEM scalar bias
        x = jnp.where(seq_mask, jnp.maximum(y + bcnn, 0.0), 0.0)

    # ---------------- attention ----------------
    wa = W[_R_WA:_R_WA + DIM, 0:DIM]
    ba = W[_R_BA:_R_BA + 1, 0:DIM]
    h = jnp.maximum(jnp.dot(compound, wa, preferred_element_type=f32) + ba, 0.0)
    hs = jnp.maximum(jnp.dot(x, wa, preferred_element_type=f32) + ba, 0.0)
    hs = jnp.where(seq_mask, hs, 0.0)              # padded rows must not contribute
    weights = jnp.tanh(
        jax.lax.dot_general(h, hs, (((1,), (1,)), ((), ())),
                            preferred_element_type=f32))            # (1, r_pad)
    protein = jnp.dot(weights, hs, preferred_element_type=f32)       # (1, DIM)

    # ---------------- output MLP on concat([compound, protein]) -------------
    # concat folded into a row split of W_out[0]^T.
    wo0 = W[_R_WO:_R_WO + 2 * DIM, :]
    bo0 = W[_R_BO:_R_BO + 1, :]
    v = jnp.maximum(
        jnp.dot(compound, wo0[0:DIM, :], preferred_element_type=f32)
        + jnp.dot(protein, wo0[DIM:2 * DIM, :], preferred_element_type=f32)
        + bo0, 0.0)
    for j in range(1, LAYER_OUT):
        woj = W[_R_WO + 24 * j:_R_WO + 24 * j + 2 * DIM, :]
        boj = W[_R_BO + 8 * j:_R_BO + 8 * j + 1, :]
        v = jnp.maximum(jnp.dot(v, woj, preferred_element_type=f32) + boj, 0.0)
    wi = W[_R_WI:_R_WI + 1, :]                                       # (1, 2*DIM)
    y_out = jnp.sum(v * wi, axis=1, keepdims=True) + scal_ref[LAYER_CNN]
    out_ref[...] = jax.nn.sigmoid(y_out)


def prepare_params(params):
    """One-time packing of the model weights for the fused kernel.

    Hoisted out of the per-call forward (perf-review item 1): these gathers,
    transposes and concats are pure weight re-layouts and would otherwise be
    re-traced and re-executed on every forward call.
    """
    f32 = jnp.float32

    # conv kernels -> im2col mixing matrices:
    #   W_col[l, a*DIM + j_in, j_out] = w[l, a, WINDOW + j_in - j_out]
    w = params["W_cnn_w"][:, 0, 0].astype(f32)                     # (L, 23, 23)
    j_in = jnp.arange(DIM)[:, None]
    j_out = jnp.arange(DIM)[None, :]
    cidx = WINDOW + j_in - j_out                                   # values in [2, 20]
    w_cnn_col = w[:, :, cidx].reshape(LAYER_CNN, KSIZE * DIM, DIM)  # (L, 230, 10)

    # all tiny weights/biases in one 8-row-aligned (200, 20) table
    tbl = jnp.zeros((_N_SMALL_ROWS, 2 * DIM), f32)
    for i in range(LAYER_GNN):
        tbl = tbl.at[_R_WG + 16 * i:_R_WG + 16 * i + DIM, 0:DIM].set(
            params["W_gnn_w"][i].T.astype(f32))
        tbl = tbl.at[_R_BG + 8 * i, 0:DIM].set(params["W_gnn_b"][i].astype(f32))
    tbl = tbl.at[_R_WA:_R_WA + DIM, 0:DIM].set(params["W_attention_w"].T.astype(f32))
    tbl = tbl.at[_R_BA, 0:DIM].set(params["W_attention_b"].astype(f32))
    for j in range(LAYER_OUT):
        tbl = tbl.at[_R_WO + 24 * j:_R_WO + 24 * j + 2 * DIM, :].set(
            params["W_out_w"][j].T.astype(f32))
        tbl = tbl.at[_R_BO + 8 * j, :].set(params["W_out_b"][j].astype(f32))
    tbl = tbl.at[_R_WI, :].set(params["W_interaction_w"][0].astype(f32))

    scal = jnp.concatenate([params["W_cnn_b"].astype(f32).reshape(-1),
                            params["W_interaction_b"].astype(f32).reshape(-1)])
    return {
        "embed_fingerprint": params["embed_fingerprint"].astype(f32),
        "embed_word": params["embed_word"].astype(f32),
        "w_cnn_col": w_cnn_col,          # (3, 230, 10)
        "w_small": tbl,                  # (200, 20)
        "scal": scal,                    # (4,)  [bcnn0, bcnn1, bcnn2, b_interaction]
    }


def _vmem_limit_bytes(a_pad, r_pad):
    # Last dim of f32 VMEM tensors pads to 128 lanes.
    lane = 128
    b = (r_pad + 2 * HALO) * lane * 4            # haloed-x scratch
    b += r_pad * 2 * lane * 4                    # X_col scratch (230 -> 256 lanes)
    b += 6 * r_pad * lane * 4                    # x / y / hs / masks / input buffers
    b += 2 * a_pad * a_pad * 4 + 4 * a_pad * lane * 4
    b += 4 << 20                                 # weights + headroom
    return int(max(16 << 20, min(b, 100 << 20)))


@jax.jit
def _forward_padded(packed, fp_idx, adj, word_idx, meta_i, meta_f):
    f32 = jnp.float32
    a_pad = fp_idx.shape[0]
    r_pad = word_idx.shape[0]

    # Embedding gathers stay in the (jitted) wrapper; padded rows are masked
    # to zero inside the kernel using the runtime n_atoms / n_words scalars.
    fp_vec = packed["embed_fingerprint"][fp_idx]          # (a_pad, DIM)
    wv = packed["embed_word"][word_idx]                   # (r_pad, DIM)

    smem = pl.BlockSpec(memory_space=pltpu.MemorySpace.SMEM)
    vmem = pl.BlockSpec(memory_space=pltpu.MemorySpace.VMEM)

    out = pl.pallas_call(
        _cyp_kernel,
        out_shape=jax.ShapeDtypeStruct((1, 1), f32),
        in_specs=[smem, smem, smem, vmem, vmem, vmem, vmem, vmem],
        out_specs=vmem,
        scratch_shapes=[
            pltpu.VMEM((r_pad + 2 * HALO, DIM), f32),     # haloed activation
            pltpu.VMEM((r_pad, KSIZE * DIM), f32),        # im2col buffer
        ],
        compiler_params=pltpu.CompilerParams(
            vmem_limit_bytes=_vmem_limit_bytes(a_pad, r_pad)),
    )(meta_i, meta_f, packed["scal"], fp_vec, adj, wv,
      packed["w_cnn_col"], packed["w_small"])
    # torch: W_interaction(cat).squeeze(0) -> shape (1,), then sigmoid
    return out[0]


def cyp_forward(packed, fingerprints, adjacency, words):
    """Single-sample forward. Padding to coarse buckets happens OUTSIDE jit so
    the kernel is compiled once per (a_pad, r_pad) bucket, not per exact length.
    Padded adjacency rows/cols must stay exactly zero (kernel invariant)."""
    n_atoms = int(fingerprints.shape[0])
    n_words = int(words.shape[0])
    a_pad = _round_up(max(n_atoms, 1), 64)
    r_pad = _round_up(max(n_words, 1), 128)

    fp_idx = jnp.pad(fingerprints.astype(jnp.int32), (0, a_pad - n_atoms))
    word_idx = jnp.pad(words.astype(jnp.int32), (0, r_pad - n_words))
    adj_p = jnp.pad(adjacency.astype(jnp.float32),
                    ((0, a_pad - n_atoms), (0, a_pad - n_atoms)))
    meta_i = jnp.array([n_words, n_atoms], jnp.int32)
    meta_f = jnp.array([1.0 / n_atoms], jnp.float32)
    return _forward_padded(packed, fp_idx, adj_p, word_idx, meta_i, meta_f)


def _ref_forward(params, fingerprints, adjacency, words):
    """Pure-JAX reference mirroring the PyTorch forward (HIGHEST precision)."""
    HI = jax.lax.Precision.HIGHEST
    xs = params["embed_fingerprint"][fingerprints]
    for i in range(LAYER_GNN):
        hs = jax.nn.relu(jnp.dot(xs, params["W_gnn_w"][i].T, precision=HI)
                         + params["W_gnn_b"][i])
        xs = xs + jnp.dot(adjacency, hs, precision=HI)
    compound = jnp.mean(xs, axis=0, keepdims=True)

    wv = params["embed_word"][words]
    x = wv[None, None]                                        # NCHW (1,1,N,DIM)
    for i in range(LAYER_CNN):
        x = jax.lax.conv_general_dilated(
            x, params["W_cnn_w"][i], window_strides=(1, 1),
            padding=[(WINDOW, WINDOW), (WINDOW, WINDOW)],
            dimension_numbers=("NCHW", "OIHW", "NCHW"), precision=HI)
        x = jax.nn.relu(x + params["W_cnn_b"][i])
    xs_c = x[0, 0]
    h = jax.nn.relu(jnp.dot(compound, params["W_attention_w"].T, precision=HI)
                    + params["W_attention_b"])
    hs = jax.nn.relu(jnp.dot(xs_c, params["W_attention_w"].T, precision=HI)
                     + params["W_attention_b"])
    weights = jnp.tanh(jnp.dot(h, hs.T, precision=HI))
    protein = jnp.dot(weights, hs, precision=HI)
    cat = jnp.concatenate([compound, protein], axis=1)
    for j in range(LAYER_OUT):
        cat = jax.nn.relu(jnp.dot(cat, params["W_out_w"][j].T, precision=HI)
                          + params["W_out_b"][j])
    y = jnp.dot(cat, params["W_interaction_w"].T, precision=HI) + params["W_interaction_b"]
    return jax.nn.sigmoid(y[0])


def init_params(key):
    ks = jax.random.split(key, 12)

    def rnd(k, shape, scale=0.1):
        return jax.random.normal(k, shape, jnp.float32) * scale

    return {
        "embed_fingerprint": rnd(ks[0], (N_FINGERPRINT, DIM), 1.0),
        "embed_word": rnd(ks[1], (N_WORD, DIM), 1.0),
        "W_gnn_w": rnd(ks[2], (LAYER_GNN, DIM, DIM)),
        "W_gnn_b": rnd(ks[3], (LAYER_GNN, DIM)),
        "W_cnn_w": rnd(ks[4], (LAYER_CNN, 1, 1, KSIZE, KSIZE)),
        "W_cnn_b": rnd(ks[5], (LAYER_CNN,)),
        "W_attention_w": rnd(ks[6], (DIM, DIM)),
        "W_attention_b": rnd(ks[7], (DIM,)),
        "W_out_w": rnd(ks[8], (LAYER_OUT, 2 * DIM, 2 * DIM)),
        "W_out_b": rnd(ks[9], (LAYER_OUT, 2 * DIM)),
        "W_interaction_w": rnd(ks[10], (1, 2 * DIM)),
        "W_interaction_b": rnd(ks[11], (1,)),
    }


if __name__ == "__main__":
    key = jax.random.PRNGKey(0)
    kp, kf1, ka1, kw1, kf2, ka2, kw2 = jax.random.split(key, 7)
    params = init_params(kp)
    packed = prepare_params(params)     # one-time weight packing (hoisted)

    # case 1: "nice" sizes; case 2: ragged sizes exercising the runtime
    # n_atoms / n_words masking.  Both map to the same (64, 128) bucket so a
    # single kernel compile serves both calls.
    cases = [(16, 48, kf1, ka1, kw1), (13, 95, kf2, ka2, kw2)]
    for n_atoms, n_words, kfa, kad, kwd in cases:
        fingerprints = jax.random.randint(kfa, (n_atoms,), 0, N_FINGERPRINT)
        adjacency = (jax.random.uniform(kad, (n_atoms, n_atoms)) < 0.3).astype(jnp.float32)
        words = jax.random.randint(kwd, (n_words,), 0, N_WORD)

        out = jax.block_until_ready(cyp_forward(packed, fingerprints, adjacency, words))
        assert out.shape == (1,)

        ref = jax.block_until_ready(_ref_forward(params, fingerprints, adjacency, words))
        # all-f32 path; residual only covers MXU f32-emulation rounding in the
        # kernel's matmuls (reference runs at Precision.HIGHEST).
        assert jnp.max(jnp.abs(out - ref)) < 2e-3, (out, ref)

    print("KERNEL_OK")
</pallas_src>

<mosaic_0001>
module attributes {stable_mosaic.version = 11 : i64} {
  func.func @_cyp_kernel(%arg0: memref<2xi32, #tpu.memory_space<smem>>, %arg1: memref<1xf32, #tpu.memory_space<smem>>, %arg2: memref<4xf32, #tpu.memory_space<smem>>, %arg3: memref<64x10xf32, #tpu.memory_space<vmem>>, %arg4: memref<64x64xf32, #tpu.memory_space<vmem>>, %arg5: memref<128x10xf32, #tpu.memory_space<vmem>>, %arg6: memref<3x230x10xf32, #tpu.memory_space<vmem>>, %arg7: memref<200x20xf32, #tpu.memory_space<vmem>>, %arg8: memref<1x1xf32, #tpu.memory_space<vmem>>, %arg9: memref<160x10xf32, #tpu.memory_space<vmem>>, %arg10: memref<128x230xf32, #tpu.memory_space<vmem>>) attributes {dimension_semantics = [], scalar_prefetch = 0 : i64, scratch_operands = 2 : i64, tpu.core_type = #tpu.core_type<tc>} {
    %c0 = arith.constant 0 : index
    %0 = memref.load %arg0[%c0] : memref<2xi32, #tpu.memory_space<smem>>
    %c1 = arith.constant 1 : index
    %1 = memref.load %arg0[%c1] : memref<2xi32, #tpu.memory_space<smem>>
    %c0_0 = arith.constant 0 : index
    %2 = memref.load %arg1[%c0_0] : memref<1xf32, #tpu.memory_space<smem>>
    %c0_1 = arith.constant 0 : index
    %c0_2 = arith.constant 0 : index
    %3 = vector.load %arg7[%c0_1, %c0_2] : memref<200x20xf32, #tpu.memory_space<vmem>>, vector<200x20xf32>
    %4 = tpu.iota {dimensions = array<i32: 0>} : vector<64x10xi32>
    %5 = vector.broadcast %1 : i32 to vector<64x10xi32>
    %6 = arith.cmpi slt, %4, %5 : vector<64x10xi32>
    %c0_3 = arith.constant 0 : index
    %c0_4 = arith.constant 0 : index
    %7 = vector.load %arg3[%c0_3, %c0_4] : memref<64x10xf32, #tpu.memory_space<vmem>>, vector<64x10xf32>
    %cst = arith.constant 0.000000e+00 : f32
    %8 = vector.broadcast %cst : f32 to vector<64x10xf32>
    %9 = arith.select %6, %7, %8 : vector<64x10xi1>, vector<64x10xf32>
    %c0_5 = arith.constant 0 : index
    %c0_6 = arith.constant 0 : index
    %10 = vector.load %arg4[%c0_5, %c0_6] : memref<64x64xf32, #tpu.memory_space<vmem>>, vector<64x64xf32>
    %11 = vector.extract_strided_slice %3 {offsets = [0, 0], sizes = [10, 10], strides = [1, 1]} : vector<200x20xf32> to vector<10x10xf32>
    %12 = vector.extract_strided_slice %3 {offsets = [48, 0], sizes = [1, 10], strides = [1, 1]} : vector<200x20xf32> to vector<1x10xf32>
    %cst_7 = arith.constant dense<0.000000e+00> : vector<64x10xf32>
    %13 = tpu.matmul %9, %11, %cst_7 {dimension_numbers = #tpu.dot_dimension_numbers<[1], [0], [0], [1], [0, 0, 1, 1], [], []>} : vector<64x10xf32>, vector<10x10xf32>, vector<64x10xf32> -> vector<64x10xf32>
    %14 = vector.broadcast %12 : vector<1x10xf32> to vector<64x10xf32>
    %15 = arith.addf %13, %14 : vector<64x10xf32>
    %cst_8 = arith.constant 0.000000e+00 : f32
    %16 = vector.broadcast %cst_8 : f32 to vector<64x10xf32>
    %17 = arith.maximumf %15, %16 : vector<64x10xf32>
    %cst_9 = arith.constant dense<0.000000e+00> : vector<64x10xf32>
    %18 = tpu.matmul %10, %17, %cst_9 {dimension_numbers = #tpu.dot_dimension_numbers<[1], [0], [0], [1], [0, 0, 1, 1], [], []>} : vector<64x64xf32>, vector<64x10xf32>, vector<64x10xf32> -> vector<64x10xf32>
    %19 = arith.addf %9, %18 : vector<64x10xf32>
    %20 = vector.extract_strided_slice %3 {offsets = [16, 0], sizes = [10, 10], strides = [1, 1]} : vector<200x20xf32> to vector<10x10xf32>
    %21 = vector.extract_strided_slice %3 {offsets = [56, 0], sizes = [1, 10], strides = [1, 1]} : vector<200x20xf32> to vector<1x10xf32>
    %cst_10 = arith.constant dense<0.000000e+00> : vector<64x10xf32>
    %22 = tpu.matmul %19, %20, %cst_10 {dimension_numbers = #tpu.dot_dimension_numbers<[1], [0], [0], [1], [0, 0, 1, 1], [], []>} : vector<64x10xf32>, vector<10x10xf32>, vector<64x10xf32> -> vector<64x10xf32>
    %23 = vector.broadcast %21 : vector<1x10xf32> to vector<64x10xf32>
    %24 = arith.addf %22, %23 : vector<64x10xf32>
    %cst_11 = arith.constant 0.000000e+00 : f32
    %25 = vector.broadcast %cst_11 : f32 to vector<64x10xf32>
    %26 = arith.maximumf %24, %25 : vector<64x10xf32>
    %cst_12 = arith.constant dense<0.000000e+00> : vector<64x10xf32>
    %27 = tpu.matmul %10, %26, %cst_12 {dimension_numbers = #tpu.dot_dimension_numbers<[1], [0], [0], [1], [0, 0, 1, 1], [], []>} : vector<64x64xf32>, vector<64x10xf32>, vector<64x10xf32> -> vector<64x10xf32>
    %28 = arith.addf %19, %27 : vector<64x10xf32>
    %29 = vector.extract_strided_slice %3 {offsets = [32, 0], sizes = [10, 10], strides = [1, 1]} : vector<200x20xf32> to vector<10x10xf32>
    %30 = vector.extract_strided_slice %3 {offsets = [64, 0], sizes = [1, 10], strides = [1, 1]} : vector<200x20xf32> to vector<1x10xf32>
    %cst_13 = arith.constant dense<0.000000e+00> : vector<64x10xf32>
    %31 = tpu.matmul %28, %29, %cst_13 {dimension_numbers = #tpu.dot_dimension_numbers<[1], [0], [0], [1], [0, 0, 1, 1], [], []>} : vector<64x10xf32>, vector<10x10xf32>, vector<64x10xf32> -> vector<64x10xf32>
    %32 = vector.broadcast %30 : vector<1x10xf32> to vector<64x10xf32>
    %33 = arith.addf %31, %32 : vector<64x10xf32>
    %cst_14 = arith.constant 0.000000e+00 : f32
    %34 = vector.broadcast %cst_14 : f32 to vector<64x10xf32>
    %35 = arith.maximumf %33, %34 : vector<64x10xf32>
    %cst_15 = arith.constant dense<0.000000e+00> : vector<64x10xf32>
    %36 = tpu.matmul %10, %35, %cst_15 {dimension_numbers = #tpu.dot_dimension_numbers<[1], [0], [0], [1], [0, 0, 1, 1], [], []>} : vector<64x64xf32>, vector<64x10xf32>, vector<64x10xf32> -> vector<64x10xf32>
    %37 = arith.addf %28, %36 : vector<64x10xf32>
    %cst_16 = arith.constant dense<0.000000e+00> : vector<10xf32>
    %38 = vector.multi_reduction <add>, %37, %cst_16 [0] : vector<64x10xf32> to vector<10xf32>
    %39 = vector.shape_cast %38 : vector<10xf32> to vector<1x10xf32>
    %40 = vector.broadcast %2 : f32 to vector<1x10xf32>
    %41 = arith.mulf %39, %40 : vector<1x10xf32>
    %42 = tpu.iota {dimensions = array<i32: 0>} : vector<128x10xi32>
    %43 = vector.broadcast %0 : i32 to vector<128x10xi32>
    %44 = arith.cmpi slt, %42, %43 : vector<128x10xi32>
    %cst_17 = arith.constant 0.000000e+00 : f32
    %45 = vector.broadcast %cst_17 : f32 to vector<16x10xf32>
    %c0_18 = arith.constant 0 : index
    %c0_19 = arith.constant 0 : index
    %46 = vector.load %arg9[%c0_18, %c0_19] : memref<160x10xf32, #tpu.memory_space<vmem>>, vector<16x10xf32>
    tpu.vector_store %arg9[%c0_18, %c0_19], %45 {strides = array<i32>} : memref<160x10xf32, #tpu.memory_space<vmem>>, vector<16x10xf32>,
    %cst_20 = arith.constant 0.000000e+00 : f32
    %47 = vector.broadcast %cst_20 : f32 to vector<16x10xf32>
    %c144 = arith.constant 144 : index
    %c0_21 = arith.constant 0 : index
    %48 = vector.load %arg9[%c144, %c0_21] : memref<160x10xf32, #tpu.memory_space<vmem>>, vector<16x10xf32>
    tpu.vector_store %arg9[%c144, %c0_21], %47 {strides = array<i32>} : memref<160x10xf32, #tpu.memory_space<vmem>>, vector<16x10xf32>,
    %c0_22 = arith.constant 0 : index
    %c0_23 = arith.constant 0 : index
    %49 = vector.load %arg5[%c0_22, %c0_23] : memref<128x10xf32, #tpu.memory_space<vmem>>, vector<128x10xf32>
    %cst_24 = arith.constant 0.000000e+00 : f32
    %50 = vector.broadcast %cst_24 : f32 to vector<128x10xf32>
    %51 = arith.select %44, %49, %50 : vector<128x10xi1>, vector<128x10xf32>
    %c16 = arith.constant 16 : index
    %c0_25 = arith.constant 0 : index
    %52 = vector.load %arg9[%c16, %c0_25] : memref<160x10xf32, #tpu.memory_space<vmem>>, vector<128x10xf32>
    tpu.vector_store %arg9[%c16, %c0_25], %51 {strides = array<i32>} : memref<160x10xf32, #tpu.memory_space<vmem>>, vector<128x10xf32>,
    %c5 = arith.constant 5 : index
    %c0_26 = arith.constant 0 : index
    %53 = vector.load %arg9[%c5, %c0_26] : memref<160x10xf32, #tpu.memory_space<vmem>>, vector<128x10xf32>
    %c0_27 = arith.constant 0 : index
    %c0_28 = arith.constant 0 : index
    %54 = vector.load %arg10[%c0_27, %c0_28] : memref<128x230xf32, #tpu.memory_space<vmem>>, vector<128x10xf32>
    tpu.vector_store %arg10[%c0_27, %c0_28], %53 {strides = array<i32>} : memref<128x230xf32, #tpu.memory_space<vmem>>, vector<128x10xf32>,
    %c6 = arith.constant 6 : index
    %c0_29 = arith.constant 0 : index
    %55 = vector.load %arg9[%c6, %c0_29] : memref<160x10xf32, #tpu.memory_space<vmem>>, vector<128x10xf32>
    %c0_30 = arith.constant 0 : index
    %c10 = arith.constant 10 : index
    %56 = vector.load %arg10[%c0_30, %c10] : memref<128x230xf32, #tpu.memory_space<vmem>>, vector<128x10xf32>
    tpu.vector_store %arg10[%c0_30, %c10], %55 {strides = array<i32>} : memref<128x230xf32, #tpu.memory_space<vmem>>, vector<128x10xf32>,
    %c7 = arith.constant 7 : index
    %c0_31 = arith.constant 0 : index
    %57 = vector.load %arg9[%c7, %c0_31] : memref<160x10xf32, #tpu.memory_space<vmem>>, vector<128x10xf32>
    %c0_32 = arith.constant 0 : index
    %c20 = arith.constant 20 : index
    %58 = vector.load %arg10[%c0_32, %c20] : memref<128x230xf32, #tpu.memory_space<vmem>>, vector<128x10xf32>
    tpu.vector_store %arg10[%c0_32, %c20], %57 {strides = array<i32>} : memref<128x230xf32, #tpu.memory_space<vmem>>, vector<128x10xf32>,
    %c8 = arith.constant 8 : index
    %c0_33 = arith.constant 0 : index
    %59 = vector.load %arg9[%c8, %c0_33] : memref<160x10xf32, #tpu.memory_space<vmem>>, vector<128x10xf32>
    %c0_34 = arith.constant 0 : index
    %c30 = arith.constant 30 : index
    %60 = vector.load %arg10[%c0_34, %c30] : memref<128x230xf32, #tpu.memory_space<vmem>>, vector<128x10xf32>
    tpu.vector_store %arg10[%c0_34, %c30], %59 {strides = array<i32>} : memref<128x230xf32, #tpu.memory_space<vmem>>, vector<128x10xf32>,
    %c9 = arith.constant 9 : index
    %c0_35 = arith.constant 0 : index
    %61 = vector.load %arg9[%c9, %c0_35] : memref<160x10xf32, #tpu.memory_space<vmem>>, vector<128x10xf32>
    %c0_36 = arith.constant 0 : index
    %c40 = arith.constant 40 : index
    %62 = vector.load %arg10[%c0_36, %c40] : memref<128x230xf32, #tpu.memory_space<vmem>>, vector<128x10xf32>
    tpu.vector_store %arg10[%c0_36, %c40], %61 {strides = array<i32>} : memref<128x230xf32, #tpu.memory_space<vmem>>, vector<128x10xf32>,
    %c10_37 = arith.constant 10 : index
    %c0_38 = arith.constant 0 : index
    %63 = vector.load %arg9[%c10_37, %c0_38] : memref<160x10xf32, #tpu.memory_space<vmem>>, vector<128x10xf32>
    %c0_39 = arith.constant 0 : index
    %c50 = arith.constant 50 : index
    %64 = vector.load %arg10[%c0_39, %c50] : memref<128x230xf32, #tpu.memory_space<vmem>>, vector<128x10xf32>
    tpu.vector_store %arg10[%c0_39, %c50], %63 {strides = array<i32>} : memref<128x230xf32, #tpu.memory_space<vmem>>, vector<128x10xf32>,
    %c11 = arith.constant 11 : index
    %c0_40 = arith.constant 0 : index
    %65 = vector.load %arg9[%c11, %c0_40] : memref<160x10xf32, #tpu.memory_space<vmem>>, vector<128x10xf32>
    %c0_41 = arith.constant 0 : index
    %c60 = arith.constant 60 : index
    %66 = vector.load %arg10[%c0_41, %c60] : memref<128x230xf32, #tpu.memory_space<vmem>>, vector<128x10xf32>
    tpu.vector_store %arg10[%c0_41, %c60], %65 {strides = array<i32>} : memref<128x230xf32, #tpu.memory_space<vmem>>, vector<128x10xf32>,
    %c12 = arith.constant 12 : index
    %c0_42 = arith.constant 0 : index
    %67 = vector.load %arg9[%c12, %c0_42] : memref<160x10xf32, #tpu.memory_space<vmem>>, vector<128x10xf32>
    %c0_43 = arith.constant 0 : index
    %c70 = arith.constant 70 : index
    %68 = vector.load %arg10[%c0_43, %c70] : memref<128x230xf32, #tpu.memory_space<vmem>>, vector<128x10xf32>
    tpu.vector_store %arg10[%c0_43, %c70], %67 {strides = array<i32>} : memref<128x230xf32, #tpu.memory_space<vmem>>, vector<128x10xf32>,
    %c13 = arith.constant 13 : index
    %c0_44 = arith.constant 0 : index
    %69 = vector.load %arg9[%c13, %c0_44] : memref<160x10xf32, #tpu.memory_space<vmem>>, vector<128x10xf32>
    %c0_45 = arith.constant 0 : index
    %c80 = arith.constant 80 : index
    %70 = vector.load %arg10[%c0_45, %c80] : memref<128x230xf32, #tpu.memory_space<vmem>>, vector<128x10xf32>
    tpu.vector_store %arg10[%c0_45, %c80], %69 {strides = array<i32>} : memref<128x230xf32, #tpu.memory_space<vmem>>, vector<128x10xf32>,
    %c14 = arith.constant 14 : index
    %c0_46 = arith.constant 0 : index
    %71 = vector.load %arg9[%c14, %c0_46] : memref<160x10xf32, #tpu.memory_space<vmem>>, vector<128x10xf32>
    %c0_47 = arith.constant 0 : index
    %c90 = arith.constant 90 : index
    %72 = vector.load %arg10[%c0_47, %c90] : memref<128x230xf32, #tpu.memory_space<vmem>>, vector<128x10xf32>
    tpu.vector_store %arg10[%c0_47, %c90], %71 {strides = array<i32>} : memref<128x230xf32, #tpu.memory_space<vmem>>, vector<128x10xf32>,
    %c15 = arith.constant 15 : index
    %c0_48 = arith.constant 0 : index
    %73 = vector.load %arg9[%c15, %c0_48] : memref<160x10xf32, #tpu.memory_space<vmem>>, vector<128x10xf32>
    %c0_49 = arith.constant 0 : index
    %c100 = arith.constant 100 : index
    %74 = vector.load %arg10[%c0_49, %c100] : memref<128x230xf32, #tpu.memory_space<vmem>>, vector<128x10xf32>
    tpu.vector_store %arg10[%c0_49, %c100], %73 {strides = array<i32>} : memref<128x230xf32, #tpu.memory_space<vmem>>, vector<128x10xf32>,
    %c16_50 = arith.constant 16 : index
    %c0_51 = arith.constant 0 : index
    %75 = vector.load %arg9[%c16_50, %c0_51] : memref<160x10xf32, #tpu.memory_space<vmem>>, vector<128x10xf32>
    %c0_52 = arith.constant 0 : index
    %c110 = arith.constant 110 : index
    %76 = vector.load %arg10[%c0_52, %c110] : memref<128x230xf32, #tpu.memory_space<vmem>>, vector<128x10xf32>
    tpu.vector_store %arg10[%c0_52, %c110], %75 {strides = array<i32>} : memref<128x230xf32, #tpu.memory_space<vmem>>, vector<128x10xf32>,
    %c17 = arith.constant 17 : index
    %c0_53 = arith.constant 0 : index
    %77 = vector.load %arg9[%c17, %c0_53] : memref<160x10xf32, #tpu.memory_space<vmem>>, vector<128x10xf32>
    %c0_54 = arith.constant 0 : index
    %c120 = arith.constant 120 : index
    %78 = vector.load %arg10[%c0_54, %c120] : memref<128x230xf32, #tpu.memory_space<vmem>>, vector<128x10xf32>
    tpu.vector_store %arg10[%c0_54, %c120], %77 {strides = array<i32>} : memref<128x230xf32, #tpu.memory_space<vmem>>, vector<128x10xf32>,
    %c18 = arith.constant 18 : index
    %c0_55 = arith.constant 0 : index
    %79 = vector.load %arg9[%c18, %c0_55] : memref<160x10xf32, #tpu.memory_space<vmem>>, vector<128x10xf32>
    %c0_56 = arith.constant 0 : index
    %c130 = arith.constant 130 : index
    %80 = vector.load %arg10[%c0_56, %c130] : memref<128x230xf32, #tpu.memory_space<vmem>>, vector<128x10xf32>
    tpu.vector_store %arg10[%c0_56, %c130], %79 {strides = array<i32>} : memref<128x230xf32, #tpu.memory_space<vmem>>, vector<128x10xf32>,
    %c19 = arith.constant 19 : index
    %c0_57 = arith.constant 0 : index
    %81 = vector.load %arg9[%c19, %c0_57] : memref<160x10xf32, #tpu.memory_space<vmem>>, vector<128x10xf32>
    %c0_58 = arith.constant 0 : index
    %c140 = arith.constant 140 : index
    %82 = vector.load %arg10[%c0_58, %c140] : memref<128x230xf32, #tpu.memory_space<vmem>>, vector<128x10xf32>
    tpu.vector_store %arg10[%c0_58, %c140], %81 {strides = array<i32>} : memref<128x230xf32, #tpu.memory_space<vmem>>, vector<128x10xf32>,
    %c20_59 = arith.constant 20 : index
    %c0_60 = arith.constant 0 : index
    %83 = vector.load %arg9[%c20_59, %c0_60] : memref<160x10xf32, #tpu.memory_space<vmem>>, vector<128x10xf32>
    %c0_61 = arith.constant 0 : index
    %c150 = arith.constant 150 : index
    %84 = vector.load %arg10[%c0_61, %c150] : memref<128x230xf32, #tpu.memory_space<vmem>>, vector<128x10xf32>
    tpu.vector_store %arg10[%c0_61, %c150], %83 {strides = array<i32>} : memref<128x230xf32, #tpu.memory_space<vmem>>, vector<128x10xf32>,
    %c21 = arith.constant 21 : index
    %c0_62 = arith.constant 0 : index
    %85 = vector.load %arg9[%c21, %c0_62] : memref<160x10xf32, #tpu.memory_space<vmem>>, vector<128x10xf32>
    %c0_63 = arith.constant 0 : index
    %c160 = arith.constant 160 : index
    %86 = vector.load %arg10[%c0_63, %c160] : memref<128x230xf32, #tpu.memory_space<vmem>>, vector<128x10xf32>
    tpu.vector_store %arg10[%c0_63, %c160], %85 {strides = array<i32>} : memref<128x230xf32, #tpu.memory_space<vmem>>, vector<128x10xf32>,
    %c22 = arith.constant 22 : index
    %c0_64 = arith.constant 0 : index
    %87 = vector.load %arg9[%c22, %c0_64] : memref<160x10xf32, #tpu.memory_space<vmem>>, vector<128x10xf32>
    %c0_65 = arith.constant 0 : index
    %c170 = arith.constant 170 : index
    %88 = vector.load %arg10[%c0_65, %c170] : memref<128x230xf32, #tpu.memory_space<vmem>>, vector<128x10xf32>
    tpu.vector_store %arg10[%c0_65, %c170], %87 {strides = array<i32>} : memref<128x230xf32, #tpu.memory_space<vmem>>, vector<128x10xf32>,
    %c23 = arith.constant 23 : index
    %c0_66 = arith.constant 0 : index
    %89 = vector.load %arg9[%c23, %c0_66] : memref<160x10xf32, #tpu.memory_space<vmem>>, vector<128x10xf32>
    %c0_67 = arith.constant 0 : index
    %c180 = arith.constant 180 : index
    %90 = vector.load %arg10[%c0_67, %c180] : memref<128x230xf32, #tpu.memory_space<vmem>>, vector<128x10xf32>
    tpu.vector_store %arg10[%c0_67, %c180], %89 {strides = array<i32>} : memref<128x230xf32, #tpu.memory_space<vmem>>, vector<128x10xf32>,
    %c24 = arith.constant 24 : index
    %c0_68 = arith.constant 0 : index
    %91 = vector.load %arg9[%c24, %c0_68] : memref<160x10xf32, #tpu.memory_space<vmem>>, vector<128x10xf32>
    %c0_69 = arith.constant 0 : index
    %c190 = arith.constant 190 : index
    %92 = vector.load %arg10[%c0_69, %c190] : memref<128x230xf32, #tpu.memory_space<vmem>>, vector<128x10xf32>
    tpu.vector_store %arg10[%c0_69, %c190], %91 {strides = array<i32>} : memref<128x230xf32, #tpu.memory_space<vmem>>, vector<128x10xf32>,
    %c25 = arith.constant 25 : index
    %c0_70 = arith.constant 0 : index
    %93 = vector.load %arg9[%c25, %c0_70] : memref<160x10xf32, #tpu.memory_space<vmem>>, vector<128x10xf32>
    %c0_71 = arith.constant 0 : index
    %c200 = arith.constant 200 : index
    %94 = vector.load %arg10[%c0_71, %c200] : memref<128x230xf32, #tpu.memory_space<vmem>>, vector<128x10xf32>
    tpu.vector_store %arg10[%c0_71, %c200], %93 {strides = array<i32>} : memref<128x230xf32, #tpu.memory_space<vmem>>, vector<128x10xf32>,
    %c26 = arith.constant 26 : index
    %c0_72 = arith.constant 0 : index
    %95 = vector.load %arg9[%c26, %c0_72] : memref<160x10xf32, #tpu.memory_space<vmem>>, vector<128x10xf32>
    %c0_73 = arith.constant 0 : index
    %c210 = arith.constant 210 : index
    %96 = vector.load %arg10[%c0_73, %c210] : memref<128x230xf32, #tpu.memory_space<vmem>>, vector<128x10xf32>
    tpu.vector_store %arg10[%c0_73, %c210], %95 {strides = array<i32>} : memref<128x230xf32, #tpu.memory_space<vmem>>, vector<128x10xf32>,
    %c27 = arith.constant 27 : index
    %c0_74 = arith.constant 0 : index
    %97 = vector.load %arg9[%c27, %c0_74] : memref<160x10xf32, #tpu.memory_space<vmem>>, vector<128x10xf32>
    %c0_75 = arith.constant 0 : index
    %c220 = arith.constant 220 : index
    %98 = vector.load %arg10[%c0_75, %c220] : memref<128x230xf32, #tpu.memory_space<vmem>>, vector<128x10xf32>
    tpu.vector_store %arg10[%c0_75, %c220], %97 {strides = array<i32>} : memref<128x230xf32, #tpu.memory_space<vmem>>, vector<128x10xf32>,
    %c0_76 = arith.constant 0 : index
    %c0_77 = arith.constant 0 : index
    %99 = vector.load %arg10[%c0_76, %c0_77] : memref<128x230xf32, #tpu.memory_space<vmem>>, vector<128x230xf32>
    %c0_78 = arith.constant 0 : index
    %c0_79 = arith.constant 0 : index
    %c0_80 = arith.constant 0 : index
    %100 = vector.load %arg6[%c0_78, %c0_79, %c0_80] : memref<3x230x10xf32, #tpu.memory_space<vmem>>, vector<1x230x10xf32>
    %101 = vector.shape_cast %100 : vector<1x230x10xf32> to vector<230x10xf32>
    %cst_81 = arith.constant dense<0.000000e+00> : vector<128x10xf32>
    %102 = tpu.matmul %99, %101, %cst_81 {dimension_numbers = #tpu.dot_dimension_numbers<[1], [0], [0], [1], [0, 0, 1, 1], [], []>} : vector<128x230xf32>, vector<230x10xf32>, vector<128x10xf32> -> vector<128x10xf32>
    %c0_82 = arith.constant 0 : index
    %103 = memref.load %arg2[%c0_82] : memref<4xf32, #tpu.memory_space<smem>>
    %104 = vector.broadcast %103 : f32 to vector<128x10xf32>
    %105 = arith.addf %102, %104 : vector<128x10xf32>
    %cst_83 = arith.constant 0.000000e+00 : f32
    %106 = vector.broadcast %cst_83 : f32 to vector<128x10xf32>
    %107 = arith.maximumf %105, %106 : vector<128x10xf32>
    %cst_84 = arith.constant 0.000000e+00 : f32
    %108 = vector.broadcast %cst_84 : f32 to vector<128x10xf32>
    %109 = arith.select %44, %107, %108 : vector<128x10xi1>, vector<128x10xf32>
    %c16_85 = arith.constant 16 : index
    %c0_86 = arith.constant 0 : index
    %110 = vector.load %arg9[%c16_85, %c0_86] : memref<160x10xf32, #tpu.memory_space<vmem>>, vector<128x10xf32>
    tpu.vector_store %arg9[%c16_85, %c0_86], %109 {strides = array<i32>} : memref<160x10xf32, #tpu.memory_space<vmem>>, vector<128x10xf32>,
    %c5_87 = arith.constant 5 : index
    %c0_88 = arith.constant 0 : index
    %111 = vector.load %arg9[%c5_87, %c0_88] : memref<160x10xf32, #tpu.memory_space<vmem>>, vector<128x10xf32>
    %c0_89 = arith.constant 0 : index
    %c0_90 = arith.constant 0 : index
    %112 = vector.load %arg10[%c0_89, %c0_90] : memref<128x230xf32, #tpu.memory_space<vmem>>, vector<128x10xf32>
    tpu.vector_store %arg10[%c0_89, %c0_90], %111 {strides = array<i32>} : memref<128x230xf32, #tpu.memory_space<vmem>>, vector<128x10xf32>,
    %c6_91 = arith.constant 6 : index
    %c0_92 = arith.constant 0 : index
    %113 = vector.load %arg9[%c6_91, %c0_92] : memref<160x10xf32, #tpu.memory_space<vmem>>, vector<128x10xf32>
    %c0_93 = arith.constant 0 : index
    %c10_94 = arith.constant 10 : index
    %114 = vector.load %arg10[%c0_93, %c10_94] : memref<128x230xf32, #tpu.memory_space<vmem>>, vector<128x10xf32>
    tpu.vector_store %arg10[%c0_93, %c10_94], %113 {strides = array<i32>} : memref<128x230xf32, #tpu.memory_space<vmem>>, vector<128x10xf32>,
    %c7_95 = arith.constant 7 : index
    %c0_96 = arith.constant 0 : index
    %115 = vector.load %arg9[%c7_95, %c0_96] : memref<160x10xf32, #tpu.memory_space<vmem>>, vector<128x10xf32>
    %c0_97 = arith.constant 0 : index
    %c20_98 = arith.constant 20 : index
    %116 = vector.load %arg10[%c0_97, %c20_98] : memref<128x230xf32, #tpu.memory_space<vmem>>, vector<128x10xf32>
    tpu.vector_store %arg10[%c0_97, %c20_98], %115 {strides = array<i32>} : memref<128x230xf32, #tpu.memory_space<vmem>>, vector<128x10xf32>,
    %c8_99 = arith.constant 8 : index
    %c0_100 = arith.constant 0 : index
    %117 = vector.load %arg9[%c8_99, %c0_100] : memref<160x10xf32, #tpu.memory_space<vmem>>, vector<128x10xf32>
    %c0_101 = arith.constant 0 : index
    %c30_102 = arith.constant 30 : index
    %118 = vector.load %arg10[%c0_101, %c30_102] : memref<128x230xf32, #tpu.memory_space<vmem>>, vector<128x10xf32>
    tpu.vector_store %arg10[%c0_101, %c30_102], %117 {strides = array<i32>} : memref<128x230xf32, #tpu.memory_space<vmem>>, vector<128x10xf32>,
    %c9_103 = arith.constant 9 : index
    %c0_104 = arith.constant 0 : index
    %119 = vector.load %arg9[%c9_103, %c0_104] : memref<160x10xf32, #tpu.memory_space<vmem>>, vector<128x10xf32>
    %c0_105 = arith.constant 0 : index
    %c40_106 = arith.constant 40 : index
    %120 = vector.load %arg10[%c0_105, %c40_106] : memref<128x230xf32, #tpu.memory_space<vmem>>, vector<128x10xf32>
    tpu.vector_store %arg10[%c0_105, %c40_106], %119 {strides = array<i32>} : memref<128x230xf32, #tpu.memory_space<vmem>>, vector<128x10xf32>,
    %c10_107 = arith.constant 10 : index
    %c0_108 = arith.constant 0 : index
    %121 = vector.load %arg9[%c10_107, %c0_108] : memref<160x10xf32, #tpu.memory_space<vmem>>, vector<128x10xf32>
    %c0_109 = arith.constant 0 : index
    %c50_110 = arith.constant 50 : index
    %122 = vector.load %arg10[%c0_109, %c50_110] : memref<128x230xf32, #tpu.memory_space<vmem>>, vector<128x10xf32>
    tpu.vector_store %arg10[%c0_109, %c50_110], %121 {strides = array<i32>} : memref<128x230xf32, #tpu.memory_space<vmem>>, vector<128x10xf32>,
    %c11_111 = arith.constant 11 : index
    %c0_112 = arith.constant 0 : index
    %123 = vector.load %arg9[%c11_111, %c0_112] : memref<160x10xf32, #tpu.memory_space<vmem>>, vector<128x10xf32>
    %c0_113 = arith.constant 0 : index
    %c60_114 = arith.constant 60 : index
    %124 = vector.load %arg10[%c0_113, %c60_114] : memref<128x230xf32, #tpu.memory_space<vmem>>, vector<128x10xf32>
    tpu.vector_store %arg10[%c0_113, %c60_114], %123 {strides = array<i32>} : memref<128x230xf32, #tpu.memory_space<vmem>>, vector<128x10xf32>,
    %c12_115 = arith.constant 12 : index
    %c0_116 = arith.constant 0 : index
    %125 = vector.load %arg9[%c12_115, %c0_116] : memref<160x10xf32, #tpu.memory_space<vmem>>, vector<128x10xf32>
    %c0_117 = arith.constant 0 : index
    %c70_118 = arith.constant 70 : index
    %126 = vector.load %arg10[%c0_117, %c70_118] : memref<128x230xf32, #tpu.memory_space<vmem>>, vector<128x10xf32>
    tpu.vector_store %arg10[%c0_117, %c70_118], %125 {strides = array<i32>} : memref<128x230xf32, #tpu.memory_space<vmem>>, vector<128x10xf32>,
    %c13_119 = arith.constant 13 : index
    %c0_120 = arith.constant 0 : index
    %127 = vector.load %arg9[%c13_119, %c0_120] : memref<160x10xf32, #tpu.memory_space<vmem>>, vector<128x10xf32>
    %c0_121 = arith.constant 0 : index
    %c80_122 = arith.constant 80 : index
    %128 = vector.load %arg10[%c0_121, %c80_122] : memref<128x230xf32, #tpu.memory_space<vmem>>, vector<128x10xf32>
    tpu.vector_store %arg10[%c0_121, %c80_122], %127 {strides = array<i32>} : memref<128x230xf32, #tpu.memory_space<vmem>>, vector<128x10xf32>,
    %c14_123 = arith.constant 14 : index
    %c0_124 = arith.constant 0 : index
    %129 = vector.load %arg9[%c14_123, %c0_124] : memref<160x10xf32, #tpu.memory_space<vmem>>, vector<128x10xf32>
    %c0_125 = arith.constant 0 : index
    %c90_126 = arith.constant 90 : index
    %130 = vector.load %arg10[%c0_125, %c90_126] : memref<128x230xf32, #tpu.memory_space<vmem>>, vector<128x10xf32>
    tpu.vector_store %arg10[%c0_125, %c90_126], %129 {strides = array<i32>} : memref<128x230xf32, #tpu.memory_space<vmem>>, vector<128x10xf32>,
    %c15_127 = arith.constant 15 : index
    %c0_128 = arith.constant 0 : index
    %131 = vector.load %arg9[%c15_127, %c0_128] : memref<160x10xf32, #tpu.memory_space<vmem>>, vector<128x10xf32>
    %c0_129 = arith.constant 0 : index
    %c100_130 = arith.constant 100 : index
    %132 = vector.load %arg10[%c0_129, %c100_130] : memref<128x230xf32, #tpu.memory_space<vmem>>, vector<128x10xf32>
    tpu.vector_store %arg10[%c0_129, %c100_130], %131 {strides = array<i32>} : memref<128x230xf32, #tpu.memory_space<vmem>>, vector<128x10xf32>,
    %c16_131 = arith.constant 16 : index
    %c0_132 = arith.constant 0 : index
    %133 = vector.load %arg9[%c16_131, %c0_132] : memref<160x10xf32, #tpu.memory_space<vmem>>, vector<128x10xf32>
    %c0_133 = arith.constant 0 : index
    %c110_134 = arith.constant 110 : index
    %134 = vector.load %arg10[%c0_133, %c110_134] : memref<128x230xf32, #tpu.memory_space<vmem>>, vector<128x10xf32>
    tpu.vector_store %arg10[%c0_133, %c110_134], %133 {strides = array<i32>} : memref<128x230xf32, #tpu.memory_space<vmem>>, vector<128x10xf32>,
    %c17_135 = arith.constant 17 : index
    %c0_136 = arith.constant 0 : index
    %135 = vector.load %arg9[%c17_135, %c0_136] : memref<160x10xf32, #tpu.memory_space<vmem>>, vector<128x10xf32>
    %c0_137 = arith.constant 0 : index
    %c120_138 = arith.constant 120 : index
    %136 = vector.load %arg10[%c0_137, %c120_138] : memref<128x230xf32, #tpu.memory_space<vmem>>, vector<128x10xf32>
    tpu.vector_store %arg10[%c0_137, %c120_138], %135 {strides = array<i32>} : memref<128x230xf32, #tpu.memory_space<vmem>>, vector<128x10xf32>,
    %c18_139 = arith.constant 18 : index
    %c0_140 = arith.constant 0 : index
    %137 = vector.load %arg9[%c18_139, %c0_140] : memref<160x10xf32, #tpu.memory_space<vmem>>, vector<128x10xf32>
    %c0_141 = arith.constant 0 : index
    %c130_142 = arith.constant 130 : index
    %138 = vector.load %arg10[%c0_141, %c130_142] : memref<128x230xf32, #tpu.memory_space<vmem>>, vector<128x10xf32>
    tpu.vector_store %arg10[%c0_141, %c130_142], %137 {strides = array<i32>} : memref<128x230xf32, #tpu.memory_space<vmem>>, vector<128x10xf32>,
    %c19_143 = arith.constant 19 : index
    %c0_144 = arith.constant 0 : index
    %139 = vector.load %arg9[%c19_143, %c0_144] : memref<160x10xf32, #tpu.memory_space<vmem>>, vector<128x10xf32>
    %c0_145 = arith.constant 0 : index
    %c140_146 = arith.constant 140 : index
    %140 = vector.load %arg10[%c0_145, %c140_146] : memref<128x230xf32, #tpu.memory_space<vmem>>, vector<128x10xf32>
    tpu.vector_store %arg10[%c0_145, %c140_146], %139 {strides = array<i32>} : memref<128x230xf32, #tpu.memory_space<vmem>>, vector<128x10xf32>,
    %c20_147 = arith.constant 20 : index
    %c0_148 = arith.constant 0 : index
    %141 = vector.load %arg9[%c20_147, %c0_148] : memref<160x10xf32, #tpu.memory_space<vmem>>, vector<128x10xf32>
    %c0_149 = arith.constant 0 : index
    %c150_150 = arith.constant 150 : index
    %142 = vector.load %arg10[%c0_149, %c150_150] : memref<128x230xf32, #tpu.memory_space<vmem>>, vector<128x10xf32>
    tpu.vector_store %arg10[%c0_149, %c150_150], %141 {strides = array<i32>} : memref<128x230xf32, #tpu.memory_space<vmem>>, vector<128x10xf32>,
    %c21_151 = arith.constant 21 : index
    %c0_152 = arith.constant 0 : index
    %143 = vector.load %arg9[%c21_151, %c0_152] : memref<160x10xf32, #tpu.memory_space<vmem>>, vector<128x10xf32>
    %c0_153 = arith.constant 0 : index
    %c160_154 = arith.constant 160 : index
    %144 = vector.load %arg10[%c0_153, %c160_154] : memref<128x230xf32, #tpu.memory_space<vmem>>, vector<128x10xf32>
    tpu.vector_store %arg10[%c0_153, %c160_154], %143 {strides = array<i32>} : memref<128x230xf32, #tpu.memory_space<vmem>>, vector<128x10xf32>,
    %c22_155 = arith.constant 22 : index
    %c0_156 = arith.constant 0 : index
    %145 = vector.load %arg9[%c22_155, %c0_156] : memref<160x10xf32, #tpu.memory_space<vmem>>, vector<128x10xf32>
    %c0_157 = arith.constant 0 : index
    %c170_158 = arith.constant 170 : index
    %146 = vector.load %arg10[%c0_157, %c170_158] : memref<128x230xf32, #tpu.memory_space<vmem>>, vector<128x10xf32>
    tpu.vector_store %arg10[%c0_157, %c170_158], %145 {strides = array<i32>} : memref<128x230xf32, #tpu.memory_space<vmem>>, vector<128x10xf32>,
    %c23_159 = arith.constant 23 : index
    %c0_160 = arith.constant 0 : index
    %147 = vector.load %arg9[%c23_159, %c0_160] : memref<160x10xf32, #tpu.memory_space<vmem>>, vector<128x10xf32>
    %c0_161 = arith.constant 0 : index
    %c180_162 = arith.constant 180 : index
    %148 = vector.load %arg10[%c0_161, %c180_162] : memref<128x230xf32, #tpu.memory_space<vmem>>, vector<128x10xf32>
    tpu.vector_store %arg10[%c0_161, %c180_162], %147 {strides = array<i32>} : memref<128x230xf32, #tpu.memory_space<vmem>>, vector<128x10xf32>,
    %c24_163 = arith.constant 24 : index
    %c0_164 = arith.constant 0 : index
    %149 = vector.load %arg9[%c24_163, %c0_164] : memref<160x10xf32, #tpu.memory_space<vmem>>, vector<128x10xf32>
    %c0_165 = arith.constant 0 : index
    %c190_166 = arith.constant 190 : index
    %150 = vector.load %arg10[%c0_165, %c190_166] : memref<128x230xf32, #tpu.memory_space<vmem>>, vector<128x10xf32>
    tpu.vector_store %arg10[%c0_165, %c190_166], %149 {strides = array<i32>} : memref<128x230xf32, #tpu.memory_space<vmem>>, vector<128x10xf32>,
    %c25_167 = arith.constant 25 : index
    %c0_168 = arith.constant 0 : index
    %151 = vector.load %arg9[%c25_167, %c0_168] : memref<160x10xf32, #tpu.memory_space<vmem>>, vector<128x10xf32>
    %c0_169 = arith.constant 0 : index
    %c200_170 = arith.constant 200 : index
    %152 = vector.load %arg10[%c0_169, %c200_170] : memref<128x230xf32, #tpu.memory_space<vmem>>, vector<128x10xf32>
    tpu.vector_store %arg10[%c0_169, %c200_170], %151 {strides = array<i32>} : memref<128x230xf32, #tpu.memory_space<vmem>>, vector<128x10xf32>,
    %c26_171 = arith.constant 26 : index
    %c0_172 = arith.constant 0 : index
    %153 = vector.load %arg9[%c26_171, %c0_172] : memref<160x10xf32, #tpu.memory_space<vmem>>, vector<128x10xf32>
    %c0_173 = arith.constant 0 : index
    %c210_174 = arith.constant 210 : index
    %154 = vector.load %arg10[%c0_173, %c210_174] : memref<128x230xf32, #tpu.memory_space<vmem>>, vector<128x10xf32>
    tpu.vector_store %arg10[%c0_173, %c210_174], %153 {strides = array<i32>} : memref<128x230xf32, #tpu.memory_space<vmem>>, vector<128x10xf32>,
    %c27_175 = arith.constant 27 : index
    %c0_176 = arith.constant 0 : index
    %155 = vector.load %arg9[%c27_175, %c0_176] : memref<160x10xf32, #tpu.memory_space<vmem>>, vector<128x10xf32>
    %c0_177 = arith.constant 0 : index
    %c220_178 = arith.constant 220 : index
    %156 = vector.load %arg10[%c0_177, %c220_178] : memref<128x230xf32, #tpu.memory_space<vmem>>, vector<128x10xf32>
    tpu.vector_store %arg10[%c0_177, %c220_178], %155 {strides = array<i32>} : memref<128x230xf32, #tpu.memory_space<vmem>>, vector<128x10xf32>,
    %c0_179 = arith.constant 0 : index
    %c0_180 = arith.constant 0 : index
    %157 = vector.load %arg10[%c0_179, %c0_180] : memref<128x230xf32, #tpu.memory_space<vmem>>, vector<128x230xf32>
    %c1_181 = arith.constant 1 : index
    %c0_182 = arith.constant 0 : index
    %c0_183 = arith.constant 0 : index
    %158 = vector.load %arg6[%c1_181, %c0_182, %c0_183] : memref<3x230x10xf32, #tpu.memory_space<vmem>>, vector<1x230x10xf32>
    %159 = vector.shape_cast %158 : vector<1x230x10xf32> to vector<230x10xf32>
    %cst_184 = arith.constant dense<0.000000e+00> : vector<128x10xf32>
    %160 = tpu.matmul %157, %159, %cst_184 {dimension_numbers = #tpu.dot_dimension_numbers<[1], [0], [0], [1], [0, 0, 1, 1], [], []>} : vector<128x230xf32>, vector<230x10xf32>, vector<128x10xf32> -> vector<128x10xf32>
    %c1_185 = arith.constant 1 : index
    %161 = memref.load %arg2[%c1_185] : memref<4xf32, #tpu.memory_space<smem>>
    %162 = vector.broadcast %161 : f32 to vector<128x10xf32>
    %163 = arith.addf %160, %162 : vector<128x10xf32>
    %cst_186 = arith.constant 0.000000e+00 : f32
    %164 = vector.broadcast %cst_186 : f32 to vector<128x10xf32>
    %165 = arith.maximumf %163, %164 : vector<128x10xf32>
    %cst_187 = arith.constant 0.000000e+00 : f32
    %166 = vector.broadcast %cst_187 : f32 to vector<128x10xf32>
    %167 = arith.select %44, %165, %166 : vector<128x10xi1>, vector<128x10xf32>
    %c16_188 = arith.constant 16 : index
    %c0_189 = arith.constant 0 : index
    %168 = vector.load %arg9[%c16_188, %c0_189] : memref<160x10xf32, #tpu.memory_space<vmem>>, vector<128x10xf32>
    tpu.vector_store %arg9[%c16_188, %c0_189], %167 {strides = array<i32>} : memref<160x10xf32, #tpu.memory_space<vmem>>, vector<128x10xf32>,
    %c5_190 = arith.constant 5 : index
    %c0_191 = arith.constant 0 : index
    %169 = vector.load %arg9[%c5_190, %c0_191] : memref<160x10xf32, #tpu.memory_space<vmem>>, vector<128x10xf32>
    %c0_192 = arith.constant 0 : index
    %c0_193 = arith.constant 0 : index
    %170 = vector.load %arg10[%c0_192, %c0_193] : memref<128x230xf32, #tpu.memory_space<vmem>>, vector<128x10xf32>
    tpu.vector_store %arg10[%c0_192, %c0_193], %169 {strides = array<i32>} : memref<128x230xf32, #tpu.memory_space<vmem>>, vector<128x10xf32>,
    %c6_194 = arith.constant 6 : index
    %c0_195 = arith.constant 0 : index
    %171 = vector.load %arg9[%c6_194, %c0_195] : memref<160x10xf32, #tpu.memory_space<vmem>>, vector<128x10xf32>
    %c0_196 = arith.constant 0 : index
    %c10_197 = arith.constant 10 : index
    %172 = vector.load %arg10[%c0_196, %c10_197] : memref<128x230xf32, #tpu.memory_space<vmem>>, vector<128x10xf32>
    tpu.vector_store %arg10[%c0_196, %c10_197], %171 {strides = array<i32>} : memref<128x230xf32, #tpu.memory_space<vmem>>, vector<128x10xf32>,
    %c7_198 = arith.constant 7 : index
    %c0_199 = arith.constant 0 : index
    %173 = vector.load %arg9[%c7_198, %c0_199] : memref<160x10xf32, #tpu.memory_space<vmem>>, vector<128x10xf32>
    %c0_200 = arith.constant 0 : index
    %c20_201 = arith.constant 20 : index
    %174 = vector.load %arg10[%c0_200, %c20_201] : memref<128x230xf32, #tpu.memory_space<vmem>>, vector<128x10xf32>
    tpu.vector_store %arg10[%c0_200, %c20_201], %173 {strides = array<i32>} : memref<128x230xf32, #tpu.memory_space<vmem>>, vector<128x10xf32>,
    %c8_202 = arith.constant 8 : index
    %c0_203 = arith.constant 0 : index
    %175 = vector.load %arg9[%c8_202, %c0_203] : memref<160x10xf32, #tpu.memory_space<vmem>>, vector<128x10xf32>
    %c0_204 = arith.constant 0 : index
    %c30_205 = arith.constant 30 : index
    %176 = vector.load %arg10[%c0_204, %c30_205] : memref<128x230xf32, #tpu.memory_space<vmem>>, vector<128x10xf32>
    tpu.vector_store %arg10[%c0_204, %c30_205], %175 {strides = array<i32>} : memref<128x230xf32, #tpu.memory_space<vmem>>, vector<128x10xf32>,
    %c9_206 = arith.constant 9 : index
    %c0_207 = arith.constant 0 : index
    %177 = vector.load %arg9[%c9_206, %c0_207] : memref<160x10xf32, #tpu.memory_space<vmem>>, vector<128x10xf32>
    %c0_208 = arith.constant 0 : index
    %c40_209 = arith.constant 40 : index
    %178 = vector.load %arg10[%c0_208, %c40_209] : memref<128x230xf32, #tpu.memory_space<vmem>>, vector<128x10xf32>
    tpu.vector_store %arg10[%c0_208, %c40_209], %177 {strides = array<i32>} : memref<128x230xf32, #tpu.memory_space<vmem>>, vector<128x10xf32>,
    %c10_210 = arith.constant 10 : index
    %c0_211 = arith.constant 0 : index
    %179 = vector.load %arg9[%c10_210, %c0_211] : memref<160x10xf32, #tpu.memory_space<vmem>>, vector<128x10xf32>
    %c0_212 = arith.constant 0 : index
    %c50_213 = arith.constant 50 : index
    %180 = vector.load %arg10[%c0_212, %c50_213] : memref<128x230xf32, #tpu.memory_space<vmem>>, vector<128x10xf32>
    tpu.vector_store %arg10[%c0_212, %c50_213], %179 {strides = array<i32>} : memref<128x230xf32, #tpu.memory_space<vmem>>, vector<128x10xf32>,
    %c11_214 = arith.constant 11 : index
    %c0_215 = arith.constant 0 : index
    %181 = vector.load %arg9[%c11_214, %c0_215] : memref<160x10xf32, #tpu.memory_space<vmem>>, vector<128x10xf32>
    %c0_216 = arith.constant 0 : index
    %c60_217 = arith.constant 60 : index
    %182 = vector.load %arg10[%c0_216, %c60_217] : memref<128x230xf32, #tpu.memory_space<vmem>>, vector<128x10xf32>
    tpu.vector_store %arg10[%c0_216, %c60_217], %181 {strides = array<i32>} : memref<128x230xf32, #tpu.memory_space<vmem>>, vector<128x10xf32>,
    %c12_218 = arith.constant 12 : index
    %c0_219 = arith.constant 0 : index
    %183 = vector.load %arg9[%c12_218, %c0_219] : memref<160x10xf32, #tpu.memory_space<vmem>>, vector<128x10xf32>
    %c0_220 = arith.constant 0 : index
    %c70_221 = arith.constant 70 : index
    %184 = vector.load %arg10[%c0_220, %c70_221] : memref<128x230xf32, #tpu.memory_space<vmem>>, vector<128x10xf32>
    tpu.vector_store %arg10[%c0_220, %c70_221], %183 {strides = array<i32>} : memref<128x230xf32, #tpu.memory_space<vmem>>, vector<128x10xf32>,
    %c13_222 = arith.constant 13 : index
    %c0_223 = arith.constant 0 : index
    %185 = vector.load %arg9[%c13_222, %c0_223] : memref<160x10xf32, #tpu.memory_space<vmem>>, vector<128x10xf32>
    %c0_224 = arith.constant 0 : index
    %c80_225 = arith.constant 80 : index
    %186 = vector.load %arg10[%c0_224, %c80_225] : memref<128x230xf32, #tpu.memory_space<vmem>>, vector<128x10xf32>
    tpu.vector_store %arg10[%c0_224, %c80_225], %185 {strides = array<i32>} : memref<128x230xf32, #tpu.memory_space<vmem>>, vector<128x10xf32>,
    %c14_226 = arith.constant 14 : index
    %c0_227 = arith.constant 0 : index
    %187 = vector.load %arg9[%c14_226, %c0_227] : memref<160x10xf32, #tpu.memory_space<vmem>>, vector<128x10xf32>
    %c0_228 = arith.constant 0 : index
    %c90_229 = arith.constant 90 : index
    %188 = vector.load %arg10[%c0_228, %c90_229] : memref<128x230xf32, #tpu.memory_space<vmem>>, vector<128x10xf32>
    tpu.vector_store %arg10[%c0_228, %c90_229], %187 {strides = array<i32>} : memref<128x230xf32, #tpu.memory_space<vmem>>, vector<128x10xf32>,
    %c15_230 = arith.constant 15 : index
    %c0_231 = arith.constant 0 : index
    %189 = vector.load %arg9[%c15_230, %c0_231] : memref<160x10xf32, #tpu.memory_space<vmem>>, vector<128x10xf32>
    %c0_232 = arith.constant 0 : index
    %c100_233 = arith.constant 100 : index
    %190 = vector.load %arg10[%c0_232, %c100_233] : memref<128x230xf32, #tpu.memory_space<vmem>>, vector<128x10xf32>
    tpu.vector_store %arg10[%c0_232, %c100_233], %189 {strides = array<i32>} : memref<128x230xf32, #tpu.memory_space<vmem>>, vector<128x10xf32>,
    %c16_234 = arith.constant 16 : index
    %c0_235 = arith.constant 0 : index
    %191 = vector.load %arg9[%c16_234, %c0_235] : memref<160x10xf32, #tpu.memory_space<vmem>>, vector<128x10xf32>
    %c0_236 = arith.constant 0 : index
    %c110_237 = arith.constant 110 : index
    %192 = vector.load %arg10[%c0_236, %c110_237] : memref<128x230xf32, #tpu.memory_space<vmem>>, vector<128x10xf32>
    tpu.vector_store %arg10[%c0_236, %c110_237], %191 {strides = array<i32>} : memref<128x230xf32, #tpu.memory_space<vmem>>, vector<128x10xf32>,
    %c17_238 = arith.constant 17 : index
    %c0_239 = arith.constant 0 : index
    %193 = vector.load %arg9[%c17_238, %c0_239] : memref<160x10xf32, #tpu.memory_space<vmem>>, vector<128x10xf32>
    %c0_240 = arith.constant 0 : index
    %c120_241 = arith.constant 120 : index
    %194 = vector.load %arg10[%c0_240, %c120_241] : memref<128x230xf32, #tpu.memory_space<vmem>>, vector<128x10xf32>
    tpu.vector_store %arg10[%c0_240, %c120_241], %193 {strides = array<i32>} : memref<128x230xf32, #tpu.memory_space<vmem>>, vector<128x10xf32>,
    %c18_242 = arith.constant 18 : index
    %c0_243 = arith.constant 0 : index
    %195 = vector.load %arg9[%c18_242, %c0_243] : memref<160x10xf32, #tpu.memory_space<vmem>>, vector<128x10xf32>
    %c0_244 = arith.constant 0 : index
    %c130_245 = arith.constant 130 : index
    %196 = vector.load %arg10[%c0_244, %c130_245] : memref<128x230xf32, #tpu.memory_space<vmem>>, vector<128x10xf32>
    tpu.vector_store %arg10[%c0_244, %c130_245], %195 {strides = array<i32>} : memref<128x230xf32, #tpu.memory_space<vmem>>, vector<128x10xf32>,
    %c19_246 = arith.constant 19 : index
    %c0_247 = arith.constant 0 : index
    %197 = vector.load %arg9[%c19_246, %c0_247] : memref<160x10xf32, #tpu.memory_space<vmem>>, vector<128x10xf32>
    %c0_248 = arith.constant 0 : index
    %c140_249 = arith.constant 140 : index
    %198 = vector.load %arg10[%c0_248, %c140_249] : memref<128x230xf32, #tpu.memory_space<vmem>>, vector<128x10xf32>
    tpu.vector_store %arg10[%c0_248, %c140_249], %197 {strides = array<i32>} : memref<128x230xf32, #tpu.memory_space<vmem>>, vector<128x10xf32>,
    %c20_250 = arith.constant 20 : index
    %c0_251 = arith.constant 0 : index
    %199 = vector.load %arg9[%c20_250, %c0_251] : memref<160x10xf32, #tpu.memory_space<vmem>>, vector<128x10xf32>
    %c0_252 = arith.constant 0 : index
    %c150_253 = arith.constant 150 : index
    %200 = vector.load %arg10[%c0_252, %c150_253] : memref<128x230xf32, #tpu.memory_space<vmem>>, vector<128x10xf32>
    tpu.vector_store %arg10[%c0_252, %c150_253], %199 {strides = array<i32>} : memref<128x230xf32, #tpu.memory_space<vmem>>, vector<128x10xf32>,
    %c21_254 = arith.constant 21 : index
    %c0_255 = arith.constant 0 : index
    %201 = vector.load %arg9[%c21_254, %c0_255] : memref<160x10xf32, #tpu.memory_space<vmem>>, vector<128x10xf32>
    %c0_256 = arith.constant 0 : index
    %c160_257 = arith.constant 160 : index
    %202 = vector.load %arg10[%c0_256, %c160_257] : memref<128x230xf32, #tpu.memory_space<vmem>>, vector<128x10xf32>
    tpu.vector_store %arg10[%c0_256, %c160_257], %201 {strides = array<i32>} : memref<128x230xf32, #tpu.memory_space<vmem>>, vector<128x10xf32>,
    %c22_258 = arith.constant 22 : index
    %c0_259 = arith.constant 0 : index
    %203 = vector.load %arg9[%c22_258, %c0_259] : memref<160x10xf32, #tpu.memory_space<vmem>>, vector<128x10xf32>
    %c0_260 = arith.constant 0 : index
    %c170_261 = arith.constant 170 : index
    %204 = vector.load %arg10[%c0_260, %c170_261] : memref<128x230xf32, #tpu.memory_space<vmem>>, vector<128x10xf32>
    tpu.vector_store %arg10[%c0_260, %c170_261], %203 {strides = array<i32>} : memref<128x230xf32, #tpu.memory_space<vmem>>, vector<128x10xf32>,
    %c23_262 = arith.constant 23 : index
    %c0_263 = arith.constant 0 : index
    %205 = vector.load %arg9[%c23_262, %c0_263] : memref<160x10xf32, #tpu.memory_space<vmem>>, vector<128x10xf32>
    %c0_264 = arith.constant 0 : index
    %c180_265 = arith.constant 180 : index
    %206 = vector.load %arg10[%c0_264, %c180_265] : memref<128x230xf32, #tpu.memory_space<vmem>>, vector<128x10xf32>
    tpu.vector_store %arg10[%c0_264, %c180_265], %205 {strides = array<i32>} : memref<128x230xf32, #tpu.memory_space<vmem>>, vector<128x10xf32>,
    %c24_266 = arith.constant 24 : index
    %c0_267 = arith.constant 0 : index
    %207 = vector.load %arg9[%c24_266, %c0_267] : memref<160x10xf32, #tpu.memory_space<vmem>>, vector<128x10xf32>
    %c0_268 = arith.constant 0 : index
    %c190_269 = arith.constant 190 : index
    %208 = vector.load %arg10[%c0_268, %c190_269] : memref<128x230xf32, #tpu.memory_space<vmem>>, vector<128x10xf32>
    tpu.vector_store %arg10[%c0_268, %c190_269], %207 {strides = array<i32>} : memref<128x230xf32, #tpu.memory_space<vmem>>, vector<128x10xf32>,
    %c25_270 = arith.constant 25 : index
    %c0_271 = arith.constant 0 : index
    %209 = vector.load %arg9[%c25_270, %c0_271] : memref<160x10xf32, #tpu.memory_space<vmem>>, vector<128x10xf32>
    %c0_272 = arith.constant 0 : index
    %c200_273 = arith.constant 200 : index
    %210 = vector.load %arg10[%c0_272, %c200_273] : memref<128x230xf32, #tpu.memory_space<vmem>>, vector<128x10xf32>
    tpu.vector_store %arg10[%c0_272, %c200_273], %209 {strides = array<i32>} : memref<128x230xf32, #tpu.memory_space<vmem>>, vector<128x10xf32>,
    %c26_274 = arith.constant 26 : index
    %c0_275 = arith.constant 0 : index
    %211 = vector.load %arg9[%c26_274, %c0_275] : memref<160x10xf32, #tpu.memory_space<vmem>>, vector<128x10xf32>
    %c0_276 = arith.constant 0 : index
    %c210_277 = arith.constant 210 : index
    %212 = vector.load %arg10[%c0_276, %c210_277] : memref<128x230xf32, #tpu.memory_space<vmem>>, vector<128x10xf32>
    tpu.vector_store %arg10[%c0_276, %c210_277], %211 {strides = array<i32>} : memref<128x230xf32, #tpu.memory_space<vmem>>, vector<128x10xf32>,
    %c27_278 = arith.constant 27 : index
    %c0_279 = arith.constant 0 : index
    %213 = vector.load %arg9[%c27_278, %c0_279] : memref<160x10xf32, #tpu.memory_space<vmem>>, vector<128x10xf32>
    %c0_280 = arith.constant 0 : index
    %c220_281 = arith.constant 220 : index
    %214 = vector.load %arg10[%c0_280, %c220_281] : memref<128x230xf32, #tpu.memory_space<vmem>>, vector<128x10xf32>
    tpu.vector_store %arg10[%c0_280, %c220_281], %213 {strides = array<i32>} : memref<128x230xf32, #tpu.memory_space<vmem>>, vector<128x10xf32>,
    %c0_282 = arith.constant 0 : index
    %c0_283 = arith.constant 0 : index
    %215 = vector.load %arg10[%c0_282, %c0_283] : memref<128x230xf32, #tpu.memory_space<vmem>>, vector<128x230xf32>
    %c2 = arith.constant 2 : index
    %c0_284 = arith.constant 0 : index
    %c0_285 = arith.constant 0 : index
    %216 = vector.load %arg6[%c2, %c0_284, %c0_285] : memref<3x230x10xf32, #tpu.memory_space<vmem>>, vector<1x230x10xf32>
    %217 = vector.shape_cast %216 : vector<1x230x10xf32> to vector<230x10xf32>
    %cst_286 = arith.constant dense<0.000000e+00> : vector<128x10xf32>
    %218 = tpu.matmul %215, %217, %cst_286 {dimension_numbers = #tpu.dot_dimension_numbers<[1], [0], [0], [1], [0, 0, 1, 1], [], []>} : vector<128x230xf32>, vector<230x10xf32>, vector<128x10xf32> -> vector<128x10xf32>
    %c2_287 = arith.constant 2 : index
    %219 = memref.load %arg2[%c2_287] : memref<4xf32, #tpu.memory_space<smem>>
    %220 = vector.broadcast %219 : f32 to vector<128x10xf32>
    %221 = arith.addf %218, %220 : vector<128x10xf32>
    %cst_288 = arith.constant 0.000000e+00 : f32
    %222 = vector.broadcast %cst_288 : f32 to vector<128x10xf32>
    %223 = arith.maximumf %221, %222 : vector<128x10xf32>
    %cst_289 = arith.constant 0.000000e+00 : f32
    %224 = vector.broadcast %cst_289 : f32 to vector<128x10xf32>
    %225 = arith.select %44, %223, %224 : vector<128x10xi1>, vector<128x10xf32>
    %226 = vector.extract_strided_slice %3 {offsets = [72, 0], sizes = [10, 10], strides = [1, 1]} : vector<200x20xf32> to vector<10x10xf32>
    %227 = vector.extract_strided_slice %3 {offsets = [88, 0], sizes = [1, 10], strides = [1, 1]} : vector<200x20xf32> to vector<1x10xf32>
    %cst_290 = arith.constant dense<0.000000e+00> : vector<1x10xf32>
    %228 = tpu.matmul %41, %226, %cst_290 {dimension_numbers = #tpu.dot_dimension_numbers<[1], [0], [0], [1], [0, 0, 1, 1], [], []>} : vector<1x10xf32>, vector<10x10xf32>, vector<1x10xf32> -> vector<1x10xf32>
    %229 = arith.addf %228, %227 : vector<1x10xf32>
    %cst_291 = arith.constant 0.000000e+00 : f32
    %230 = vector.broadcast %cst_291 : f32 to vector<1x10xf32>
    %231 = arith.maximumf %229, %230 : vector<1x10xf32>
    %cst_292 = arith.constant dense<0.000000e+00> : vector<128x10xf32>
    %232 = tpu.matmul %225, %226, %cst_292 {dimension_numbers = #tpu.dot_dimension_numbers<[1], [0], [0], [1], [0, 0, 1, 1], [], []>} : vector<128x10xf32>, vector<10x10xf32>, vector<128x10xf32> -> vector<128x10xf32>
    %233 = vector.broadcast %227 : vector<1x10xf32> to vector<128x10xf32>
    %234 = arith.addf %232, %233 : vector<128x10xf32>
    %cst_293 = arith.constant 0.000000e+00 : f32
    %235 = vector.broadcast %cst_293 : f32 to vector<128x10xf32>
    %236 = arith.maximumf %234, %235 : vector<128x10xf32>
    %cst_294 = arith.constant 0.000000e+00 : f32
    %237 = vector.broadcast %cst_294 : f32 to vector<128x10xf32>
    %238 = arith.select %44, %236, %237 : vector<128x10xi1>, vector<128x10xf32>
    %cst_295 = arith.constant dense<0.000000e+00> : vector<1x128xf32>
    %239 = tpu.matmul %231, %238, %cst_295 {dimension_numbers = #tpu.dot_dimension_numbers<[1], [1], [0], [0], [0, 0, 1, 0], [], []>} : vector<1x10xf32>, vector<128x10xf32>, vector<1x128xf32> -> vector<1x128xf32>
    %240 = math.tanh %239 : vector<1x128xf32>
    %cst_296 = arith.constant dense<0.000000e+00> : vector<1x10xf32>
    %241 = tpu.matmul %240, %238, %cst_296 {dimension_numbers = #tpu.dot_dimension_numbers<[1], [0], [0], [1], [0, 0, 1, 1], [], []>} : vector<1x128xf32>, vector<128x10xf32>, vector<1x10xf32> -> vector<1x10xf32>
    %242 = vector.extract_strided_slice %3 {offsets = [96, 0], sizes = [20, 20], strides = [1, 1]} : vector<200x20xf32> to vector<20x20xf32>
    %243 = vector.extract_strided_slice %3 {offsets = [168, 0], sizes = [1, 20], strides = [1, 1]} : vector<200x20xf32> to vector<1x20xf32>
    %244 = vector.extract_strided_slice %242 {offsets = [0, 0], sizes = [10, 20], strides = [1, 1]} : vector<20x20xf32> to vector<10x20xf32>
    %cst_297 = arith.constant dense<0.000000e+00> : vector<1x20xf32>
    %245 = tpu.matmul %41, %244, %cst_297 {dimension_numbers = #tpu.dot_dimension_numbers<[1], [0], [0], [1], [0, 0, 1, 1], [], []>} : vector<1x10xf32>, vector<10x20xf32>, vector<1x20xf32> -> vector<1x20xf32>
    %246 = vector.extract_strided_slice %242 {offsets = [10, 0], sizes = [10, 20], strides = [1, 1]} : vector<20x20xf32> to vector<10x20xf32>
    %cst_298 = arith.constant dense<0.000000e+00> : vector<1x20xf32>
    %247 = tpu.matmul %241, %246, %cst_298 {dimension_numbers = #tpu.dot_dimension_numbers<[1], [0], [0], [1], [0, 0, 1, 1], [], []>} : vector<1x10xf32>, vector<10x20xf32>, vector<1x20xf32> -> vector<1x20xf32>
    %248 = arith.addf %245, %247 : vector<1x20xf32>
    %249 = arith.addf %248, %243 : vector<1x20xf32>
    %cst_299 = arith.constant 0.000000e+00 : f32
    %250 = vector.broadcast %cst_299 : f32 to vector<1x20xf32>
    %251 = arith.maximumf %249, %250 : vector<1x20xf32>
    %252 = vector.extract_strided_slice %3 {offsets = [120, 0], sizes = [20, 20], strides = [1, 1]} : vector<200x20xf32> to vector<20x20xf32>
    %253 = vector.extract_strided_slice %3 {offsets = [176, 0], sizes = [1, 20], strides = [1, 1]} : vector<200x20xf32> to vector<1x20xf32>
    %cst_300 = arith.constant dense<0.000000e+00> : vector<1x20xf32>
    %254 = tpu.matmul %251, %252, %cst_300 {dimension_numbers = #tpu.dot_dimension_numbers<[1], [0], [0], [1], [0, 0, 1, 1], [], []>} : vector<1x20xf32>, vector<20x20xf32>, vector<1x20xf32> -> vector<1x20xf32>
    %255 = arith.addf %254, %253 : vector<1x20xf32>
    %cst_301 = arith.constant 0.000000e+00 : f32
    %256 = vector.broadcast %cst_301 : f32 to vector<1x20xf32>
    %257 = arith.maximumf %255, %256 : vector<1x20xf32>
    %258 = vector.extract_strided_slice %3 {offsets = [144, 0], sizes = [20, 20], strides = [1, 1]} : vector<200x20xf32> to vector<20x20xf32>
    %259 = vector.extract_strided_slice %3 {offsets = [184, 0], sizes = [1, 20], strides = [1, 1]} : vector<200x20xf32> to vector<1x20xf32>
    %cst_302 = arith.constant dense<0.000000e+00> : vector<1x20xf32>
    %260 = tpu.matmul %257, %258, %cst_302 {dimension_numbers = #tpu.dot_dimension_numbers<[1], [0], [0], [1], [0, 0, 1, 1], [], []>} : vector<1x20xf32>, vector<20x20xf32>, vector<1x20xf32> -> vector<1x20xf32>
    %261 = arith.addf %260, %259 : vector<1x20xf32>
    %cst_303 = arith.constant 0.000000e+00 : f32
    %262 = vector.broadcast %cst_303 : f32 to vector<1x20xf32>
    %263 = arith.maximumf %261, %262 : vector<1x20xf32>
    %264 = vector.extract_strided_slice %3 {offsets = [192, 0], sizes = [1, 20], strides = [1, 1]} : vector<200x20xf32> to vector<1x20xf32>
    %265 = arith.mulf %263, %264 : vector<1x20xf32>
    %cst_304 = arith.constant dense<0.000000e+00> : vector<1xf32>
    %266 = vector.multi_reduction <add>, %265, %cst_304 [1] : vector<1x20xf32> to vector<1xf32>
    %267 = vector.shape_cast %266 : vector<1xf32> to vector<1x1xf32>
    %c3 = arith.constant 3 : index
    %268 = memref.load %arg2[%c3] : memref<4xf32, #tpu.memory_space<smem>>
    %269 = vector.broadcast %268 : f32 to vector<1x1xf32>
    %270 = arith.addf %267, %269 : vector<1x1xf32>
    %271 = arith.negf %270 : vector<1x1xf32>
    %272 = math.exp %271 : vector<1x1xf32>
    %cst_305 = arith.constant 1.000000e+00 : f32
    %273 = vector.broadcast %cst_305 : f32 to vector<1x1xf32>
    %274 = arith.addf %273, %272 : vector<1x1xf32>
    %275 = arith.divf %273, %274 : vector<1x1xf32>
    %c0_306 = arith.constant 0 : index
    %c0_307 = arith.constant 0 : index
    %276 = vector.load %arg8[%c0_306, %c0_307] : memref<1x1xf32, #tpu.memory_space<vmem>>, vector<1x1xf32>
    tpu.vector_store %arg8[%c0_306, %c0_307], %275 {strides = array<i32>} : memref<1x1xf32, #tpu.memory_space<vmem>>, vector<1x1xf32>,
    return
  }
}

</mosaic_0001>

<llo_original>
// kernel: _forward_padded.1
$region0: #{_forward_padded.1}
  #allocation0 [shape = 'u32[]', space=smem, size = 0x4, offset = 0x4, fixed_abs, tag = 'smem constant byte address 0x4 - core index']
  #allocation1 [shape = 'u32[144,128]{1,0:T(1,128)}', space=vmem, size = 0x12000, scoped, tag = 'internal scratch']
  #allocation2 [shape = 'f32[160,10]{1,0:T(8,128)}', space=vmem, size = 0x14000, scoped, tag = 'scratch operand']
  #allocation3 [shape = 'f32[128,230]{1,0:T(8,128)}', space=vmem, size = 0x20000, scoped, tag = 'scratch operand']
  #allocation4 [shape = 'f32[1]{0:T(128)S(6)}', space=smem, size = 0x200, scoped, tag = 'scoped memory for _forward_padded.1']
  %s0 = inlined_call_operand.vmem [shape: s32[2], index: 0, kind: input, shape index: {}]
  %s1 = inlined_call_operand.<no memory space> [shape: f32[1], index: 1, kind: input, shape index: {}]
  %s2 = inlined_call_operand.vmem [shape: f32[4], index: 2, kind: input, shape index: {}]
  %s3 = inlined_call_operand.vmem [shape: f32[64,10], index: 3, kind: input, shape index: {}]
  %s4 = inlined_call_operand.vmem [shape: f32[64,64], index: 4, kind: input, shape index: {}]
  %s5 = inlined_call_operand.vmem [shape: f32[128,10], index: 5, kind: input, shape index: {}]
  %s6 = inlined_call_operand.vmem [shape: f32[3,230,10], index: 6, kind: input, shape index: {}]
  %s7 = inlined_call_operand.vmem [shape: f32[200,20], index: 7, kind: input, shape index: {}]
  %s8 = inlined_call_operand.hbm [shape: f32[1,1], index: 8, kind: output, shape index: {}]
  %s9 = sld [smem:[#allocation0]]
  $region50: #{_forward_padded.1} parent=0
    _
  %s11 = ssub.s32 1, %s9
  %s12 = scalar_select 0, %s11, %s9
  %13 = sst [smem:[#allocation4]] %s1
  $region1: #{_forward_padded.1} parent=0
    #allocation5 [shape = 'u8[512]{0}', space=smem, size = 0x200, scoped, tag = 'input window, operand 0, single buffered']
    #allocation6 [shape = 's32[1]{0}', space=sflag, size = 0x4, scoped, tag = 'scoped memory for _forward_padded.1']
    #allocation7 [shape = 's32[1]{0}', space=sflag, size = 0x4, scoped, tag = 'scoped memory for _forward_padded.1']
    #allocation8 [shape = 'u8[512]{0}', space=smem, size = 0x200, scoped, tag = 'input window, operand 2, single buffered']
    #allocation9 [shape = 's32[1]{0}', space=sflag, size = 0x4, scoped, tag = 'scoped memory for _forward_padded.1']
    #allocation10 [shape = 'u8[512]{0}', space=vmem, size = 0x400, scoped, tag = 'output window, operand 0, single buffered']
    %14 = vsyncpa [#allocation7], 0
    %15 = vsyncpa [#allocation9], 0
    %16 = vsyncpa [#allocation6], 0
    // Predicated region
    $region2: #{_forward_padded.1} parent=1 // pred_check
      _
    $region3: #{_forward_padded.1} parent=1 // pred_check_branch
      %18 = sbr.rel (0) target = $region5
    $region4: #{_forward_padded.1} parent=1 // pred_region
      %s20 = ssub.s32 16, 16
      %21 = vsyncadd [#allocation7], %s20
      %s23 = sshll.u32 %s0, 4
      %s24 = int_to_ptr.vmem [resolvable:$true] %s23
      %26 = dma.vmem_to_smem %s24, 16, [#allocation5], [#allocation7]
    $region5: #{_forward_padded.1} parent=1 // pred_fallthru
      _
    // Predicated region
    $region6: #{_forward_padded.1} parent=1 // pred_check
      _
    $region7: #{_forward_padded.1} parent=1 // pred_check_branch
      %28 = sbr.rel (0) target = $region9
    $region8: #{_forward_padded.1} parent=1 // pred_region
      _
    $region9: #{_forward_padded.1} parent=1 // pred_fallthru
      _
    // Predicated region
    $region10: #{_forward_padded.1} parent=1 // pred_check
      _
    $region11: #{_forward_padded.1} parent=1 // pred_check_branch
      %30 = sbr.rel (0) target = $region13
    $region12: #{_forward_padded.1} parent=1 // pred_region
      %s32 = ssub.s32 16, 16
      %33 = vsyncadd [#allocation9], %s32
      %s35 = sshll.u32 %s2, 4
      %s36 = int_to_ptr.vmem [resolvable:$true] %s35
      %38 = dma.vmem_to_smem %s36, 16, [#allocation8], [#allocation9]
    $region13: #{_forward_padded.1} parent=1 // pred_fallthru
      _
    // Predicated region
    $region14: #{_forward_padded.1} parent=1 // pred_check
      _
    $region15: #{_forward_padded.1} parent=1 // pred_check_branch
      %40 = sbr.rel (0) target = $region17
    $region16: #{_forward_padded.1} parent=1 // pred_region
      _
    $region17: #{_forward_padded.1} parent=1 // pred_fallthru
      _
    // Predicated region
    $region18: #{_forward_padded.1} parent=1 // pred_check
      _
    $region19: #{_forward_padded.1} parent=1 // pred_check_branch
      %42 = sbr.rel (0) target = $region21
    $region20: #{_forward_padded.1} parent=1 // pred_region
      _
    $region21: #{_forward_padded.1} parent=1 // pred_fallthru
      _
    // Predicated region
    $region22: #{_forward_padded.1} parent=1 // pred_check
      _
    $region23: #{_forward_padded.1} parent=1 // pred_check_branch
      %44 = sbr.rel (0) target = $region25
    $region24: #{_forward_padded.1} parent=1 // pred_region
      _
    $region25: #{_forward_padded.1} parent=1 // pred_fallthru
      _
    // Predicated region
    $region26: #{_forward_padded.1} parent=1 // pred_check
      _
    $region27: #{_forward_padded.1} parent=1 // pred_check_branch
      %46 = sbr.rel (0) target = $region29
    $region28: #{_forward_padded.1} parent=1 // pred_region
      _
    $region29: #{_forward_padded.1} parent=1 // pred_fallthru
      _
    // Predicated region
    $region30: #{_forward_padded.1} parent=1 // pred_check
      _
    $region31: #{_forward_padded.1} parent=1 // pred_check_branch
      %48 = sbr.rel (0) target = $region33
    $region32: #{_forward_padded.1} parent=1 // pred_region
      _
    $region33: #{_forward_padded.1} parent=1 // pred_fallthru
      _
    // Predicated region
    $region34: #{_forward_padded.1} parent=1 // pred_check
      _
    $region35: #{_forward_padded.1} parent=1 // pred_check_branch
      %50 = sbr.rel (0) target = $region37
    $region36: #{_forward_padded.1} parent=1 // pred_region
      %51 = dma.done [#allocation7], 16
    $region37: #{_forward_padded.1} parent=1 // pred_fallthru
      _
    // Predicated region
    $region38: #{_forward_padded.1} parent=1 // pred_check
      _
    $region39: #{_forward_padded.1} parent=1 // pred_check_branch
      %53 = sbr.rel (0) target = $region41
    $region40: #{_forward_padded.1} parent=1 // pred_region
      %54 = dma.done [#allocation9], 16
    $region41: #{_forward_padded.1} parent=1 // pred_fallthru
      _
    %55 = sfence
    %s56 = sld [smem:[#allocation5]]
    %s57 = sld [smem:[#allocation5 + $0x1]]
    %s58 = sld [smem:[#allocation4]]
    %v59 = vld [vmem:[%s7] sm:$0xff]
    %v60 = vld [vmem:[%s7 + $0x8] sm:$0xff]
    %v61 = vld [vmem:[%s7 + $0x10] sm:$0xff]
    %v62 = vld [vmem:[%s7 + $0x18] sm:$0xff]
    %v63 = vld [vmem:[%s7 + $0x20] sm:$0xff]
    %v64 = vld [vmem:[%s7 + $0x28] sm:$0xff]
    %v65 = vld [vmem:[%s7 + $0x30] sm:$0xff]
    %v66 = vld [vmem:[%s7 + $0x38] sm:$0xff]
    %v67 = vld [vmem:[%s7 + $0x40] sm:$0xff]
    %v68 = vld [vmem:[%s7 + $0x48] sm:$0xff]
    %v69 = vld [vmem:[%s7 + $0x50] sm:$0xff]
    %v70 = vld [vmem:[%s7 + $0x58] sm:$0xff]
    %v71 = vld [vmem:[%s7 + $0x60] sm:$0xff]
    %v72 = vld [vmem:[%s7 + $0x68] sm:$0xff]
    %v73 = vld [vmem:[%s7 + $0x70] sm:$0xff]
    %v74 = vld [vmem:[%s7 + $0x78] sm:$0xff]
    %v75 = vld [vmem:[%s7 + $0x80] sm:$0xff]
    %v76 = vld [vmem:[%s7 + $0x88] sm:$0xff]
    %v77 = vld [vmem:[%s7 + $0x90] sm:$0xff]
    %v78 = vld [vmem:[%s7 + $0x98] sm:$0xff]
    %v79 = vld [vmem:[%s7 + $0xa0] sm:$0xff]
    %v80 = vld [vmem:[%s7 + $0xa8] sm:$0xff]
    %v81 = vld [vmem:[%s7 + $0xb0] sm:$0xff]
    %v82 = vld [vmem:[%s7 + $0xb8] sm:$0xff]
    %v83 = vld [vmem:[%s7 + $0xc0] sm:$0xff]
    %v84 = vlaneseq
    %v85 = vshrl.u32 %v84, 7
    %v86 = vadd.s32 %v85, 8
    %v87 = vadd.s32 %v85, 16
    %v88 = vadd.s32 %v85, 24
    %v89 = vadd.s32 %v85, 32
    %v90 = vadd.s32 %v85, 40
    %v91 = vadd.s32 %v85, 48
    %v92 = vadd.s32 %v85, 56
    %v93 = vstv %s57
    %vm94 = vcmp.lt.s32.totalorder %v85, %v93
    %vm95 = vcmp.lt.s32.totalorder %v86, %v93
    %vm96 = vcmp.lt.s32.totalorder %v87, %v93
    %vm97 = vcmp.lt.s32.totalorder %v88, %v93
    %vm98 = vcmp.lt.s32.totalorder %v89, %v93
    %vm99 = vcmp.lt.s32.totalorder %v90, %v93
    %vm100 = vcmp.lt.s32.totalorder %v91, %v93
    %vm101 = vcmp.lt.s32.totalorder %v92, %v93
    %v102 = vld [vmem:[%s3] sm:$0xff]
    %v103 = vld [vmem:[%s3 + $0x8] sm:$0xff]
    %v104 = vld [vmem:[%s3 + $0x10] sm:$0xff]
    %v105 = vld [vmem:[%s3 + $0x18] sm:$0xff]
    %v106 = vld [vmem:[%s3 + $0x20] sm:$0xff]
    %v107 = vld [vmem:[%s3 + $0x28] sm:$0xff]
    %v108 = vld [vmem:[%s3 + $0x30] sm:$0xff]
    %v109 = vld [vmem:[%s3 + $0x38] sm:$0xff]
    %v110 = vsel %vm94, %v102, 0.0
    %v111 = vsel %vm95, %v103, 0.0
    %v112 = vsel %vm96, %v104, 0.0
    %v113 = vsel %vm97, %v105, 0.0
    %v114 = vsel %vm98, %v106, 0.0
    %v115 = vsel %vm99, %v107, 0.0
    %v116 = vsel %vm100, %v108, 0.0
    %v117 = vsel %vm101, %v109, 0.0
    %v118 = vld [vmem:[%s4] sm:$0xff]
    %v119 = vld [vmem:[%s4 + $0x8] sm:$0xff]
    %v120 = vld [vmem:[%s4 + $0x10] sm:$0xff]
    %v121 = vld [vmem:[%s4 + $0x18] sm:$0xff]
    %v122 = vld [vmem:[%s4 + $0x20] sm:$0xff]
    %v123 = vld [vmem:[%s4 + $0x28] sm:$0xff]
    %v124 = vld [vmem:[%s4 + $0x30] sm:$0xff]
    %v125 = vld [vmem:[%s4 + $0x38] sm:$0xff]
    %v126 = vlaneseq
    %v127 = vshrl.u32 %v126, 7
    %v128 = vsub.s32 0, %v127
    %v129 = vrot.slane %v65, %v128
    %vm130 = vcmask 80896
    %v132 = vsel %vm130, %v110, 0
    %v135 = vsel %vm130, %v111, 0
    %v138 = vsel %vm130, %v112, 0
    %v141 = vsel %vm130, %v113, 0
    %v144 = vsel %vm130, %v114, 0
    %v147 = vsel %vm130, %v115, 0
    %v150 = vsel %vm130, %v116, 0
    %v153 = vsel %vm130, %v117, 0
    %vm155 = vcmask 1041408
    %v157 = vsel %vm155, %v60, 0
    %159 = vmatprep.subr.mxu0 0.0
    %160 = vmatpush1.msra.mxu0 0.0
    %161 = vmatprep.subr.mxu0 0.0
    %162 = vmatpush1.msra.mxu0 0.0
    %163 = vmatprep.subr.mxu0 0.0
    %164 = vmatpush1.msra.mxu0 0.0
    %165 = vmatprep.subr.mxu0 0.0
    %166 = vmatpush1.msra.mxu0 0.0
    %167 = vmatprep.subr.mxu0 0.0
    %168 = vmatpush1.msra.mxu0 0.0
    %169 = vmatprep.subr.mxu0 0.0
    %170 = vmatpush1.msra.mxu0 0.0
    %171 = vmatprep.subr.mxu0 0.0
    %172 = vmatpush1.msra.mxu0 0.0
    %173 = vmatprep.subr.mxu0 0.0
    %174 = vmatpush1.msra.mxu0 0.0
    %175 = vmatprep.subr.mxu0 0.0
    %176 = vmatpush1.msra.mxu0 0.0
    %177 = vmatprep.subr.mxu0 0.0
    %178 = vmatpush1.msra.mxu0 0.0
    %179 = vmatprep.subr.mxu0 0.0
    %180 = vmatpush1.msra.mxu0 0.0
    %181 = vmatprep.subr.mxu0 0.0
    %182 = vmatpush1.msra.mxu0 0.0
    %183 = vmatprep.subr.mxu0 0.0
    %184 = vmatpush1.msra.mxu0 0.0
    %185 = vmatprep.subr.mxu0 0.0
    %186 = vmatpush1.msra.mxu0 0.0
    %187 = vmatprep.subr.mxu0 0.0
    %188 = vmatpush1.msra.mxu0 %v157
    %189 = vmatprep.subr.mxu0 0.0
    %190 = vmatpush1.msra.mxu0 %v59
    %191 = vmatprep.subr.mxu0 0.0
    %192 = vmatpush2.msra.mxu0 0.0
    %193 = vmatprep.subr.mxu0 0.0
    %194 = vmatpush2.msra.mxu0 0.0
    %195 = vmatprep.subr.mxu0 0.0
    %196 = vmatpush2.msra.mxu0 0.0
    %197 = vmatprep.subr.mxu0 0.0
    %198 = vmatpush2.msra.mxu0 0.0
    %199 = vmatprep.subr.mxu0 0.0
    %200 = vmatpush2.msra.mxu0 0.0
    %201 = vmatprep.subr.mxu0 0.0
    %202 = vmatpush2.msra.mxu0 0.0
    %203 = vmatprep.subr.mxu0 0.0
    %204 = vmatpush2.msra.mxu0 0.0
    %205 = vmatprep.subr.mxu0 0.0
    %206 = vmatpush2.msra.mxu0 0.0
    %207 = vmatprep.subr.mxu0 0.0
    %208 = vmatpush2.msra.mxu0 0.0
    %209 = vmatprep.subr.mxu0 0.0
    %210 = vmatpush2.msra.mxu0 0.0
    %211 = vmatprep.subr.mxu0 0.0
    %212 = vmatpush2.msra.mxu0 0.0
    %213 = vmatprep.subr.mxu0 0.0
    %214 = vmatpush2.msra.mxu0 0.0
    %215 = vmatprep.subr.mxu0 0.0
    %216 = vmatpush2.msra.mxu0 0.0
    %217 = vmatprep.subr.mxu0 0.0
    %218 = vmatpush2.msra.mxu0 0.0
    %219 = vmatprep.subr.mxu0 0.0
    %220 = vmatpush2.msra.mxu0 0.0
    %221 = vmatprep.subr.mxu0 0.0
    %222 = vmatpush2.msra.mxu0 0.0
    %223 = vmatprep.mubr.f32.mxu0 0.0
    %224 = vmatmul.mubr.f32.gmra.mxu0 %v132
    %v225 = vpop.f32.mrf.mxu0
    %v226 = vadd.f32 %v129, %v225
    %v227 = vpop.f32.mrf.mxu0
    %228 = vmatprep.mubr.f32.mxu0 0.0
    %229 = vmatmul.mubr.f32.gmra.mxu0 %v135
    %v230 = vpop.f32.mrf.mxu0
    %v231 = vadd.f32 %v129, %v230
    %v232 = vpop.f32.mrf.mxu0
    %233 = vmatprep.mubr.f32.mxu0 0.0
    %234 = vmatmul.mubr.f32.gmra.mxu0 %v138
    %v235 = vpop.f32.mrf.mxu0
    %v236 = vadd.f32 %v129, %v235
    %v237 = vpop.f32.mrf.mxu0
    %238 = vmatprep.mubr.f32.mxu0 0.0
    %239 = vmatmul.mubr.f32.gmra.mxu0 %v141
    %v240 = vpop.f32.mrf.mxu0
    %v241 = vadd.f32 %v129, %v240
    %v242 = vpop.f32.mrf.mxu0
    %243 = vmatprep.mubr.f32.mxu0 0.0
    %244 = vmatmul.mubr.f32.gmra.mxu0 %v144
    %v245 = vpop.f32.mrf.mxu0
    %v246 = vadd.f32 %v129, %v245
    %v247 = vpop.f32.mrf.mxu0
    %248 = vmatprep.mubr.f32.mxu0 0.0
    %249 = vmatmul.mubr.f32.gmra.mxu0 %v147
    %v250 = vpop.f32.mrf.mxu0
    %v251 = vadd.f32 %v129, %v250
    %v252 = vpop.f32.mrf.mxu0
    %253 = vmatprep.mubr.f32.mxu0 0.0
    %254 = vmatmul.mubr.f32.gmra.mxu0 %v150
    %v255 = vpop.f32.mrf.mxu0
    %v256 = vadd.f32 %v129, %v255
    %v257 = vpop.f32.mrf.mxu0
    %258 = vmatprep.mubr.f32.mxu0 0.0
    %259 = vmatmul.mubr.f32.gmra.mxu0 %v153
    %v260 = vpop.f32.mrf.mxu0
    %v261 = vadd.f32 %v129, %v260
    %v262 = vpop.f32.mrf.mxu0
    %263 = vdwg.mxu0
    %v264 = vmax.f32 %v226, 0.0
    %v265 = vmax.f32 %v231, 0.0
    %v266 = vmax.f32 %v236, 0.0
    %v267 = vmax.f32 %v241, 0.0
    %v268 = vmax.f32 %v246, 0.0
    %v269 = vmax.f32 %v251, 0.0
    %v270 = vmax.f32 %v256, 0.0
    %v271 = vmax.f32 %v261, 0.0
    %vm272 = vcmask 523264
    %v274 = vsel %vm272, %v118, 0
    %v277 = vsel %vm272, %v119, 0
    %v280 = vsel %vm272, %v120, 0
    %v283 = vsel %vm272, %v121, 0
    %v286 = vsel %vm272, %v122, 0
    %v289 = vsel %vm272, %v123, 0
    %v292 = vsel %vm272, %v124, 0
    %v295 = vsel %vm272, %v125, 0
    %297 = vmatprep.subr.mxu0 0.0
    %298 = vmatpush1.msra.mxu0 0.0
    %299 = vmatprep.subr.mxu0 0.0
    %300 = vmatpush1.msra.mxu0 0.0
    %301 = vmatprep.subr.mxu0 0.0
    %302 = vmatpush1.msra.mxu0 0.0
    %303 = vmatprep.subr.mxu0 0.0
    %304 = vmatpush1.msra.mxu0 0.0
    %305 = vmatprep.subr.mxu0 0.0
    %306 = vmatpush1.msra.mxu0 0.0
    %307 = vmatprep.subr.mxu0 0.0
    %308 = vmatpush1.msra.mxu0 0.0
    %309 = vmatprep.subr.mxu0 0.0
    %310 = vmatpush1.msra.mxu0 0.0
    %311 = vmatprep.subr.mxu0 0.0
    %312 = vmatpush1.msra.mxu0 0.0
    %313 = vmatprep.subr.mxu0 0.0
    %314 = vmatpush1.msra.mxu0 %v271
    %315 = vmatprep.subr.mxu0 0.0
    %316 = vmatpush1.msra.mxu0 %v270
    %317 = vmatprep.subr.mxu0 0.0
    %318 = vmatpush1.msra.mxu0 %v269
    %319 = vmatprep.subr.mxu0 0.0
    %320 = vmatpush1.msra.mxu0 %v268
    %321 = vmatprep.subr.mxu0 0.0
    %322 = vmatpush1.msra.mxu0 %v267
    %323 = vmatprep.subr.mxu0 0.0
    %324 = vmatpush1.msra.mxu0 %v266
    %325 = vmatprep.subr.mxu0 0.0
    %326 = vmatpush1.msra.mxu0 %v265
    %327 = vmatprep.subr.mxu0 0.0
    %328 = vmatpush1.msra.mxu0 %v264
    %329 = vmatprep.subr.mxu0 0.0
    %330 = vmatpush2.msra.mxu0 0.0
    %331 = vmatprep.subr.mxu0 0.0
    %332 = vmatpush2.msra.mxu0 0.0
    %333 = vmatprep.subr.mxu0 0.0
    %334 = vmatpush2.msra.mxu0 0.0
    %335 = vmatprep.subr.mxu0 0.0
    %336 = vmatpush2.msra.mxu0 0.0
    %337 = vmatprep.subr.mxu0 0.0
    %338 = vmatpush2.msra.mxu0 0.0
    %339 = vmatprep.subr.mxu0 0.0
    %340 = vmatpush2.msra.mxu0 0.0
    %341 = vmatprep.subr.mxu0 0.0
    %342 = vmatpush2.msra.mxu0 0.0
    %343 = vmatprep.subr.mxu0 0.0
    %344 = vmatpush2.msra.mxu0 0.0
    %345 = vmatprep.subr.mxu0 0.0
    %346 = vmatpush2.msra.mxu0 0.0
    %347 = vmatprep.subr.mxu0 0.0
    %348 = vmatpush2.msra.mxu0 0.0
    %349 = vmatprep.subr.mxu0 0.0
    %350 = vmatpush2.msra.mxu0 0.0
    %351 = vmatprep.subr.mxu0 0.0
    %352 = vmatpush2.msra.mxu0 0.0
    %353 = vmatprep.subr.mxu0 0.0
    %354 = vmatpush2.msra.mxu0 0.0
    %355 = vmatprep.subr.mxu0 0.0
    %356 = vmatpush2.msra.mxu0 0.0
    %357 = vmatprep.subr.mxu0 0.0
    %358 = vmatpush2.msra.mxu0 0.0
    %359 = vmatprep.subr.mxu0 0.0
    %360 = vmatpush2.msra.mxu0 0.0
    %361 = vmatprep.mubr.f32.mxu0 0.0
    %362 = vmatmul.mubr.f32.gmra.mxu0 %v274
    %v363 = vpop.f32.mrf.mxu0
    %v364 = vadd.f32 0.0, %v363
    %v365 = vpop.f32.mrf.mxu0
    %366 = vmatprep.mubr.f32.mxu0 0.0
    %367 = vmatmul.mubr.f32.gmra.mxu0 %v277
    %v368 = vpop.f32.mrf.mxu0
    %v369 = vadd.f32 0.0, %v368
    %v370 = vpop.f32.mrf.mxu0
    %371 = vmatprep.mubr.f32.mxu0 0.0
    %372 = vmatmul.mubr.f32.gmra.mxu0 %v280
    %v373 = vpop.f32.mrf.mxu0
    %v374 = vadd.f32 0.0, %v373
    %v375 = vpop.f32.mrf.mxu0
    %376 = vmatprep.mubr.f32.mxu0 0.0
    %377 = vmatmul.mubr.f32.gmra.mxu0 %v283
    %v378 = vpop.f32.mrf.mxu0
    %v379 = vadd.f32 0.0, %v378
    %v380 = vpop.f32.mrf.mxu0
    %381 = vmatprep.mubr.f32.mxu0 0.0
    %382 = vmatmul.mubr.f32.gmra.mxu0 %v286
    %v383 = vpop.f32.mrf.mxu0
    %v384 = vadd.f32 0.0, %v383
    %v385 = vpop.f32.mrf.mxu0
    %386 = vmatprep.mubr.f32.mxu0 0.0
    %387 = vmatmul.mubr.f32.gmra.mxu0 %v289
    %v388 = vpop.f32.mrf.mxu0
    %v389 = vadd.f32 0.0, %v388
    %v390 = vpop.f32.mrf.mxu0
    %391 = vmatprep.mubr.f32.mxu0 0.0
    %392 = vmatmul.mubr.f32.gmra.mxu0 %v292
    %v393 = vpop.f32.mrf.mxu0
    %v394 = vadd.f32 0.0, %v393
    %v395 = vpop.f32.mrf.mxu0
    %396 = vmatprep.mubr.f32.mxu0 0.0
    %397 = vmatmul.mubr.f32.gmra.mxu0 %v295
    %v398 = vpop.f32.mrf.mxu0
    %v399 = vadd.f32 0.0, %v398
    %v400 = vpop.f32.mrf.mxu0
    %401 = vdwg.mxu0
    %v402 = vadd.f32 %v110, %v364
    %v403 = vadd.f32 %v111, %v369
    %v404 = vadd.f32 %v112, %v374
    %v405 = vadd.f32 %v113, %v379
    %v406 = vadd.f32 %v114, %v384
    %v407 = vadd.f32 %v115, %v389
    %v408 = vadd.f32 %v116, %v394
    %v409 = vadd.f32 %v117, %v399
    %v410 = vlaneseq
    %v411 = vshrl.u32 %v410, 7
    %v412 = vsub.s32 0, %v411
    %v413 = vrot.slane %v66, %v412
    %v415 = vsel %vm130, %v402, 0
    %v418 = vsel %vm130, %v403, 0
    %v421 = vsel %vm130, %v404, 0
    %v424 = vsel %vm130, %v405, 0
    %v427 = vsel %vm130, %v406, 0
    %v430 = vsel %vm130, %v407, 0
    %v433 = vsel %vm130, %v408, 0
    %v436 = vsel %vm130, %v409, 0
    %v439 = vsel %vm155, %v62, 0
    %441 = vmatprep.subr.mxu0 0.0
    %442 = vmatpush1.msra.mxu0 0.0
    %443 = vmatprep.subr.mxu0 0.0
    %444 = vmatpush1.msra.mxu0 0.0
    %445 = vmatprep.subr.mxu0 0.0
    %446 = vmatpush1.msra.mxu0 0.0
    %447 = vmatprep.subr.mxu0 0.0
    %448 = vmatpush1.msra.mxu0 0.0
    %449 = vmatprep.subr.mxu0 0.0
    %450 = vmatpush1.msra.mxu0 0.0
    %451 = vmatprep.subr.mxu0 0.0
    %452 = vmatpush1.msra.mxu0 0.0
    %453 = vmatprep.subr.mxu0 0.0
    %454 = vmatpush1.msra.mxu0 0.0
    %455 = vmatprep.subr.mxu0 0.0
    %456 = vmatpush1.msra.mxu0 0.0
    %457 = vmatprep.subr.mxu0 0.0
    %458 = vmatpush1.msra.mxu0 0.0
    %459 = vmatprep.subr.mxu0 0.0
    %460 = vmatpush1.msra.mxu0 0.0
    %461 = vmatprep.subr.mxu0 0.0
    %462 = vmatpush1.msra.mxu0 0.0
    %463 = vmatprep.subr.mxu0 0.0
    %464 = vmatpush1.msra.mxu0 0.0
    %465 = vmatprep.subr.mxu0 0.0
    %466 = vmatpush1.msra.mxu0 0.0
    %467 = vmatprep.subr.mxu0 0.0
    %468 = vmatpush1.msra.mxu0 0.0
    %469 = vmatprep.subr.mxu0 0.0
    %470 = vmatpush1.msra.mxu0 %v439
    %471 = vmatprep.subr.mxu0 0.0
    %472 = vmatpush1.msra.mxu0 %v61
    %473 = vmatprep.subr.mxu0 0.0
    %474 = vmatpush2.msra.mxu0 0.0
    %475 = vmatprep.subr.mxu0 0.0
    %476 = vmatpush2.msra.mxu0 0.0
    %477 = vmatprep.subr.mxu0 0.0
    %478 = vmatpush2.msra.mxu0 0.0
    %479 = vmatprep.subr.mxu0 0.0
    %480 = vmatpush2.msra.mxu0 0.0
    %481 = vmatprep.subr.mxu0 0.0
    %482 = vmatpush2.msra.mxu0 0.0
    %483 = vmatprep.subr.mxu0 0.0
    %484 = vmatpush2.msra.mxu0 0.0
    %485 = vmatprep.subr.mxu0 0.0
    %486 = vmatpush2.msra.mxu0 0.0
    %487 = vmatprep.subr.mxu0 0.0
    %488 = vmatpush2.msra.mxu0 0.0
    %489 = vmatprep.subr.mxu0 0.0
    %490 = vmatpush2.msra.mxu0 0.0
    %491 = vmatprep.subr.mxu0 0.0
    %492 = vmatpush2.msra.mxu0 0.0
    %493 = vmatprep.subr.mxu0 0.0
    %494 = vmatpush2.msra.mxu0 0.0
    %495 = vmatprep.subr.mxu0 0.0
    %496 = vmatpush2.msra.mxu0 0.0
    %497 = vmatprep.subr.mxu0 0.0
    %498 = vmatpush2.msra.mxu0 0.0
    %499 = vmatprep.subr.mxu0 0.0
    %500 = vmatpush2.msra.mxu0 0.0
    %501 = vmatprep.subr.mxu0 0.0
    %502 = vmatpush2.msra.mxu0 0.0
    %503 = vmatprep.subr.mxu0 0.0
    %504 = vmatpush2.msra.mxu0 0.0
    %505 = vmatprep.mubr.f32.mxu0 0.0
    %506 = vmatmul.mubr.f32.gmra.mxu0 %v415
    %v507 = vpop.f32.mrf.mxu0
    %v508 = vadd.f32 %v413, %v507
    %v509 = vpop.f32.mrf.mxu0
    %510 = vmatprep.mubr.f32.mxu0 0.0
    %511 = vmatmul.mubr.f32.gmra.mxu0 %v418
    %v512 = vpop.f32.mrf.mxu0
    %v513 = vadd.f32 %v413, %v512
    %v514 = vpop.f32.mrf.mxu0
    %515 = vmatprep.mubr.f32.mxu0 0.0
    %516 = vmatmul.mubr.f32.gmra.mxu0 %v421
    %v517 = vpop.f32.mrf.mxu0
    %v518 = vadd.f32 %v413, %v517
    %v519 = vpop.f32.mrf.mxu0
    %520 = vmatprep.mubr.f32.mxu0 0.0
    %521 = vmatmul.mubr.f32.gmra.mxu0 %v424
    %v522 = vpop.f32.mrf.mxu0
    %v523 = vadd.f32 %v413, %v522
    %v524 = vpop.f32.mrf.mxu0
    %525 = vmatprep.mubr.f32.mxu0 0.0
    %526 = vmatmul.mubr.f32.gmra.mxu0 %v427
    %v527 = vpop.f32.mrf.mxu0
    %v528 = vadd.f32 %v413, %v527
    %v529 = vpop.f32.mrf.mxu0
    %530 = vmatprep.mubr.f32.mxu0 0.0
    %531 = vmatmul.mubr.f32.gmra.mxu0 %v430
    %v532 = vpop.f32.mrf.mxu0
    %v533 = vadd.f32 %v413, %v532
    %v534 = vpop.f32.mrf.mxu0
    %535 = vmatprep.mubr.f32.mxu0 0.0
    %536 = vmatmul.mubr.f32.gmra.mxu0 %v433
    %v537 = vpop.f32.mrf.mxu0
    %v538 = vadd.f32 %v413, %v537
    %v539 = vpop.f32.mrf.mxu0
    %540 = vmatprep.mubr.f32.mxu0 0.0
    %541 = vmatmul.mubr.f32.gmra.mxu0 %v436
    %v542 = vpop.f32.mrf.mxu0
    %v543 = vadd.f32 %v413, %v542
    %v544 = vpop.f32.mrf.mxu0
    %545 = vdwg.mxu0
    %v546 = vmax.f32 %v508, 0.0
    %v547 = vmax.f32 %v513, 0.0
    %v548 = vmax.f32 %v518, 0.0
    %v549 = vmax.f32 %v523, 0.0
    %v550 = vmax.f32 %v528, 0.0
    %v551 = vmax.f32 %v533, 0.0
    %v552 = vmax.f32 %v538, 0.0
    %v553 = vmax.f32 %v543, 0.0
    %554 = vmatprep.subr.mxu0 0.0
    %555 = vmatpush1.msra.mxu0 0.0
    %556 = vmatprep.subr.mxu0 0.0
    %557 = vmatpush1.msra.mxu0 0.0
    %558 = vmatprep.subr.mxu0 0.0
    %559 = vmatpush1.msra.mxu0 0.0
    %560 = vmatprep.subr.mxu0 0.0
    %561 = vmatpush1.msra.mxu0 0.0
    %562 = vmatprep.subr.mxu0 0.0
    %563 = vmatpush1.msra.mxu0 0.0
    %564 = vmatprep.subr.mxu0 0.0
    %565 = vmatpush1.msra.mxu0 0.0
    %566 = vmatprep.subr.mxu0 0.0
    %567 = vmatpush1.msra.mxu0 0.0
    %568 = vmatprep.subr.mxu0 0.0
    %569 = vmatpush1.msra.mxu0 0.0
    %570 = vmatprep.subr.mxu0 0.0
    %571 = vmatpush1.msra.mxu0 %v553
    %572 = vmatprep.subr.mxu0 0.0
    %573 = vmatpush1.msra.mxu0 %v552
    %574 = vmatprep.subr.mxu0 0.0
    %575 = vmatpush1.msra.mxu0 %v551
    %576 = vmatprep.subr.mxu0 0.0
    %577 = vmatpush1.msra.mxu0 %v550
    %578 = vmatprep.subr.mxu0 0.0
    %579 = vmatpush1.msra.mxu0 %v549
    %580 = vmatprep.subr.mxu0 0.0
    %581 = vmatpush1.msra.mxu0 %v548
    %582 = vmatprep.subr.mxu0 0.0
    %583 = vmatpush1.msra.mxu0 %v547
    %584 = vmatprep.subr.mxu0 0.0
    %585 = vmatpush1.msra.mxu0 %v546
    %586 = vmatprep.subr.mxu0 0.0
    %587 = vmatpush2.msra.mxu0 0.0
    %588 = vmatprep.subr.mxu0 0.0
    %589 = vmatpush2.msra.mxu0 0.0
    %590 = vmatprep.subr.mxu0 0.0
    %591 = vmatpush2.msra.mxu0 0.0
    %592 = vmatprep.subr.mxu0 0.0
    %593 = vmatpush2.msra.mxu0 0.0
    %594 = vmatprep.subr.mxu0 0.0
    %595 = vmatpush2.msra.mxu0 0.0
    %596 = vmatprep.subr.mxu0 0.0
    %597 = vmatpush2.msra.mxu0 0.0
    %598 = vmatprep.subr.mxu0 0.0
    %599 = vmatpush2.msra.mxu0 0.0
    %600 = vmatprep.subr.mxu0 0.0
    %601 = vmatpush2.msra.mxu0 0.0
    %602 = vmatprep.subr.mxu0 0.0
    %603 = vmatpush2.msra.mxu0 0.0
    %604 = vmatprep.subr.mxu0 0.0
    %605 = vmatpush2.msra.mxu0 0.0
    %606 = vmatprep.subr.mxu0 0.0
    %607 = vmatpush2.msra.mxu0 0.0
    %608 = vmatprep.subr.mxu0 0.0
    %609 = vmatpush2.msra.mxu0 0.0
    %610 = vmatprep.subr.mxu0 0.0
    %611 = vmatpush2.msra.mxu0 0.0
    %612 = vmatprep.subr.mxu0 0.0
    %613 = vmatpush2.msra.mxu0 0.0
    %614 = vmatprep.subr.mxu0 0.0
    %615 = vmatpush2.msra.mxu0 0.0
    %616 = vmatprep.subr.mxu0 0.0
    %617 = vmatpush2.msra.mxu0 0.0
    %618 = vmatprep.mubr.f32.mxu0 0.0
    %619 = vmatmul.mubr.f32.gmra.mxu0 %v274
    %v620 = vpop.f32.mrf.mxu0
    %v621 = vadd.f32 0.0, %v620
    %v622 = vpop.f32.mrf.mxu0
    %623 = vmatprep.mubr.f32.mxu0 0.0
    %624 = vmatmul.mubr.f32.gmra.mxu0 %v277
    %v625 = vpop.f32.mrf.mxu0
    %v626 = vadd.f32 0.0, %v625
    %v627 = vpop.f32.mrf.mxu0
    %628 = vmatprep.mubr.f32.mxu0 0.0
    %629 = vmatmul.mubr.f32.gmra.mxu0 %v280
    %v630 = vpop.f32.mrf.mxu0
    %v631 = vadd.f32 0.0, %v630
    %v632 = vpop.f32.mrf.mxu0
    %633 = vmatprep.mubr.f32.mxu0 0.0
    %634 = vmatmul.mubr.f32.gmra.mxu0 %v283
    %v635 = vpop.f32.mrf.mxu0
    %v636 = vadd.f32 0.0, %v635
    %v637 = vpop.f32.mrf.mxu0
    %638 = vmatprep.mubr.f32.mxu0 0.0
    %639 = vmatmul.mubr.f32.gmra.mxu0 %v286
    %v640 = vpop.f32.mrf.mxu0
    %v641 = vadd.f32 0.0, %v640
    %v642 = vpop.f32.mrf.mxu0
    %643 = vmatprep.mubr.f32.mxu0 0.0
    %644 = vmatmul.mubr.f32.gmra.mxu0 %v289
    %v645 = vpop.f32.mrf.mxu0
    %v646 = vadd.f32 0.0, %v645
    %v647 = vpop.f32.mrf.mxu0
    %648 = vmatprep.mubr.f32.mxu0 0.0
    %649 = vmatmul.mubr.f32.gmra.mxu0 %v292
    %v650 = vpop.f32.mrf.mxu0
    %v651 = vadd.f32 0.0, %v650
    %v652 = vpop.f32.mrf.mxu0
    %653 = vmatprep.mubr.f32.mxu0 0.0
    %654 = vmatmul.mubr.f32.gmra.mxu0 %v295
    %v655 = vpop.f32.mrf.mxu0
    %v656 = vadd.f32 0.0, %v655
    %v657 = vpop.f32.mrf.mxu0
    %658 = vdwg.mxu0
    %v659 = vadd.f32 %v402, %v621
    %v660 = vadd.f32 %v403, %v626
    %v661 = vadd.f32 %v404, %v631
    %v662 = vadd.f32 %v405, %v636
    %v663 = vadd.f32 %v406, %v641
    %v664 = vadd.f32 %v407, %v646
    %v665 = vadd.f32 %v408, %v651
    %v666 = vadd.f32 %v409, %v656
    %v667 = vlaneseq
    %v668 = vshrl.u32 %v667, 7
    %v669 = vsub.s32 0, %v668
    %v670 = vrot.slane %v67, %v669
    %v672 = vsel %vm130, %v659, 0
    %v675 = vsel %vm130, %v660, 0
    %v678 = vsel %vm130, %v661, 0
    %v681 = vsel %vm130, %v662, 0
    %v684 = vsel %vm130, %v663, 0
    %v687 = vsel %vm130, %v664, 0
    %v690 = vsel %vm130, %v665, 0
    %v693 = vsel %vm130, %v666, 0
    %v696 = vsel %vm155, %v64, 0
    %698 = vmatprep.subr.mxu0 0.0
    %699 = vmatpush1.msra.mxu0 0.0
    %700 = vmatprep.subr.mxu0 0.0
    %701 = vmatpush1.msra.mxu0 0.0
    %702 = vmatprep.subr.mxu0 0.0
    %703 = vmatpush1.msra.mxu0 0.0
    %704 = vmatprep.subr.mxu0 0.0
    %705 = vmatpush1.msra.mxu0 0.0
    %706 = vmatprep.subr.mxu0 0.0
    %707 = vmatpush1.msra.mxu0 0.0
    %708 = vmatprep.subr.mxu0 0.0
    %709 = vmatpush1.msra.mxu0 0.0
    %710 = vmatprep.subr.mxu0 0.0
    %711 = vmatpush1.msra.mxu0 0.0
    %712 = vmatprep.subr.mxu0 0.0
    %713 = vmatpush1.msra.mxu0 0.0
    %714 = vmatprep.subr.mxu0 0.0
    %715 = vmatpush1.msra.mxu0 0.0
    %716 = vmatprep.subr.mxu0 0.0
    %717 = vmatpush1.msra.mxu0 0.0
    %718 = vmatprep.subr.mxu0 0.0
    %719 = vmatpush1.msra.mxu0 0.0
    %720 = vmatprep.subr.mxu0 0.0
    %721 = vmatpush1.msra.mxu0 0.0
    %722 = vmatprep.subr.mxu0 0.0
    %723 = vmatpush1.msra.mxu0 0.0
    %724 = vmatprep.subr.mxu0 0.0
    %725 = vmatpush1.msra.mxu0 0.0
    %726 = vmatprep.subr.mxu0 0.0
    %727 = vmatpush1.msra.mxu0 %v696
    %728 = vmatprep.subr.mxu0 0.0
    %729 = vmatpush1.msra.mxu0 %v63
    %730 = vmatprep.subr.mxu0 0.0
    %731 = vmatpush2.msra.mxu0 0.0
    %732 = vmatprep.subr.mxu0 0.0
    %733 = vmatpush2.msra.mxu0 0.0
    %734 = vmatprep.subr.mxu0 0.0
    %735 = vmatpush2.msra.mxu0 0.0
    %736 = vmatprep.subr.mxu0 0.0
    %737 = vmatpush2.msra.mxu0 0.0
    %738 = vmatprep.subr.mxu0 0.0
    %739 = vmatpush2.msra.mxu0 0.0
    %740 = vmatprep.subr.mxu0 0.0
    %741 = vmatpush2.msra.mxu0 0.0
    %742 = vmatprep.subr.mxu0 0.0
    %743 = vmatpush2.msra.mxu0 0.0
    %744 = vmatprep.subr.mxu0 0.0
    %745 = vmatpush2.msra.mxu0 0.0
    %746 = vmatprep.subr.mxu0 0.0
    %747 = vmatpush2.msra.mxu0 0.0
    %748 = vmatprep.subr.mxu0 0.0
    %749 = vmatpush2.msra.mxu0 0.0
    %750 = vmatprep.subr.mxu0 0.0
    %751 = vmatpush2.msra.mxu0 0.0
    %752 = vmatprep.subr.mxu0 0.0
    %753 = vmatpush2.msra.mxu0 0.0
    %754 = vmatprep.subr.mxu0 0.0
    %755 = vmatpush2.msra.mxu0 0.0
    %756 = vmatprep.subr.mxu0 0.0
    %757 = vmatpush2.msra.mxu0 0.0
    %758 = vmatprep.subr.mxu0 0.0
    %759 = vmatpush2.msra.mxu0 0.0
    %760 = vmatprep.subr.mxu0 0.0
    %761 = vmatpush2.msra.mxu0 0.0
    %762 = vmatprep.mubr.f32.mxu0 0.0
    %763 = vmatmul.mubr.f32.gmra.mxu0 %v672
    %v764 = vpop.f32.mrf.mxu0
    %v765 = vadd.f32 %v670, %v764
    %v766 = vpop.f32.mrf.mxu0
    %767 = vmatprep.mubr.f32.mxu0 0.0
    %768 = vmatmul.mubr.f32.gmra.mxu0 %v675
    %v769 = vpop.f32.mrf.mxu0
    %v770 = vadd.f32 %v670, %v769
    %v771 = vpop.f32.mrf.mxu0
    %772 = vmatprep.mubr.f32.mxu0 0.0
    %773 = vmatmul.mubr.f32.gmra.mxu0 %v678
    %v774 = vpop.f32.mrf.mxu0
    %v775 = vadd.f32 %v670, %v774
    %v776 = vpop.f32.mrf.mxu0
    %777 = vmatprep.mubr.f32.mxu0 0.0
    %778 = vmatmul.mubr.f32.gmra.mxu0 %v681
    %v779 = vpop.f32.mrf.mxu0
    %v780 = vadd.f32 %v670, %v779
    %v781 = vpop.f32.mrf.mxu0
    %782 = vmatprep.mubr.f32.mxu0 0.0
    %783 = vmatmul.mubr.f32.gmra.mxu0 %v684
    %v784 = vpop.f32.mrf.mxu0
    %v785 = vadd.f32 %v670, %v784
    %v786 = vpop.f32.mrf.mxu0
    %787 = vmatprep.mubr.f32.mxu0 0.0
    %788 = vmatmul.mubr.f32.gmra.mxu0 %v687
    %v789 = vpop.f32.mrf.mxu0
    %v790 = vadd.f32 %v670, %v789
    %v791 = vpop.f32.mrf.mxu0
    %792 = vmatprep.mubr.f32.mxu0 0.0
    %793 = vmatmul.mubr.f32.gmra.mxu0 %v690
    %v794 = vpop.f32.mrf.mxu0
    %v795 = vadd.f32 %v670, %v794
    %v796 = vpop.f32.mrf.mxu0
    %797 = vmatprep.mubr.f32.mxu0 0.0
    %798 = vmatmul.mubr.f32.gmra.mxu0 %v693
    %v799 = vpop.f32.mrf.mxu0
    %v800 = vadd.f32 %v670, %v799
    %v801 = vpop.f32.mrf.mxu0
    %802 = vdwg.mxu0
    %v803 = vmax.f32 %v765, 0.0
    %v804 = vmax.f32 %v770, 0.0
    %v805 = vmax.f32 %v775, 0.0
    %v806 = vmax.f32 %v780, 0.0
    %v807 = vmax.f32 %v785, 0.0
    %v808 = vmax.f32 %v790, 0.0
    %v809 = vmax.f32 %v795, 0.0
    %v810 = vmax.f32 %v800, 0.0
    %811 = vmatprep.subr.mxu0 0.0
    %812 = vmatpush1.msra.mxu0 0.0
    %813 = vmatprep.subr.mxu0 0.0
    %814 = vmatpush1.msra.mxu0 0.0
    %815 = vmatprep.subr.mxu0 0.0
    %816 = vmatpush1.msra.mxu0 0.0
    %817 = vmatprep.subr.mxu0 0.0
    %818 = vmatpush1.msra.mxu0 0.0
    %819 = vmatprep.subr.mxu0 0.0
    %820 = vmatpush1.msra.mxu0 0.0
    %821 = vmatprep.subr.mxu0 0.0
    %822 = vmatpush1.msra.mxu0 0.0
    %823 = vmatprep.subr.mxu0 0.0
    %824 = vmatpush1.msra.mxu0 0.0
    %825 = vmatprep.subr.mxu0 0.0
    %826 = vmatpush1.msra.mxu0 0.0
    %827 = vmatprep.subr.mxu0 0.0
    %828 = vmatpush1.msra.mxu0 %v810
    %829 = vmatprep.subr.mxu0 0.0
    %830 = vmatpush1.msra.mxu0 %v809
    %831 = vmatprep.subr.mxu0 0.0
    %832 = vmatpush1.msra.mxu0 %v808
    %833 = vmatprep.subr.mxu0 0.0
    %834 = vmatpush1.msra.mxu0 %v807
    %835 = vmatprep.subr.mxu0 0.0
    %836 = vmatpush1.msra.mxu0 %v806
    %837 = vmatprep.subr.mxu0 0.0
    %838 = vmatpush1.msra.mxu0 %v805
    %839 = vmatprep.subr.mxu0 0.0
    %840 = vmatpush1.msra.mxu0 %v804
    %841 = vmatprep.subr.mxu0 0.0
    %842 = vmatpush1.msra.mxu0 %v803
    %843 = vmatprep.subr.mxu0 0.0
    %844 = vmatpush2.msra.mxu0 0.0
    %845 = vmatprep.subr.mxu0 0.0
    %846 = vmatpush2.msra.mxu0 0.0
    %847 = vmatprep.subr.mxu0 0.0
    %848 = vmatpush2.msra.mxu0 0.0
    %849 = vmatprep.subr.mxu0 0.0
    %850 = vmatpush2.msra.mxu0 0.0
    %851 = vmatprep.subr.mxu0 0.0
    %852 = vmatpush2.msra.mxu0 0.0
    %853 = vmatprep.subr.mxu0 0.0
    %854 = vmatpush2.msra.mxu0 0.0
    %855 = vmatprep.subr.mxu0 0.0
    %856 = vmatpush2.msra.mxu0 0.0
    %857 = vmatprep.subr.mxu0 0.0
    %858 = vmatpush2.msra.mxu0 0.0
    %859 = vmatprep.subr.mxu0 0.0
    %860 = vmatpush2.msra.mxu0 0.0
    %861 = vmatprep.subr.mxu0 0.0
    %862 = vmatpush2.msra.mxu0 0.0
    %863 = vmatprep.subr.mxu0 0.0
    %864 = vmatpush2.msra.mxu0 0.0
    %865 = vmatprep.subr.mxu0 0.0
    %866 = vmatpush2.msra.mxu0 0.0
    %867 = vmatprep.subr.mxu0 0.0
    %868 = vmatpush2.msra.mxu0 0.0
    %869 = vmatprep.subr.mxu0 0.0
    %870 = vmatpush2.msra.mxu0 0.0
    %871 = vmatprep.subr.mxu0 0.0
    %872 = vmatpush2.msra.mxu0 0.0
    %873 = vmatprep.subr.mxu0 0.0
    %874 = vmatpush2.msra.mxu0 0.0
    %875 = vmatprep.mubr.f32.mxu0 0.0
    %876 = vmatmul.mubr.f32.gmra.mxu0 %v274
    %v877 = vpop.f32.mrf.mxu0
    %v878 = vadd.f32 0.0, %v877
    %v879 = vpop.f32.mrf.mxu0
    %880 = vmatprep.mubr.f32.mxu0 0.0
    %881 = vmatmul.mubr.f32.gmra.mxu0 %v277
    %v882 = vpop.f32.mrf.mxu0
    %v883 = vadd.f32 0.0, %v882
    %v884 = vpop.f32.mrf.mxu0
    %885 = vmatprep.mubr.f32.mxu0 0.0
    %886 = vmatmul.mubr.f32.gmra.mxu0 %v280
    %v887 = vpop.f32.mrf.mxu0
    %v888 = vadd.f32 0.0, %v887
    %v889 = vpop.f32.mrf.mxu0
    %890 = vmatprep.mubr.f32.mxu0 0.0
    %891 = vmatmul.mubr.f32.gmra.mxu0 %v283
    %v892 = vpop.f32.mrf.mxu0
    %v893 = vadd.f32 0.0, %v892
    %v894 = vpop.f32.mrf.mxu0
    %895 = vmatprep.mubr.f32.mxu0 0.0
    %896 = vmatmul.mubr.f32.gmra.mxu0 %v286
    %v897 = vpop.f32.mrf.mxu0
    %v898 = vadd.f32 0.0, %v897
    %v899 = vpop.f32.mrf.mxu0
    %900 = vmatprep.mubr.f32.mxu0 0.0
    %901 = vmatmul.mubr.f32.gmra.mxu0 %v289
    %v902 = vpop.f32.mrf.mxu0
    %v903 = vadd.f32 0.0, %v902
    %v904 = vpop.f32.mrf.mxu0
    %905 = vmatprep.mubr.f32.mxu0 0.0
    %906 = vmatmul.mubr.f32.gmra.mxu0 %v292
    %v907 = vpop.f32.mrf.mxu0
    %v908 = vadd.f32 0.0, %v907
    %v909 = vpop.f32.mrf.mxu0
    %910 = vmatprep.mubr.f32.mxu0 0.0
    %911 = vmatmul.mubr.f32.gmra.mxu0 %v295
    %v912 = vpop.f32.mrf.mxu0
    %v913 = vadd.f32 0.0, %v912
    %v914 = vpop.f32.mrf.mxu0
    %915 = vdwg.mxu0
    %v916 = vadd.f32 %v659, %v878
    %v917 = vadd.f32 %v660, %v883
    %v918 = vadd.f32 %v661, %v888
    %v919 = vadd.f32 %v662, %v893
    %v920 = vadd.f32 %v663, %v898
    %v921 = vadd.f32 %v664, %v903
    %v922 = vadd.f32 %v665, %v908
    %v923 = vadd.f32 %v666, %v913
    %v924 = vsel %vm130, %v916, 0.0
    %v925 = vsel %vm130, %v917, 0.0
    %v926 = vadd.f32 %v924, %v925
    %v927 = vsel %vm130, %v918, 0.0
    %v928 = vadd.f32 %v926, %v927
    %v929 = vsel %vm130, %v919, 0.0
    %v930 = vadd.f32 %v928, %v929
    %v931 = vsel %vm130, %v920, 0.0
    %v932 = vadd.f32 %v930, %v931
    %v933 = vsel %vm130, %v921, 0.0
    %v934 = vadd.f32 %v932, %v933
    %v935 = vsel %vm130, %v922, 0.0
    %v936 = vadd.f32 %v934, %v935
    %v937 = vsel %vm130, %v923, 0.0
    %v938 = vadd.f32 %v936, %v937
    %v939 = vrot.slane %v938, 4
    %v940 = vadd.f32 %v938, %v939
    %v941 = vrot.slane %v940, 2
    %v942 = vadd.f32 %v940, %v941
    %v943 = vrot.slane %v942, 1
    %v944 = vadd.f32 %v942, %v943
    %v945 = vstv %s58
    %v946 = vmul.f32 %v944, %v945
    %v947 = vadd.s32 %v85, 64
    %v948 = vadd.s32 %v85, 72
    %v949 = vadd.s32 %v85, 80
    %v950 = vadd.s32 %v85, 88
    %v951 = vadd.s32 %v85, 96
    %v952 = vadd.s32 %v85, 104
    %v953 = vadd.s32 %v85, 112
    %v954 = vadd.s32 %v85, 120
    %v955 = vstv %s56
    %vm956 = vcmp.lt.s32.totalorder %v85, %v955
    %vm957 = vcmp.lt.s32.totalorder %v86, %v955
    %vm958 = vcmp.lt.s32.totalorder %v87, %v955
    %vm959 = vcmp.lt.s32.totalorder %v88, %v955
    %vm960 = vcmp.lt.s32.totalorder %v89, %v955
    %vm961 = vcmp.lt.s32.totalorder %v90, %v955
    %vm962 = vcmp.lt.s32.totalorder %v91, %v955
    %vm963 = vcmp.lt.s32.totalorder %v92, %v955
    %vm964 = vcmp.lt.s32.totalorder %v947, %v955
    %vm965 = vcmp.lt.s32.totalorder %v948, %v955
    %vm966 = vcmp.lt.s32.totalorder %v949, %v955
    %vm967 = vcmp.lt.s32.totalorder %v950, %v955
    %vm968 = vcmp.lt.s32.totalorder %v951, %v955
    %vm969 = vcmp.lt.s32.totalorder %v952, %v955
    %vm970 = vcmp.lt.s32.totalorder %v953, %v955
    %vm971 = vcmp.lt.s32.totalorder %v954, %v955
    %972 = vst.msk [vmem:[#allocation2] sm:$0xff] %vm130, 0.0
    %973 = vst.msk [vmem:[#allocation2 + $0x8] sm:$0xff] %vm130, 0.0
    %974 = vst.msk [vmem:[#allocation2 + $0x90] sm:$0xff] %vm130, 0.0
    %975 = vst.msk [vmem:[#allocation2 + $0x98] sm:$0xff] %vm130, 0.0
    %v976 = vld [vmem:[%s5] sm:$0xff]
    %v977 = vld [vmem:[%s5 + $0x8] sm:$0xff]
    %v978 = vld [vmem:[%s5 + $0x10] sm:$0xff]
    %v979 = vld [vmem:[%s5 + $0x18] sm:$0xff]
    %v980 = vld [vmem:[%s5 + $0x20] sm:$0xff]
    %v981 = vld [vmem:[%s5 + $0x28] sm:$0xff]
    %v982 = vld [vmem:[%s5 + $0x30] sm:$0xff]
    %v983 = vld [vmem:[%s5 + $0x38] sm:$0xff]
    %v984 = vld [vmem:[%s5 + $0x40] sm:$0xff]
    %v985 = vld [vmem:[%s5 + $0x48] sm:$0xff]
    %v986 = vld [vmem:[%s5 + $0x50] sm:$0xff]
    %v987 = vld [vmem:[%s5 + $0x58] sm:$0xff]
    %v988 = vld [vmem:[%s5 + $0x60] sm:$0xff]
    %v989 = vld [vmem:[%s5 + $0x68] sm:$0xff]
    %v990 = vld [vmem:[%s5 + $0x70] sm:$0xff]
    %v991 = vld [vmem:[%s5 + $0x78] sm:$0xff]
    %v992 = vsel %vm956, %v976, 0.0
    %v993 = vsel %vm957, %v977, 0.0
    %v994 = vsel %vm958, %v978, 0.0
    %v995 = vsel %vm959, %v979, 0.0
    %v996 = vsel %vm960, %v980, 0.0
    %v997 = vsel %vm961, %v981, 0.0
    %v998 = vsel %vm962, %v982, 0.0
    %v999 = vsel %vm963, %v983, 0.0
    %v1000 = vsel %vm964, %v984, 0.0
    %v1001 = vsel %vm965, %v985, 0.0
    %v1002 = vsel %vm966, %v986, 0.0
    %v1003 = vsel %vm967, %v987, 0.0
    %v1004 = vsel %vm968, %v988, 0.0
    %v1005 = vsel %vm969, %v989, 0.0
    %v1006 = vsel %vm970, %v990, 0.0
    %v1007 = vsel %vm971, %v991, 0.0
    %1008 = vst.msk [vmem:[#allocation2 + $0x10] sm:$0xff] %vm130, %v992
    %1009 = vst.msk [vmem:[#allocation2 + $0x18] sm:$0xff] %vm130, %v993
    %1010 = vst.msk [vmem:[#allocation2 + $0x20] sm:$0xff] %vm130, %v994
    %1011 = vst.msk [vmem:[#allocation2 + $0x28] sm:$0xff] %vm130, %v995
    %1012 = vst.msk [vmem:[#allocation2 + $0x30] sm:$0xff] %vm130, %v996
    %1013 = vst.msk [vmem:[#allocation2 + $0x38] sm:$0xff] %vm130, %v997
    %1014 = vst.msk [vmem:[#allocation2 + $0x40] sm:$0xff] %vm130, %v998
    %1015 = vst.msk [vmem:[#allocation2 + $0x48] sm:$0xff] %vm130, %v999
    %1016 = vst.msk [vmem:[#allocation2 + $0x50] sm:$0xff] %vm130, %v1000
    %1017 = vst.msk [vmem:[#allocation2 + $0x58] sm:$0xff] %vm130, %v1001
    %1018 = vst.msk [vmem:[#allocation2 + $0x60] sm:$0xff] %vm130, %v1002
    %1019 = vst.msk [vmem:[#allocation2 + $0x68] sm:$0xff] %vm130, %v1003
    %1020 = vst.msk [vmem:[#allocation2 + $0x70] sm:$0xff] %vm130, %v1004
    %1021 = vst.msk [vmem:[#allocation2 + $0x78] sm:$0xff] %vm130, %v1005
    %1022 = vst.msk [vmem:[#allocation2 + $0x80] sm:$0xff] %vm130, %v1006
    %1023 = vst.msk [vmem:[#allocation2 + $0x88] sm:$0xff] %vm130, %v1007
    %v1024 = vld [vmem:[#allocation2 + $0x5] sm:$0xff]
    %v1025 = vld [vmem:[#allocation2 + $0xd] sm:$0xff]
    %v1026 = vld [vmem:[#allocation2 + $0x15] sm:$0xff]
    %v1027 = vld [vmem:[#allocation2 + $0x1d] sm:$0xff]
    %v1028 = vld [vmem:[#allocation2 + $0x25] sm:$0xff]
    %v1029 = vld [vmem:[#allocation2 + $0x2d] sm:$0xff]
    %v1030 = vld [vmem:[#allocation2 + $0x35] sm:$0xff]
    %v1031 = vld [vmem:[#allocation2 + $0x3d] sm:$0xff]
    %v1032 = vld [vmem:[#allocation2 + $0x45] sm:$0xff]
    %v1033 = vld [vmem:[#allocation2 + $0x4d] sm:$0xff]
    %v1034 = vld [vmem:[#allocation2 + $0x55] sm:$0xff]
    %v1035 = vld [vmem:[#allocation2 + $0x5d] sm:$0xff]
    %v1036 = vld [vmem:[#allocation2 + $0x65] sm:$0xff]
    %v1037 = vld [vmem:[#allocation2 + $0x6d] sm:$0xff]
    %v1038 = vld [vmem:[#allocation2 + $0x75] sm:$0xff]
    %v1039 = vld [vmem:[#allocation2 + $0x7d] sm:$0xff]
    %1040 = vst.msk [vmem:[#allocation3] sm:$0xff] %vm130, %v1024
    %1041 = vst.msk [vmem:[#allocation3 + $0x10] sm:$0xff] %vm130, %v1025
    %1042 = vst.msk [vmem:[#allocation3 + $0x20] sm:$0xff] %vm130, %v1026
    %1043 = vst.msk [vmem:[#allocation3 + $0x30] sm:$0xff] %vm130, %v1027
    %1044 = vst.msk [vmem:[#allocation3 + $0x40] sm:$0xff] %vm130, %v1028
    %1045 = vst.msk [vmem:[#allocation3 + $0x50] sm:$0xff] %vm130, %v1029
    %1046 = vst.msk [vmem:[#allocation3 + $0x60] sm:$0xff] %vm130, %v1030
    %1047 = vst.msk [vmem:[#allocation3 + $0x70] sm:$0xff] %vm130, %v1031
    %1048 = vst.msk [vmem:[#allocation3 + $0x80] sm:$0xff] %vm130, %v1032
    %1049 = vst.msk [vmem:[#allocation3 + $0x90] sm:$0xff] %vm130, %v1033
    %1050 = vst.msk [vmem:[#allocation3 + $0xa0] sm:$0xff] %vm130, %v1034
    %1051 = vst.msk [vmem:[#allocation3 + $0xb0] sm:$0xff] %vm130, %v1035
    %1052 = vst.msk [vmem:[#allocation3 + $0xc0] sm:$0xff] %vm130, %v1036
    %1053 = vst.msk [vmem:[#allocation3 + $0xd0] sm:$0xff] %vm130, %v1037
    %1054 = vst.msk [vmem:[#allocation3 + $0xe0] sm:$0xff] %vm130, %v1038
    %1055 = vst.msk [vmem:[#allocation3 + $0xf0] sm:$0xff] %vm130, %v1039
    %v1056 = vld [vmem:[#allocation2 + $0x6] sm:$0xff]
    %v1057 = vld [vmem:[#allocation2 + $0xe] sm:$0xff]
    %v1058 = vld [vmem:[#allocation2 + $0x16] sm:$0xff]
    %v1059 = vld [vmem:[#allocation2 + $0x1e] sm:$0xff]
    %v1060 = vld [vmem:[#allocation2 + $0x26] sm:$0xff]
    %v1061 = vld [vmem:[#allocation2 + $0x2e] sm:$0xff]
    %v1062 = vld [vmem:[#allocation2 + $0x36] sm:$0xff]
    %v1063 = vld [vmem:[#allocation2 + $0x3e] sm:$0xff]
    %v1064 = vld [vmem:[#allocation2 + $0x46] sm:$0xff]
    %v1065 = vld [vmem:[#allocation2 + $0x4e] sm:$0xff]
    %v1066 = vld [vmem:[#allocation2 + $0x56] sm:$0xff]
    %v1067 = vld [vmem:[#allocation2 + $0x5e] sm:$0xff]
    %v1068 = vld [vmem:[#allocation2 + $0x66] sm:$0xff]
    %v1069 = vld [vmem:[#allocation2 + $0x6e] sm:$0xff]
    %v1070 = vld [vmem:[#allocation2 + $0x76] sm:$0xff]
    %v1071 = vld [vmem:[#allocation2 + $0x7e] sm:$0xff]
    %1088 = vrot.lane.b32.xlu0 %v1056, 10
    %v1089 = vpop.permute.xlu0 %1088
    %1090 = vrot.lane.b32.xlu0 %v1057, 10
    %v1091 = vpop.permute.xlu0 %1090
    %1092 = vrot.lane.b32.xlu0 %v1058, 10
    %v1093 = vpop.permute.xlu0 %1092
    %1094 = vrot.lane.b32.xlu0 %v1059, 10
    %v1095 = vpop.permute.xlu0 %1094
    %1096 = vrot.lane.b32.xlu0 %v1060, 10
    %v1097 = vpop.permute.xlu0 %1096
    %1098 = vrot.lane.b32.xlu0 %v1061, 10
    %v1099 = vpop.permute.xlu0 %1098
    %1100 = vrot.lane.b32.xlu0 %v1062, 10
    %v1101 = vpop.permute.xlu0 %1100
    %1102 = vrot.lane.b32.xlu0 %v1063, 10
    %v1103 = vpop.permute.xlu0 %1102
    %1104 = vrot.lane.b32.xlu0 %v1064, 10
    %v1105 = vpop.permute.xlu0 %1104
    %1106 = vrot.lane.b32.xlu0 %v1065, 10
    %v1107 = vpop.permute.xlu0 %1106
    %1108 = vrot.lane.b32.xlu0 %v1066, 10
    %v1109 = vpop.permute.xlu0 %1108
    %1110 = vrot.lane.b32.xlu0 %v1067, 10
    %v1111 = vpop.permute.xlu0 %1110
    %1112 = vrot.lane.b32.xlu0 %v1068, 10
    %v1113 = vpop.permute.xlu0 %1112
    %1114 = vrot.lane.b32.xlu0 %v1069, 10
    %v1115 = vpop.permute.xlu0 %1114
    %1116 = vrot.lane.b32.xlu0 %v1070, 10
    %v1117 = vpop.permute.xlu0 %1116
    %1118 = vrot.lane.b32.xlu0 %v1071, 10
    %v1119 = vpop.permute.xlu0 %1118
    %vm1136 = vcmask 162896
    %1137 = vst.msk [vmem:[#allocation3] sm:$0xff] %vm1136, %v1089
    %1138 = vst.msk [vmem:[#allocation3 + $0x10] sm:$0xff] %vm1136, %v1091
    %1139 = vst.msk [vmem:[#allocation3 + $0x20] sm:$0xff] %vm1136, %v1093
    %1140 = vst.msk [vmem:[#allocation3 + $0x30] sm:$0xff] %vm1136, %v1095
    %1141 = vst.msk [vmem:[#allocation3 + $0x40] sm:$0xff] %vm1136, %v1097
    %1142 = vst.msk [vmem:[#allocation3 + $0x50] sm:$0xff] %vm1136, %v1099
    %1143 = vst.msk [vmem:[#allocation3 + $0x60] sm:$0xff] %vm1136, %v1101
    %1144 = vst.msk [vmem:[#allocation3 + $0x70] sm:$0xff] %vm1136, %v1103
    %1145 = vst.msk [vmem:[#allocation3 + $0x80] sm:$0xff] %vm1136, %v1105
    %1146 = vst.msk [vmem:[#allocation3 + $0x90] sm:$0xff] %vm1136, %v1107
    %1147 = vst.msk [vmem:[#allocation3 + $0xa0] sm:$0xff] %vm1136, %v1109
    %1148 = vst.msk [vmem:[#allocation3 + $0xb0] sm:$0xff] %vm1136, %v1111
    %1149 = vst.msk [vmem:[#allocation3 + $0xc0] sm:$0xff] %vm1136, %v1113
    %1150 = vst.msk [vmem:[#allocation3 + $0xd0] sm:$0xff] %vm1136, %v1115
    %1151 = vst.msk [vmem:[#allocation3 + $0xe0] sm:$0xff] %vm1136, %v1117
    %1152 = vst.msk [vmem:[#allocation3 + $0xf0] sm:$0xff] %vm1136, %v1119
    %v1153 = vld [vmem:[#allocation2 + $0x7] sm:$0xff]
    %v1154 = vld [vmem:[#allocation2 + $0xf] sm:$0xff]
    %v1155 = vld [vmem:[#allocation2 + $0x17] sm:$0xff]
    %v1156 = vld [vmem:[#allocation2 + $0x1f] sm:$0xff]
    %v1157 = vld [vmem:[#allocation2 + $0x27] sm:$0xff]
    %v1158 = vld [vmem:[#allocation2 + $0x2f] sm:$0xff]
    %v1159 = vld [vmem:[#allocation2 + $0x37] sm:$0xff]
    %v1160 = vld [vmem:[#allocation2 + $0x3f] sm:$0xff]
    %v1161 = vld [vmem:[#allocation2 + $0x47] sm:$0xff]
    %v1162 = vld [vmem:[#allocation2 + $0x4f] sm:$0xff]
    %v1163 = vld [vmem:[#allocation2 + $0x57] sm:$0xff]
    %v1164 = vld [vmem:[#allocation2 + $0x5f] sm:$0xff]
    %v1165 = vld [vmem:[#allocation2 + $0x67] sm:$0xff]
    %v1166 = vld [vmem:[#allocation2 + $0x6f] sm:$0xff]
    %v1167 = vld [vmem:[#allocation2 + $0x77] sm:$0xff]
    %v1168 = vld [vmem:[#allocation2 + $0x7f] sm:$0xff]
    %1185 = vrot.lane.b32.xlu0 %v1153, 20
    %v1186 = vpop.permute.xlu0 %1185
    %1187 = vrot.lane.b32.xlu0 %v1154, 20
    %v1188 = vpop.permute.xlu0 %1187
    %1189 = vrot.lane.b32.xlu0 %v1155, 20
    %v1190 = vpop.permute.xlu0 %1189
    %1191 = vrot.lane.b32.xlu0 %v1156, 20
    %v1192 = vpop.permute.xlu0 %1191
    %1193 = vrot.lane.b32.xlu0 %v1157, 20
    %v1194 = vpop.permute.xlu0 %1193
    %1195 = vrot.lane.b32.xlu0 %v1158, 20
    %v1196 = vpop.permute.xlu0 %1195
    %1197 = vrot.lane.b32.xlu0 %v1159, 20
    %v1198 = vpop.permute.xlu0 %1197
    %1199 = vrot.lane.b32.xlu0 %v1160, 20
    %v1200 = vpop.permute.xlu0 %1199
    %1201 = vrot.lane.b32.xlu0 %v1161, 20
    %v1202 = vpop.permute.xlu0 %1201
    %1203 = vrot.lane.b32.xlu0 %v1162, 20
    %v1204 = vpop.permute.xlu0 %1203
    %1205 = vrot.lane.b32.xlu0 %v1163, 20
    %v1206 = vpop.permute.xlu0 %1205
    %1207 = vrot.lane.b32.xlu0 %v1164, 20
    %v1208 = vpop.permute.xlu0 %1207
    %1209 = vrot.lane.b32.xlu0 %v1165, 20
    %v1210 = vpop.permute.xlu0 %1209
    %1211 = vrot.lane.b32.xlu0 %v1166, 20
    %v1212 = vpop.permute.xlu0 %1211
    %1213 = vrot.lane.b32.xlu0 %v1167, 20
    %v1214 = vpop.permute.xlu0 %1213
    %1215 = vrot.lane.b32.xlu0 %v1168, 20
    %v1216 = vpop.permute.xlu0 %1215
    %vm1233 = vcmask 244896
    %1234 = vst.msk [vmem:[#allocation3] sm:$0xff] %vm1233, %v1186
    %1235 = vst.msk [vmem:[#allocation3 + $0x10] sm:$0xff] %vm1233, %v1188
    %1236 = vst.msk [vmem:[#allocation3 + $0x20] sm:$0xff] %vm1233, %v1190
    %1237 = vst.msk [vmem:[#allocation3 + $0x30] sm:$0xff] %vm1233, %v1192
    %1238 = vst.msk [vmem:[#allocation3 + $0x40] sm:$0xff] %vm1233, %v1194
    %1239 = vst.msk [vmem:[#allocation3 + $0x50] sm:$0xff] %vm1233, %v1196
    %1240 = vst.msk [vmem:[#allocation3 + $0x60] sm:$0xff] %vm1233, %v1198
    %1241 = vst.msk [vmem:[#allocation3 + $0x70] sm:$0xff] %vm1233, %v1200
    %1242 = vst.msk [vmem:[#allocation3 + $0x80] sm:$0xff] %vm1233, %v1202
    %1243 = vst.msk [vmem:[#allocation3 + $0x90] sm:$0xff] %vm1233, %v1204
    %1244 = vst.msk [vmem:[#allocation3 + $0xa0] sm:$0xff] %vm1233, %v1206
    %1245 = vst.msk [vmem:[#allocation3 + $0xb0] sm:$0xff] %vm1233, %v1208
    %1246 = vst.msk [vmem:[#allocation3 + $0xc0] sm:$0xff] %vm1233, %v1210
    %1247 = vst.msk [vmem:[#allocation3 + $0xd0] sm:$0xff] %vm1233, %v1212
    %1248 = vst.msk [vmem:[#allocation3 + $0xe0] sm:$0xff] %vm1233, %v1214
    %1249 = vst.msk [vmem:[#allocation3 + $0xf0] sm:$0xff] %vm1233, %v1216
    %v1250 = vld [vmem:[#allocation2 + $0x8] sm:$0xff]
    %v1251 = vld [vmem:[#allocation2 + $0x10] sm:$0xff]
    %v1252 = vld [vmem:[#allocation2 + $0x18] sm:$0xff]
    %v1253 = vld [vmem:[#allocation2 + $0x20] sm:$0xff]
    %v1254 = vld [vmem:[#allocation2 + $0x28] sm:$0xff]
    %v1255 = vld [vmem:[#allocation2 + $0x30] sm:$0xff]
    %v1256 = vld [vmem:[#allocation2 + $0x38] sm:$0xff]
    %v1257 = vld [vmem:[#allocation2 + $0x40] sm:$0xff]
    %v1258 = vld [vmem:[#allocation2 + $0x48] sm:$0xff]
    %v1259 = vld [vmem:[#allocation2 + $0x50] sm:$0xff]
    %v1260 = vld [vmem:[#allocation2 + $0x58] sm:$0xff]
    %v1261 = vld [vmem:[#allocation2 + $0x60] sm:$0xff]
    %v1262 = vld [vmem:[#allocation2 + $0x68] sm:$0xff]
    %v1263 = vld [vmem:[#allocation2 + $0x70] sm:$0xff]
    %v1264 = vld [vmem:[#allocation2 + $0x78] sm:$0xff]
    %v1265 = vld [vmem:[#allocation2 + $0x80] sm:$0xff]
    %1282 = vrot.lane.b32.xlu0 %v1250, 30
    %v1283 = vpop.permute.xlu0 %1282
    %1284 = vrot.lane.b32.xlu0 %v1251, 30
    %v1285 = vpop.permute.xlu0 %1284
    %1286 = vrot.lane.b32.xlu0 %v1252, 30
    %v1287 = vpop.permute.xlu0 %1286
    %1288 = vrot.lane.b32.xlu0 %v1253, 30
    %v1289 = vpop.permute.xlu0 %1288
    %1290 = vrot.lane.b32.xlu0 %v1254, 30
    %v1291 = vpop.permute.xlu0 %1290
    %1292 = vrot.lane.b32.xlu0 %v1255, 30
    %v1293 = vpop.permute.xlu0 %1292
    %1294 = vrot.lane.b32.xlu0 %v1256, 30
    %v1295 = vpop.permute.xlu0 %1294
    %1296 = vrot.lane.b32.xlu0 %v1257, 30
    %v1297 = vpop.permute.xlu0 %1296
    %1298 = vrot.lane.b32.xlu0 %v1258, 30
    %v1299 = vpop.permute.xlu0 %1298
    %1300 = vrot.lane.b32.xlu0 %v1259, 30
    %v1301 = vpop.permute.xlu0 %1300
    %1302 = vrot.lane.b32.xlu0 %v1260, 30
    %v1303 = vpop.permute.xlu0 %1302
    %1304 = vrot.lane.b32.xlu0 %v1261, 30
    %v1305 = vpop.permute.xlu0 %1304
    %1306 = vrot.lane.b32.xlu0 %v1262, 30
    %v1307 = vpop.permute.xlu0 %1306
    %1308 = vrot.lane.b32.xlu0 %v1263, 30
    %v1309 = vpop.permute.xlu0 %1308
    %1310 = vrot.lane.b32.xlu0 %v1264, 30
    %v1311 = vpop.permute.xlu0 %1310
    %1312 = vrot.lane.b32.xlu0 %v1265, 30
    %v1313 = vpop.permute.xlu0 %1312
    %vm1330 = vcmask 326896
    %1331 = vst.msk [vmem:[#allocation3] sm:$0xff] %vm1330, %v1283
    %1332 = vst.msk [vmem:[#allocation3 + $0x10] sm:$0xff] %vm1330, %v1285
    %1333 = vst.msk [vmem:[#allocation3 + $0x20] sm:$0xff] %vm1330, %v1287
    %1334 = vst.msk [vmem:[#allocation3 + $0x30] sm:$0xff] %vm1330, %v1289
    %1335 = vst.msk [vmem:[#allocation3 + $0x40] sm:$0xff] %vm1330, %v1291
    %1336 = vst.msk [vmem:[#allocation3 + $0x50] sm:$0xff] %vm1330, %v1293
    %1337 = vst.msk [vmem:[#allocation3 + $0x60] sm:$0xff] %vm1330, %v1295
    %1338 = vst.msk [vmem:[#allocation3 + $0x70] sm:$0xff] %vm1330, %v1297
    %1339 = vst.msk [vmem:[#allocation3 + $0x80] sm:$0xff] %vm1330, %v1299
    %1340 = vst.msk [vmem:[#allocation3 + $0x90] sm:$0xff] %vm1330, %v1301
    %1341 = vst.msk [vmem:[#allocation3 + $0xa0] sm:$0xff] %vm1330, %v1303
    %1342 = vst.msk [vmem:[#allocation3 + $0xb0] sm:$0xff] %vm1330, %v1305
    %1343 = vst.msk [vmem:[#allocation3 + $0xc0] sm:$0xff] %vm1330, %v1307
    %1344 = vst.msk [vmem:[#allocation3 + $0xd0] sm:$0xff] %vm1330, %v1309
    %1345 = vst.msk [vmem:[#allocation3 + $0xe0] sm:$0xff] %vm1330, %v1311
    %1346 = vst.msk [vmem:[#allocation3 + $0xf0] sm:$0xff] %vm1330, %v1313
    %v1347 = vld [vmem:[#allocation2 + $0x9] sm:$0xff]
    %v1348 = vld [vmem:[#allocation2 + $0x11] sm:$0xff]
    %v1349 = vld [vmem:[#allocation2 + $0x19] sm:$0xff]
    %v1350 = vld [vmem:[#allocation2 + $0x21] sm:$0xff]
    %v1351 = vld [vmem:[#allocation2 + $0x29] sm:$0xff]
    %v1352 = vld [vmem:[#allocation2 + $0x31] sm:$0xff]
    %v1353 = vld [vmem:[#allocation2 + $0x39] sm:$0xff]
    %v1354 = vld [vmem:[#allocation2 + $0x41] sm:$0xff]
    %v1355 = vld [vmem:[#allocation2 + $0x49] sm:$0xff]
    %v1356 = vld [vmem:[#allocation2 + $0x51] sm:$0xff]
    %v1357 = vld [vmem:[#allocation2 + $0x59] sm:$0xff]
    %v1358 = vld [vmem:[#allocation2 + $0x61] sm:$0xff]
    %v1359 = vld [vmem:[#allocation2 + $0x69] sm:$0xff]
    %v1360 = vld [vmem:[#allocation2 + $0x71] sm:$0xff]
    %v1361 = vld [vmem:[#allocation2 + $0x79] sm:$0xff]
    %v1362 = vld [vmem:[#allocation2 + $0x81] sm:$0xff]
    %1379 = vrot.lane.b32.xlu0 %v1347, 40
    %v1380 = vpop.permute.xlu0 %1379
    %1381 = vrot.lane.b32.xlu0 %v1348, 40
    %v1382 = vpop.permute.xlu0 %1381
    %1383 = vrot.lane.b32.xlu0 %v1349, 40
    %v1384 = vpop.permute.xlu0 %1383
    %1385 = vrot.lane.b32.xlu0 %v1350, 40
    %v1386 = vpop.permute.xlu0 %1385
    %1387 = vrot.lane.b32.xlu0 %v1351, 40
    %v1388 = vpop.permute.xlu0 %1387
    %1389 = vrot.lane.b32.xlu0 %v1352, 40
    %v1390 = vpop.permute.xlu0 %1389
    %1391 = vrot.lane.b32.xlu0 %v1353, 40
    %v1392 = vpop.permute.xlu0 %1391
    %1393 = vrot.lane.b32.xlu0 %v1354, 40
    %v1394 = vpop.permute.xlu0 %1393
    %1395 = vrot.lane.b32.xlu0 %v1355, 40
    %v1396 = vpop.permute.xlu0 %1395
    %1397 = vrot.lane.b32.xlu0 %v1356, 40
    %v1398 = vpop.permute.xlu0 %1397
    %1399 = vrot.lane.b32.xlu0 %v1357, 40
    %v1400 = vpop.permute.xlu0 %1399
    %1401 = vrot.lane.b32.xlu0 %v1358, 40
    %v1402 = vpop.permute.xlu0 %1401
    %1403 = vrot.lane.b32.xlu0 %v1359, 40
    %v1404 = vpop.permute.xlu0 %1403
    %1405 = vrot.lane.b32.xlu0 %v1360, 40
    %v1406 = vpop.permute.xlu0 %1405
    %1407 = vrot.lane.b32.xlu0 %v1361, 40
    %v1408 = vpop.permute.xlu0 %1407
    %1409 = vrot.lane.b32.xlu0 %v1362, 40
    %v1410 = vpop.permute.xlu0 %1409
    %vm1427 = vcmask 408896
    %1428 = vst.msk [vmem:[#allocation3] sm:$0xff] %vm1427, %v1380
    %1429 = vst.msk [vmem:[#allocation3 + $0x10] sm:$0xff] %vm1427, %v1382
    %1430 = vst.msk [vmem:[#allocation3 + $0x20] sm:$0xff] %vm1427, %v1384
    %1431 = vst.msk [vmem:[#allocation3 + $0x30] sm:$0xff] %vm1427, %v1386
    %1432 = vst.msk [vmem:[#allocation3 + $0x40] sm:$0xff] %vm1427, %v1388
    %1433 = vst.msk [vmem:[#allocation3 + $0x50] sm:$0xff] %vm1427, %v1390
    %1434 = vst.msk [vmem:[#allocation3 + $0x60] sm:$0xff] %vm1427, %v1392
    %1435 = vst.msk [vmem:[#allocation3 + $0x70] sm:$0xff] %vm1427, %v1394
    %1436 = vst.msk [vmem:[#allocation3 + $0x80] sm:$0xff] %vm1427, %v1396
    %1437 = vst.msk [vmem:[#allocation3 + $0x90] sm:$0xff] %vm1427, %v1398
    %1438 = vst.msk [vmem:[#allocation3 + $0xa0] sm:$0xff] %vm1427, %v1400
    %1439 = vst.msk [vmem:[#allocation3 + $0xb0] sm:$0xff] %vm1427, %v1402
    %1440 = vst.msk [vmem:[#allocation3 + $0xc0] sm:$0xff] %vm1427, %v1404
    %1441 = vst.msk [vmem:[#allocation3 + $0xd0] sm:$0xff] %vm1427, %v1406
    %1442 = vst.msk [vmem:[#allocation3 + $0xe0] sm:$0xff] %vm1427, %v1408
    %1443 = vst.msk [vmem:[#allocation3 + $0xf0] sm:$0xff] %vm1427, %v1410
    %v1444 = vld [vmem:[#allocation2 + $0xa] sm:$0xff]
    %v1445 = vld [vmem:[#allocation2 + $0x12] sm:$0xff]
    %v1446 = vld [vmem:[#allocation2 + $0x1a] sm:$0xff]
    %v1447 = vld [vmem:[#allocation2 + $0x22] sm:$0xff]
    %v1448 = vld [vmem:[#allocation2 + $0x2a] sm:$0xff]
    %v1449 = vld [vmem:[#allocation2 + $0x32] sm:$0xff]
    %v1450 = vld [vmem:[#allocation2 + $0x3a] sm:$0xff]
    %v1451 = vld [vmem:[#allocation2 + $0x42] sm:$0xff]
    %v1452 = vld [vmem:[#allocation2 + $0x4a] sm:$0xff]
    %v1453 = vld [vmem:[#allocation2 + $0x52] sm:$0xff]
    %v1454 = vld [vmem:[#allocation2 + $0x5a] sm:$0xff]
    %v1455 = vld [vmem:[#allocation2 + $0x62] sm:$0xff]
    %v1456 = vld [vmem:[#allocation2 + $0x6a] sm:$0xff]
    %v1457 = vld [vmem:[#allocation2 + $0x72] sm:$0xff]
    %v1458 = vld [vmem:[#allocation2 + $0x7a] sm:$0xff]
    %v1459 = vld [vmem:[#allocation2 + $0x82] sm:$0xff]
    %1476 = vrot.lane.b32.xlu0 %v1444, 50
    %v1477 = vpop.permute.xlu0 %1476
    %1478 = vrot.lane.b32.xlu0 %v1445, 50
    %v1479 = vpop.permute.xlu0 %1478
    %1480 = vrot.lane.b32.xlu0 %v1446, 50
    %v1481 = vpop.permute.xlu0 %1480
    %1482 = vrot.lane.b32.xlu0 %v1447, 50
    %v1483 = vpop.permute.xlu0 %1482
    %1484 = vrot.lane.b32.xlu0 %v1448, 50
    %v1485 = vpop.permute.xlu0 %1484
    %1486 = vrot.lane.b32.xlu0 %v1449, 50
    %v1487 = vpop.permute.xlu0 %1486
    %1488 = vrot.lane.b32.xlu0 %v1450, 50
    %v1489 = vpop.permute.xlu0 %1488
    %1490 = vrot.lane.b32.xlu0 %v1451, 50
    %v1491 = vpop.permute.xlu0 %1490
    %1492 = vrot.lane.b32.xlu0 %v1452, 50
    %v1493 = vpop.permute.xlu0 %1492
    %1494 = vrot.lane.b32.xlu0 %v1453, 50
    %v1495 = vpop.permute.xlu0 %1494
    %1496 = vrot.lane.b32.xlu0 %v1454, 50
    %v1497 = vpop.permute.xlu0 %1496
    %1498 = vrot.lane.b32.xlu0 %v1455, 50
    %v1499 = vpop.permute.xlu0 %1498
    %1500 = vrot.lane.b32.xlu0 %v1456, 50
    %v1501 = vpop.permute.xlu0 %1500
    %1502 = vrot.lane.b32.xlu0 %v1457, 50
    %v1503 = vpop.permute.xlu0 %1502
    %1504 = vrot.lane.b32.xlu0 %v1458, 50
    %v1505 = vpop.permute.xlu0 %1504
    %1506 = vrot.lane.b32.xlu0 %v1459, 50
    %v1507 = vpop.permute.xlu0 %1506
    %vm1524 = vcmask 490896
    %1525 = vst.msk [vmem:[#allocation3] sm:$0xff] %vm1524, %v1477
    %1526 = vst.msk [vmem:[#allocation3 + $0x10] sm:$0xff] %vm1524, %v1479
    %1527 = vst.msk [vmem:[#allocation3 + $0x20] sm:$0xff] %vm1524, %v1481
    %1528 = vst.msk [vmem:[#allocation3 + $0x30] sm:$0xff] %vm1524, %v1483
    %1529 = vst.msk [vmem:[#allocation3 + $0x40] sm:$0xff] %vm1524, %v1485
    %1530 = vst.msk [vmem:[#allocation3 + $0x50] sm:$0xff] %vm1524, %v1487
    %1531 = vst.msk [vmem:[#allocation3 + $0x60] sm:$0xff] %vm1524, %v1489
    %1532 = vst.msk [vmem:[#allocation3 + $0x70] sm:$0xff] %vm1524, %v1491
    %1533 = vst.msk [vmem:[#allocation3 + $0x80] sm:$0xff] %vm1524, %v1493
    %1534 = vst.msk [vmem:[#allocation3 + $0x90] sm:$0xff] %vm1524, %v1495
    %1535 = vst.msk [vmem:[#allocation3 + $0xa0] sm:$0xff] %vm1524, %v1497
    %1536 = vst.msk [vmem:[#allocation3 + $0xb0] sm:$0xff] %vm1524, %v1499
    %1537 = vst.msk [vmem:[#allocation3 + $0xc0] sm:$0xff] %vm1524, %v1501
    %1538 = vst.msk [vmem:[#allocation3 + $0xd0] sm:$0xff] %vm1524, %v1503
    %1539 = vst.msk [vmem:[#allocation3 + $0xe0] sm:$0xff] %vm1524, %v1505
    %1540 = vst.msk [vmem:[#allocation3 + $0xf0] sm:$0xff] %vm1524, %v1507
    %v1541 = vld [vmem:[#allocation2 + $0xb] sm:$0xff]
    %v1542 = vld [vmem:[#allocation2 + $0x13] sm:$0xff]
    %v1543 = vld [vmem:[#allocation2 + $0x1b] sm:$0xff]
    %v1544 = vld [vmem:[#allocation2 + $0x23] sm:$0xff]
    %v1545 = vld [vmem:[#allocation2 + $0x2b] sm:$0xff]
    %v1546 = vld [vmem:[#allocation2 + $0x33] sm:$0xff]
    %v1547 = vld [vmem:[#allocation2 + $0x3b] sm:$0xff]
    %v1548 = vld [vmem:[#allocation2 + $0x43] sm:$0xff]
    %v1549 = vld [vmem:[#allocation2 + $0x4b] sm:$0xff]
    %v1550 = vld [vmem:[#allocation2 + $0x53] sm:$0xff]
    %v1551 = vld [vmem:[#allocation2 + $0x5b] sm:$0xff]
    %v1552 = vld [vmem:[#allocation2 + $0x63] sm:$0xff]
    %v1553 = vld [vmem:[#allocation2 + $0x6b] sm:$0xff]
    %v1554 = vld [vmem:[#allocation2 + $0x73] sm:$0xff]
    %v1555 = vld [vmem:[#allocation2 + $0x7b] sm:$0xff]
    %v1556 = vld [vmem:[#allocation2 + $0x83] sm:$0xff]
    %1573 = vrot.lane.b32.xlu0 %v1541, 60
    %v1574 = vpop.permute.xlu0 %1573
    %1575 = vrot.lane.b32.xlu0 %v1542, 60
    %v1576 = vpop.permute.xlu0 %1575
    %1577 = vrot.lane.b32.xlu0 %v1543, 60
    %v1578 = vpop.permute.xlu0 %1577
    %1579 = vrot.lane.b32.xlu0 %v1544, 60
    %v1580 = vpop.permute.xlu0 %1579
    %1581 = vrot.lane.b32.xlu0 %v1545, 60
    %v1582 = vpop.permute.xlu0 %1581
    %1583 = vrot.lane.b32.xlu0 %v1546, 60
    %v1584 = vpop.permute.xlu0 %1583
    %1585 = vrot.lane.b32.xlu0 %v1547, 60
    %v1586 = vpop.permute.xlu0 %1585
    %1587 = vrot.lane.b32.xlu0 %v1548, 60
    %v1588 = vpop.permute.xlu0 %1587
    %1589 = vrot.lane.b32.xlu0 %v1549, 60
    %v1590 = vpop.permute.xlu0 %1589
    %1591 = vrot.lane.b32.xlu0 %v1550, 60
    %v1592 = vpop.permute.xlu0 %1591
    %1593 = vrot.lane.b32.xlu0 %v1551, 60
    %v1594 = vpop.permute.xlu0 %1593
    %1595 = vrot.lane.b32.xlu0 %v1552, 60
    %v1596 = vpop.permute.xlu0 %1595
    %1597 = vrot.lane.b32.xlu0 %v1553, 60
    %v1598 = vpop.permute.xlu0 %1597
    %1599 = vrot.lane.b32.xlu0 %v1554, 60
    %v1600 = vpop.permute.xlu0 %1599
    %1601 = vrot.lane.b32.xlu0 %v1555, 60
    %v1602 = vpop.permute.xlu0 %1601
    %1603 = vrot.lane.b32.xlu0 %v1556, 60
    %v1604 = vpop.permute.xlu0 %1603
    %vm1621 = vcmask 572896
    %1622 = vst.msk [vmem:[#allocation3] sm:$0xff] %vm1621, %v1574
    %1623 = vst.msk [vmem:[#allocation3 + $0x10] sm:$0xff] %vm1621, %v1576
    %1624 = vst.msk [vmem:[#allocation3 + $0x20] sm:$0xff] %vm1621, %v1578
    %1625 = vst.msk [vmem:[#allocation3 + $0x30] sm:$0xff] %vm1621, %v1580
    %1626 = vst.msk [vmem:[#allocation3 + $0x40] sm:$0xff] %vm1621, %v1582
    %1627 = vst.msk [vmem:[#allocation3 + $0x50] sm:$0xff] %vm1621, %v1584
    %1628 = vst.msk [vmem:[#allocation3 + $0x60] sm:$0xff] %vm1621, %v1586
    %1629 = vst.msk [vmem:[#allocation3 + $0x70] sm:$0xff] %vm1621, %v1588
    %1630 = vst.msk [vmem:[#allocation3 + $0x80] sm:$0xff] %vm1621, %v1590
    %1631 = vst.msk [vmem:[#allocation3 + $0x90] sm:$0xff] %vm1621, %v1592
    %1632 = vst.msk [vmem:[#allocation3 + $0xa0] sm:$0xff] %vm1621, %v1594
    %1633 = vst.msk [vmem:[#allocation3 + $0xb0] sm:$0xff] %vm1621, %v1596
    %1634 = vst.msk [vmem:[#allocation3 + $0xc0] sm:$0xff] %vm1621, %v1598
    %1635 = vst.msk [vmem:[#allocation3 + $0xd0] sm:$0xff] %vm1621, %v1600
    %1636 = vst.msk [vmem:[#allocation3 + $0xe0] sm:$0xff] %vm1621, %v1602
    %1637 = vst.msk [vmem:[#allocation3 + $0xf0] sm:$0xff] %vm1621, %v1604
    %v1638 = vld [vmem:[#allocation2 + $0xc] sm:$0xff]
    %v1639 = vld [vmem:[#allocation2 + $0x14] sm:$0xff]
    %v1640 = vld [vmem:[#allocation2 + $0x1c] sm:$0xff]
    %v1641 = vld [vmem:[#allocation2 + $0x24] sm:$0xff]
    %v1642 = vld [vmem:[#allocation2 + $0x2c] sm:$0xff]
    %v1643 = vld [vmem:[#allocation2 + $0x34] sm:$0xff]
    %v1644 = vld [vmem:[#allocation2 + $0x3c] sm:$0xff]
    %v1645 = vld [vmem:[#allocation2 + $0x44] sm:$0xff]
    %v1646 = vld [vmem:[#allocation2 + $0x4c] sm:$0xff]
    %v1647 = vld [vmem:[#allocation2 + $0x54] sm:$0xff]
    %v1648 = vld [vmem:[#allocation2 + $0x5c] sm:$0xff]
    %v1649 = vld [vmem:[#allocation2 + $0x64] sm:$0xff]
    %v1650 = vld [vmem:[#allocation2 + $0x6c] sm:$0xff]
    %v1651 = vld [vmem:[#allocation2 + $0x74] sm:$0xff]
    %v1652 = vld [vmem:[#allocation2 + $0x7c] sm:$0xff]
    %v1653 = vld [vmem:[#allocation2 + $0x84] sm:$0xff]
    %1670 = vrot.lane.b32.xlu0 %v1638, 70
    %v1671 = vpop.permute.xlu0 %1670
    %1672 = vrot.lane.b32.xlu0 %v1639, 70
    %v1673 = vpop.permute.xlu0 %1672
    %1674 = vrot.lane.b32.xlu0 %v1640, 70
    %v1675 = vpop.permute.xlu0 %1674
    %1676 = vrot.lane.b32.xlu0 %v1641, 70
    %v1677 = vpop.permute.xlu0 %1676
    %1678 = vrot.lane.b32.xlu0 %v1642, 70
    %v1679 = vpop.permute.xlu0 %1678
    %1680 = vrot.lane.b32.xlu0 %v1643, 70
    %v1681 = vpop.permute.xlu0 %1680
    %1682 = vrot.lane.b32.xlu0 %v1644, 70
    %v1683 = vpop.permute.xlu0 %1682
    %1684 = vrot.lane.b32.xlu0 %v1645, 70
    %v1685 = vpop.permute.xlu0 %1684
    %1686 = vrot.lane.b32.xlu0 %v1646, 70
    %v1687 = vpop.permute.xlu0 %1686
    %1688 = vrot.lane.b32.xlu0 %v1647, 70
    %v1689 = vpop.permute.xlu0 %1688
    %1690 = vrot.lane.b32.xlu0 %v1648, 70
    %v1691 = vpop.permute.xlu0 %1690
    %1692 = vrot.lane.b32.xlu0 %v1649, 70
    %v1693 = vpop.permute.xlu0 %1692
    %1694 = vrot.lane.b32.xlu0 %v1650, 70
    %v1695 = vpop.permute.xlu0 %1694
    %1696 = vrot.lane.b32.xlu0 %v1651, 70
    %v1697 = vpop.permute.xlu0 %1696
    %1698 = vrot.lane.b32.xlu0 %v1652, 70
    %v1699 = vpop.permute.xlu0 %1698
    %1700 = vrot.lane.b32.xlu0 %v1653, 70
    %v1701 = vpop.permute.xlu0 %1700
    %vm1718 = vcmask 654896
    %1719 = vst.msk [vmem:[#allocation3] sm:$0xff] %vm1718, %v1671
    %1720 = vst.msk [vmem:[#allocation3 + $0x10] sm:$0xff] %vm1718, %v1673
    %1721 = vst.msk [vmem:[#allocation3 + $0x20] sm:$0xff] %vm1718, %v1675
    %1722 = vst.msk [vmem:[#allocation3 + $0x30] sm:$0xff] %vm1718, %v1677
    %1723 = vst.msk [vmem:[#allocation3 + $0x40] sm:$0xff] %vm1718, %v1679
    %1724 = vst.msk [vmem:[#allocation3 + $0x50] sm:$0xff] %vm1718, %v1681
    %1725 = vst.msk [vmem:[#allocation3 + $0x60] sm:$0xff] %vm1718, %v1683
    %1726 = vst.msk [vmem:[#allocation3 + $0x70] sm:$0xff] %vm1718, %v1685
    %1727 = vst.msk [vmem:[#allocation3 + $0x80] sm:$0xff] %vm1718, %v1687
    %1728 = vst.msk [vmem:[#allocation3 + $0x90] sm:$0xff] %vm1718, %v1689
    %1729 = vst.msk [vmem:[#allocation3 + $0xa0] sm:$0xff] %vm1718, %v1691
    %1730 = vst.msk [vmem:[#allocation3 + $0xb0] sm:$0xff] %vm1718, %v1693
    %1731 = vst.msk [vmem:[#allocation3 + $0xc0] sm:$0xff] %vm1718, %v1695
    %1732 = vst.msk [vmem:[#allocation3 + $0xd0] sm:$0xff] %vm1718, %v1697
    %1733 = vst.msk [vmem:[#allocation3 + $0xe0] sm:$0xff] %vm1718, %v1699
    %1734 = vst.msk [vmem:[#allocation3 + $0xf0] sm:$0xff] %vm1718, %v1701
    %v1735 = vld [vmem:[#allocation2 + $0xd] sm:$0xff]
    %v1736 = vld [vmem:[#allocation2 + $0x15] sm:$0xff]
    %v1737 = vld [vmem:[#allocation2 + $0x1d] sm:$0xff]
    %v1738 = vld [vmem:[#allocation2 + $0x25] sm:$0xff]
    %v1739 = vld [vmem:[#allocation2 + $0x2d] sm:$0xff]
    %v1740 = vld [vmem:[#allocation2 + $0x35] sm:$0xff]
    %v1741 = vld [vmem:[#allocation2 + $0x3d] sm:$0xff]
    %v1742 = vld [vmem:[#allocation2 + $0x45] sm:$0xff]
    %v1743 = vld [vmem:[#allocation2 + $0x4d] sm:$0xff]
    %v1744 = vld [vmem:[#allocation2 + $0x55] sm:$0xff]
    %v1745 = vld [vmem:[#allocation2 + $0x5d] sm:$0xff]
    %v1746 = vld [vmem:[#allocation2 + $0x65] sm:$0xff]
    %v1747 = vld [vmem:[#allocation2 + $0x6d] sm:$0xff]
    %v1748 = vld [vmem:[#allocation2 + $0x75] sm:$0xff]
    %v1749 = vld [vmem:[#allocation2 + $0x7d] sm:$0xff]
    %v1750 = vld [vmem:[#allocation2 + $0x85] sm:$0xff]
    %1767 = vrot.lane.b32.xlu0 %v1735, 80
    %v1768 = vpop.permute.xlu0 %1767
    %1769 = vrot.lane.b32.xlu0 %v1736, 80
    %v1770 = vpop.permute.xlu0 %1769
    %1771 = vrot.lane.b32.xlu0 %v1737, 80
    %v1772 = vpop.permute.xlu0 %1771
    %1773 = vrot.lane.b32.xlu0 %v1738, 80
    %v1774 = vpop.permute.xlu0 %1773
    %1775 = vrot.lane.b32.xlu0 %v1739, 80
    %v1776 = vpop.permute.xlu0 %1775
    %1777 = vrot.lane.b32.xlu0 %v1740, 80
    %v1778 = vpop.permute.xlu0 %1777
    %1779 = vrot.lane.b32.xlu0 %v1741, 80
    %v1780 = vpop.permute.xlu0 %1779
    %1781 = vrot.lane.b32.xlu0 %v1742, 80
    %v1782 = vpop.permute.xlu0 %1781
    %1783 = vrot.lane.b32.xlu0 %v1743, 80
    %v1784 = vpop.permute.xlu0 %1783
    %1785 = vrot.lane.b32.xlu0 %v1744, 80
    %v1786 = vpop.permute.xlu0 %1785
    %1787 = vrot.lane.b32.xlu0 %v1745, 80
    %v1788 = vpop.permute.xlu0 %1787
    %1789 = vrot.lane.b32.xlu0 %v1746, 80
    %v1790 = vpop.permute.xlu0 %1789
    %1791 = vrot.lane.b32.xlu0 %v1747, 80
    %v1792 = vpop.permute.xlu0 %1791
    %1793 = vrot.lane.b32.xlu0 %v1748, 80
    %v1794 = vpop.permute.xlu0 %1793
    %1795 = vrot.lane.b32.xlu0 %v1749, 80
    %v1796 = vpop.permute.xlu0 %1795
    %1797 = vrot.lane.b32.xlu0 %v1750, 80
    %v1798 = vpop.permute.xlu0 %1797
    %vm1815 = vcmask 736896
    %1816 = vst.msk [vmem:[#allocation3] sm:$0xff] %vm1815, %v1768
    %1817 = vst.msk [vmem:[#allocation3 + $0x10] sm:$0xff] %vm1815, %v1770
    %1818 = vst.msk [vmem:[#allocation3 + $0x20] sm:$0xff] %vm1815, %v1772
    %1819 = vst.msk [vmem:[#allocation3 + $0x30] sm:$0xff] %vm1815, %v1774
    %1820 = vst.msk [vmem:[#allocation3 + $0x40] sm:$0xff] %vm1815, %v1776
    %1821 = vst.msk [vmem:[#allocation3 + $0x50] sm:$0xff] %vm1815, %v1778
    %1822 = vst.msk [vmem:[#allocation3 + $0x60] sm:$0xff] %vm1815, %v1780
    %1823 = vst.msk [vmem:[#allocation3 + $0x70] sm:$0xff] %vm1815, %v1782
    %1824 = vst.msk [vmem:[#allocation3 + $0x80] sm:$0xff] %vm1815, %v1784
    %1825 = vst.msk [vmem:[#allocation3 + $0x90] sm:$0xff] %vm1815, %v1786
    %1826 = vst.msk [vmem:[#allocation3 + $0xa0] sm:$0xff] %vm1815, %v1788
    %1827 = vst.msk [vmem:[#allocation3 + $0xb0] sm:$0xff] %vm1815, %v1790
    %1828 = vst.msk [vmem:[#allocation3 + $0xc0] sm:$0xff] %vm1815, %v1792
    %1829 = vst.msk [vmem:[#allocation3 + $0xd0] sm:$0xff] %vm1815, %v1794
    %1830 = vst.msk [vmem:[#allocation3 + $0xe0] sm:$0xff] %vm1815, %v1796
    %1831 = vst.msk [vmem:[#allocation3 + $0xf0] sm:$0xff] %vm1815, %v1798
    %v1832 = vld [vmem:[#allocation2 + $0xe] sm:$0xff]
    %v1833 = vld [vmem:[#allocation2 + $0x16] sm:$0xff]
    %v1834 = vld [vmem:[#allocation2 + $0x1e] sm:$0xff]
    %v1835 = vld [vmem:[#allocation2 + $0x26] sm:$0xff]
    %v1836 = vld [vmem:[#allocation2 + $0x2e] sm:$0xff]
    %v1837 = vld [vmem:[#allocation2 + $0x36] sm:$0xff]
    %v1838 = vld [vmem:[#allocation2 + $0x3e] sm:$0xff]
    %v1839 = vld [vmem:[#allocation2 + $0x46] sm:$0xff]
    %v1840 = vld [vmem:[#allocation2 + $0x4e] sm:$0xff]
    %v1841 = vld [vmem:[#allocation2 + $0x56] sm:$0xff]
    %v1842 = vld [vmem:[#allocation2 + $0x5e] sm:$0xff]
    %v1843 = vld [vmem:[#allocation2 + $0x66] sm:$0xff]
    %v1844 = vld [vmem:[#allocation2 + $0x6e] sm:$0xff]
    %v1845 = vld [vmem:[#allocation2 + $0x76] sm:$0xff]
    %v1846 = vld [vmem:[#allocation2 + $0x7e] sm:$0xff]
    %v1847 = vld [vmem:[#allocation2 + $0x86] sm:$0xff]
    %1864 = vrot.lane.b32.xlu0 %v1832, 90
    %v1865 = vpop.permute.xlu0 %1864
    %1866 = vrot.lane.b32.xlu0 %v1833, 90
    %v1867 = vpop.permute.xlu0 %1866
    %1868 = vrot.lane.b32.xlu0 %v1834, 90
    %v1869 = vpop.permute.xlu0 %1868
    %1870 = vrot.lane.b32.xlu0 %v1835, 90
    %v1871 = vpop.permute.xlu0 %1870
    %1872 = vrot.lane.b32.xlu0 %v1836, 90
    %v1873 = vpop.permute.xlu0 %1872
    %1874 = vrot.lane.b32.xlu0 %v1837, 90
    %v1875 = vpop.permute.xlu0 %1874
    %1876 = vrot.lane.b32.xlu0 %v1838, 90
    %v1877 = vpop.permute.xlu0 %1876
    %1878 = vrot.lane.b32.xlu0 %v1839, 90
    %v1879 = vpop.permute.xlu0 %1878
    %1880 = vrot.lane.b32.xlu0 %v1840, 90
    %v1881 = vpop.permute.xlu0 %1880
    %1882 = vrot.lane.b32.xlu0 %v1841, 90
    %v1883 = vpop.permute.xlu0 %1882
    %1884 = vrot.lane.b32.xlu0 %v1842, 90
    %v1885 = vpop.permute.xlu0 %1884
    %1886 = vrot.lane.b32.xlu0 %v1843, 90
    %v1887 = vpop.permute.xlu0 %1886
    %1888 = vrot.lane.b32.xlu0 %v1844, 90
    %v1889 = vpop.permute.xlu0 %1888
    %1890 = vrot.lane.b32.xlu0 %v1845, 90
    %v1891 = vpop.permute.xlu0 %1890
    %1892 = vrot.lane.b32.xlu0 %v1846, 90
    %v1893 = vpop.permute.xlu0 %1892
    %1894 = vrot.lane.b32.xlu0 %v1847, 90
    %v1895 = vpop.permute.xlu0 %1894
    %vm1912 = vcmask 818896
    %1913 = vst.msk [vmem:[#allocation3] sm:$0xff] %vm1912, %v1865
    %1914 = vst.msk [vmem:[#allocation3 + $0x10] sm:$0xff] %vm1912, %v1867
    %1915 = vst.msk [vmem:[#allocation3 + $0x20] sm:$0xff] %vm1912, %v1869
    %1916 = vst.msk [vmem:[#allocation3 + $0x30] sm:$0xff] %vm1912, %v1871
    %1917 = vst.msk [vmem:[#allocation3 + $0x40] sm:$0xff] %vm1912, %v1873
    %1918 = vst.msk [vmem:[#allocation3 + $0x50] sm:$0xff] %vm1912, %v1875
    %1919 = vst.msk [vmem:[#allocation3 + $0x60] sm:$0xff] %vm1912, %v1877
    %1920 = vst.msk [vmem:[#allocation3 + $0x70] sm:$0xff] %vm1912, %v1879
    %1921 = vst.msk [vmem:[#allocation3 + $0x80] sm:$0xff] %vm1912, %v1881
    %1922 = vst.msk [vmem:[#allocation3 + $0x90] sm:$0xff] %vm1912, %v1883
    %1923 = vst.msk [vmem:[#allocation3 + $0xa0] sm:$0xff] %vm1912, %v1885
    %1924 = vst.msk [vmem:[#allocation3 + $0xb0] sm:$0xff] %vm1912, %v1887
    %1925 = vst.msk [vmem:[#allocation3 + $0xc0] sm:$0xff] %vm1912, %v1889
    %1926 = vst.msk [vmem:[#allocation3 + $0xd0] sm:$0xff] %vm1912, %v1891
    %1927 = vst.msk [vmem:[#allocation3 + $0xe0] sm:$0xff] %vm1912, %v1893
    %1928 = vst.msk [vmem:[#allocation3 + $0xf0] sm:$0xff] %vm1912, %v1895
    %v1929 = vld [vmem:[#allocation2 + $0xf] sm:$0xff]
    %v1930 = vld [vmem:[#allocation2 + $0x17] sm:$0xff]
    %v1931 = vld [vmem:[#allocation2 + $0x1f] sm:$0xff]
    %v1932 = vld [vmem:[#allocation2 + $0x27] sm:$0xff]
    %v1933 = vld [vmem:[#allocation2 + $0x2f] sm:$0xff]
    %v1934 = vld [vmem:[#allocation2 + $0x37] sm:$0xff]
    %v1935 = vld [vmem:[#allocation2 + $0x3f] sm:$0xff]
    %v1936 = vld [vmem:[#allocation2 + $0x47] sm:$0xff]
    %v1937 = vld [vmem:[#allocation2 + $0x4f] sm:$0xff]
    %v1938 = vld [vmem:[#allocation2 + $0x57] sm:$0xff]
    %v1939 = vld [vmem:[#allocation2 + $0x5f] sm:$0xff]
    %v1940 = vld [vmem:[#allocation2 + $0x67] sm:$0xff]
    %v1941 = vld [vmem:[#allocation2 + $0x6f] sm:$0xff]
    %v1942 = vld [vmem:[#allocation2 + $0x77] sm:$0xff]
    %v1943 = vld [vmem:[#allocation2 + $0x7f] sm:$0xff]
    %v1944 = vld [vmem:[#allocation2 + $0x87] sm:$0xff]
    %1961 = vrot.lane.b32.xlu0 %v1929, 100
    %v1962 = vpop.permute.xlu0 %1961
    %1963 = vrot.lane.b32.xlu0 %v1930, 100
    %v1964 = vpop.permute.xlu0 %1963
    %1965 = vrot.lane.b32.xlu0 %v1931, 100
    %v1966 = vpop.permute.xlu0 %1965
    %1967 = vrot.lane.b32.xlu0 %v1932, 100
    %v1968 = vpop.permute.xlu0 %1967
    %1969 = vrot.lane.b32.xlu0 %v1933, 100
    %v1970 = vpop.permute.xlu0 %1969
    %1971 = vrot.lane.b32.xlu0 %v1934, 100
    %v1972 = vpop.permute.xlu0 %1971
    %1973 = vrot.lane.b32.xlu0 %v1935, 100
    %v1974 = vpop.permute.xlu0 %1973
    %1975 = vrot.lane.b32.xlu0 %v1936, 100
    %v1976 = vpop.permute.xlu0 %1975
    %1977 = vrot.lane.b32.xlu0 %v1937, 100
    %v1978 = vpop.permute.xlu0 %1977
    %1979 = vrot.lane.b32.xlu0 %v1938, 100
    %v1980 = vpop.permute.xlu0 %1979
    %1981 = vrot.lane.b32.xlu0 %v1939, 100
    %v1982 = vpop.permute.xlu0 %1981
    %1983 = vrot.lane.b32.xlu0 %v1940, 100
    %v1984 = vpop.permute.xlu0 %1983
    %1985 = vrot.lane.b32.xlu0 %v1941, 100
    %v1986 = vpop.permute.xlu0 %1985
    %1987 = vrot.lane.b32.xlu0 %v1942, 100
    %v1988 = vpop.permute.xlu0 %1987
    %1989 = vrot.lane.b32.xlu0 %v1943, 100
    %v1990 = vpop.permute.xlu0 %1989
    %1991 = vrot.lane.b32.xlu0 %v1944, 100
    %v1992 = vpop.permute.xlu0 %1991
    %vm2009 = vcmask 900896
    %2010 = vst.msk [vmem:[#allocation3] sm:$0xff] %vm2009, %v1962
    %2011 = vst.msk [vmem:[#allocation3 + $0x10] sm:$0xff] %vm2009, %v1964
    %2012 = vst.msk [vmem:[#allocation3 + $0x20] sm:$0xff] %vm2009, %v1966
    %2013 = vst.msk [vmem:[#allocation3 + $0x30] sm:$0xff] %vm2009, %v1968
    %2014 = vst.msk [vmem:[#allocation3 + $0x40] sm:$0xff] %vm2009, %v1970
    %2015 = vst.msk [vmem:[#allocation3 + $0x50] sm:$0xff] %vm2009, %v1972
    %2016 = vst.msk [vmem:[#allocation3 + $0x60] sm:$0xff] %vm2009, %v1974
    %2017 = vst.msk [vmem:[#allocation3 + $0x70] sm:$0xff] %vm2009, %v1976
    %2018 = vst.msk [vmem:[#allocation3 + $0x80] sm:$0xff] %vm2009, %v1978
    %2019 = vst.msk [vmem:[#allocation3 + $0x90] sm:$0xff] %vm2009, %v1980
    %2020 = vst.msk [vmem:[#allocation3 + $0xa0] sm:$0xff] %vm2009, %v1982
    %2021 = vst.msk [vmem:[#allocation3 + $0xb0] sm:$0xff] %vm2009, %v1984
    %2022 = vst.msk [vmem:[#allocation3 + $0xc0] sm:$0xff] %vm2009, %v1986
    %2023 = vst.msk [vmem:[#allocation3 + $0xd0] sm:$0xff] %vm2009, %v1988
    %2024 = vst.msk [vmem:[#allocation3 + $0xe0] sm:$0xff] %vm2009, %v1990
    %2025 = vst.msk [vmem:[#allocation3 + $0xf0] sm:$0xff] %vm2009, %v1992
    %v2026 = vld [vmem:[#allocation2 + $0x10] sm:$0xff]
    %v2027 = vld [vmem:[#allocation2 + $0x18] sm:$0xff]
    %v2028 = vld [vmem:[#allocation2 + $0x20] sm:$0xff]
    %v2029 = vld [vmem:[#allocation2 + $0x28] sm:$0xff]
    %v2030 = vld [vmem:[#allocation2 + $0x30] sm:$0xff]
    %v2031 = vld [vmem:[#allocation2 + $0x38] sm:$0xff]
    %v2032 = vld [vmem:[#allocation2 + $0x40] sm:$0xff]
    %v2033 = vld [vmem:[#allocation2 + $0x48] sm:$0xff]
    %v2034 = vld [vmem:[#allocation2 + $0x50] sm:$0xff]
    %v2035 = vld [vmem:[#allocation2 + $0x58] sm:$0xff]
    %v2036 = vld [vmem:[#allocation2 + $0x60] sm:$0xff]
    %v2037 = vld [vmem:[#allocation2 + $0x68] sm:$0xff]
    %v2038 = vld [vmem:[#allocation2 + $0x70] sm:$0xff]
    %v2039 = vld [vmem:[#allocation2 + $0x78] sm:$0xff]
    %v2040 = vld [vmem:[#allocation2 + $0x80] sm:$0xff]
    %v2041 = vld [vmem:[#allocation2 + $0x88] sm:$0xff]
    %2058 = vrot.lane.b32.xlu0 %v2026, 110
    %v2059 = vpop.permute.xlu0 %2058
    %2060 = vrot.lane.b32.xlu0 %v2027, 110
    %v2061 = vpop.permute.xlu0 %2060
    %2062 = vrot.lane.b32.xlu0 %v2028, 110
    %v2063 = vpop.permute.xlu0 %2062
    %2064 = vrot.lane.b32.xlu0 %v2029, 110
    %v2065 = vpop.permute.xlu0 %2064
    %2066 = vrot.lane.b32.xlu0 %v2030, 110
    %v2067 = vpop.permute.xlu0 %2066
    %2068 = vrot.lane.b32.xlu0 %v2031, 110
    %v2069 = vpop.permute.xlu0 %2068
    %2070 = vrot.lane.b32.xlu0 %v2032, 110
    %v2071 = vpop.permute.xlu0 %2070
    %2072 = vrot.lane.b32.xlu0 %v2033, 110
    %v2073 = vpop.permute.xlu0 %2072
    %2074 = vrot.lane.b32.xlu0 %v2034, 110
    %v2075 = vpop.permute.xlu0 %2074
    %2076 = vrot.lane.b32.xlu0 %v2035, 110
    %v2077 = vpop.permute.xlu0 %2076
    %2078 = vrot.lane.b32.xlu0 %v2036, 110
    %v2079 = vpop.permute.xlu0 %2078
    %2080 = vrot.lane.b32.xlu0 %v2037, 110
    %v2081 = vpop.permute.xlu0 %2080
    %2082 = vrot.lane.b32.xlu0 %v2038, 110
    %v2083 = vpop.permute.xlu0 %2082
    %2084 = vrot.lane.b32.xlu0 %v2039, 110
    %v2085 = vpop.permute.xlu0 %2084
    %2086 = vrot.lane.b32.xlu0 %v2040, 110
    %v2087 = vpop.permute.xlu0 %2086
    %2088 = vrot.lane.b32.xlu0 %v2041, 110
    %v2089 = vpop.permute.xlu0 %2088
    %vm2106 = vcmask 982896
    %2107 = vst.msk [vmem:[#allocation3] sm:$0xff] %vm2106, %v2059
    %2108 = vst.msk [vmem:[#allocation3 + $0x10] sm:$0xff] %vm2106, %v2061
    %2109 = vst.msk [vmem:[#allocation3 + $0x20] sm:$0xff] %vm2106, %v2063
    %2110 = vst.msk [vmem:[#allocation3 + $0x30] sm:$0xff] %vm2106, %v2065
    %2111 = vst.msk [vmem:[#allocation3 + $0x40] sm:$0xff] %vm2106, %v2067
    %2112 = vst.msk [vmem:[#allocation3 + $0x50] sm:$0xff] %vm2106, %v2069
    %2113 = vst.msk [vmem:[#allocation3 + $0x60] sm:$0xff] %vm2106, %v2071
    %2114 = vst.msk [vmem:[#allocation3 + $0x70] sm:$0xff] %vm2106, %v2073
    %2115 = vst.msk [vmem:[#allocation3 + $0x80] sm:$0xff] %vm2106, %v2075
    %2116 = vst.msk [vmem:[#allocation3 + $0x90] sm:$0xff] %vm2106, %v2077
    %2117 = vst.msk [vmem:[#allocation3 + $0xa0] sm:$0xff] %vm2106, %v2079
    %2118 = vst.msk [vmem:[#allocation3 + $0xb0] sm:$0xff] %vm2106, %v2081
    %2119 = vst.msk [vmem:[#allocation3 + $0xc0] sm:$0xff] %vm2106, %v2083
    %2120 = vst.msk [vmem:[#allocation3 + $0xd0] sm:$0xff] %vm2106, %v2085
    %2121 = vst.msk [vmem:[#allocation3 + $0xe0] sm:$0xff] %vm2106, %v2087
    %2122 = vst.msk [vmem:[#allocation3 + $0xf0] sm:$0xff] %vm2106, %v2089
    %v2123 = vld [vmem:[#allocation2 + $0x11] sm:$0xff]
    %v2124 = vld [vmem:[#allocation2 + $0x19] sm:$0xff]
    %v2125 = vld [vmem:[#allocation2 + $0x21] sm:$0xff]
    %v2126 = vld [vmem:[#allocation2 + $0x29] sm:$0xff]
    %v2127 = vld [vmem:[#allocation2 + $0x31] sm:$0xff]
    %v2128 = vld [vmem:[#allocation2 + $0x39] sm:$0xff]
    %v2129 = vld [vmem:[#allocation2 + $0x41] sm:$0xff]
    %v2130 = vld [vmem:[#allocation2 + $0x49] sm:$0xff]
    %v2131 = vld [vmem:[#allocation2 + $0x51] sm:$0xff]
    %v2132 = vld [vmem:[#allocation2 + $0x59] sm:$0xff]
    %v2133 = vld [vmem:[#allocation2 + $0x61] sm:$0xff]
    %v2134 = vld [vmem:[#allocation2 + $0x69] sm:$0xff]
    %v2135 = vld [vmem:[#allocation2 + $0x71] sm:$0xff]
    %v2136 = vld [vmem:[#allocation2 + $0x79] sm:$0xff]
    %v2137 = vld [vmem:[#allocation2 + $0x81] sm:$0xff]
    %v2138 = vld [vmem:[#allocation2 + $0x89] sm:$0xff]
    %2155 = vrot.lane.b32.xlu0 %v2123, 120
    %v2156 = vpop.permute.xlu0 %2155
    %2157 = vrot.lane.b32.xlu0 %v2124, 120
    %v2158 = vpop.permute.xlu0 %2157
    %2159 = vrot.lane.b32.xlu0 %v2125, 120
    %v2160 = vpop.permute.xlu0 %2159
    %2161 = vrot.lane.b32.xlu0 %v2126, 120
    %v2162 = vpop.permute.xlu0 %2161
    %2163 = vrot.lane.b32.xlu0 %v2127, 120
    %v2164 = vpop.permute.xlu0 %2163
    %2165 = vrot.lane.b32.xlu0 %v2128, 120
    %v2166 = vpop.permute.xlu0 %2165
    %2167 = vrot.lane.b32.xlu0 %v2129, 120
    %v2168 = vpop.permute.xlu0 %2167
    %2169 = vrot.lane.b32.xlu0 %v2130, 120
    %v2170 = vpop.permute.xlu0 %2169
    %2171 = vrot.lane.b32.xlu0 %v2131, 120
    %v2172 = vpop.permute.xlu0 %2171
    %2173 = vrot.lane.b32.xlu0 %v2132, 120
    %v2174 = vpop.permute.xlu0 %2173
    %2175 = vrot.lane.b32.xlu0 %v2133, 120
    %v2176 = vpop.permute.xlu0 %2175
    %2177 = vrot.lane.b32.xlu0 %v2134, 120
    %v2178 = vpop.permute.xlu0 %2177
    %2179 = vrot.lane.b32.xlu0 %v2135, 120
    %v2180 = vpop.permute.xlu0 %2179
    %2181 = vrot.lane.b32.xlu0 %v2136, 120
    %v2182 = vpop.permute.xlu0 %2181
    %2183 = vrot.lane.b32.xlu0 %v2137, 120
    %v2184 = vpop.permute.xlu0 %2183
    %2185 = vrot.lane.b32.xlu0 %v2138, 120
    %v2186 = vpop.permute.xlu0 %2185
    %vm2203 = vcmask 1048512
    %2204 = vst.msk [vmem:[#allocation3] sm:$0xff] %vm2203, %v2156
    %vm2205 = vcmask 15360
    %2206 = vst.msk [vmem:[#allocation3 + $0x8] sm:$0xff] %vm2205, %v2156
    %2207 = vst.msk [vmem:[#allocation3 + $0x10] sm:$0xff] %vm2203, %v2158
    %2208 = vst.msk [vmem:[#allocation3 + $0x18] sm:$0xff] %vm2205, %v2158
    %2209 = vst.msk [vmem:[#allocation3 + $0x20] sm:$0xff] %vm2203, %v2160
    %2210 = vst.msk [vmem:[#allocation3 + $0x28] sm:$0xff] %vm2205, %v2160
    %2211 = vst.msk [vmem:[#allocation3 + $0x30] sm:$0xff] %vm2203, %v2162
    %2212 = vst.msk [vmem:[#allocation3 + $0x38] sm:$0xff] %vm2205, %v2162
    %2213 = vst.msk [vmem:[#allocation3 + $0x40] sm:$0xff] %vm2203, %v2164
    %2214 = vst.msk [vmem:[#allocation3 + $0x48] sm:$0xff] %vm2205, %v2164
    %2215 = vst.msk [vmem:[#allocation3 + $0x50] sm:$0xff] %vm2203, %v2166
    %2216 = vst.msk [vmem:[#allocation3 + $0x58] sm:$0xff] %vm2205, %v2166
    %2217 = vst.msk [vmem:[#allocation3 + $0x60] sm:$0xff] %vm2203, %v2168
    %2218 = vst.msk [vmem:[#allocation3 + $0x68] sm:$0xff] %vm2205, %v2168
    %2219 = vst.msk [vmem:[#allocation3 + $0x70] sm:$0xff] %vm2203, %v2170
    %2220 = vst.msk [vmem:[#allocation3 + $0x78] sm:$0xff] %vm2205, %v2170
    %2221 = vst.msk [vmem:[#allocation3 + $0x80] sm:$0xff] %vm2203, %v2172
    %2222 = vst.msk [vmem:[#allocation3 + $0x88] sm:$0xff] %vm2205, %v2172
    %2223 = vst.msk [vmem:[#allocation3 + $0x90] sm:$0xff] %vm2203, %v2174
    %2224 = vst.msk [vmem:[#allocation3 + $0x98] sm:$0xff] %vm2205, %v2174
    %2225 = vst.msk [vmem:[#allocation3 + $0xa0] sm:$0xff] %vm2203, %v2176
    %2226 = vst.msk [vmem:[#allocation3 + $0xa8] sm:$0xff] %vm2205, %v2176
    %2227 = vst.msk [vmem:[#allocation3 + $0xb0] sm:$0xff] %vm2203, %v2178
    %2228 = vst.msk [vmem:[#allocation3 + $0xb8] sm:$0xff] %vm2205, %v2178
    %2229 = vst.msk [vmem:[#allocation3 + $0xc0] sm:$0xff] %vm2203, %v2180
    %2230 = vst.msk [vmem:[#allocation3 + $0xc8] sm:$0xff] %vm2205, %v2180
    %2231 = vst.msk [vmem:[#allocation3 + $0xd0] sm:$0xff] %vm2203, %v2182
    %2232 = vst.msk [vmem:[#allocation3 + $0xd8] sm:$0xff] %vm2205, %v2182
    %2233 = vst.msk [vmem:[#allocation3 + $0xe0] sm:$0xff] %vm2203, %v2184
    %2234 = vst.msk [vmem:[#allocation3 + $0xe8] sm:$0xff] %vm2205, %v2184
    %2235 = vst.msk [vmem:[#allocation3 + $0xf0] sm:$0xff] %vm2203, %v2186
    %2236 = vst.msk [vmem:[#allocation3 + $0xf8] sm:$0xff] %vm2205, %v2186
    %v2237 = vld [vmem:[#allocation2 + $0x12] sm:$0xff]
    %v2238 = vld [vmem:[#allocation2 + $0x1a] sm:$0xff]
    %v2239 = vld [vmem:[#allocation2 + $0x22] sm:$0xff]
    %v2240 = vld [vmem:[#allocation2 + $0x2a] sm:$0xff]
    %v2241 = vld [vmem:[#allocation2 + $0x32] sm:$0xff]
    %v2242 = vld [vmem:[#allocation2 + $0x3a] sm:$0xff]
    %v2243 = vld [vmem:[#allocation2 + $0x42] sm:$0xff]
    %v2244 = vld [vmem:[#allocation2 + $0x4a] sm:$0xff]
    %v2245 = vld [vmem:[#allocation2 + $0x52] sm:$0xff]
    %v2246 = vld [vmem:[#allocation2 + $0x5a] sm:$0xff]
    %v2247 = vld [vmem:[#allocation2 + $0x62] sm:$0xff]
    %v2248 = vld [vmem:[#allocation2 + $0x6a] sm:$0xff]
    %v2249 = vld [vmem:[#allocation2 + $0x72] sm:$0xff]
    %v2250 = vld [vmem:[#allocation2 + $0x7a] sm:$0xff]
    %v2251 = vld [vmem:[#allocation2 + $0x82] sm:$0xff]
    %v2252 = vld [vmem:[#allocation2 + $0x8a] sm:$0xff]
    %2269 = vrot.lane.b32.xlu0 %v2237, 2
    %v2270 = vpop.permute.xlu0 %2269
    %2271 = vrot.lane.b32.xlu0 %v2238, 2
    %v2272 = vpop.permute.xlu0 %2271
    %2273 = vrot.lane.b32.xlu0 %v2239, 2
    %v2274 = vpop.permute.xlu0 %2273
    %2275 = vrot.lane.b32.xlu0 %v2240, 2
    %v2276 = vpop.permute.xlu0 %2275
    %2277 = vrot.lane.b32.xlu0 %v2241, 2
    %v2278 = vpop.permute.xlu0 %2277
    %2279 = vrot.lane.b32.xlu0 %v2242, 2
    %v2280 = vpop.permute.xlu0 %2279
    %2281 = vrot.lane.b32.xlu0 %v2243, 2
    %v2282 = vpop.permute.xlu0 %2281
    %2283 = vrot.lane.b32.xlu0 %v2244, 2
    %v2284 = vpop.permute.xlu0 %2283
    %2285 = vrot.lane.b32.xlu0 %v2245, 2
    %v2286 = vpop.permute.xlu0 %2285
    %2287 = vrot.lane.b32.xlu0 %v2246, 2
    %v2288 = vpop.permute.xlu0 %2287
    %2289 = vrot.lane.b32.xlu0 %v2247, 2
    %v2290 = vpop.permute.xlu0 %2289
    %2291 = vrot.lane.b32.xlu0 %v2248, 2
    %v2292 = vpop.permute.xlu0 %2291
    %2293 = vrot.lane.b32.xlu0 %v2249, 2
    %v2294 = vpop.permute.xlu0 %2293
    %2295 = vrot.lane.b32.xlu0 %v2250, 2
    %v2296 = vpop.permute.xlu0 %2295
    %2297 = vrot.lane.b32.xlu0 %v2251, 2
    %v2298 = vpop.permute.xlu0 %2297
    %2299 = vrot.lane.b32.xlu0 %v2252, 2
    %v2300 = vpop.permute.xlu0 %2299
    %vm2317 = vcmask 97296
    %2318 = vst.msk [vmem:[#allocation3 + $0x8] sm:$0xff] %vm2317, %v2270
    %2319 = vst.msk [vmem:[#allocation3 + $0x18] sm:$0xff] %vm2317, %v2272
    %2320 = vst.msk [vmem:[#allocation3 + $0x28] sm:$0xff] %vm2317, %v2274
    %2321 = vst.msk [vmem:[#allocation3 + $0x38] sm:$0xff] %vm2317, %v2276
    %2322 = vst.msk [vmem:[#allocation3 + $0x48] sm:$0xff] %vm2317, %v2278
    %2323 = vst.msk [vmem:[#allocation3 + $0x58] sm:$0xff] %vm2317, %v2280
    %2324 = vst.msk [vmem:[#allocation3 + $0x68] sm:$0xff] %vm2317, %v2282
    %2325 = vst.msk [vmem:[#allocation3 + $0x78] sm:$0xff] %vm2317, %v2284
    %2326 = vst.msk [vmem:[#allocation3 + $0x88] sm:$0xff] %vm2317, %v2286
    %2327 = vst.msk [vmem:[#allocation3 + $0x98] sm:$0xff] %vm2317, %v2288
    %2328 = vst.msk [vmem:[#allocation3 + $0xa8] sm:$0xff] %vm2317, %v2290
    %2329 = vst.msk [vmem:[#allocation3 + $0xb8] sm:$0xff] %vm2317, %v2292
    %2330 = vst.msk [vmem:[#allocation3 + $0xc8] sm:$0xff] %vm2317, %v2294
    %2331 = vst.msk [vmem:[#allocation3 + $0xd8] sm:$0xff] %vm2317, %v2296
    %2332 = vst.msk [vmem:[#allocation3 + $0xe8] sm:$0xff] %vm2317, %v2298
    %2333 = vst.msk [vmem:[#allocation3 + $0xf8] sm:$0xff] %vm2317, %v2300
    %v2334 = vld [vmem:[#allocation2 + $0x13] sm:$0xff]
    %v2335 = vld [vmem:[#allocation2 + $0x1b] sm:$0xff]
    %v2336 = vld [vmem:[#allocation2 + $0x23] sm:$0xff]
    %v2337 = vld [vmem:[#allocation2 + $0x2b] sm:$0xff]
    %v2338 = vld [vmem:[#allocation2 + $0x33] sm:$0xff]
    %v2339 = vld [vmem:[#allocation2 + $0x3b] sm:$0xff]
    %v2340 = vld [vmem:[#allocation2 + $0x43] sm:$0xff]
    %v2341 = vld [vmem:[#allocation2 + $0x4b] sm:$0xff]
    %v2342 = vld [vmem:[#allocation2 + $0x53] sm:$0xff]
    %v2343 = vld [vmem:[#allocation2 + $0x5b] sm:$0xff]
    %v2344 = vld [vmem:[#allocation2 + $0x63] sm:$0xff]
    %v2345 = vld [vmem:[#allocation2 + $0x6b] sm:$0xff]
    %v2346 = vld [vmem:[#allocation2 + $0x73] sm:$0xff]
    %v2347 = vld [vmem:[#allocation2 + $0x7b] sm:$0xff]
    %v2348 = vld [vmem:[#allocation2 + $0x83] sm:$0xff]
    %v2349 = vld [vmem:[#allocation2 + $0x8b] sm:$0xff]
    %2366 = vrot.lane.b32.xlu0 %v2334, 12
    %v2367 = vpop.permute.xlu0 %2366
    %2368 = vrot.lane.b32.xlu0 %v2335, 12
    %v2369 = vpop.permute.xlu0 %2368
    %2370 = vrot.lane.b32.xlu0 %v2336, 12
    %v2371 = vpop.permute.xlu0 %2370
    %2372 = vrot.lane.b32.xlu0 %v2337, 12
    %v2373 = vpop.permute.xlu0 %2372
    %2374 = vrot.lane.b32.xlu0 %v2338, 12
    %v2375 = vpop.permute.xlu0 %2374
    %2376 = vrot.lane.b32.xlu0 %v2339, 12
    %v2377 = vpop.permute.xlu0 %2376
    %2378 = vrot.lane.b32.xlu0 %v2340, 12
    %v2379 = vpop.permute.xlu0 %2378
    %2380 = vrot.lane.b32.xlu0 %v2341, 12
    %v2381 = vpop.permute.xlu0 %2380
    %2382 = vrot.lane.b32.xlu0 %v2342, 12
    %v2383 = vpop.permute.xlu0 %2382
    %2384 = vrot.lane.b32.xlu0 %v2343, 12
    %v2385 = vpop.permute.xlu0 %2384
    %2386 = vrot.lane.b32.xlu0 %v2344, 12
    %v2387 = vpop.permute.xlu0 %2386
    %2388 = vrot.lane.b32.xlu0 %v2345, 12
    %v2389 = vpop.permute.xlu0 %2388
    %2390 = vrot.lane.b32.xlu0 %v2346, 12
    %v2391 = vpop.permute.xlu0 %2390
    %2392 = vrot.lane.b32.xlu0 %v2347, 12
    %v2393 = vpop.permute.xlu0 %2392
    %2394 = vrot.lane.b32.xlu0 %v2348, 12
    %v2395 = vpop.permute.xlu0 %2394
    %2396 = vrot.lane.b32.xlu0 %v2349, 12
    %v2397 = vpop.permute.xlu0 %2396
    %vm2414 = vcmask 179296
    %2415 = vst.msk [vmem:[#allocation3 + $0x8] sm:$0xff] %vm2414, %v2367
    %2416 = vst.msk [vmem:[#allocation3 + $0x18] sm:$0xff] %vm2414, %v2369
    %2417 = vst.msk [vmem:[#allocation3 + $0x28] sm:$0xff] %vm2414, %v2371
    %2418 = vst.msk [vmem:[#allocation3 + $0x38] sm:$0xff] %vm2414, %v2373
    %2419 = vst.msk [vmem:[#allocation3 + $0x48] sm:$0xff] %vm2414, %v2375
    %2420 = vst.msk [vmem:[#allocation3 + $0x58] sm:$0xff] %vm2414, %v2377
    %2421 = vst.msk [vmem:[#allocation3 + $0x68] sm:$0xff] %vm2414, %v2379
    %2422 = vst.msk [vmem:[#allocation3 + $0x78] sm:$0xff] %vm2414, %v2381
    %2423 = vst.msk [vmem:[#allocation3 + $0x88] sm:$0xff] %vm2414, %v2383
    %2424 = vst.msk [vmem:[#allocation3 + $0x98] sm:$0xff] %vm2414, %v2385
    %2425 = vst.msk [vmem:[#allocation3 + $0xa8] sm:$0xff] %vm2414, %v2387
    %2426 = vst.msk [vmem:[#allocation3 + $0xb8] sm:$0xff] %vm2414, %v2389
    %2427 = vst.msk [vmem:[#allocation3 + $0xc8] sm:$0xff] %vm2414, %v2391
    %2428 = vst.msk [vmem:[#allocation3 + $0xd8] sm:$0xff] %vm2414, %v2393
    %2429 = vst.msk [vmem:[#allocation3 + $0xe8] sm:$0xff] %vm2414, %v2395
    %2430 = vst.msk [vmem:[#allocation3 + $0xf8] sm:$0xff] %vm2414, %v2397
    %v2431 = vld [vmem:[#allocation2 + $0x14] sm:$0xff]
    %v2432 = vld [vmem:[#allocation2 + $0x1c] sm:$0xff]
    %v2433 = vld [vmem:[#allocation2 + $0x24] sm:$0xff]
    %v2434 = vld [vmem:[#allocation2 + $0x2c] sm:$0xff]
    %v2435 = vld [vmem:[#allocation2 + $0x34] sm:$0xff]
    %v2436 = vld [vmem:[#allocation2 + $0x3c] sm:$0xff]
    %v2437 = vld [vmem:[#allocation2 + $0x44] sm:$0xff]
    %v2438 = vld [vmem:[#allocation2 + $0x4c] sm:$0xff]
    %v2439 = vld [vmem:[#allocation2 + $0x54] sm:$0xff]
    %v2440 = vld [vmem:[#allocation2 + $0x5c] sm:$0xff]
    %v2441 = vld [vmem:[#allocation2 + $0x64] sm:$0xff]
    %v2442 = vld [vmem:[#allocation2 + $0x6c] sm:$0xff]
    %v2443 = vld [vmem:[#allocation2 + $0x74] sm:$0xff]
    %v2444 = vld [vmem:[#allocation2 + $0x7c] sm:$0xff]
    %v2445 = vld [vmem:[#allocation2 + $0x84] sm:$0xff]
    %v2446 = vld [vmem:[#allocation2 + $0x8c] sm:$0xff]
    %2463 = vrot.lane.b32.xlu0 %v2431, 22
    %v2464 = vpop.permute.xlu0 %2463
    %2465 = vrot.lane.b32.xlu0 %v2432, 22
    %v2466 = vpop.permute.xlu0 %2465
    %2467 = vrot.lane.b32.xlu0 %v2433, 22
    %v2468 = vpop.permute.xlu0 %2467
    %2469 = vrot.lane.b32.xlu0 %v2434, 22
    %v2470 = vpop.permute.xlu0 %2469
    %2471 = vrot.lane.b32.xlu0 %v2435, 22
    %v2472 = vpop.permute.xlu0 %2471
    %2473 = vrot.lane.b32.xlu0 %v2436, 22
    %v2474 = vpop.permute.xlu0 %2473
    %2475 = vrot.lane.b32.xlu0 %v2437, 22
    %v2476 = vpop.permute.xlu0 %2475
    %2477 = vrot.lane.b32.xlu0 %v2438, 22
    %v2478 = vpop.permute.xlu0 %2477
    %2479 = vrot.lane.b32.xlu0 %v2439, 22
    %v2480 = vpop.permute.xlu0 %2479
    %2481 = vrot.lane.b32.xlu0 %v2440, 22
    %v2482 = vpop.permute.xlu0 %2481
    %2483 = vrot.lane.b32.xlu0 %v2441, 22
    %v2484 = vpop.permute.xlu0 %2483
    %2485 = vrot.lane.b32.xlu0 %v2442, 22
    %v2486 = vpop.permute.xlu0 %2485
    %2487 = vrot.lane.b32.xlu0 %v2443, 22
    %v2488 = vpop.permute.xlu0 %2487
    %2489 = vrot.lane.b32.xlu0 %v2444, 22
    %v2490 = vpop.permute.xlu0 %2489
    %2491 = vrot.lane.b32.xlu0 %v2445, 22
    %v2492 = vpop.permute.xlu0 %2491
    %2493 = vrot.lane.b32.xlu0 %v2446, 22
    %v2494 = vpop.permute.xlu0 %2493
    %vm2511 = vcmask 261296
    %2512 = vst.msk [vmem:[#allocation3 + $0x8] sm:$0xff] %vm2511, %v2464
    %2513 = vst.msk [vmem:[#allocation3 + $0x18] sm:$0xff] %vm2511, %v2466
    %2514 = vst.msk [vmem:[#allocation3 + $0x28] sm:$0xff] %vm2511, %v2468
    %2515 = vst.msk [vmem:[#allocation3 + $0x38] sm:$0xff] %vm2511, %v2470
    %2516 = vst.msk [vmem:[#allocation3 + $0x48] sm:$0xff] %vm2511, %v2472
    %2517 = vst.msk [vmem:[#allocation3 + $0x58] sm:$0xff] %vm2511, %v2474
    %2518 = vst.msk [vmem:[#allocation3 + $0x68] sm:$0xff] %vm2511, %v2476
    %2519 = vst.msk [vmem:[#allocation3 + $0x78] sm:$0xff] %vm2511, %v2478
    %2520 = vst.msk [vmem:[#allocation3 + $0x88] sm:$0xff] %vm2511, %v2480
    %2521 = vst.msk [vmem:[#allocation3 + $0x98] sm:$0xff] %vm2511, %v2482
    %2522 = vst.msk [vmem:[#allocation3 + $0xa8] sm:$0xff] %vm2511, %v2484
    %2523 = vst.msk [vmem:[#allocation3 + $0xb8] sm:$0xff] %vm2511, %v2486
    %2524 = vst.msk [vmem:[#allocation3 + $0xc8] sm:$0xff] %vm2511, %v2488
    %2525 = vst.msk [vmem:[#allocation3 + $0xd8] sm:$0xff] %vm2511, %v2490
    %2526 = vst.msk [vmem:[#allocation3 + $0xe8] sm:$0xff] %vm2511, %v2492
    %2527 = vst.msk [vmem:[#allocation3 + $0xf8] sm:$0xff] %vm2511, %v2494
    %v2528 = vld [vmem:[#allocation2 + $0x15] sm:$0xff]
    %v2529 = vld [vmem:[#allocation2 + $0x1d] sm:$0xff]
    %v2530 = vld [vmem:[#allocation2 + $0x25] sm:$0xff]
    %v2531 = vld [vmem:[#allocation2 + $0x2d] sm:$0xff]
    %v2532 = vld [vmem:[#allocation2 + $0x35] sm:$0xff]
    %v2533 = vld [vmem:[#allocation2 + $0x3d] sm:$0xff]
    %v2534 = vld [vmem:[#allocation2 + $0x45] sm:$0xff]
    %v2535 = vld [vmem:[#allocation2 + $0x4d] sm:$0xff]
    %v2536 = vld [vmem:[#allocation2 + $0x55] sm:$0xff]
    %v2537 = vld [vmem:[#allocation2 + $0x5d] sm:$0xff]
    %v2538 = vld [vmem:[#allocation2 + $0x65] sm:$0xff]
    %v2539 = vld [vmem:[#allocation2 + $0x6d] sm:$0xff]
    %v2540 = vld [vmem:[#allocation2 + $0x75] sm:$0xff]
    %v2541 = vld [vmem:[#allocation2 + $0x7d] sm:$0xff]
    %v2542 = vld [vmem:[#allocation2 + $0x85] sm:$0xff]
    %v2543 = vld [vmem:[#allocation2 + $0x8d] sm:$0xff]
    %2560 = vrot.lane.b32.xlu0 %v2528, 32
    %v2561 = vpop.permute.xlu0 %2560
    %2562 = vrot.lane.b32.xlu0 %v2529, 32
    %v2563 = vpop.permute.xlu0 %2562
    %2564 = vrot.lane.b32.xlu0 %v2530, 32
    %v2565 = vpop.permute.xlu0 %2564
    %2566 = vrot.lane.b32.xlu0 %v2531, 32
    %v2567 = vpop.permute.xlu0 %2566
    %2568 = vrot.lane.b32.xlu0 %v2532, 32
    %v2569 = vpop.permute.xlu0 %2568
    %2570 = vrot.lane.b32.xlu0 %v2533, 32
    %v2571 = vpop.permute.xlu0 %2570
    %2572 = vrot.lane.b32.xlu0 %v2534, 32
    %v2573 = vpop.permute.xlu0 %2572
    %2574 = vrot.lane.b32.xlu0 %v2535, 32
    %v2575 = vpop.permute.xlu0 %2574
    %2576 = vrot.lane.b32.xlu0 %v2536, 32
    %v2577 = vpop.permute.xlu0 %2576
    %2578 = vrot.lane.b32.xlu0 %v2537, 32
    %v2579 = vpop.permute.xlu0 %2578
    %2580 = vrot.lane.b32.xlu0 %v2538, 32
    %v2581 = vpop.permute.xlu0 %2580
    %2582 = vrot.lane.b32.xlu0 %v2539, 32
    %v2583 = vpop.permute.xlu0 %2582
    %2584 = vrot.lane.b32.xlu0 %v2540, 32
    %v2585 = vpop.permute.xlu0 %2584
    %2586 = vrot.lane.b32.xlu0 %v2541, 32
    %v2587 = vpop.permute.xlu0 %2586
    %2588 = vrot.lane.b32.xlu0 %v2542, 32
    %v2589 = vpop.permute.xlu0 %2588
    %2590 = vrot.lane.b32.xlu0 %v2543, 32
    %v2591 = vpop.permute.xlu0 %2590
    %vm2608 = vcmask 343296
    %2609 = vst.msk [vmem:[#allocation3 + $0x8] sm:$0xff] %vm2608, %v2561
    %2610 = vst.msk [vmem:[#allocation3 + $0x18] sm:$0xff] %vm2608, %v2563
    %2611 = vst.msk [vmem:[#allocation3 + $0x28] sm:$0xff] %vm2608, %v2565
    %2612 = vst.msk [vmem:[#allocation3 + $0x38] sm:$0xff] %vm2608, %v2567
    %2613 = vst.msk [vmem:[#allocation3 + $0x48] sm:$0xff] %vm2608, %v2569
    %2614 = vst.msk [vmem:[#allocation3 + $0x58] sm:$0xff] %vm2608, %v2571
    %2615 = vst.msk [vmem:[#allocation3 + $0x68] sm:$0xff] %vm2608, %v2573
    %2616 = vst.msk [vmem:[#allocation3 + $0x78] sm:$0xff] %vm2608, %v2575
    %2617 = vst.msk [vmem:[#allocation3 + $0x88] sm:$0xff] %vm2608, %v2577
    %2618 = vst.msk [vmem:[#allocation3 + $0x98] sm:$0xff] %vm2608, %v2579
    %2619 = vst.msk [vmem:[#allocation3 + $0xa8] sm:$0xff] %vm2608, %v2581
    %2620 = vst.msk [vmem:[#allocation3 + $0xb8] sm:$0xff] %vm2608, %v2583
    %2621 = vst.msk [vmem:[#allocation3 + $0xc8] sm:$0xff] %vm2608, %v2585
    %2622 = vst.msk [vmem:[#allocation3 + $0xd8] sm:$0xff] %vm2608, %v2587
    %2623 = vst.msk [vmem:[#allocation3 + $0xe8] sm:$0xff] %vm2608, %v2589
    %2624 = vst.msk [vmem:[#allocation3 + $0xf8] sm:$0xff] %vm2608, %v2591
    %v2625 = vld [vmem:[#allocation2 + $0x16] sm:$0xff]
    %v2626 = vld [vmem:[#allocation2 + $0x1e] sm:$0xff]
    %v2627 = vld [vmem:[#allocation2 + $0x26] sm:$0xff]
    %v2628 = vld [vmem:[#allocation2 + $0x2e] sm:$0xff]
    %v2629 = vld [vmem:[#allocation2 + $0x36] sm:$0xff]
    %v2630 = vld [vmem:[#allocation2 + $0x3e] sm:$0xff]
    %v2631 = vld [vmem:[#allocation2 + $0x46] sm:$0xff]
    %v2632 = vld [vmem:[#allocation2 + $0x4e] sm:$0xff]
    %v2633 = vld [vmem:[#allocation2 + $0x56] sm:$0xff]
    %v2634 = vld [vmem:[#allocation2 + $0x5e] sm:$0xff]
    %v2635 = vld [vmem:[#allocation2 + $0x66] sm:$0xff]
    %v2636 = vld [vmem:[#allocation2 + $0x6e] sm:$0xff]
    %v2637 = vld [vmem:[#allocation2 + $0x76] sm:$0xff]
    %v2638 = vld [vmem:[#allocation2 + $0x7e] sm:$0xff]
    %v2639 = vld [vmem:[#allocation2 + $0x86] sm:$0xff]
    %v2640 = vld [vmem:[#allocation2 + $0x8e] sm:$0xff]
    %2657 = vrot.lane.b32.xlu0 %v2625, 42
    %v2658 = vpop.permute.xlu0 %2657
    %2659 = vrot.lane.b32.xlu0 %v2626, 42
    %v2660 = vpop.permute.xlu0 %2659
    %2661 = vrot.lane.b32.xlu0 %v2627, 42
    %v2662 = vpop.permute.xlu0 %2661
    %2663 = vrot.lane.b32.xlu0 %v2628, 42
    %v2664 = vpop.permute.xlu0 %2663
    %2665 = vrot.lane.b32.xlu0 %v2629, 42
    %v2666 = vpop.permute.xlu0 %2665
    %2667 = vrot.lane.b32.xlu0 %v2630, 42
    %v2668 = vpop.permute.xlu0 %2667
    %2669 = vrot.lane.b32.xlu0 %v2631, 42
    %v2670 = vpop.permute.xlu0 %2669
    %2671 = vrot.lane.b32.xlu0 %v2632, 42
    %v2672 = vpop.permute.xlu0 %2671
    %2673 = vrot.lane.b32.xlu0 %v2633, 42
    %v2674 = vpop.permute.xlu0 %2673
    %2675 = vrot.lane.b32.xlu0 %v2634, 42
    %v2676 = vpop.permute.xlu0 %2675
    %2677 = vrot.lane.b32.xlu0 %v2635, 42
    %v2678 = vpop.permute.xlu0 %2677
    %2679 = vrot.lane.b32.xlu0 %v2636, 42
    %v2680 = vpop.permute.xlu0 %2679
    %2681 = vrot.lane.b32.xlu0 %v2637, 42
    %v2682 = vpop.permute.xlu0 %2681
    %2683 = vrot.lane.b32.xlu0 %v2638, 42
    %v2684 = vpop.permute.xlu0 %2683
    %2685 = vrot.lane.b32.xlu0 %v2639, 42
    %v2686 = vpop.permute.xlu0 %2685
    %2687 = vrot.lane.b32.xlu0 %v2640, 42
    %v2688 = vpop.permute.xlu0 %2687
    %vm2705 = vcmask 425296
    %2706 = vst.msk [vmem:[#allocation3 + $0x8] sm:$0xff] %vm2705, %v2658
    %2707 = vst.msk [vmem:[#allocation3 + $0x18] sm:$0xff] %vm2705, %v2660
    %2708 = vst.msk [vmem:[#allocation3 + $0x28] sm:$0xff] %vm2705, %v2662
    %2709 = vst.msk [vmem:[#allocation3 + $0x38] sm:$0xff] %vm2705, %v2664
    %2710 = vst.msk [vmem:[#allocation3 + $0x48] sm:$0xff] %vm2705, %v2666
    %2711 = vst.msk [vmem:[#allocation3 + $0x58] sm:$0xff] %vm2705, %v2668
    %2712 = vst.msk [vmem:[#allocation3 + $0x68] sm:$0xff] %vm2705, %v2670
    %2713 = vst.msk [vmem:[#allocation3 + $0x78] sm:$0xff] %vm2705, %v2672
    %2714 = vst.msk [vmem:[#allocation3 + $0x88] sm:$0xff] %vm2705, %v2674
    %2715 = vst.msk [vmem:[#allocation3 + $0x98] sm:$0xff] %vm2705, %v2676
    %2716 = vst.msk [vmem:[#allocation3 + $0xa8] sm:$0xff] %vm2705, %v2678
    %2717 = vst.msk [vmem:[#allocation3 + $0xb8] sm:$0xff] %vm2705, %v2680
    %2718 = vst.msk [vmem:[#allocation3 + $0xc8] sm:$0xff] %vm2705, %v2682
    %2719 = vst.msk [vmem:[#allocation3 + $0xd8] sm:$0xff] %vm2705, %v2684
    %2720 = vst.msk [vmem:[#allocation3 + $0xe8] sm:$0xff] %vm2705, %v2686
    %2721 = vst.msk [vmem:[#allocation3 + $0xf8] sm:$0xff] %vm2705, %v2688
    %v2722 = vld [vmem:[#allocation2 + $0x17] sm:$0xff]
    %v2723 = vld [vmem:[#allocation2 + $0x1f] sm:$0xff]
    %v2724 = vld [vmem:[#allocation2 + $0x27] sm:$0xff]
    %v2725 = vld [vmem:[#allocation2 + $0x2f] sm:$0xff]
    %v2726 = vld [vmem:[#allocation2 + $0x37] sm:$0xff]
    %v2727 = vld [vmem:[#allocation2 + $0x3f] sm:$0xff]
    %v2728 = vld [vmem:[#allocation2 + $0x47] sm:$0xff]
    %v2729 = vld [vmem:[#allocation2 + $0x4f] sm:$0xff]
    %v2730 = vld [vmem:[#allocation2 + $0x57] sm:$0xff]
    %v2731 = vld [vmem:[#allocation2 + $0x5f] sm:$0xff]
    %v2732 = vld [vmem:[#allocation2 + $0x67] sm:$0xff]
    %v2733 = vld [vmem:[#allocation2 + $0x6f] sm:$0xff]
    %v2734 = vld [vmem:[#allocation2 + $0x77] sm:$0xff]
    %v2735 = vld [vmem:[#allocation2 + $0x7f] sm:$0xff]
    %v2736 = vld [vmem:[#allocation2 + $0x87] sm:$0xff]
    %v2737 = vld [vmem:[#allocation2 + $0x8f] sm:$0xff]
    %2754 = vrot.lane.b32.xlu0 %v2722, 52
    %v2755 = vpop.permute.xlu0 %2754
    %2756 = vrot.lane.b32.xlu0 %v2723, 52
    %v2757 = vpop.permute.xlu0 %2756
    %2758 = vrot.lane.b32.xlu0 %v2724, 52
    %v2759 = vpop.permute.xlu0 %2758
    %2760 = vrot.lane.b32.xlu0 %v2725, 52
    %v2761 = vpop.permute.xlu0 %2760
    %2762 = vrot.lane.b32.xlu0 %v2726, 52
    %v2763 = vpop.permute.xlu0 %2762
    %2764 = vrot.lane.b32.xlu0 %v2727, 52
    %v2765 = vpop.permute.xlu0 %2764
    %2766 = vrot.lane.b32.xlu0 %v2728, 52
    %v2767 = vpop.permute.xlu0 %2766
    %2768 = vrot.lane.b32.xlu0 %v2729, 52
    %v2769 = vpop.permute.xlu0 %2768
    %2770 = vrot.lane.b32.xlu0 %v2730, 52
    %v2771 = vpop.permute.xlu0 %2770
    %2772 = vrot.lane.b32.xlu0 %v2731, 52
    %v2773 = vpop.permute.xlu0 %2772
    %2774 = vrot.lane.b32.xlu0 %v2732, 52
    %v2775 = vpop.permute.xlu0 %2774
    %2776 = vrot.lane.b32.xlu0 %v2733, 52
    %v2777 = vpop.permute.xlu0 %2776
    %2778 = vrot.lane.b32.xlu0 %v2734, 52
    %v2779 = vpop.permute.xlu0 %2778
    %2780 = vrot.lane.b32.xlu0 %v2735, 52
    %v2781 = vpop.permute.xlu0 %2780
    %2782 = vrot.lane.b32.xlu0 %v2736, 52
    %v2783 = vpop.permute.xlu0 %2782
    %2784 = vrot.lane.b32.xlu0 %v2737, 52
    %v2785 = vpop.permute.xlu0 %2784
    %vm2802 = vcmask 507296
    %2803 = vst.msk [vmem:[#allocation3 + $0x8] sm:$0xff] %vm2802, %v2755
    %2804 = vst.msk [vmem:[#allocation3 + $0x18] sm:$0xff] %vm2802, %v2757
    %2805 = vst.msk [vmem:[#allocation3 + $0x28] sm:$0xff] %vm2802, %v2759
    %2806 = vst.msk [vmem:[#allocation3 + $0x38] sm:$0xff] %vm2802, %v2761
    %2807 = vst.msk [vmem:[#allocation3 + $0x48] sm:$0xff] %vm2802, %v2763
    %2808 = vst.msk [vmem:[#allocation3 + $0x58] sm:$0xff] %vm2802, %v2765
    %2809 = vst.msk [vmem:[#allocation3 + $0x68] sm:$0xff] %vm2802, %v2767
    %2810 = vst.msk [vmem:[#allocation3 + $0x78] sm:$0xff] %vm2802, %v2769
    %2811 = vst.msk [vmem:[#allocation3 + $0x88] sm:$0xff] %vm2802, %v2771
    %2812 = vst.msk [vmem:[#allocation3 + $0x98] sm:$0xff] %vm2802, %v2773
    %2813 = vst.msk [vmem:[#allocation3 + $0xa8] sm:$0xff] %vm2802, %v2775
    %2814 = vst.msk [vmem:[#allocation3 + $0xb8] sm:$0xff] %vm2802, %v2777
    %2815 = vst.msk [vmem:[#allocation3 + $0xc8] sm:$0xff] %vm2802, %v2779
    %2816 = vst.msk [vmem:[#allocation3 + $0xd8] sm:$0xff] %vm2802, %v2781
    %2817 = vst.msk [vmem:[#allocation3 + $0xe8] sm:$0xff] %vm2802, %v2783
    %2818 = vst.msk [vmem:[#allocation3 + $0xf8] sm:$0xff] %vm2802, %v2785
    %v2819 = vld [vmem:[#allocation2 + $0x18] sm:$0xff]
    %v2820 = vld [vmem:[#allocation2 + $0x20] sm:$0xff]
    %v2821 = vld [vmem:[#allocation2 + $0x28] sm:$0xff]
    %v2822 = vld [vmem:[#allocation2 + $0x30] sm:$0xff]
    %v2823 = vld [vmem:[#allocation2 + $0x38] sm:$0xff]
    %v2824 = vld [vmem:[#allocation2 + $0x40] sm:$0xff]
    %v2825 = vld [vmem:[#allocation2 + $0x48] sm:$0xff]
    %v2826 = vld [vmem:[#allocation2 + $0x50] sm:$0xff]
    %v2827 = vld [vmem:[#allocation2 + $0x58] sm:$0xff]
    %v2828 = vld [vmem:[#allocation2 + $0x60] sm:$0xff]
    %v2829 = vld [vmem:[#allocation2 + $0x68] sm:$0xff]
    %v2830 = vld [vmem:[#allocation2 + $0x70] sm:$0xff]
    %v2831 = vld [vmem:[#allocation2 + $0x78] sm:$0xff]
    %v2832 = vld [vmem:[#allocation2 + $0x80] sm:$0xff]
    %v2833 = vld [vmem:[#allocation2 + $0x88] sm:$0xff]
    %v2834 = vld [vmem:[#allocation2 + $0x90] sm:$0xff]
    %2851 = vrot.lane.b32.xlu0 %v2819, 62
    %v2852 = vpop.permute.xlu0 %2851
    %2853 = vrot.lane.b32.xlu0 %v2820, 62
    %v2854 = vpop.permute.xlu0 %2853
    %2855 = vrot.lane.b32.xlu0 %v2821, 62
    %v2856 = vpop.permute.xlu0 %2855
    %2857 = vrot.lane.b32.xlu0 %v2822, 62
    %v2858 = vpop.permute.xlu0 %2857
    %2859 = vrot.lane.b32.xlu0 %v2823, 62
    %v2860 = vpop.permute.xlu0 %2859
    %2861 = vrot.lane.b32.xlu0 %v2824, 62
    %v2862 = vpop.permute.xlu0 %2861
    %2863 = vrot.lane.b32.xlu0 %v2825, 62
    %v2864 = vpop.permute.xlu0 %2863
    %2865 = vrot.lane.b32.xlu0 %v2826, 62
    %v2866 = vpop.permute.xlu0 %2865
    %2867 = vrot.lane.b32.xlu0 %v2827, 62
    %v2868 = vpop.permute.xlu0 %2867
    %2869 = vrot.lane.b32.xlu0 %v2828, 62
    %v2870 = vpop.permute.xlu0 %2869
    %2871 = vrot.lane.b32.xlu0 %v2829, 62
    %v2872 = vpop.permute.xlu0 %2871
    %2873 = vrot.lane.b32.xlu0 %v2830, 62
    %v2874 = vpop.permute.xlu0 %2873
    %2875 = vrot.lane.b32.xlu0 %v2831, 62
    %v2876 = vpop.permute.xlu0 %2875
    %2877 = vrot.lane.b32.xlu0 %v2832, 62
    %v2878 = vpop.permute.xlu0 %2877
    %2879 = vrot.lane.b32.xlu0 %v2833, 62
    %v2880 = vpop.permute.xlu0 %2879
    %2881 = vrot.lane.b32.xlu0 %v2834, 62
    %v2882 = vpop.permute.xlu0 %2881
    %vm2899 = vcmask 589296
    %2900 = vst.msk [vmem:[#allocation3 + $0x8] sm:$0xff] %vm2899, %v2852
    %2901 = vst.msk [vmem:[#allocation3 + $0x18] sm:$0xff] %vm2899, %v2854
    %2902 = vst.msk [vmem:[#allocation3 + $0x28] sm:$0xff] %vm2899, %v2856
    %2903 = vst.msk [vmem:[#allocation3 + $0x38] sm:$0xff] %vm2899, %v2858
    %2904 = vst.msk [vmem:[#allocation3 + $0x48] sm:$0xff] %vm2899, %v2860
    %2905 = vst.msk [vmem:[#allocation3 + $0x58] sm:$0xff] %vm2899, %v2862
    %2906 = vst.msk [vmem:[#allocation3 + $0x68] sm:$0xff] %vm2899, %v2864
    %2907 = vst.msk [vmem:[#allocation3 + $0x78] sm:$0xff] %vm2899, %v2866
    %2908 = vst.msk [vmem:[#allocation3 + $0x88] sm:$0xff] %vm2899, %v2868
    %2909 = vst.msk [vmem:[#allocation3 + $0x98] sm:$0xff] %vm2899, %v2870
    %2910 = vst.msk [vmem:[#allocation3 + $0xa8] sm:$0xff] %vm2899, %v2872
    %2911 = vst.msk [vmem:[#allocation3 + $0xb8] sm:$0xff] %vm2899, %v2874
    %2912 = vst.msk [vmem:[#allocation3 + $0xc8] sm:$0xff] %vm2899, %v2876
    %2913 = vst.msk [vmem:[#allocation3 + $0xd8] sm:$0xff] %vm2899, %v2878
    %2914 = vst.msk [vmem:[#allocation3 + $0xe8] sm:$0xff] %vm2899, %v2880
    %2915 = vst.msk [vmem:[#allocation3 + $0xf8] sm:$0xff] %vm2899, %v2882
    %v2916 = vld [vmem:[#allocation2 + $0x19] sm:$0xff]
    %v2917 = vld [vmem:[#allocation2 + $0x21] sm:$0xff]
    %v2918 = vld [vmem:[#allocation2 + $0x29] sm:$0xff]
    %v2919 = vld [vmem:[#allocation2 + $0x31] sm:$0xff]
    %v2920 = vld [vmem:[#allocation2 + $0x39] sm:$0xff]
    %v2921 = vld [vmem:[#allocation2 + $0x41] sm:$0xff]
    %v2922 = vld [vmem:[#allocation2 + $0x49] sm:$0xff]
    %v2923 = vld [vmem:[#allocation2 + $0x51] sm:$0xff]
    %v2924 = vld [vmem:[#allocation2 + $0x59] sm:$0xff]
    %v2925 = vld [vmem:[#allocation2 + $0x61] sm:$0xff]
    %v2926 = vld [vmem:[#allocation2 + $0x69] sm:$0xff]
    %v2927 = vld [vmem:[#allocation2 + $0x71] sm:$0xff]
    %v2928 = vld [vmem:[#allocation2 + $0x79] sm:$0xff]
    %v2929 = vld [vmem:[#allocation2 + $0x81] sm:$0xff]
    %v2930 = vld [vmem:[#allocation2 + $0x89] sm:$0xff]
    %v2931 = vld [vmem:[#allocation2 + $0x91] sm:$0xff]
    %2948 = vrot.lane.b32.xlu0 %v2916, 72
    %v2949 = vpop.permute.xlu0 %2948
    %2950 = vrot.lane.b32.xlu0 %v2917, 72
    %v2951 = vpop.permute.xlu0 %2950
    %2952 = vrot.lane.b32.xlu0 %v2918, 72
    %v2953 = vpop.permute.xlu0 %2952
    %2954 = vrot.lane.b32.xlu0 %v2919, 72
    %v2955 = vpop.permute.xlu0 %2954
    %2956 = vrot.lane.b32.xlu0 %v2920, 72
    %v2957 = vpop.permute.xlu0 %2956
    %2958 = vrot.lane.b32.xlu0 %v2921, 72
    %v2959 = vpop.permute.xlu0 %2958
    %2960 = vrot.lane.b32.xlu0 %v2922, 72
    %v2961 = vpop.permute.xlu0 %2960
    %2962 = vrot.lane.b32.xlu0 %v2923, 72
    %v2963 = vpop.permute.xlu0 %2962
    %2964 = vrot.lane.b32.xlu0 %v2924, 72
    %v2965 = vpop.permute.xlu0 %2964
    %2966 = vrot.lane.b32.xlu0 %v2925, 72
    %v2967 = vpop.permute.xlu0 %2966
    %2968 = vrot.lane.b32.xlu0 %v2926, 72
    %v2969 = vpop.permute.xlu0 %2968
    %2970 = vrot.lane.b32.xlu0 %v2927, 72
    %v2971 = vpop.permute.xlu0 %2970
    %2972 = vrot.lane.b32.xlu0 %v2928, 72
    %v2973 = vpop.permute.xlu0 %2972
    %2974 = vrot.lane.b32.xlu0 %v2929, 72
    %v2975 = vpop.permute.xlu0 %2974
    %2976 = vrot.lane.b32.xlu0 %v2930, 72
    %v2977 = vpop.permute.xlu0 %2976
    %2978 = vrot.lane.b32.xlu0 %v2931, 72
    %v2979 = vpop.permute.xlu0 %2978
    %vm2996 = vcmask 671296
    %2997 = vst.msk [vmem:[#allocation3 + $0x8] sm:$0xff] %vm2996, %v2949
    %2998 = vst.msk [vmem:[#allocation3 + $0x18] sm:$0xff] %vm2996, %v2951
    %2999 = vst.msk [vmem:[#allocation3 + $0x28] sm:$0xff] %vm2996, %v2953
    %3000 = vst.msk [vmem:[#allocation3 + $0x38] sm:$0xff] %vm2996, %v2955
    %3001 = vst.msk [vmem:[#allocation3 + $0x48] sm:$0xff] %vm2996, %v2957
    %3002 = vst.msk [vmem:[#allocation3 + $0x58] sm:$0xff] %vm2996, %v2959
    %3003 = vst.msk [vmem:[#allocation3 + $0x68] sm:$0xff] %vm2996, %v2961
    %3004 = vst.msk [vmem:[#allocation3 + $0x78] sm:$0xff] %vm2996, %v2963
    %3005 = vst.msk [vmem:[#allocation3 + $0x88] sm:$0xff] %vm2996, %v2965
    %3006 = vst.msk [vmem:[#allocation3 + $0x98] sm:$0xff] %vm2996, %v2967
    %3007 = vst.msk [vmem:[#allocation3 + $0xa8] sm:$0xff] %vm2996, %v2969
    %3008 = vst.msk [vmem:[#allocation3 + $0xb8] sm:$0xff] %vm2996, %v2971
    %3009 = vst.msk [vmem:[#allocation3 + $0xc8] sm:$0xff] %vm2996, %v2973
    %3010 = vst.msk [vmem:[#allocation3 + $0xd8] sm:$0xff] %vm2996, %v2975
    %3011 = vst.msk [vmem:[#allocation3 + $0xe8] sm:$0xff] %vm2996, %v2977
    %3012 = vst.msk [vmem:[#allocation3 + $0xf8] sm:$0xff] %vm2996, %v2979
    %v3013 = vld [vmem:[#allocation2 + $0x1a] sm:$0xff]
    %v3014 = vld [vmem:[#allocation2 + $0x22] sm:$0xff]
    %v3015 = vld [vmem:[#allocation2 + $0x2a] sm:$0xff]
    %v3016 = vld [vmem:[#allocation2 + $0x32] sm:$0xff]
    %v3017 = vld [vmem:[#allocation2 + $0x3a] sm:$0xff]
    %v3018 = vld [vmem:[#allocation2 + $0x42] sm:$0xff]
    %v3019 = vld [vmem:[#allocation2 + $0x4a] sm:$0xff]
    %v3020 = vld [vmem:[#allocation2 + $0x52] sm:$0xff]
    %v3021 = vld [vmem:[#allocation2 + $0x5a] sm:$0xff]
    %v3022 = vld [vmem:[#allocation2 + $0x62] sm:$0xff]
    %v3023 = vld [vmem:[#allocation2 + $0x6a] sm:$0xff]
    %v3024 = vld [vmem:[#allocation2 + $0x72] sm:$0xff]
    %v3025 = vld [vmem:[#allocation2 + $0x7a] sm:$0xff]
    %v3026 = vld [vmem:[#allocation2 + $0x82] sm:$0xff]
    %v3027 = vld [vmem:[#allocation2 + $0x8a] sm:$0xff]
    %v3028 = vld [vmem:[#allocation2 + $0x92] sm:$0xff]
    %3045 = vrot.lane.b32.xlu0 %v3013, 82
    %v3046 = vpop.permute.xlu0 %3045
    %3047 = vrot.lane.b32.xlu0 %v3014, 82
    %v3048 = vpop.permute.xlu0 %3047
    %3049 = vrot.lane.b32.xlu0 %v3015, 82
    %v3050 = vpop.permute.xlu0 %3049
    %3051 = vrot.lane.b32.xlu0 %v3016, 82
    %v3052 = vpop.permute.xlu0 %3051
    %3053 = vrot.lane.b32.xlu0 %v3017, 82
    %v3054 = vpop.permute.xlu0 %3053
    %3055 = vrot.lane.b32.xlu0 %v3018, 82
    %v3056 = vpop.permute.xlu0 %3055
    %3057 = vrot.lane.b32.xlu0 %v3019, 82
    %v3058 = vpop.permute.xlu0 %3057
    %3059 = vrot.lane.b32.xlu0 %v3020, 82
    %v3060 = vpop.permute.xlu0 %3059
    %3061 = vrot.lane.b32.xlu0 %v3021, 82
    %v3062 = vpop.permute.xlu0 %3061
    %3063 = vrot.lane.b32.xlu0 %v3022, 82
    %v3064 = vpop.permute.xlu0 %3063
    %3065 = vrot.lane.b32.xlu0 %v3023, 82
    %v3066 = vpop.permute.xlu0 %3065
    %3067 = vrot.lane.b32.xlu0 %v3024, 82
    %v3068 = vpop.permute.xlu0 %3067
    %3069 = vrot.lane.b32.xlu0 %v3025, 82
    %v3070 = vpop.permute.xlu0 %3069
    %3071 = vrot.lane.b32.xlu0 %v3026, 82
    %v3072 = vpop.permute.xlu0 %3071
    %3073 = vrot.lane.b32.xlu0 %v3027, 82
    %v3074 = vpop.permute.xlu0 %3073
    %3075 = vrot.lane.b32.xlu0 %v3028, 82
    %v3076 = vpop.permute.xlu0 %3075
    %vm3093 = vcmask 753296
    %3094 = vst.msk [vmem:[#allocation3 + $0x8] sm:$0xff] %vm3093, %v3046
    %3095 = vst.msk [vmem:[#allocation3 + $0x18] sm:$0xff] %vm3093, %v3048
    %3096 = vst.msk [vmem:[#allocation3 + $0x28] sm:$0xff] %vm3093, %v3050
    %3097 = vst.msk [vmem:[#allocation3 + $0x38] sm:$0xff] %vm3093, %v3052
    %3098 = vst.msk [vmem:[#allocation3 + $0x48] sm:$0xff] %vm3093, %v3054
    %3099 = vst.msk [vmem:[#allocation3 + $0x58] sm:$0xff] %vm3093, %v3056
    %3100 = vst.msk [vmem:[#allocation3 + $0x68] sm:$0xff] %vm3093, %v3058
    %3101 = vst.msk [vmem:[#allocation3 + $0x78] sm:$0xff] %vm3093, %v3060
    %3102 = vst.msk [vmem:[#allocation3 + $0x88] sm:$0xff] %vm3093, %v3062
    %3103 = vst.msk [vmem:[#allocation3 + $0x98] sm:$0xff] %vm3093, %v3064
    %3104 = vst.msk [vmem:[#allocation3 + $0xa8] sm:$0xff] %vm3093, %v3066
    %3105 = vst.msk [vmem:[#allocation3 + $0xb8] sm:$0xff] %vm3093, %v3068
    %3106 = vst.msk [vmem:[#allocation3 + $0xc8] sm:$0xff] %vm3093, %v3070
    %3107 = vst.msk [vmem:[#allocation3 + $0xd8] sm:$0xff] %vm3093, %v3072
    %3108 = vst.msk [vmem:[#allocation3 + $0xe8] sm:$0xff] %vm3093, %v3074
    %3109 = vst.msk [vmem:[#allocation3 + $0xf8] sm:$0xff] %vm3093, %v3076
    %v3110 = vld [vmem:[#allocation2 + $0x1b] sm:$0xff]
    %v3111 = vld [vmem:[#allocation2 + $0x23] sm:$0xff]
    %v3112 = vld [vmem:[#allocation2 + $0x2b] sm:$0xff]
    %v3113 = vld [vmem:[#allocation2 + $0x33] sm:$0xff]
    %v3114 = vld [vmem:[#allocation2 + $0x3b] sm:$0xff]
    %v3115 = vld [vmem:[#allocation2 + $0x43] sm:$0xff]
    %v3116 = vld [vmem:[#allocation2 + $0x4b] sm:$0xff]
    %v3117 = vld [vmem:[#allocation2 + $0x53] sm:$0xff]
    %v3118 = vld [vmem:[#allocation2 + $0x5b] sm:$0xff]
    %v3119 = vld [vmem:[#allocation2 + $0x63] sm:$0xff]
    %v3120 = vld [vmem:[#allocation2 + $0x6b] sm:$0xff]
    %v3121 = vld [vmem:[#allocation2 + $0x73] sm:$0xff]
    %v3122 = vld [vmem:[#allocation2 + $0x7b] sm:$0xff]
    %v3123 = vld [vmem:[#allocation2 + $0x83] sm:$0xff]
    %v3124 = vld [vmem:[#allocation2 + $0x8b] sm:$0xff]
    %v3125 = vld [vmem:[#allocation2 + $0x93] sm:$0xff]
    %3142 = vrot.lane.b32.xlu0 %v3110, 92
    %v3143 = vpop.permute.xlu0 %3142
    %3144 = vrot.lane.b32.xlu0 %v3111, 92
    %v3145 = vpop.permute.xlu0 %3144
    %3146 = vrot.lane.b32.xlu0 %v3112, 92
    %v3147 = vpop.permute.xlu0 %3146
    %3148 = vrot.lane.b32.xlu0 %v3113, 92
    %v3149 = vpop.permute.xlu0 %3148
    %3150 = vrot.lane.b32.xlu0 %v3114, 92
    %v3151 = vpop.permute.xlu0 %3150
    %3152 = vrot.lane.b32.xlu0 %v3115, 92
    %v3153 = vpop.permute.xlu0 %3152
    %3154 = vrot.lane.b32.xlu0 %v3116, 92
    %v3155 = vpop.permute.xlu0 %3154
    %3156 = vrot.lane.b32.xlu0 %v3117, 92
    %v3157 = vpop.permute.xlu0 %3156
    %3158 = vrot.lane.b32.xlu0 %v3118, 92
    %v3159 = vpop.permute.xlu0 %3158
    %3160 = vrot.lane.b32.xlu0 %v3119, 92
    %v3161 = vpop.permute.xlu0 %3160
    %3162 = vrot.lane.b32.xlu0 %v3120, 92
    %v3163 = vpop.permute.xlu0 %3162
    %3164 = vrot.lane.b32.xlu0 %v3121, 92
    %v3165 = vpop.permute.xlu0 %3164
    %3166 = vrot.lane.b32.xlu0 %v3122, 92
    %v3167 = vpop.permute.xlu0 %3166
    %3168 = vrot.lane.b32.xlu0 %v3123, 92
    %v3169 = vpop.permute.xlu0 %3168
    %3170 = vrot.lane.b32.xlu0 %v3124, 92
    %v3171 = vpop.permute.xlu0 %3170
    %3172 = vrot.lane.b32.xlu0 %v3125, 92
    %v3173 = vpop.permute.xlu0 %3172
    %vm3190 = vcmask 835296
    %3191 = vst.msk [vmem:[#allocation3 + $0x8] sm:$0xff] %vm3190, %v3143
    %3192 = vst.msk [vmem:[#allocation3 + $0x18] sm:$0xff] %vm3190, %v3145
    %3193 = vst.msk [vmem:[#allocation3 + $0x28] sm:$0xff] %vm3190, %v3147
    %3194 = vst.msk [vmem:[#allocation3 + $0x38] sm:$0xff] %vm3190, %v3149
    %3195 = vst.msk [vmem:[#allocation3 + $0x48] sm:$0xff] %vm3190, %v3151
    %3196 = vst.msk [vmem:[#allocation3 + $0x58] sm:$0xff] %vm3190, %v3153
    %3197 = vst.msk [vmem:[#allocation3 + $0x68] sm:$0xff] %vm3190, %v3155
    %3198 = vst.msk [vmem:[#allocation3 + $0x78] sm:$0xff] %vm3190, %v3157
    %3199 = vst.msk [vmem:[#allocation3 + $0x88] sm:$0xff] %vm3190, %v3159
    %3200 = vst.msk [vmem:[#allocation3 + $0x98] sm:$0xff] %vm3190, %v3161
    %3201 = vst.msk [vmem:[#allocation3 + $0xa8] sm:$0xff] %vm3190, %v3163
    %3202 = vst.msk [vmem:[#allocation3 + $0xb8] sm:$0xff] %vm3190, %v3165
    %3203 = vst.msk [vmem:[#allocation3 + $0xc8] sm:$0xff] %vm3190, %v3167
    %3204 = vst.msk [vmem:[#allocation3 + $0xd8] sm:$0xff] %vm3190, %v3169
    %3205 = vst.msk [vmem:[#allocation3 + $0xe8] sm:$0xff] %vm3190, %v3171
    %3206 = vst.msk [vmem:[#allocation3 + $0xf8] sm:$0xff] %vm3190, %v3173
    %v3207 = vld [vmem:[#allocation3] sm:$0xff]
    %v3208 = vld [vmem:[#allocation3 + $0x8] sm:$0xff]
    %v3209 = vld [vmem:[#allocation3 + $0x10] sm:$0xff]
    %v3210 = vld [vmem:[#allocation3 + $0x18] sm:$0xff]
    %v3211 = vld [vmem:[#allocation3 + $0x20] sm:$0xff]
    %v3212 = vld [vmem:[#allocation3 + $0x28] sm:$0xff]
    %v3213 = vld [vmem:[#allocation3 + $0x30] sm:$0xff]
    %v3214 = vld [vmem:[#allocation3 + $0x38] sm:$0xff]
    %v3215 = vld [vmem:[#allocation3 + $0x40] sm:$0xff]
    %v3216 = vld [vmem:[#allocation3 + $0x48] sm:$0xff]
    %v3217 = vld [vmem:[#allocation3 + $0x50] sm:$0xff]
    %v3218 = vld [vmem:[#allocation3 + $0x58] sm:$0xff]
    %v3219 = vld [vmem:[#allocation3 + $0x60] sm:$0xff]
    %v3220 = vld [vmem:[#allocation3 + $0x68] sm:$0xff]
    %v3221 = vld [vmem:[#allocation3 + $0x70] sm:$0xff]
    %v3222 = vld [vmem:[#allocation3 + $0x78] sm:$0xff]
    %v3223 = vld [vmem:[#allocation3 + $0x80] sm:$0xff]
    %v3224 = vld [vmem:[#allocation3 + $0x88] sm:$0xff]
    %v3225 = vld [vmem:[#allocation3 + $0x90] sm:$0xff]
    %v3226 = vld [vmem:[#allocation3 + $0x98] sm:$0xff]
    %v3227 = vld [vmem:[#allocation3 + $0xa0] sm:$0xff]
    %v3228 = vld [vmem:[#allocation3 + $0xa8] sm:$0xff]
    %v3229 = vld [vmem:[#allocation3 + $0xb0] sm:$0xff]
    %v3230 = vld [vmem:[#allocation3 + $0xb8] sm:$0xff]
    %v3231 = vld [vmem:[#allocation3 + $0xc0] sm:$0xff]
    %v3232 = vld [vmem:[#allocation3 + $0xc8] sm:$0xff]
    %v3233 = vld [vmem:[#allocation3 + $0xd0] sm:$0xff]
    %v3234 = vld [vmem:[#allocation3 + $0xd8] sm:$0xff]
    %v3235 = vld [vmem:[#allocation3 + $0xe0] sm:$0xff]
    %v3236 = vld [vmem:[#allocation3 + $0xe8] sm:$0xff]
    %v3237 = vld [vmem:[#allocation3 + $0xf0] sm:$0xff]
    %v3238 = vld [vmem:[#allocation3 + $0xf8] sm:$0xff]
    %v3239 = vld [vmem:[%s6] sm:$0xff]
    %v3240 = vld [vmem:[%s6 + $0x8] sm:$0xff]
    %v3241 = vld [vmem:[%s6 + $0x10] sm:$0xff]
    %v3242 = vld [vmem:[%s6 + $0x18] sm:$0xff]
    %v3243 = vld [vmem:[%s6 + $0x20] sm:$0xff]
    %v3244 = vld [vmem:[%s6 + $0x28] sm:$0xff]
    %v3245 = vld [vmem:[%s6 + $0x30] sm:$0xff]
    %v3246 = vld [vmem:[%s6 + $0x38] sm:$0xff]
    %v3247 = vld [vmem:[%s6 + $0x40] sm:$0xff]
    %v3248 = vld [vmem:[%s6 + $0x48] sm:$0xff]
    %v3249 = vld [vmem:[%s6 + $0x50] sm:$0xff]
    %v3250 = vld [vmem:[%s6 + $0x58] sm:$0xff]
    %v3251 = vld [vmem:[%s6 + $0x60] sm:$0xff]
    %v3252 = vld [vmem:[%s6 + $0x68] sm:$0xff]
    %v3253 = vld [vmem:[%s6 + $0x70] sm:$0xff]
    %v3254 = vld [vmem:[%s6 + $0x78] sm:$0xff]
    %v3255 = vld [vmem:[%s6 + $0x80] sm:$0xff]
    %v3256 = vld [vmem:[%s6 + $0x88] sm:$0xff]
    %v3257 = vld [vmem:[%s6 + $0x90] sm:$0xff]
    %v3258 = vld [vmem:[%s6 + $0x98] sm:$0xff]
    %v3259 = vld [vmem:[%s6 + $0xa0] sm:$0xff]
    %v3260 = vld [vmem:[%s6 + $0xa8] sm:$0xff]
    %v3261 = vld [vmem:[%s6 + $0xb0] sm:$0xff]
    %v3262 = vld [vmem:[%s6 + $0xb8] sm:$0xff]
    %v3263 = vld [vmem:[%s6 + $0xc0] sm:$0xff]
    %v3264 = vld [vmem:[%s6 + $0xc8] sm:$0xff]
    %v3265 = vld [vmem:[%s6 + $0xd0] sm:$0xff]
    %v3266 = vld [vmem:[%s6 + $0xd8] sm:$0xff]
    %v3267 = vld [vmem:[%s6 + $0xe0] sm:$0x3f]
    %s3268 = sld [smem:[#allocation8]]
    %v3269 = vstv %s3268
    %vm3270 = vcmask 834560
    %v3272 = vsel %vm3270, %v3208, 0
    %v3275 = vsel %vm3270, %v3210, 0
    %v3278 = vsel %vm3270, %v3212, 0
    %v3281 = vsel %vm3270, %v3214, 0
    %v3284 = vsel %vm3270, %v3216, 0
    %v3287 = vsel %vm3270, %v3218, 0
    %v3290 = vsel %vm3270, %v3220, 0
    %v3293 = vsel %vm3270, %v3222, 0
    %v3296 = vsel %vm3270, %v3224, 0
    %v3299 = vsel %vm3270, %v3226, 0
    %v3302 = vsel %vm3270, %v3228, 0
    %v3305 = vsel %vm3270, %v3230, 0
    %v3308 = vsel %vm3270, %v3232, 0
    %v3311 = vsel %vm3270, %v3234, 0
    %v3314 = vsel %vm3270, %v3236, 0
    %v3317 = vsel %vm3270, %v3238, 0
    %vm3319 = vcmask 1045504
    %v3321 = vsel %vm3319, %v3267, 0
    %3323 = vmatprep.subr.mxu0 0.0
    %3324 = vmatpush1.msra.mxu0 %v3254
    %3325 = vmatprep.subr.mxu0 0.0
    %3326 = vmatpush1.msra.mxu0 %v3253
    %3327 = vmatprep.subr.mxu0 0.0
    %3328 = vmatpush1.msra.mxu0 %v3252
    %3329 = vmatprep.subr.mxu0 0.0
    %3330 = vmatpush1.msra.mxu0 %v3251
    %3331 = vmatprep.subr.mxu0 0.0
    %3332 = vmatpush1.msra.mxu0 %v3250
    %3333 = vmatprep.subr.mxu0 0.0
    %3334 = vmatpush1.msra.mxu0 %v3249
    %3335 = vmatprep.subr.mxu0 0.0
    %3336 = vmatpush1.msra.mxu0 %v3248
    %3337 = vmatprep.subr.mxu0 0.0
    %3338 = vmatpush1.msra.mxu0 %v3247
    %3339 = vmatprep.subr.mxu0 0.0
    %3340 = vmatpush1.msra.mxu0 %v3246
    %3341 = vmatprep.subr.mxu0 0.0
    %3342 = vmatpush1.msra.mxu0 %v3245
    %3343 = vmatprep.subr.mxu0 0.0
    %3344 = vmatpush1.msra.mxu0 %v3244
    %3345 = vmatprep.subr.mxu0 0.0
    %3346 = vmatpush1.msra.mxu0 %v3243
    %3347 = vmatprep.subr.mxu0 0.0
    %3348 = vmatpush1.msra.mxu0 %v3242
    %3349 = vmatprep.subr.mxu0 0.0
    %3350 = vmatpush1.msra.mxu0 %v3241
    %3351 = vmatprep.subr.mxu0 0.0
    %3352 = vmatpush1.msra.mxu0 %v3240
    %3353 = vmatprep.subr.mxu0 0.0
    %3354 = vmatpush1.msra.mxu0 %v3239
    %3355 = vmatprep.subr.mxu0 0.0
    %3356 = vmatpush2.msra.mxu0 0.0
    %3357 = vmatprep.subr.mxu0 0.0
    %3358 = vmatpush2.msra.mxu0 0.0
    %3359 = vmatprep.subr.mxu0 0.0
    %3360 = vmatpush2.msra.mxu0 0.0
    %3361 = vmatprep.subr.mxu0 0.0
    %3362 = vmatpush2.msra.mxu0 %v3321
    %3363 = vmatprep.subr.mxu0 0.0
    %3364 = vmatpush2.msra.mxu0 %v3266
    %3365 = vmatprep.subr.mxu0 0.0
    %3366 = vmatpush2.msra.mxu0 %v3265
    %3367 = vmatprep.subr.mxu0 0.0
    %3368 = vmatpush2.msra.mxu0 %v3264
    %3369 = vmatprep.subr.mxu0 0.0
    %3370 = vmatpush2.msra.mxu0 %v3263
    %3371 = vmatprep.subr.mxu0 0.0
    %3372 = vmatpush2.msra.mxu0 %v3262
    %3373 = vmatprep.subr.mxu0 0.0
    %3374 = vmatpush2.msra.mxu0 %v3261
    %3375 = vmatprep.subr.mxu0 0.0
    %3376 = vmatpush2.msra.mxu0 %v3260
    %3377 = vmatprep.subr.mxu0 0.0
    %3378 = vmatpush2.msra.mxu0 %v3259
    %3379 = vmatprep.subr.mxu0 0.0
    %3380 = vmatpush2.msra.mxu0 %v3258
    %3381 = vmatprep.subr.mxu0 0.0
    %3382 = vmatpush2.msra.mxu0 %v3257
    %3383 = vmatprep.subr.mxu0 0.0
    %3384 = vmatpush2.msra.mxu0 %v3256
    %3385 = vmatprep.subr.mxu0 0.0
    %3386 = vmatpush2.msra.mxu0 %v3255
    %3387 = vmatprep.mubr.f32.mxu0 %v3272
    %3388 = vmatmul.mubr.f32.gmra.mxu0 %v3207
    %v3389 = vpop.f32.mrf.mxu0
    %v3390 = vadd.f32 %v3269, %v3389
    %v3391 = vpop.f32.mrf.mxu0
    %3392 = vmatprep.mubr.f32.mxu0 %v3275
    %3393 = vmatmul.mubr.f32.gmra.mxu0 %v3209
    %v3394 = vpop.f32.mrf.mxu0
    %v3395 = vadd.f32 %v3269, %v3394
    %v3396 = vpop.f32.mrf.mxu0
    %3397 = vmatprep.mubr.f32.mxu0 %v3278
    %3398 = vmatmul.mubr.f32.gmra.mxu0 %v3211
    %v3399 = vpop.f32.mrf.mxu0
    %v3400 = vadd.f32 %v3269, %v3399
    %v3401 = vpop.f32.mrf.mxu0
    %3402 = vmatprep.mubr.f32.mxu0 %v3281
    %3403 = vmatmul.mubr.f32.gmra.mxu0 %v3213
    %v3404 = vpop.f32.mrf.mxu0
    %v3405 = vadd.f32 %v3269, %v3404
    %v3406 = vpop.f32.mrf.mxu0
    %3407 = vmatprep.mubr.f32.mxu0 %v3284
    %3408 = vmatmul.mubr.f32.gmra.mxu0 %v3215
    %v3409 = vpop.f32.mrf.mxu0
    %v3410 = vadd.f32 %v3269, %v3409
    %v3411 = vpop.f32.mrf.mxu0
    %3412 = vmatprep.mubr.f32.mxu0 %v3287
    %3413 = vmatmul.mubr.f32.gmra.mxu0 %v3217
    %v3414 = vpop.f32.mrf.mxu0
    %v3415 = vadd.f32 %v3269, %v3414
    %v3416 = vpop.f32.mrf.mxu0
    %3417 = vmatprep.mubr.f32.mxu0 %v3290
    %3418 = vmatmul.mubr.f32.gmra.mxu0 %v3219
    %v3419 = vpop.f32.mrf.mxu0
    %v3420 = vadd.f32 %v3269, %v3419
    %v3421 = vpop.f32.mrf.mxu0
    %3422 = vmatprep.mubr.f32.mxu0 %v3293
    %3423 = vmatmul.mubr.f32.gmra.mxu0 %v3221
    %v3424 = vpop.f32.mrf.mxu0
    %v3425 = vadd.f32 %v3269, %v3424
    %v3426 = vpop.f32.mrf.mxu0
    %3427 = vmatprep.mubr.f32.mxu0 %v3296
    %3428 = vmatmul.mubr.f32.gmra.mxu0 %v3223
    %v3429 = vpop.f32.mrf.mxu0
    %v3430 = vadd.f32 %v3269, %v3429
    %v3431 = vpop.f32.mrf.mxu0
    %3432 = vmatprep.mubr.f32.mxu0 %v3299
    %3433 = vmatmul.mubr.f32.gmra.mxu0 %v3225
    %v3434 = vpop.f32.mrf.mxu0
    %v3435 = vadd.f32 %v3269, %v3434
    %v3436 = vpop.f32.mrf.mxu0
    %3437 = vmatprep.mubr.f32.mxu0 %v3302
    %3438 = vmatmul.mubr.f32.gmra.mxu0 %v3227
    %v3439 = vpop.f32.mrf.mxu0
    %v3440 = vadd.f32 %v3269, %v3439
    %v3441 = vpop.f32.mrf.mxu0
    %3442 = vmatprep.mubr.f32.mxu0 %v3305
    %3443 = vmatmul.mubr.f32.gmra.mxu0 %v3229
    %v3444 = vpop.f32.mrf.mxu0
    %v3445 = vadd.f32 %v3269, %v3444
    %v3446 = vpop.f32.mrf.mxu0
    %3447 = vmatprep.mubr.f32.mxu0 %v3308
    %3448 = vmatmul.mubr.f32.gmra.mxu0 %v3231
    %v3449 = vpop.f32.mrf.mxu0
    %v3450 = vadd.f32 %v3269, %v3449
    %v3451 = vpop.f32.mrf.mxu0
    %3452 = vmatprep.mubr.f32.mxu0 %v3311
    %3453 = vmatmul.mubr.f32.gmra.mxu0 %v3233
    %v3454 = vpop.f32.mrf.mxu0
    %v3455 = vadd.f32 %v3269, %v3454
    %v3456 = vpop.f32.mrf.mxu0
    %3457 = vmatprep.mubr.f32.mxu0 %v3314
    %3458 = vmatmul.mubr.f32.gmra.mxu0 %v3235
    %v3459 = vpop.f32.mrf.mxu0
    %v3460 = vadd.f32 %v3269, %v3459
    %v3461 = vpop.f32.mrf.mxu0
    %3462 = vmatprep.mubr.f32.mxu0 %v3317
    %3463 = vmatmul.mubr.f32.gmra.mxu0 %v3237
    %v3464 = vpop.f32.mrf.mxu0
    %v3465 = vadd.f32 %v3269, %v3464
    %v3466 = vpop.f32.mrf.mxu0
    %3467 = vdwg.mxu0
    %v3468 = vmax.f32 %v3390, 0.0
    %v3469 = vmax.f32 %v3395, 0.0
    %v3470 = vmax.f32 %v3400, 0.0
    %v3471 = vmax.f32 %v3405, 0.0
    %v3472 = vmax.f32 %v3410, 0.0
    %v3473 = vmax.f32 %v3415, 0.0
    %v3474 = vmax.f32 %v3420, 0.0
    %v3475 = vmax.f32 %v3425, 0.0
    %v3476 = vmax.f32 %v3430, 0.0
    %v3477 = vmax.f32 %v3435, 0.0
    %v3478 = vmax.f32 %v3440, 0.0
    %v3479 = vmax.f32 %v3445, 0.0
    %v3480 = vmax.f32 %v3450, 0.0
    %v3481 = vmax.f32 %v3455, 0.0
    %v3482 = vmax.f32 %v3460, 0.0
    %v3483 = vmax.f32 %v3465, 0.0
    %v3484 = vsel %vm956, %v3468, 0.0
    %v3485 = vsel %vm957, %v3469, 0.0
    %v3486 = vsel %vm958, %v3470, 0.0
    %v3487 = vsel %vm959, %v3471, 0.0
    %v3488 = vsel %vm960, %v3472, 0.0
    %v3489 = vsel %vm961, %v3473, 0.0
    %v3490 = vsel %vm962, %v3474, 0.0
    %v3491 = vsel %vm963, %v3475, 0.0
    %v3492 = vsel %vm964, %v3476, 0.0
    %v3493 = vsel %vm965, %v3477, 0.0
    %v3494 = vsel %vm966, %v3478, 0.0
    %v3495 = vsel %vm967, %v3479, 0.0
    %v3496 = vsel %vm968, %v3480, 0.0
    %v3497 = vsel %vm969, %v3481, 0.0
    %v3498 = vsel %vm970, %v3482, 0.0
    %v3499 = vsel %vm971, %v3483, 0.0
    %3500 = vst.msk [vmem:[#allocation2 + $0x10] sm:$0xff] %vm130, %v3484
    %3501 = vst.msk [vmem:[#allocation2 + $0x18] sm:$0xff] %vm130, %v3485
    %3502 = vst.msk [vmem:[#allocation2 + $0x20] sm:$0xff] %vm130, %v3486
    %3503 = vst.msk [vmem:[#allocation2 + $0x28] sm:$0xff] %vm130, %v3487
    %3504 = vst.msk [vmem:[#allocation2 + $0x30] sm:$0xff] %vm130, %v3488
    %3505 = vst.msk [vmem:[#allocation2 + $0x38] sm:$0xff] %vm130, %v3489
    %3506 = vst.msk [vmem:[#allocation2 + $0x40] sm:$0xff] %vm130, %v3490
    %3507 = vst.msk [vmem:[#allocation2 + $0x48] sm:$0xff] %vm130, %v3491
    %3508 = vst.msk [vmem:[#allocation2 + $0x50] sm:$0xff] %vm130, %v3492
    %3509 = vst.msk [vmem:[#allocation2 + $0x58] sm:$0xff] %vm130, %v3493
    %3510 = vst.msk [vmem:[#allocation2 + $0x60] sm:$0xff] %vm130, %v3494
    %3511 = vst.msk [vmem:[#allocation2 + $0x68] sm:$0xff] %vm130, %v3495
    %3512 = vst.msk [vmem:[#allocation2 + $0x70] sm:$0xff] %vm130, %v3496
    %3513 = vst.msk [vmem:[#allocation2 + $0x78] sm:$0xff] %vm130, %v3497
    %3514 = vst.msk [vmem:[#allocation2 + $0x80] sm:$0xff] %vm130, %v3498
    %3515 = vst.msk [vmem:[#allocation2 + $0x88] sm:$0xff] %vm130, %v3499
    %v3516 = vld [vmem:[#allocation2 + $0x5] sm:$0xff]
    %v3517 = vld [vmem:[#allocation2 + $0xd] sm:$0xff]
    %v3518 = vld [vmem:[#allocation2 + $0x15] sm:$0xff]
    %v3519 = vld [vmem:[#allocation2 + $0x1d] sm:$0xff]
    %v3520 = vld [vmem:[#allocation2 + $0x25] sm:$0xff]
    %v3521 = vld [vmem:[#allocation2 + $0x2d] sm:$0xff]
    %v3522 = vld [vmem:[#allocation2 + $0x35] sm:$0xff]
    %v3523 = vld [vmem:[#allocation2 + $0x3d] sm:$0xff]
    %v3524 = vld [vmem:[#allocation2 + $0x45] sm:$0xff]
    %v3525 = vld [vmem:[#allocation2 + $0x4d] sm:$0xff]
    %v3526 = vld [vmem:[#allocation2 + $0x55] sm:$0xff]
    %v3527 = vld [vmem:[#allocation2 + $0x5d] sm:$0xff]
    %v3528 = vld [vmem:[#allocation2 + $0x65] sm:$0xff]
    %v3529 = vld [vmem:[#allocation2 + $0x6d] sm:$0xff]
    %v3530 = vld [vmem:[#allocation2 + $0x75] sm:$0xff]
    %v3531 = vld [vmem:[#allocation2 + $0x7d] sm:$0xff]
    %3532 = vst.msk [vmem:[#allocation3] sm:$0xff] %vm130, %v3516
    %3533 = vst.msk [vmem:[#allocation3 + $0x10] sm:$0xff] %vm130, %v3517
    %3534 = vst.msk [vmem:[#allocation3 + $0x20] sm:$0xff] %vm130, %v3518
    %3535 = vst.msk [vmem:[#allocation3 + $0x30] sm:$0xff] %vm130, %v3519
    %3536 = vst.msk [vmem:[#allocation3 + $0x40] sm:$0xff] %vm130, %v3520
    %3537 = vst.msk [vmem:[#allocation3 + $0x50] sm:$0xff] %vm130, %v3521
    %3538 = vst.msk [vmem:[#allocation3 + $0x60] sm:$0xff] %vm130, %v3522
    %3539 = vst.msk [vmem:[#allocation3 + $0x70] sm:$0xff] %vm130, %v3523
    %3540 = vst.msk [vmem:[#allocation3 + $0x80] sm:$0xff] %vm130, %v3524
    %3541 = vst.msk [vmem:[#allocation3 + $0x90] sm:$0xff] %vm130, %v3525
    %3542 = vst.msk [vmem:[#allocation3 + $0xa0] sm:$0xff] %vm130, %v3526
    %3543 = vst.msk [vmem:[#allocation3 + $0xb0] sm:$0xff] %vm130, %v3527
    %3544 = vst.msk [vmem:[#allocation3 + $0xc0] sm:$0xff] %vm130, %v3528
    %3545 = vst.msk [vmem:[#allocation3 + $0xd0] sm:$0xff] %vm130, %v3529
    %3546 = vst.msk [vmem:[#allocation3 + $0xe0] sm:$0xff] %vm130, %v3530
    %3547 = vst.msk [vmem:[#allocation3 + $0xf0] sm:$0xff] %vm130, %v3531
    %v3548 = vld [vmem:[#allocation2 + $0x6] sm:$0xff]
    %v3549 = vld [vmem:[#allocation2 + $0xe] sm:$0xff]
    %v3550 = vld [vmem:[#allocation2 + $0x16] sm:$0xff]
    %v3551 = vld [vmem:[#allocation2 + $0x1e] sm:$0xff]
    %v3552 = vld [vmem:[#allocation2 + $0x26] sm:$0xff]
    %v3553 = vld [vmem:[#allocation2 + $0x2e] sm:$0xff]
    %v3554 = vld [vmem:[#allocation2 + $0x36] sm:$0xff]
    %v3555 = vld [vmem:[#allocation2 + $0x3e] sm:$0xff]
    %v3556 = vld [vmem:[#allocation2 + $0x46] sm:$0xff]
    %v3557 = vld [vmem:[#allocation2 + $0x4e] sm:$0xff]
    %v3558 = vld [vmem:[#allocation2 + $0x56] sm:$0xff]
    %v3559 = vld [vmem:[#allocation2 + $0x5e] sm:$0xff]
    %v3560 = vld [vmem:[#allocation2 + $0x66] sm:$0xff]
    %v3561 = vld [vmem:[#allocation2 + $0x6e] sm:$0xff]
    %v3562 = vld [vmem:[#allocation2 + $0x76] sm:$0xff]
    %v3563 = vld [vmem:[#allocation2 + $0x7e] sm:$0xff]
    %3580 = vrot.lane.b32.xlu0 %v3548, 10
    %v3581 = vpop.permute.xlu0 %3580
    %3582 = vrot.lane.b32.xlu0 %v3549, 10
    %v3583 = vpop.permute.xlu0 %3582
    %3584 = vrot.lane.b32.xlu0 %v3550, 10
    %v3585 = vpop.permute.xlu0 %3584
    %3586 = vrot.lane.b32.xlu0 %v3551, 10
    %v3587 = vpop.permute.xlu0 %3586
    %3588 = vrot.lane.b32.xlu0 %v3552, 10
    %v3589 = vpop.permute.xlu0 %3588
    %3590 = vrot.lane.b32.xlu0 %v3553, 10
    %v3591 = vpop.permute.xlu0 %3590
    %3592 = vrot.lane.b32.xlu0 %v3554, 10
    %v3593 = vpop.permute.xlu0 %3592
    %3594 = vrot.lane.b32.xlu0 %v3555, 10
    %v3595 = vpop.permute.xlu0 %3594
    %3596 = vrot.lane.b32.xlu0 %v3556, 10
    %v3597 = vpop.permute.xlu0 %3596
    %3598 = vrot.lane.b32.xlu0 %v3557, 10
    %v3599 = vpop.permute.xlu0 %3598
    %3600 = vrot.lane.b32.xlu0 %v3558, 10
    %v3601 = vpop.permute.xlu0 %3600
    %3602 = vrot.lane.b32.xlu0 %v3559, 10
    %v3603 = vpop.permute.xlu0 %3602
    %3604 = vrot.lane.b32.xlu0 %v3560, 10
    %v3605 = vpop.permute.xlu0 %3604
    %3606 = vrot.lane.b32.xlu0 %v3561, 10
    %v3607 = vpop.permute.xlu0 %3606
    %3608 = vrot.lane.b32.xlu0 %v3562, 10
    %v3609 = vpop.permute.xlu0 %3608
    %3610 = vrot.lane.b32.xlu0 %v3563, 10
    %v3611 = vpop.permute.xlu0 %3610
    %3628 = vst.msk [vmem:[#allocation3] sm:$0xff] %vm1136, %v3581
    %3629 = vst.msk [vmem:[#allocation3 + $0x10] sm:$0xff] %vm1136, %v3583
    %3630 = vst.msk [vmem:[#allocation3 + $0x20] sm:$0xff] %vm1136, %v3585
    %3631 = vst.msk [vmem:[#allocation3 + $0x30] sm:$0xff] %vm1136, %v3587
    %3632 = vst.msk [vmem:[#allocation3 + $0x40] sm:$0xff] %vm1136, %v3589
    %3633 = vst.msk [vmem:[#allocation3 + $0x50] sm:$0xff] %vm1136, %v3591
    %3634 = vst.msk [vmem:[#allocation3 + $0x60] sm:$0xff] %vm1136, %v3593
    %3635 = vst.msk [vmem:[#allocation3 + $0x70] sm:$0xff] %vm1136, %v3595
    %3636 = vst.msk [vmem:[#allocation3 + $0x80] sm:$0xff] %vm1136, %v3597
    %3637 = vst.msk [vmem:[#allocation3 + $0x90] sm:$0xff] %vm1136, %v3599
    %3638 = vst.msk [vmem:[#allocation3 + $0xa0] sm:$0xff] %vm1136, %v3601
    %3639 = vst.msk [vmem:[#allocation3 + $0xb0] sm:$0xff] %vm1136, %v3603
    %3640 = vst.msk [vmem:[#allocation3 + $0xc0] sm:$0xff] %vm1136, %v3605
    %3641 = vst.msk [vmem:[#allocation3 + $0xd0] sm:$0xff] %vm1136, %v3607
    %3642 = vst.msk [vmem:[#allocation3 + $0xe0] sm:$0xff] %vm1136, %v3609
    %3643 = vst.msk [vmem:[#allocation3 + $0xf0] sm:$0xff] %vm1136, %v3611
    %v3644 = vld [vmem:[#allocation2 + $0x7] sm:$0xff]
    %v3645 = vld [vmem:[#allocation2 + $0xf] sm:$0xff]
    %v3646 = vld [vmem:[#allocation2 + $0x17] sm:$0xff]
    %v3647 = vld [vmem:[#allocation2 + $0x1f] sm:$0xff]
    %v3648 = vld [vmem:[#allocation2 + $0x27] sm:$0xff]
    %v3649 = vld [vmem:[#allocation2 + $0x2f] sm:$0xff]
    %v3650 = vld [vmem:[#allocation2 + $0x37] sm:$0xff]
    %v3651 = vld [vmem:[#allocation2 + $0x3f] sm:$0xff]
    %v3652 = vld [vmem:[#allocation2 + $0x47] sm:$0xff]
    %v3653 = vld [vmem:[#allocation2 + $0x4f] sm:$0xff]
    %v3654 = vld [vmem:[#allocation2 + $0x57] sm:$0xff]
    %v3655 = vld [vmem:[#allocation2 + $0x5f] sm:$0xff]
    %v3656 = vld [vmem:[#allocation2 + $0x67] sm:$0xff]
    %v3657 = vld [vmem:[#allocation2 + $0x6f] sm:$0xff]
    %v3658 = vld [vmem:[#allocation2 + $0x77] sm:$0xff]
    %v3659 = vld [vmem:[#allocation2 + $0x7f] sm:$0xff]
    %3676 = vrot.lane.b32.xlu0 %v3644, 20
    %v3677 = vpop.permute.xlu0 %3676
    %3678 = vrot.lane.b32.xlu0 %v3645, 20
    %v3679 = vpop.permute.xlu0 %3678
    %3680 = vrot.lane.b32.xlu0 %v3646, 20
    %v3681 = vpop.permute.xlu0 %3680
    %3682 = vrot.lane.b32.xlu0 %v3647, 20
    %v3683 = vpop.permute.xlu0 %3682
    %3684 = vrot.lane.b32.xlu0 %v3648, 20
    %v3685 = vpop.permute.xlu0 %3684
    %3686 = vrot.lane.b32.xlu0 %v3649, 20
    %v3687 = vpop.permute.xlu0 %3686
    %3688 = vrot.lane.b32.xlu0 %v3650, 20
    %v3689 = vpop.permute.xlu0 %3688
    %3690 = vrot.lane.b32.xlu0 %v3651, 20
    %v3691 = vpop.permute.xlu0 %3690
    %3692 = vrot.lane.b32.xlu0 %v3652, 20
    %v3693 = vpop.permute.xlu0 %3692
    %3694 = vrot.lane.b32.xlu0 %v3653, 20
    %v3695 = vpop.permute.xlu0 %3694
    %3696 = vrot.lane.b32.xlu0 %v3654, 20
    %v3697 = vpop.permute.xlu0 %3696
    %3698 = vrot.lane.b32.xlu0 %v3655, 20
    %v3699 = vpop.permute.xlu0 %3698
    %3700 = vrot.lane.b32.xlu0 %v3656, 20
    %v3701 = vpop.permute.xlu0 %3700
    %3702 = vrot.lane.b32.xlu0 %v3657, 20
    %v3703 = vpop.permute.xlu0 %3702
    %3704 = vrot.lane.b32.xlu0 %v3658, 20
    %v3705 = vpop.permute.xlu0 %3704
    %3706 = vrot.lane.b32.xlu0 %v3659, 20
    %v3707 = vpop.permute.xlu0 %3706
    %3724 = vst.msk [vmem:[#allocation3] sm:$0xff] %vm1233, %v3677
    %3725 = vst.msk [vmem:[#allocation3 + $0x10] sm:$0xff] %vm1233, %v3679
    %3726 = vst.msk [vmem:[#allocation3 + $0x20] sm:$0xff] %vm1233, %v3681
    %3727 = vst.msk [vmem:[#allocation3 + $0x30] sm:$0xff] %vm1233, %v3683
    %3728 = vst.msk [vmem:[#allocation3 + $0x40] sm:$0xff] %vm1233, %v3685
    %3729 = vst.msk [vmem:[#allocation3 + $0x50] sm:$0xff] %vm1233, %v3687
    %3730 = vst.msk [vmem:[#allocation3 + $0x60] sm:$0xff] %vm1233, %v3689
    %3731 = vst.msk [vmem:[#allocation3 + $0x70] sm:$0xff] %vm1233, %v3691
    %3732 = vst.msk [vmem:[#allocation3 + $0x80] sm:$0xff] %vm1233, %v3693
    %3733 = vst.msk [vmem:[#allocation3 + $0x90] sm:$0xff] %vm1233, %v3695
    %3734 = vst.msk [vmem:[#allocation3 + $0xa0] sm:$0xff] %vm1233, %v3697
    %3735 = vst.msk [vmem:[#allocation3 + $0xb0] sm:$0xff] %vm1233, %v3699
    %3736 = vst.msk [vmem:[#allocation3 + $0xc0] sm:$0xff] %vm1233, %v3701
    %3737 = vst.msk [vmem:[#allocation3 + $0xd0] sm:$0xff] %vm1233, %v3703
    %3738 = vst.msk [vmem:[#allocation3 + $0xe0] sm:$0xff] %vm1233, %v3705
    %3739 = vst.msk [vmem:[#allocation3 + $0xf0] sm:$0xff] %vm1233, %v3707
    %v3740 = vld [vmem:[#allocation2 + $0x8] sm:$0xff]
    %v3741 = vld [vmem:[#allocation2 + $0x10] sm:$0xff]
    %v3742 = vld [vmem:[#allocation2 + $0x18] sm:$0xff]
    %v3743 = vld [vmem:[#allocation2 + $0x20] sm:$0xff]
    %v3744 = vld [vmem:[#allocation2 + $0x28] sm:$0xff]
    %v3745 = vld [vmem:[#allocation2 + $0x30] sm:$0xff]
    %v3746 = vld [vmem:[#allocation2 + $0x38] sm:$0xff]
    %v3747 = vld [vmem:[#allocation2 + $0x40] sm:$0xff]
    %v3748 = vld [vmem:[#allocation2 + $0x48] sm:$0xff]
    %v3749 = vld [vmem:[#allocation2 + $0x50] sm:$0xff]
    %v3750 = vld [vmem:[#allocation2 + $0x58] sm:$0xff]
    %v3751 = vld [vmem:[#allocation2 + $0x60] sm:$0xff]
    %v3752 = vld [vmem:[#allocation2 + $0x68] sm:$0xff]
    %v3753 = vld [vmem:[#allocation2 + $0x70] sm:$0xff]
    %v3754 = vld [vmem:[#allocation2 + $0x78] sm:$0xff]
    %v3755 = vld [vmem:[#allocation2 + $0x80] sm:$0xff]
    %3772 = vrot.lane.b32.xlu0 %v3740, 30
    %v3773 = vpop.permute.xlu0 %3772
    %3774 = vrot.lane.b32.xlu0 %v3741, 30
    %v3775 = vpop.permute.xlu0 %3774
    %3776 = vrot.lane.b32.xlu0 %v3742, 30
    %v3777 = vpop.permute.xlu0 %3776
    %3778 = vrot.lane.b32.xlu0 %v3743, 30
    %v3779 = vpop.permute.xlu0 %3778
    %3780 = vrot.lane.b32.xlu0 %v3744, 30
    %v3781 = vpop.permute.xlu0 %3780
    %3782 = vrot.lane.b32.xlu0 %v3745, 30
    %v3783 = vpop.permute.xlu0 %3782
    %3784 = vrot.lane.b32.xlu0 %v3746, 30
    %v3785 = vpop.permute.xlu0 %3784
    %3786 = vrot.lane.b32.xlu0 %v3747, 30
    %v3787 = vpop.permute.xlu0 %3786
    %3788 = vrot.lane.b32.xlu0 %v3748, 30
    %v3789 = vpop.permute.xlu0 %3788
    %3790 = vrot.lane.b32.xlu0 %v3749, 30
    %v3791 = vpop.permute.xlu0 %3790
    %3792 = vrot.lane.b32.xlu0 %v3750, 30
    %v3793 = vpop.permute.xlu0 %3792
    %3794 = vrot.lane.b32.xlu0 %v3751, 30
    %v3795 = vpop.permute.xlu0 %3794
    %3796 = vrot.lane.b32.xlu0 %v3752, 30
    %v3797 = vpop.permute.xlu0 %3796
    %3798 = vrot.lane.b32.xlu0 %v3753, 30
    %v3799 = vpop.permute.xlu0 %3798
    %3800 = vrot.lane.b32.xlu0 %v3754, 30
    %v3801 = vpop.permute.xlu0 %3800
    %3802 = vrot.lane.b32.xlu0 %v3755, 30
    %v3803 = vpop.permute.xlu0 %3802
    %3820 = vst.msk [vmem:[#allocation3] sm:$0xff] %vm1330, %v3773
    %3821 = vst.msk [vmem:[#allocation3 + $0x10] sm:$0xff] %vm1330, %v3775
    %3822 = vst.msk [vmem:[#allocation3 + $0x20] sm:$0xff] %vm1330, %v3777
    %3823 = vst.msk [vmem:[#allocation3 + $0x30] sm:$0xff] %vm1330, %v3779
    %3824 = vst.msk [vmem:[#allocation3 + $0x40] sm:$0xff] %vm1330, %v3781
    %3825 = vst.msk [vmem:[#allocation3 + $0x50] sm:$0xff] %vm1330, %v3783
    %3826 = vst.msk [vmem:[#allocation3 + $0x60] sm:$0xff] %vm1330, %v3785
    %3827 = vst.msk [vmem:[#allocation3 + $0x70] sm:$0xff] %vm1330, %v3787
    %3828 = vst.msk [vmem:[#allocation3 + $0x80] sm:$0xff] %vm1330, %v3789
    %3829 = vst.msk [vmem:[#allocation3 + $0x90] sm:$0xff] %vm1330, %v3791
    %3830 = vst.msk [vmem:[#allocation3 + $0xa0] sm:$0xff] %vm1330, %v3793
    %3831 = vst.msk [vmem:[#allocation3 + $0xb0] sm:$0xff] %vm1330, %v3795
    %3832 = vst.msk [vmem:[#allocation3 + $0xc0] sm:$0xff] %vm1330, %v3797
    %3833 = vst.msk [vmem:[#allocation3 + $0xd0] sm:$0xff] %vm1330, %v3799
    %3834 = vst.msk [vmem:[#allocation3 + $0xe0] sm:$0xff] %vm1330, %v3801
    %3835 = vst.msk [vmem:[#allocation3 + $0xf0] sm:$0xff] %vm1330, %v3803
    %v3836 = vld [vmem:[#allocation2 + $0x9] sm:$0xff]
    %v3837 = vld [vmem:[#allocation2 + $0x11] sm:$0xff]
    %v3838 = vld [vmem:[#allocation2 + $0x19] sm:$0xff]
    %v3839 = vld [vmem:[#allocation2 + $0x21] sm:$0xff]
    %v3840 = vld [vmem:[#allocation2 + $0x29] sm:$0xff]
    %v3841 = vld [vmem:[#allocation2 + $0x31] sm:$0xff]
    %v3842 = vld [vmem:[#allocation2 + $0x39] sm:$0xff]
    %v3843 = vld [vmem:[#allocation2 + $0x41] sm:$0xff]
    %v3844 = vld [vmem:[#allocation2 + $0x49] sm:$0xff]
    %v3845 = vld [vmem:[#allocation2 + $0x51] sm:$0xff]
    %v3846 = vld [vmem:[#allocation2 + $0x59] sm:$0xff]
    %v3847 = vld [vmem:[#allocation2 + $0x61] sm:$0xff]
    %v3848 = vld [vmem:[#allocation2 + $0x69] sm:$0xff]
    %v3849 = vld [vmem:[#allocation2 + $0x71] sm:$0xff]
    %v3850 = vld [vmem:[#allocation2 + $0x79] sm:$0xff]
    %v3851 = vld [vmem:[#allocation2 + $0x81] sm:$0xff]
    %3868 = vrot.lane.b32.xlu0 %v3836, 40
    %v3869 = vpop.permute.xlu0 %3868
    %3870 = vrot.lane.b32.xlu0 %v3837, 40
    %v3871 = vpop.permute.xlu0 %3870
    %3872 = vrot.lane.b32.xlu0 %v3838, 40
    %v3873 = vpop.permute.xlu0 %3872
    %3874 = vrot.lane.b32.xlu0 %v3839, 40
    %v3875 = vpop.permute.xlu0 %3874
    %3876 = vrot.lane.b32.xlu0 %v3840, 40
    %v3877 = vpop.permute.xlu0 %3876
    %3878 = vrot.lane.b32.xlu0 %v3841, 40
    %v3879 = vpop.permute.xlu0 %3878
    %3880 = vrot.lane.b32.xlu0 %v3842, 40
    %v3881 = vpop.permute.xlu0 %3880
    %3882 = vrot.lane.b32.xlu0 %v3843, 40
    %v3883 = vpop.permute.xlu0 %3882
    %3884 = vrot.lane.b32.xlu0 %v3844, 40
    %v3885 = vpop.permute.xlu0 %3884
    %3886 = vrot.lane.b32.xlu0 %v3845, 40
    %v3887 = vpop.permute.xlu0 %3886
    %3888 = vrot.lane.b32.xlu0 %v3846, 40
    %v3889 = vpop.permute.xlu0 %3888
    %3890 = vrot.lane.b32.xlu0 %v3847, 40
    %v3891 = vpop.permute.xlu0 %3890
    %3892 = vrot.lane.b32.xlu0 %v3848, 40
    %v3893 = vpop.permute.xlu0 %3892
    %3894 = vrot.lane.b32.xlu0 %v3849, 40
    %v3895 = vpop.permute.xlu0 %3894
    %3896 = vrot.lane.b32.xlu0 %v3850, 40
    %v3897 = vpop.permute.xlu0 %3896
    %3898 = vrot.lane.b32.xlu0 %v3851, 40
    %v3899 = vpop.permute.xlu0 %3898
    %3916 = vst.msk [vmem:[#allocation3] sm:$0xff] %vm1427, %v3869
    %3917 = vst.msk [vmem:[#allocation3 + $0x10] sm:$0xff] %vm1427, %v3871
    %3918 = vst.msk [vmem:[#allocation3 + $0x20] sm:$0xff] %vm1427, %v3873
    %3919 = vst.msk [vmem:[#allocation3 + $0x30] sm:$0xff] %vm1427, %v3875
    %3920 = vst.msk [vmem:[#allocation3 + $0x40] sm:$0xff] %vm1427, %v3877
    %3921 = vst.msk [vmem:[#allocation3 + $0x50] sm:$0xff] %vm1427, %v3879
    %3922 = vst.msk [vmem:[#allocation3 + $0x60] sm:$0xff] %vm1427, %v3881
    %3923 = vst.msk [vmem:[#allocation3 + $0x70] sm:$0xff] %vm1427, %v3883
    %3924 = vst.msk [vmem:[#allocation3 + $0x80] sm:$0xff] %vm1427, %v3885
    %3925 = vst.msk [vmem:[#allocation3 + $0x90] sm:$0xff] %vm1427, %v3887
    %3926 = vst.msk [vmem:[#allocation3 + $0xa0] sm:$0xff] %vm1427, %v3889
    %3927 = vst.msk [vmem:[#allocation3 + $0xb0] sm:$0xff] %vm1427, %v3891
    %3928 = vst.msk [vmem:[#allocation3 + $0xc0] sm:$0xff] %vm1427, %v3893
    %3929 = vst.msk [vmem:[#allocation3 + $0xd0] sm:$0xff] %vm1427, %v3895
    %3930 = vst.msk [vmem:[#allocation3 + $0xe0] sm:$0xff] %vm1427, %v3897
    %3931 = vst.msk [vmem:[#allocation3 + $0xf0] sm:$0xff] %vm1427, %v3899
    %v3932 = vld [vmem:[#allocation2 + $0xa] sm:$0xff]
    %v3933 = vld [vmem:[#allocation2 + $0x12] sm:$0xff]
    %v3934 = vld [vmem:[#allocation2 + $0x1a] sm:$0xff]
    %v3935 = vld [vmem:[#allocation2 + $0x22] sm:$0xff]
    %v3936 = vld [vmem:[#allocation2 + $0x2a] sm:$0xff]
    %v3937 = vld [vmem:[#allocation2 + $0x32] sm:$0xff]
    %v3938 = vld [vmem:[#allocation2 + $0x3a] sm:$0xff]
    %v3939 = vld [vmem:[#allocation2 + $0x42] sm:$0xff]
    %v3940 = vld [vmem:[#allocation2 + $0x4a] sm:$0xff]
    %v3941 = vld [vmem:[#allocation2 + $0x52] sm:$0xff]
    %v3942 = vld [vmem:[#allocation2 + $0x5a] sm:$0xff]
    %v3943 = vld [vmem:[#allocation2 + $0x62] sm:$0xff]
    %v3944 = vld [vmem:[#allocation2 + $0x6a] sm:$0xff]
    %v3945 = vld [vmem:[#allocation2 + $0x72] sm:$0xff]
    %v3946 = vld [vmem:[#allocation2 + $0x7a] sm:$0xff]
    %v3947 = vld [vmem:[#allocation2 + $0x82] sm:$0xff]
    %3964 = vrot.lane.b32.xlu0 %v3932, 50
    %v3965 = vpop.permute.xlu0 %3964
    %3966 = vrot.lane.b32.xlu0 %v3933, 50
    %v3967 = vpop.permute.xlu0 %3966
    %3968 = vrot.lane.b32.xlu0 %v3934, 50
    %v3969 = vpop.permute.xlu0 %3968
    %3970 = vrot.lane.b32.xlu0 %v3935, 50
    %v3971 = vpop.permute.xlu0 %3970
    %3972 = vrot.lane.b32.xlu0 %v3936, 50
    %v3973 = vpop.permute.xlu0 %3972
    %3974 = vrot.lane.b32.xlu0 %v3937, 50
    %v3975 = vpop.permute.xlu0 %3974
    %3976 = vrot.lane.b32.xlu0 %v3938, 50
    %v3977 = vpop.permute.xlu0 %3976
    %3978 = vrot.lane.b32.xlu0 %v3939, 50
    %v3979 = vpop.permute.xlu0 %3978
    %3980 = vrot.lane.b32.xlu0 %v3940, 50
    %v3981 = vpop.permute.xlu0 %3980
    %3982 = vrot.lane.b32.xlu0 %v3941, 50
    %v3983 = vpop.permute.xlu0 %3982
    %3984 = vrot.lane.b32.xlu0 %v3942, 50
    %v3985 = vpop.permute.xlu0 %3984
    %3986 = vrot.lane.b32.xlu0 %v3943, 50
    %v3987 = vpop.permute.xlu0 %3986
    %3988 = vrot.lane.b32.xlu0 %v3944, 50
    %v3989 = vpop.permute.xlu0 %3988
    %3990 = vrot.lane.b32.xlu0 %v3945, 50
    %v3991 = vpop.permute.xlu0 %3990
    %3992 = vrot.lane.b32.xlu0 %v3946, 50
    %v3993 = vpop.permute.xlu0 %3992
    %3994 = vrot.lane.b32.xlu0 %v3947, 50
    %v3995 = vpop.permute.xlu0 %3994
    %4012 = vst.msk [vmem:[#allocation3] sm:$0xff] %vm1524, %v3965
    %4013 = vst.msk [vmem:[#allocation3 + $0x10] sm:$0xff] %vm1524, %v3967
    %4014 = vst.msk [vmem:[#allocation3 + $0x20] sm:$0xff] %vm1524, %v3969
    %4015 = vst.msk [vmem:[#allocation3 + $0x30] sm:$0xff] %vm1524, %v3971
    %4016 = vst.msk [vmem:[#allocation3 + $0x40] sm:$0xff] %vm1524, %v3973
    %4017 = vst.msk [vmem:[#allocation3 + $0x50] sm:$0xff] %vm1524, %v3975
    %4018 = vst.msk [vmem:[#allocation3 + $0x60] sm:$0xff] %vm1524, %v3977
    %4019 = vst.msk [vmem:[#allocation3 + $0x70] sm:$0xff] %vm1524, %v3979
    %4020 = vst.msk [vmem:[#allocation3 + $0x80] sm:$0xff] %vm1524, %v3981
    %4021 = vst.msk [vmem:[#allocation3 + $0x90] sm:$0xff] %vm1524, %v3983
    %4022 = vst.msk [vmem:[#allocation3 + $0xa0] sm:$0xff] %vm1524, %v3985
    %4023 = vst.msk [vmem:[#allocation3 + $0xb0] sm:$0xff] %vm1524, %v3987
    %4024 = vst.msk [vmem:[#allocation3 + $0xc0] sm:$0xff] %vm1524, %v3989
    %4025 = vst.msk [vmem:[#allocation3 + $0xd0] sm:$0xff] %vm1524, %v3991
    %4026 = vst.msk [vmem:[#allocation3 + $0xe0] sm:$0xff] %vm1524, %v3993
    %4027 = vst.msk [vmem:[#allocation3 + $0xf0] sm:$0xff] %vm1524, %v3995
    %v4028 = vld [vmem:[#allocation2 + $0xb] sm:$0xff]
    %v4029 = vld [vmem:[#allocation2 + $0x13] sm:$0xff]
    %v4030 = vld [vmem:[#allocation2 + $0x1b] sm:$0xff]
    %v4031 = vld [vmem:[#allocation2 + $0x23] sm:$0xff]
    %v4032 = vld [vmem:[#allocation2 + $0x2b] sm:$0xff]
    %v4033 = vld [vmem:[#allocation2 + $0x33] sm:$0xff]
    %v4034 = vld [vmem:[#allocation2 + $0x3b] sm:$0xff]
    %v4035 = vld [vmem:[#allocation2 + $0x43] sm:$0xff]
    %v4036 = vld [vmem:[#allocation2 + $0x4b] sm:$0xff]
    %v4037 = vld [vmem:[#allocation2 + $0x53] sm:$0xff]
    %v4038 = vld [vmem:[#allocation2 + $0x5b] sm:$0xff]
    %v4039 = vld [vmem:[#allocation2 + $0x63] sm:$0xff]
    %v4040 = vld [vmem:[#allocation2 + $0x6b] sm:$0xff]
    %v4041 = vld [vmem:[#allocation2 + $0x73] sm:$0xff]
    %v4042 = vld [vmem:[#allocation2 + $0x7b] sm:$0xff]
    %v4043 = vld [vmem:[#allocation2 + $0x83] sm:$0xff]
    %4060 = vrot.lane.b32.xlu0 %v4028, 60
    %v4061 = vpop.permute.xlu0 %4060
    %4062 = vrot.lane.b32.xlu0 %v4029, 60
    %v4063 = vpop.permute.xlu0 %4062
    %4064 = vrot.lane.b32.xlu0 %v4030, 60
    %v4065 = vpop.permute.xlu0 %4064
    %4066 = vrot.lane.b32.xlu0 %v4031, 60
    %v4067 = vpop.permute.xlu0 %4066
    %4068 = vrot.lane.b32.xlu0 %v4032, 60
    %v4069 = vpop.permute.xlu0 %4068
    %4070 = vrot.lane.b32.xlu0 %v4033, 60
    %v4071 = vpop.permute.xlu0 %4070
    %4072 = vrot.lane.b32.xlu0 %v4034, 60
    %v4073 = vpop.permute.xlu0 %4072
    %4074 = vrot.lane.b32.xlu0 %v4035, 60
    %v4075 = vpop.permute.xlu0 %4074
    %4076 = vrot.lane.b32.xlu0 %v4036, 60
    %v4077 = vpop.permute.xlu0 %4076
    %4078 = vrot.lane.b32.xlu0 %v4037, 60
    %v4079 = vpop.permute.xlu0 %4078
    %4080 = vrot.lane.b32.xlu0 %v4038, 60
    %v4081 = vpop.permute.xlu0 %4080
    %4082 = vrot.lane.b32.xlu0 %v4039, 60
    %v4083 = vpop.permute.xlu0 %4082
    %4084 = vrot.lane.b32.xlu0 %v4040, 60
    %v4085 = vpop.permute.xlu0 %4084
    %4086 = vrot.lane.b32.xlu0 %v4041, 60
    %v4087 = vpop.permute.xlu0 %4086
    %4088 = vrot.lane.b32.xlu0 %v4042, 60
    %v4089 = vpop.permute.xlu0 %4088
    %4090 = vrot.lane.b32.xlu0 %v4043, 60
    %v4091 = vpop.permute.xlu0 %4090
    %4108 = vst.msk [vmem:[#allocation3] sm:$0xff] %vm1621, %v4061
    %4109 = vst.msk [vmem:[#allocation3 + $0x10] sm:$0xff] %vm1621, %v4063
    %4110 = vst.msk [vmem:[#allocation3 + $0x20] sm:$0xff] %vm1621, %v4065
    %4111 = vst.msk [vmem:[#allocation3 + $0x30] sm:$0xff] %vm1621, %v4067
    %4112 = vst.msk [vmem:[#allocation3 + $0x40] sm:$0xff] %vm1621, %v4069
    %4113 = vst.msk [vmem:[#allocation3 + $0x50] sm:$0xff] %vm1621, %v4071
    %4114 = vst.msk [vmem:[#allocation3 + $0x60] sm:$0xff] %vm1621, %v4073
    %4115 = vst.msk [vmem:[#allocation3 + $0x70] sm:$0xff] %vm1621, %v4075
    %4116 = vst.msk [vmem:[#allocation3 + $0x80] sm:$0xff] %vm1621, %v4077
    %4117 = vst.msk [vmem:[#allocation3 + $0x90] sm:$0xff] %vm1621, %v4079
    %4118 = vst.msk [vmem:[#allocation3 + $0xa0] sm:$0xff] %vm1621, %v4081
    %4119 = vst.msk [vmem:[#allocation3 + $0xb0] sm:$0xff] %vm1621, %v4083
    %4120 = vst.msk [vmem:[#allocation3 + $0xc0] sm:$0xff] %vm1621, %v4085
    %4121 = vst.msk [vmem:[#allocation3 + $0xd0] sm:$0xff] %vm1621, %v4087
    %4122 = vst.msk [vmem:[#allocation3 + $0xe0] sm:$0xff] %vm1621, %v4089
    %4123 = vst.msk [vmem:[#allocation3 + $0xf0] sm:$0xff] %vm1621, %v4091
    %v4124 = vld [vmem:[#allocation2 + $0xc] sm:$0xff]
    %v4125 = vld [vmem:[#allocation2 + $0x14] sm:$0xff]
    %v4126 = vld [vmem:[#allocation2 + $0x1c] sm:$0xff]
    %v4127 = vld [vmem:[#allocation2 + $0x24] sm:$0xff]
    %v4128 = vld [vmem:[#allocation2 + $0x2c] sm:$0xff]
    %v4129 = vld [vmem:[#allocation2 + $0x34] sm:$0xff]
    %v4130 = vld [vmem:[#allocation2 + $0x3c] sm:$0xff]
    %v4131 = vld [vmem:[#allocation2 + $0x44] sm:$0xff]
    %v4132 = vld [vmem:[#allocation2 + $0x4c] sm:$0xff]
    %v4133 = vld [vmem:[#allocation2 + $0x54] sm:$0xff]
    %v4134 = vld [vmem:[#allocation2 + $0x5c] sm:$0xff]
    %v4135 = vld [vmem:[#allocation2 + $0x64] sm:$0xff]
    %v4136 = vld [vmem:[#allocation2 + $0x6c] sm:$0xff]
    %v4137 = vld [vmem:[#allocation2 + $0x74] sm:$0xff]
    %v4138 = vld [vmem:[#allocation2 + $0x7c] sm:$0xff]
    %v4139 = vld [vmem:[#allocation2 + $0x84] sm:$0xff]
    %4156 = vrot.lane.b32.xlu0 %v4124, 70
    %v4157 = vpop.permute.xlu0 %4156
    %4158 = vrot.lane.b32.xlu0 %v4125, 70
    %v4159 = vpop.permute.xlu0 %4158
    %4160 = vrot.lane.b32.xlu0 %v4126, 70
    %v4161 = vpop.permute.xlu0 %4160
    %4162 = vrot.lane.b32.xlu0 %v4127, 70
    %v4163 = vpop.permute.xlu0 %4162
    %4164 = vrot.lane.b32.xlu0 %v4128, 70
    %v4165 = vpop.permute.xlu0 %4164
    %4166 = vrot.lane.b32.xlu0 %v4129, 70
    %v4167 = vpop.permute.xlu0 %4166
    %4168 = vrot.lane.b32.xlu0 %v4130, 70
    %v4169 = vpop.permute.xlu0 %4168
    %4170 = vrot.lane.b32.xlu0 %v4131, 70
    %v4171 = vpop.permute.xlu0 %4170
    %4172 = vrot.lane.b32.xlu0 %v4132, 70
    %v4173 = vpop.permute.xlu0 %4172
    %4174 = vrot.lane.b32.xlu0 %v4133, 70
    %v4175 = vpop.permute.xlu0 %4174
    %4176 = vrot.lane.b32.xlu0 %v4134, 70
    %v4177 = vpop.permute.xlu0 %4176
    %4178 = vrot.lane.b32.xlu0 %v4135, 70
    %v4179 = vpop.permute.xlu0 %4178
    %4180 = vrot.lane.b32.xlu0 %v4136, 70
    %v4181 = vpop.permute.xlu0 %4180
    %4182 = vrot.lane.b32.xlu0 %v4137, 70
    %v4183 = vpop.permute.xlu0 %4182
    %4184 = vrot.lane.b32.xlu0 %v4138, 70
    %v4185 = vpop.permute.xlu0 %4184
    %4186 = vrot.lane.b32.xlu0 %v4139, 70
    %v4187 = vpop.permute.xlu0 %4186
    %4204 = vst.msk [vmem:[#allocation3] sm:$0xff] %vm1718, %v4157
    %4205 = vst.msk [vmem:[#allocation3 + $0x10] sm:$0xff] %vm1718, %v4159
    %4206 = vst.msk [vmem:[#allocation3 + $0x20] sm:$0xff] %vm1718, %v4161
    %4207 = vst.msk [vmem:[#allocation3 + $0x30] sm:$0xff] %vm1718, %v4163
    %4208 = vst.msk [vmem:[#allocation3 + $0x40] sm:$0xff] %vm1718, %v4165
    %4209 = vst.msk [vmem:[#allocation3 + $0x50] sm:$0xff] %vm1718, %v4167
    %4210 = vst.msk [vmem:[#allocation3 + $0x60] sm:$0xff] %vm1718, %v4169
    %4211 = vst.msk [vmem:[#allocation3 + $0x70] sm:$0xff] %vm1718, %v4171
    %4212 = vst.msk [vmem:[#allocation3 + $0x80] sm:$0xff] %vm1718, %v4173
    %4213 = vst.msk [vmem:[#allocation3 + $0x90] sm:$0xff] %vm1718, %v4175
    %4214 = vst.msk [vmem:[#allocation3 + $0xa0] sm:$0xff] %vm1718, %v4177
    %4215 = vst.msk [vmem:[#allocation3 + $0xb0] sm:$0xff] %vm1718, %v4179
    %4216 = vst.msk [vmem:[#allocation3 + $0xc0] sm:$0xff] %vm1718, %v4181
    %4217 = vst.msk [vmem:[#allocation3 + $0xd0] sm:$0xff] %vm1718, %v4183
    %4218 = vst.msk [vmem:[#allocation3 + $0xe0] sm:$0xff] %vm1718, %v4185
    %4219 = vst.msk [vmem:[#allocation3 + $0xf0] sm:$0xff] %vm1718, %v4187
    %v4220 = vld [vmem:[#allocation2 + $0xd] sm:$0xff]
    %v4221 = vld [vmem:[#allocation2 + $0x15] sm:$0xff]
    %v4222 = vld [vmem:[#allocation2 + $0x1d] sm:$0xff]
    %v4223 = vld [vmem:[#allocation2 + $0x25] sm:$0xff]
    %v4224 = vld [vmem:[#allocation2 + $0x2d] sm:$0xff]
    %v4225 = vld [vmem:[#allocation2 + $0x35] sm:$0xff]
    %v4226 = vld [vmem:[#allocation2 + $0x3d] sm:$0xff]
    %v4227 = vld [vmem:[#allocation2 + $0x45] sm:$0xff]
    %v4228 = vld [vmem:[#allocation2 + $0x4d] sm:$0xff]
    %v4229 = vld [vmem:[#allocation2 + $0x55] sm:$0xff]
    %v4230 = vld [vmem:[#allocation2 + $0x5d] sm:$0xff]
    %v4231 = vld [vmem:[#allocation2 + $0x65] sm:$0xff]
    %v4232 = vld [vmem:[#allocation2 + $0x6d] sm:$0xff]
    %v4233 = vld [vmem:[#allocation2 + $0x75] sm:$0xff]
    %v4234 = vld [vmem:[#allocation2 + $0x7d] sm:$0xff]
    %v4235 = vld [vmem:[#allocation2 + $0x85] sm:$0xff]
    %4252 = vrot.lane.b32.xlu0 %v4220, 80
    %v4253 = vpop.permute.xlu0 %4252
    %4254 = vrot.lane.b32.xlu0 %v4221, 80
    %v4255 = vpop.permute.xlu0 %4254
    %4256 = vrot.lane.b32.xlu0 %v4222, 80
    %v4257 = vpop.permute.xlu0 %4256
    %4258 = vrot.lane.b32.xlu0 %v4223, 80
    %v4259 = vpop.permute.xlu0 %4258
    %4260 = vrot.lane.b32.xlu0 %v4224, 80
    %v4261 = vpop.permute.xlu0 %4260
    %4262 = vrot.lane.b32.xlu0 %v4225, 80
    %v4263 = vpop.permute.xlu0 %4262
    %4264 = vrot.lane.b32.xlu0 %v4226, 80
    %v4265 = vpop.permute.xlu0 %4264
    %4266 = vrot.lane.b32.xlu0 %v4227, 80
    %v4267 = vpop.permute.xlu0 %4266
    %4268 = vrot.lane.b32.xlu0 %v4228, 80
    %v4269 = vpop.permute.xlu0 %4268
    %4270 = vrot.lane.b32.xlu0 %v4229, 80
    %v4271 = vpop.permute.xlu0 %4270
    %4272 = vrot.lane.b32.xlu0 %v4230, 80
    %v4273 = vpop.permute.xlu0 %4272
    %4274 = vrot.lane.b32.xlu0 %v4231, 80
    %v4275 = vpop.permute.xlu0 %4274
    %4276 = vrot.lane.b32.xlu0 %v4232, 80
    %v4277 = vpop.permute.xlu0 %4276
    %4278 = vrot.lane.b32.xlu0 %v4233, 80
    %v4279 = vpop.permute.xlu0 %4278
    %4280 = vrot.lane.b32.xlu0 %v4234, 80
    %v4281 = vpop.permute.xlu0 %4280
    %4282 = vrot.lane.b32.xlu0 %v4235, 80
    %v4283 = vpop.permute.xlu0 %4282
    %4300 = vst.msk [vmem:[#allocation3] sm:$0xff] %vm1815, %v4253
    %4301 = vst.msk [vmem:[#allocation3 + $0x10] sm:$0xff] %vm1815, %v4255
    %4302 = vst.msk [vmem:[#allocation3 + $0x20] sm:$0xff] %vm1815, %v4257
    %4303 = vst.msk [vmem:[#allocation3 + $0x30] sm:$0xff] %vm1815, %v4259
    %4304 = vst.msk [vmem:[#allocation3 + $0x40] sm:$0xff] %vm1815, %v4261
    %4305 = vst.msk [vmem:[#allocation3 + $0x50] sm:$0xff] %vm1815, %v4263
    %4306 = vst.msk [vmem:[#allocation3 + $0x60] sm:$0xff] %vm1815, %v4265
    %4307 = vst.msk [vmem:[#allocation3 + $0x70] sm:$0xff] %vm1815, %v4267
    %4308 = vst.msk [vmem:[#allocation3 + $0x80] sm:$0xff] %vm1815, %v4269
    %4309 = vst.msk [vmem:[#allocation3 + $0x90] sm:$0xff] %vm1815, %v4271
    %4310 = vst.msk [vmem:[#allocation3 + $0xa0] sm:$0xff] %vm1815, %v4273
    %4311 = vst.msk [vmem:[#allocation3 + $0xb0] sm:$0xff] %vm1815, %v4275
    %4312 = vst.msk [vmem:[#allocation3 + $0xc0] sm:$0xff] %vm1815, %v4277
    %4313 = vst.msk [vmem:[#allocation3 + $0xd0] sm:$0xff] %vm1815, %v4279
    %4314 = vst.msk [vmem:[#allocation3 + $0xe0] sm:$0xff] %vm1815, %v4281
    %4315 = vst.msk [vmem:[#allocation3 + $0xf0] sm:$0xff] %vm1815, %v4283
    %v4316 = vld [vmem:[#allocation2 + $0xe] sm:$0xff]
    %v4317 = vld [vmem:[#allocation2 + $0x16] sm:$0xff]
    %v4318 = vld [vmem:[#allocation2 + $0x1e] sm:$0xff]
    %v4319 = vld [vmem:[#allocation2 + $0x26] sm:$0xff]
    %v4320 = vld [vmem:[#allocation2 + $0x2e] sm:$0xff]
    %v4321 = vld [vmem:[#allocation2 + $0x36] sm:$0xff]
    %v4322 = vld [vmem:[#allocation2 + $0x3e] sm:$0xff]
    %v4323 = vld [vmem:[#allocation2 + $0x46] sm:$0xff]
    %v4324 = vld [vmem:[#allocation2 + $0x4e] sm:$0xff]
    %v4325 = vld [vmem:[#allocation2 + $0x56] sm:$0xff]
    %v4326 = vld [vmem:[#allocation2 + $0x5e] sm:$0xff]
    %v4327 = vld [vmem:[#allocation2 + $0x66] sm:$0xff]
    %v4328 = vld [vmem:[#allocation2 + $0x6e] sm:$0xff]
    %v4329 = vld [vmem:[#allocation2 + $0x76] sm:$0xff]
    %v4330 = vld [vmem:[#allocation2 + $0x7e] sm:$0xff]
    %v4331 = vld [vmem:[#allocation2 + $0x86] sm:$0xff]
    %4348 = vrot.lane.b32.xlu0 %v4316, 90
    %v4349 = vpop.permute.xlu0 %4348
    %4350 = vrot.lane.b32.xlu0 %v4317, 90
    %v4351 = vpop.permute.xlu0 %4350
    %4352 = vrot.lane.b32.xlu0 %v4318, 90
    %v4353 = vpop.permute.xlu0 %4352
    %4354 = vrot.lane.b32.xlu0 %v4319, 90
    %v4355 = vpop.permute.xlu0 %4354
    %4356 = vrot.lane.b32.xlu0 %v4320, 90
    %v4357 = vpop.permute.xlu0 %4356
    %4358 = vrot.lane.b32.xlu0 %v4321, 90
    %v4359 = vpop.permute.xlu0 %4358
    %4360 = vrot.lane.b32.xlu0 %v4322, 90
    %v4361 = vpop.permute.xlu0 %4360
    %4362 = vrot.lane.b32.xlu0 %v4323, 90
    %v4363 = vpop.permute.xlu0 %4362
    %4364 = vrot.lane.b32.xlu0 %v4324, 90
    %v4365 = vpop.permute.xlu0 %4364
    %4366 = vrot.lane.b32.xlu0 %v4325, 90
    %v4367 = vpop.permute.xlu0 %4366
    %4368 = vrot.lane.b32.xlu0 %v4326, 90
    %v4369 = vpop.permute.xlu0 %4368
    %4370 = vrot.lane.b32.xlu0 %v4327, 90
    %v4371 = vpop.permute.xlu0 %4370
    %4372 = vrot.lane.b32.xlu0 %v4328, 90
    %v4373 = vpop.permute.xlu0 %4372
    %4374 = vrot.lane.b32.xlu0 %v4329, 90
    %v4375 = vpop.permute.xlu0 %4374
    %4376 = vrot.lane.b32.xlu0 %v4330, 90
    %v4377 = vpop.permute.xlu0 %4376
    %4378 = vrot.lane.b32.xlu0 %v4331, 90
    %v4379 = vpop.permute.xlu0 %4378
    %4396 = vst.msk [vmem:[#allocation3] sm:$0xff] %vm1912, %v4349
    %4397 = vst.msk [vmem:[#allocation3 + $0x10] sm:$0xff] %vm1912, %v4351
    %4398 = vst.msk [vmem:[#allocation3 + $0x20] sm:$0xff] %vm1912, %v4353
    %4399 = vst.msk [vmem:[#allocation3 + $0x30] sm:$0xff] %vm1912, %v4355
    %4400 = vst.msk [vmem:[#allocation3 + $0x40] sm:$0xff] %vm1912, %v4357
    %4401 = vst.msk [vmem:[#allocation3 + $0x50] sm:$0xff] %vm1912, %v4359
    %4402 = vst.msk [vmem:[#allocation3 + $0x60] sm:$0xff] %vm1912, %v4361
    %4403 = vst.msk [vmem:[#allocation3 + $0x70] sm:$0xff] %vm1912, %v4363
    %4404 = vst.msk [vmem:[#allocation3 + $0x80] sm:$0xff] %vm1912, %v4365
    %4405 = vst.msk [vmem:[#allocation3 + $0x90] sm:$0xff] %vm1912, %v4367
    %4406 = vst.msk [vmem:[#allocation3 + $0xa0] sm:$0xff] %vm1912, %v4369
    %4407 = vst.msk [vmem:[#allocation3 + $0xb0] sm:$0xff] %vm1912, %v4371
    %4408 = vst.msk [vmem:[#allocation3 + $0xc0] sm:$0xff] %vm1912, %v4373
    %4409 = vst.msk [vmem:[#allocation3 + $0xd0] sm:$0xff] %vm1912, %v4375
    %4410 = vst.msk [vmem:[#allocation3 + $0xe0] sm:$0xff] %vm1912, %v4377
    %4411 = vst.msk [vmem:[#allocation3 + $0xf0] sm:$0xff] %vm1912, %v4379
    %v4412 = vld [vmem:[#allocation2 + $0xf] sm:$0xff]
    %v4413 = vld [vmem:[#allocation2 + $0x17] sm:$0xff]
    %v4414 = vld [vmem:[#allocation2 + $0x1f] sm:$0xff]
    %v4415 = vld [vmem:[#allocation2 + $0x27] sm:$0xff]
    %v4416 = vld [vmem:[#allocation2 + $0x2f] sm:$0xff]
    %v4417 = vld [vmem:[#allocation2 + $0x37] sm:$0xff]
    %v4418 = vld [vmem:[#allocation2 + $0x3f] sm:$0xff]
    %v4419 = vld [vmem:[#allocation2 + $0x47] sm:$0xff]
    %v4420 = vld [vmem:[#allocation2 + $0x4f] sm:$0xff]
    %v4421 = vld [vmem:[#allocation2 + $0x57] sm:$0xff]
    %v4422 = vld [vmem:[#allocation2 + $0x5f] sm:$0xff]
    %v4423 = vld [vmem:[#allocation2 + $0x67] sm:$0xff]
    %v4424 = vld [vmem:[#allocation2 + $0x6f] sm:$0xff]
    %v4425 = vld [vmem:[#allocation2 + $0x77] sm:$0xff]
    %v4426 = vld [vmem:[#allocation2 + $0x7f] sm:$0xff]
    %v4427 = vld [vmem:[#allocation2 + $0x87] sm:$0xff]
    %4444 = vrot.lane.b32.xlu0 %v4412, 100
    %v4445 = vpop.permute.xlu0 %4444
    %4446 = vrot.lane.b32.xlu0 %v4413, 100
    %v4447 = vpop.permute.xlu0 %4446
    %4448 = vrot.lane.b32.xlu0 %v4414, 100
    %v4449 = vpop.permute.xlu0 %4448
    %4450 = vrot.lane.b32.xlu0 %v4415, 100
    %v4451 = vpop.permute.xlu0 %4450
    %4452 = vrot.lane.b32.xlu0 %v4416, 100
    %v4453 = vpop.permute.xlu0 %4452
    %4454 = vrot.lane.b32.xlu0 %v4417, 100
    %v4455 = vpop.permute.xlu0 %4454
    %4456 = vrot.lane.b32.xlu0 %v4418, 100
    %v4457 = vpop.permute.xlu0 %4456
    %4458 = vrot.lane.b32.xlu0 %v4419, 100
    %v4459 = vpop.permute.xlu0 %4458
    %4460 = vrot.lane.b32.xlu0 %v4420, 100
    %v4461 = vpop.permute.xlu0 %4460
    %4462 = vrot.lane.b32.xlu0 %v4421, 100
    %v4463 = vpop.permute.xlu0 %4462
    %4464 = vrot.lane.b32.xlu0 %v4422, 100
    %v4465 = vpop.permute.xlu0 %4464
    %4466 = vrot.lane.b32.xlu0 %v4423, 100
    %v4467 = vpop.permute.xlu0 %4466
    %4468 = vrot.lane.b32.xlu0 %v4424, 100
    %v4469 = vpop.permute.xlu0 %4468
    %4470 = vrot.lane.b32.xlu0 %v4425, 100
    %v4471 = vpop.permute.xlu0 %4470
    %4472 = vrot.lane.b32.xlu0 %v4426, 100
    %v4473 = vpop.permute.xlu0 %4472
    %4474 = vrot.lane.b32.xlu0 %v4427, 100
    %v4475 = vpop.permute.xlu0 %4474
    %4492 = vst.msk [vmem:[#allocation3] sm:$0xff] %vm2009, %v4445
    %4493 = vst.msk [vmem:[#allocation3 + $0x10] sm:$0xff] %vm2009, %v4447
    %4494 = vst.msk [vmem:[#allocation3 + $0x20] sm:$0xff] %vm2009, %v4449
    %4495 = vst.msk [vmem:[#allocation3 + $0x30] sm:$0xff] %vm2009, %v4451
    %4496 = vst.msk [vmem:[#allocation3 + $0x40] sm:$0xff] %vm2009, %v4453
    %4497 = vst.msk [vmem:[#allocation3 + $0x50] sm:$0xff] %vm2009, %v4455
    %4498 = vst.msk [vmem:[#allocation3 + $0x60] sm:$0xff] %vm2009, %v4457
    %4499 = vst.msk [vmem:[#allocation3 + $0x70] sm:$0xff] %vm2009, %v4459
    %4500 = vst.msk [vmem:[#allocation3 + $0x80] sm:$0xff] %vm2009, %v4461
    %4501 = vst.msk [vmem:[#allocation3 + $0x90] sm:$0xff] %vm2009, %v4463
    %4502 = vst.msk [vmem:[#allocation3 + $0xa0] sm:$0xff] %vm2009, %v4465
    %4503 = vst.msk [vmem:[#allocation3 + $0xb0] sm:$0xff] %vm2009, %v4467
    %4504 = vst.msk [vmem:[#allocation3 + $0xc0] sm:$0xff] %vm2009, %v4469
    %4505 = vst.msk [vmem:[#allocation3 + $0xd0] sm:$0xff] %vm2009, %v4471
    %4506 = vst.msk [vmem:[#allocation3 + $0xe0] sm:$0xff] %vm2009, %v4473
    %4507 = vst.msk [vmem:[#allocation3 + $0xf0] sm:$0xff] %vm2009, %v4475
    %v4508 = vld [vmem:[#allocation2 + $0x10] sm:$0xff]
    %v4509 = vld [vmem:[#allocation2 + $0x18] sm:$0xff]
    %v4510 = vld [vmem:[#allocation2 + $0x20] sm:$0xff]
    %v4511 = vld [vmem:[#allocation2 + $0x28] sm:$0xff]
    %v4512 = vld [vmem:[#allocation2 + $0x30] sm:$0xff]
    %v4513 = vld [vmem:[#allocation2 + $0x38] sm:$0xff]
    %v4514 = vld [vmem:[#allocation2 + $0x40] sm:$0xff]
    %v4515 = vld [vmem:[#allocation2 + $0x48] sm:$0xff]
    %v4516 = vld [vmem:[#allocation2 + $0x50] sm:$0xff]
    %v4517 = vld [vmem:[#allocation2 + $0x58] sm:$0xff]
    %v4518 = vld [vmem:[#allocation2 + $0x60] sm:$0xff]
    %v4519 = vld [vmem:[#allocation2 + $0x68] sm:$0xff]
    %v4520 = vld [vmem:[#allocation2 + $0x70] sm:$0xff]
    %v4521 = vld [vmem:[#allocation2 + $0x78] sm:$0xff]
    %v4522 = vld [vmem:[#allocation2 + $0x80] sm:$0xff]
    %v4523 = vld [vmem:[#allocation2 + $0x88] sm:$0xff]
    %4540 = vrot.lane.b32.xlu0 %v4508, 110
    %v4541 = vpop.permute.xlu0 %4540
    %4542 = vrot.lane.b32.xlu0 %v4509, 110
    %v4543 = vpop.permute.xlu0 %4542
    %4544 = vrot.lane.b32.xlu0 %v4510, 110
    %v4545 = vpop.permute.xlu0 %4544
    %4546 = vrot.lane.b32.xlu0 %v4511, 110
    %v4547 = vpop.permute.xlu0 %4546
    %4548 = vrot.lane.b32.xlu0 %v4512, 110
    %v4549 = vpop.permute.xlu0 %4548
    %4550 = vrot.lane.b32.xlu0 %v4513, 110
    %v4551 = vpop.permute.xlu0 %4550
    %4552 = vrot.lane.b32.xlu0 %v4514, 110
    %v4553 = vpop.permute.xlu0 %4552
    %4554 = vrot.lane.b32.xlu0 %v4515, 110
    %v4555 = vpop.permute.xlu0 %4554
    %4556 = vrot.lane.b32.xlu0 %v4516, 110
    %v4557 = vpop.permute.xlu0 %4556
    %4558 = vrot.lane.b32.xlu0 %v4517, 110
    %v4559 = vpop.permute.xlu0 %4558
    %4560 = vrot.lane.b32.xlu0 %v4518, 110
    %v4561 = vpop.permute.xlu0 %4560
    %4562 = vrot.lane.b32.xlu0 %v4519, 110
    %v4563 = vpop.permute.xlu0 %4562
    %4564 = vrot.lane.b32.xlu0 %v4520, 110
    %v4565 = vpop.permute.xlu0 %4564
    %4566 = vrot.lane.b32.xlu0 %v4521, 110
    %v4567 = vpop.permute.xlu0 %4566
    %4568 = vrot.lane.b32.xlu0 %v4522, 110
    %v4569 = vpop.permute.xlu0 %4568
    %4570 = vrot.lane.b32.xlu0 %v4523, 110
    %v4571 = vpop.permute.xlu0 %4570
    %4588 = vst.msk [vmem:[#allocation3] sm:$0xff] %vm2106, %v4541
    %4589 = vst.msk [vmem:[#allocation3 + $0x10] sm:$0xff] %vm2106, %v4543
    %4590 = vst.msk [vmem:[#allocation3 + $0x20] sm:$0xff] %vm2106, %v4545
    %4591 = vst.msk [vmem:[#allocation3 + $0x30] sm:$0xff] %vm2106, %v4547
    %4592 = vst.msk [vmem:[#allocation3 + $0x40] sm:$0xff] %vm2106, %v4549
    %4593 = vst.msk [vmem:[#allocation3 + $0x50] sm:$0xff] %vm2106, %v4551
    %4594 = vst.msk [vmem:[#allocation3 + $0x60] sm:$0xff] %vm2106, %v4553
    %4595 = vst.msk [vmem:[#allocation3 + $0x70] sm:$0xff] %vm2106, %v4555
    %4596 = vst.msk [vmem:[#allocation3 + $0x80] sm:$0xff] %vm2106, %v4557
    %4597 = vst.msk [vmem:[#allocation3 + $0x90] sm:$0xff] %vm2106, %v4559
    %4598 = vst.msk [vmem:[#allocation3 + $0xa0] sm:$0xff] %vm2106, %v4561
    %4599 = vst.msk [vmem:[#allocation3 + $0xb0] sm:$0xff] %vm2106, %v4563
    %4600 = vst.msk [vmem:[#allocation3 + $0xc0] sm:$0xff] %vm2106, %v4565
    %4601 = vst.msk [vmem:[#allocation3 + $0xd0] sm:$0xff] %vm2106, %v4567
    %4602 = vst.msk [vmem:[#allocation3 + $0xe0] sm:$0xff] %vm2106, %v4569
    %4603 = vst.msk [vmem:[#allocation3 + $0xf0] sm:$0xff] %vm2106, %v4571
    %v4604 = vld [vmem:[#allocation2 + $0x11] sm:$0xff]
    %v4605 = vld [vmem:[#allocation2 + $0x19] sm:$0xff]
    %v4606 = vld [vmem:[#allocation2 + $0x21] sm:$0xff]
    %v4607 = vld [vmem:[#allocation2 + $0x29] sm:$0xff]
    %v4608 = vld [vmem:[#allocation2 + $0x31] sm:$0xff]
    %v4609 = vld [vmem:[#allocation2 + $0x39] sm:$0xff]
    %v4610 = vld [vmem:[#allocation2 + $0x41] sm:$0xff]
    %v4611 = vld [vmem:[#allocation2 + $0x49] sm:$0xff]
    %v4612 = vld [vmem:[#allocation2 + $0x51] sm:$0xff]
    %v4613 = vld [vmem:[#allocation2 + $0x59] sm:$0xff]
    %v4614 = vld [vmem:[#allocation2 + $0x61] sm:$0xff]
    %v4615 = vld [vmem:[#allocation2 + $0x69] sm:$0xff]
    %v4616 = vld [vmem:[#allocation2 + $0x71] sm:$0xff]
    %v4617 = vld [vmem:[#allocation2 + $0x79] sm:$0xff]
    %v4618 = vld [vmem:[#allocation2 + $0x81] sm:$0xff]
    %v4619 = vld [vmem:[#allocation2 + $0x89] sm:$0xff]
    %4636 = vrot.lane.b32.xlu0 %v4604, 120
    %v4637 = vpop.permute.xlu0 %4636
    %4638 = vrot.lane.b32.xlu0 %v4605, 120
    %v4639 = vpop.permute.xlu0 %4638
    %4640 = vrot.lane.b32.xlu0 %v4606, 120
    %v4641 = vpop.permute.xlu0 %4640
    %4642 = vrot.lane.b32.xlu0 %v4607, 120
    %v4643 = vpop.permute.xlu0 %4642
    %4644 = vrot.lane.b32.xlu0 %v4608, 120
    %v4645 = vpop.permute.xlu0 %4644
    %4646 = vrot.lane.b32.xlu0 %v4609, 120
    %v4647 = vpop.permute.xlu0 %4646
    %4648 = vrot.lane.b32.xlu0 %v4610, 120
    %v4649 = vpop.permute.xlu0 %4648
    %4650 = vrot.lane.b32.xlu0 %v4611, 120
    %v4651 = vpop.permute.xlu0 %4650
    %4652 = vrot.lane.b32.xlu0 %v4612, 120
    %v4653 = vpop.permute.xlu0 %4652
    %4654 = vrot.lane.b32.xlu0 %v4613, 120
    %v4655 = vpop.permute.xlu0 %4654
    %4656 = vrot.lane.b32.xlu0 %v4614, 120
    %v4657 = vpop.permute.xlu0 %4656
    %4658 = vrot.lane.b32.xlu0 %v4615, 120
    %v4659 = vpop.permute.xlu0 %4658
    %4660 = vrot.lane.b32.xlu0 %v4616, 120
    %v4661 = vpop.permute.xlu0 %4660
    %4662 = vrot.lane.b32.xlu0 %v4617, 120
    %v4663 = vpop.permute.xlu0 %4662
    %4664 = vrot.lane.b32.xlu0 %v4618, 120
    %v4665 = vpop.permute.xlu0 %4664
    %4666 = vrot.lane.b32.xlu0 %v4619, 120
    %v4667 = vpop.permute.xlu0 %4666
    %4684 = vst.msk [vmem:[#allocation3] sm:$0xff] %vm2203, %v4637
    %4685 = vst.msk [vmem:[#allocation3 + $0x8] sm:$0xff] %vm2205, %v4637
    %4686 = vst.msk [vmem:[#allocation3 + $0x10] sm:$0xff] %vm2203, %v4639
    %4687 = vst.msk [vmem:[#allocation3 + $0x18] sm:$0xff] %vm2205, %v4639
    %4688 = vst.msk [vmem:[#allocation3 + $0x20] sm:$0xff] %vm2203, %v4641
    %4689 = vst.msk [vmem:[#allocation3 + $0x28] sm:$0xff] %vm2205, %v4641
    %4690 = vst.msk [vmem:[#allocation3 + $0x30] sm:$0xff] %vm2203, %v4643
    %4691 = vst.msk [vmem:[#allocation3 + $0x38] sm:$0xff] %vm2205, %v4643
    %4692 = vst.msk [vmem:[#allocation3 + $0x40] sm:$0xff] %vm2203, %v4645
    %4693 = vst.msk [vmem:[#allocation3 + $0x48] sm:$0xff] %vm2205, %v4645
    %4694 = vst.msk [vmem:[#allocation3 + $0x50] sm:$0xff] %vm2203, %v4647
    %4695 = vst.msk [vmem:[#allocation3 + $0x58] sm:$0xff] %vm2205, %v4647
    %4696 = vst.msk [vmem:[#allocation3 + $0x60] sm:$0xff] %vm2203, %v4649
    %4697 = vst.msk [vmem:[#allocation3 + $0x68] sm:$0xff] %vm2205, %v4649
    %4698 = vst.msk [vmem:[#allocation3 + $0x70] sm:$0xff] %vm2203, %v4651
    %4699 = vst.msk [vmem:[#allocation3 + $0x78] sm:$0xff] %vm2205, %v4651
    %4700 = vst.msk [vmem:[#allocation3 + $0x80] sm:$0xff] %vm2203, %v4653
    %4701 = vst.msk [vmem:[#allocation3 + $0x88] sm:$0xff] %vm2205, %v4653
    %4702 = vst.msk [vmem:[#allocation3 + $0x90] sm:$0xff] %vm2203, %v4655
    %4703 = vst.msk [vmem:[#allocation3 + $0x98] sm:$0xff] %vm2205, %v4655
    %4704 = vst.msk [vmem:[#allocation3 + $0xa0] sm:$0xff] %vm2203, %v4657
    %4705 = vst.msk [vmem:[#allocation3 + $0xa8] sm:$0xff] %vm2205, %v4657
    %4706 = vst.msk [vmem:[#allocation3 + $0xb0] sm:$0xff] %vm2203, %v4659
    %4707 = vst.msk [vmem:[#allocation3 + $0xb8] sm:$0xff] %vm2205, %v4659
    %4708 = vst.msk [vmem:[#allocation3 + $0xc0] sm:$0xff] %vm2203, %v4661
    %4709 = vst.msk [vmem:[#allocation3 + $0xc8] sm:$0xff] %vm2205, %v4661
    %4710 = vst.msk [vmem:[#allocation3 + $0xd0] sm:$0xff] %vm2203, %v4663
    %4711 = vst.msk [vmem:[#allocation3 + $0xd8] sm:$0xff] %vm2205, %v4663
    %4712 = vst.msk [vmem:[#allocation3 + $0xe0] sm:$0xff] %vm2203, %v4665
    %4713 = vst.msk [vmem:[#allocation3 + $0xe8] sm:$0xff] %vm2205, %v4665
    %4714 = vst.msk [vmem:[#allocation3 + $0xf0] sm:$0xff] %vm2203, %v4667
    %4715 = vst.msk [vmem:[#allocation3 + $0xf8] sm:$0xff] %vm2205, %v4667
    %v4716 = vld [vmem:[#allocation2 + $0x12] sm:$0xff]
    %v4717 = vld [vmem:[#allocation2 + $0x1a] sm:$0xff]
    %v4718 = vld [vmem:[#allocation2 + $0x22] sm:$0xff]
    %v4719 = vld [vmem:[#allocation2 + $0x2a] sm:$0xff]
    %v4720 = vld [vmem:[#allocation2 + $0x32] sm:$0xff]
    %v4721 = vld [vmem:[#allocation2 + $0x3a] sm:$0xff]
    %v4722 = vld [vmem:[#allocation2 + $0x42] sm:$0xff]
    %v4723 = vld [vmem:[#allocation2 + $0x4a] sm:$0xff]
    %v4724 = vld [vmem:[#allocation2 + $0x52] sm:$0xff]
    %v4725 = vld [vmem:[#allocation2 + $0x5a] sm:$0xff]
    %v4726 = vld [vmem:[#allocation2 + $0x62] sm:$0xff]
    %v4727 = vld [vmem:[#allocation2 + $0x6a] sm:$0xff]
    %v4728 = vld [vmem:[#allocation2 + $0x72] sm:$0xff]
    %v4729 = vld [vmem:[#allocation2 + $0x7a] sm:$0xff]
    %v4730 = vld [vmem:[#allocation2 + $0x82] sm:$0xff]
    %v4731 = vld [vmem:[#allocation2 + $0x8a] sm:$0xff]
    %4748 = vrot.lane.b32.xlu0 %v4716, 2
    %v4749 = vpop.permute.xlu0 %4748
    %4750 = vrot.lane.b32.xlu0 %v4717, 2
    %v4751 = vpop.permute.xlu0 %4750
    %4752 = vrot.lane.b32.xlu0 %v4718, 2
    %v4753 = vpop.permute.xlu0 %4752
    %4754 = vrot.lane.b32.xlu0 %v4719, 2
    %v4755 = vpop.permute.xlu0 %4754
    %4756 = vrot.lane.b32.xlu0 %v4720, 2
    %v4757 = vpop.permute.xlu0 %4756
    %4758 = vrot.lane.b32.xlu0 %v4721, 2
    %v4759 = vpop.permute.xlu0 %4758
    %4760 = vrot.lane.b32.xlu0 %v4722, 2
    %v4761 = vpop.permute.xlu0 %4760
    %4762 = vrot.lane.b32.xlu0 %v4723, 2
    %v4763 = vpop.permute.xlu0 %4762
    %4764 = vrot.lane.b32.xlu0 %v4724, 2
    %v4765 = vpop.permute.xlu0 %4764
    %4766 = vrot.lane.b32.xlu0 %v4725, 2
    %v4767 = vpop.permute.xlu0 %4766
    %4768 = vrot.lane.b32.xlu0 %v4726, 2
    %v4769 = vpop.permute.xlu0 %4768
    %4770 = vrot.lane.b32.xlu0 %v4727, 2
    %v4771 = vpop.permute.xlu0 %4770
    %4772 = vrot.lane.b32.xlu0 %v4728, 2
    %v4773 = vpop.permute.xlu0 %4772
    %4774 = vrot.lane.b32.xlu0 %v4729, 2
    %v4775 = vpop.permute.xlu0 %4774
    %4776 = vrot.lane.b32.xlu0 %v4730, 2
    %v4777 = vpop.permute.xlu0 %4776
    %4778 = vrot.lane.b32.xlu0 %v4731, 2
    %v4779 = vpop.permute.xlu0 %4778
    %4796 = vst.msk [vmem:[#allocation3 + $0x8] sm:$0xff] %vm2317, %v4749
    %4797 = vst.msk [vmem:[#allocation3 + $0x18] sm:$0xff] %vm2317, %v4751
    %4798 = vst.msk [vmem:[#allocation3 + $0x28] sm:$0xff] %vm2317, %v4753
    %4799 = vst.msk [vmem:[#allocation3 + $0x38] sm:$0xff] %vm2317, %v4755
    %4800 = vst.msk [vmem:[#allocation3 + $0x48] sm:$0xff] %vm2317, %v4757
    %4801 = vst.msk [vmem:[#allocation3 + $0x58] sm:$0xff] %vm2317, %v4759
    %4802 = vst.msk [vmem:[#allocation3 + $0x68] sm:$0xff] %vm2317, %v4761
    %4803 = vst.msk [vmem:[#allocation3 + $0x78] sm:$0xff] %vm2317, %v4763
    %4804 = vst.msk [vmem:[#allocation3 + $0x88] sm:$0xff] %vm2317, %v4765
    %4805 = vst.msk [vmem:[#allocation3 + $0x98] sm:$0xff] %vm2317, %v4767
    %4806 = vst.msk [vmem:[#allocation3 + $0xa8] sm:$0xff] %vm2317, %v4769
    %4807 = vst.msk [vmem:[#allocation3 + $0xb8] sm:$0xff] %vm2317, %v4771
    %4808 = vst.msk [vmem:[#allocation3 + $0xc8] sm:$0xff] %vm2317, %v4773
    %4809 = vst.msk [vmem:[#allocation3 + $0xd8] sm:$0xff] %vm2317, %v4775
    %4810 = vst.msk [vmem:[#allocation3 + $0xe8] sm:$0xff] %vm2317, %v4777
    %4811 = vst.msk [vmem:[#allocation3 + $0xf8] sm:$0xff] %vm2317, %v4779
    %v4812 = vld [vmem:[#allocation2 + $0x13] sm:$0xff]
    %v4813 = vld [vmem:[#allocation2 + $0x1b] sm:$0xff]
    %v4814 = vld [vmem:[#allocation2 + $0x23] sm:$0xff]
    %v4815 = vld [vmem:[#allocation2 + $0x2b] sm:$0xff]
    %v4816 = vld [vmem:[#allocation2 + $0x33] sm:$0xff]
    %v4817 = vld [vmem:[#allocation2 + $0x3b] sm:$0xff]
    %v4818 = vld [vmem:[#allocation2 + $0x43] sm:$0xff]
    %v4819 = vld [vmem:[#allocation2 + $0x4b] sm:$0xff]
    %v4820 = vld [vmem:[#allocation2 + $0x53] sm:$0xff]
    %v4821 = vld [vmem:[#allocation2 + $0x5b] sm:$0xff]
    %v4822 = vld [vmem:[#allocation2 + $0x63] sm:$0xff]
    %v4823 = vld [vmem:[#allocation2 + $0x6b] sm:$0xff]
    %v4824 = vld [vmem:[#allocation2 + $0x73] sm:$0xff]
    %v4825 = vld [vmem:[#allocation2 + $0x7b] sm:$0xff]
    %v4826 = vld [vmem:[#allocation2 + $0x83] sm:$0xff]
    %v4827 = vld [vmem:[#allocation2 + $0x8b] sm:$0xff]
    %4844 = vrot.lane.b32.xlu0 %v4812, 12
    %v4845 = vpop.permute.xlu0 %4844
    %4846 = vrot.lane.b32.xlu0 %v4813, 12
    %v4847 = vpop.permute.xlu0 %4846
    %4848 = vrot.lane.b32.xlu0 %v4814, 12
    %v4849 = vpop.permute.xlu0 %4848
    %4850 = vrot.lane.b32.xlu0 %v4815, 12
    %v4851 = vpop.permute.xlu0 %4850
    %4852 = vrot.lane.b32.xlu0 %v4816, 12
    %v4853 = vpop.permute.xlu0 %4852
    %4854 = vrot.lane.b32.xlu0 %v4817, 12
    %v4855 = vpop.permute.xlu0 %4854
    %4856 = vrot.lane.b32.xlu0 %v4818, 12
    %v4857 = vpop.permute.xlu0 %4856
    %4858 = vrot.lane.b32.xlu0 %v4819, 12
    %v4859 = vpop.permute.xlu0 %4858
    %4860 = vrot.lane.b32.xlu0 %v4820, 12
    %v4861 = vpop.permute.xlu0 %4860
    %4862 = vrot.lane.b32.xlu0 %v4821, 12
    %v4863 = vpop.permute.xlu0 %4862
    %4864 = vrot.lane.b32.xlu0 %v4822, 12
    %v4865 = vpop.permute.xlu0 %4864
    %4866 = vrot.lane.b32.xlu0 %v4823, 12
    %v4867 = vpop.permute.xlu0 %4866
    %4868 = vrot.lane.b32.xlu0 %v4824, 12
    %v4869 = vpop.permute.xlu0 %4868
    %4870 = vrot.lane.b32.xlu0 %v4825, 12
    %v4871 = vpop.permute.xlu0 %4870
    %4872 = vrot.lane.b32.xlu0 %v4826, 12
    %v4873 = vpop.permute.xlu0 %4872
    %4874 = vrot.lane.b32.xlu0 %v4827, 12
    %v4875 = vpop.permute.xlu0 %4874
    %4892 = vst.msk [vmem:[#allocation3 + $0x8] sm:$0xff] %vm2414, %v4845
    %4893 = vst.msk [vmem:[#allocation3 + $0x18] sm:$0xff] %vm2414, %v4847
    %4894 = vst.msk [vmem:[#allocation3 + $0x28] sm:$0xff] %vm2414, %v4849
    %4895 = vst.msk [vmem:[#allocation3 + $0x38] sm:$0xff] %vm2414, %v4851
    %4896 = vst.msk [vmem:[#allocation3 + $0x48] sm:$0xff] %vm2414, %v4853
    %4897 = vst.msk [vmem:[#allocation3 + $0x58] sm:$0xff] %vm2414, %v4855
    %4898 = vst.msk [vmem:[#allocation3 + $0x68] sm:$0xff] %vm2414, %v4857
    %4899 = vst.msk [vmem:[#allocation3 + $0x78] sm:$0xff] %vm2414, %v4859
    %4900 = vst.msk [vmem:[#allocation3 + $0x88] sm:$0xff] %vm2414, %v4861
    %4901 = vst.msk [vmem:[#allocation3 + $0x98] sm:$0xff] %vm2414, %v4863
    %4902 = vst.msk [vmem:[#allocation3 + $0xa8] sm:$0xff] %vm2414, %v4865
    %4903 = vst.msk [vmem:[#allocation3 + $0xb8] sm:$0xff] %vm2414, %v4867
    %4904 = vst.msk [vmem:[#allocation3 + $0xc8] sm:$0xff] %vm2414, %v4869
    %4905 = vst.msk [vmem:[#allocation3 + $0xd8] sm:$0xff] %vm2414, %v4871
    %4906 = vst.msk [vmem:[#allocation3 + $0xe8] sm:$0xff] %vm2414, %v4873
    %4907 = vst.msk [vmem:[#allocation3 + $0xf8] sm:$0xff] %vm2414, %v4875
    %v4908 = vld [vmem:[#allocation2 + $0x14] sm:$0xff]
    %v4909 = vld [vmem:[#allocation2 + $0x1c] sm:$0xff]
    %v4910 = vld [vmem:[#allocation2 + $0x24] sm:$0xff]
    %v4911 = vld [vmem:[#allocation2 + $0x2c] sm:$0xff]
    %v4912 = vld [vmem:[#allocation2 + $0x34] sm:$0xff]
    %v4913 = vld [vmem:[#allocation2 + $0x3c] sm:$0xff]
    %v4914 = vld [vmem:[#allocation2 + $0x44] sm:$0xff]
    %v4915 = vld [vmem:[#allocation2 + $0x4c] sm:$0xff]
    %v4916 = vld [vmem:[#allocation2 + $0x54] sm:$0xff]
    %v4917 = vld [vmem:[#allocation2 + $0x5c] sm:$0xff]
    %v4918 = vld [vmem:[#allocation2 + $0x64] sm:$0xff]
    %v4919 = vld [vmem:[#allocation2 + $0x6c] sm:$0xff]
    %v4920 = vld [vmem:[#allocation2 + $0x74] sm:$0xff]
    %v4921 = vld [vmem:[#allocation2 + $0x7c] sm:$0xff]
    %v4922 = vld [vmem:[#allocation2 + $0x84] sm:$0xff]
    %v4923 = vld [vmem:[#allocation2 + $0x8c] sm:$0xff]
    %4940 = vrot.lane.b32.xlu0 %v4908, 22
    %v4941 = vpop.permute.xlu0 %4940
    %4942 = vrot.lane.b32.xlu0 %v4909, 22
    %v4943 = vpop.permute.xlu0 %4942
    %4944 = vrot.lane.b32.xlu0 %v4910, 22
    %v4945 = vpop.permute.xlu0 %4944
    %4946 = vrot.lane.b32.xlu0 %v4911, 22
    %v4947 = vpop.permute.xlu0 %4946
    %4948 = vrot.lane.b32.xlu0 %v4912, 22
    %v4949 = vpop.permute.xlu0 %4948
    %4950 = vrot.lane.b32.xlu0 %v4913, 22
    %v4951 = vpop.permute.xlu0 %4950
    %4952 = vrot.lane.b32.xlu0 %v4914, 22
    %v4953 = vpop.permute.xlu0 %4952
    %4954 = vrot.lane.b32.xlu0 %v4915, 22
    %v4955 = vpop.permute.xlu0 %4954
    %4956 = vrot.lane.b32.xlu0 %v4916, 22
    %v4957 = vpop.permute.xlu0 %4956
    %4958 = vrot.lane.b32.xlu0 %v4917, 22
    %v4959 = vpop.permute.xlu0 %4958
    %4960 = vrot.lane.b32.xlu0 %v4918, 22
    %v4961 = vpop.permute.xlu0 %4960
    %4962 = vrot.lane.b32.xlu0 %v4919, 22
    %v4963 = vpop.permute.xlu0 %4962
    %4964 = vrot.lane.b32.xlu0 %v4920, 22
    %v4965 = vpop.permute.xlu0 %4964
    %4966 = vrot.lane.b32.xlu0 %v4921, 22
    %v4967 = vpop.permute.xlu0 %4966
    %4968 = vrot.lane.b32.xlu0 %v4922, 22
    %v4969 = vpop.permute.xlu0 %4968
    %4970 = vrot.lane.b32.xlu0 %v4923, 22
    %v4971 = vpop.permute.xlu0 %4970
    %4988 = vst.msk [vmem:[#allocation3 + $0x8] sm:$0xff] %vm2511, %v4941
    %4989 = vst.msk [vmem:[#allocation3 + $0x18] sm:$0xff] %vm2511, %v4943
    %4990 = vst.msk [vmem:[#allocation3 + $0x28] sm:$0xff] %vm2511, %v4945
    %4991 = vst.msk [vmem:[#allocation3 + $0x38] sm:$0xff] %vm2511, %v4947
    %4992 = vst.msk [vmem:[#allocation3 + $0x48] sm:$0xff] %vm2511, %v4949
    %4993 = vst.msk [vmem:[#allocation3 + $0x58] sm:$0xff] %vm2511, %v4951
    %4994 = vst.msk [vmem:[#allocation3 + $0x68] sm:$0xff] %vm2511, %v4953
    %4995 = vst.msk [vmem:[#allocation3 + $0x78] sm:$0xff] %vm2511, %v4955
    %4996 = vst.msk [vmem:[#allocation3 + $0x88] sm:$0xff] %vm2511, %v4957
    %4997 = vst.msk [vmem:[#allocation3 + $0x98] sm:$0xff] %vm2511, %v4959
    %4998 = vst.msk [vmem:[#allocation3 + $0xa8] sm:$0xff] %vm2511, %v4961
    %4999 = vst.msk [vmem:[#allocation3 + $0xb8] sm:$0xff] %vm2511, %v4963
    %5000 = vst.msk [vmem:[#allocation3 + $0xc8] sm:$0xff] %vm2511, %v4965
    %5001 = vst.msk [vmem:[#allocation3 + $0xd8] sm:$0xff] %vm2511, %v4967
    %5002 = vst.msk [vmem:[#allocation3 + $0xe8] sm:$0xff] %vm2511, %v4969
    %5003 = vst.msk [vmem:[#allocation3 + $0xf8] sm:$0xff] %vm2511, %v4971
    %v5004 = vld [vmem:[#allocation2 + $0x15] sm:$0xff]
    %v5005 = vld [vmem:[#allocation2 + $0x1d] sm:$0xff]
    %v5006 = vld [vmem:[#allocation2 + $0x25] sm:$0xff]
    %v5007 = vld [vmem:[#allocation2 + $0x2d] sm:$0xff]
    %v5008 = vld [vmem:[#allocation2 + $0x35] sm:$0xff]
    %v5009 = vld [vmem:[#allocation2 + $0x3d] sm:$0xff]
    %v5010 = vld [vmem:[#allocation2 + $0x45] sm:$0xff]
    %v5011 = vld [vmem:[#allocation2 + $0x4d] sm:$0xff]
    %v5012 = vld [vmem:[#allocation2 + $0x55] sm:$0xff]
    %v5013 = vld [vmem:[#allocation2 + $0x5d] sm:$0xff]
    %v5014 = vld [vmem:[#allocation2 + $0x65] sm:$0xff]
    %v5015 = vld [vmem:[#allocation2 + $0x6d] sm:$0xff]
    %v5016 = vld [vmem:[#allocation2 + $0x75] sm:$0xff]
    %v5017 = vld [vmem:[#allocation2 + $0x7d] sm:$0xff]
    %v5018 = vld [vmem:[#allocation2 + $0x85] sm:$0xff]
    %v5019 = vld [vmem:[#allocation2 + $0x8d] sm:$0xff]
    %5036 = vrot.lane.b32.xlu0 %v5004, 32
    %v5037 = vpop.permute.xlu0 %5036
    %5038 = vrot.lane.b32.xlu0 %v5005, 32
    %v5039 = vpop.permute.xlu0 %5038
    %5040 = vrot.lane.b32.xlu0 %v5006, 32
    %v5041 = vpop.permute.xlu0 %5040
    %5042 = vrot.lane.b32.xlu0 %v5007, 32
    %v5043 = vpop.permute.xlu0 %5042
    %5044 = vrot.lane.b32.xlu0 %v5008, 32
    %v5045 = vpop.permute.xlu0 %5044
    %5046 = vrot.lane.b32.xlu0 %v5009, 32
    %v5047 = vpop.permute.xlu0 %5046
    %5048 = vrot.lane.b32.xlu0 %v5010, 32
    %v5049 = vpop.permute.xlu0 %5048
    %5050 = vrot.lane.b32.xlu0 %v5011, 32
    %v5051 = vpop.permute.xlu0 %5050
    %5052 = vrot.lane.b32.xlu0 %v5012, 32
    %v5053 = vpop.permute.xlu0 %5052
    %5054 = vrot.lane.b32.xlu0 %v5013, 32
    %v5055 = vpop.permute.xlu0 %5054
    %5056 = vrot.lane.b32.xlu0 %v5014, 32
    %v5057 = vpop.permute.xlu0 %5056
    %5058 = vrot.lane.b32.xlu0 %v5015, 32
    %v5059 = vpop.permute.xlu0 %5058
    %5060 = vrot.lane.b32.xlu0 %v5016, 32
    %v5061 = vpop.permute.xlu0 %5060
    %5062 = vrot.lane.b32.xlu0 %v5017, 32
    %v5063 = vpop.permute.xlu0 %5062
    %5064 = vrot.lane.b32.xlu0 %v5018, 32
    %v5065 = vpop.permute.xlu0 %5064
    %5066 = vrot.lane.b32.xlu0 %v5019, 32
    %v5067 = vpop.permute.xlu0 %5066
    %5084 = vst.msk [vmem:[#allocation3 + $0x8] sm:$0xff] %vm2608, %v5037
    %5085 = vst.msk [vmem:[#allocation3 + $0x18] sm:$0xff] %vm2608, %v5039
    %5086 = vst.msk [vmem:[#allocation3 + $0x28] sm:$0xff] %vm2608, %v5041
    %5087 = vst.msk [vmem:[#allocation3 + $0x38] sm:$0xff] %vm2608, %v5043
    %5088 = vst.msk [vmem:[#allocation3 + $0x48] sm:$0xff] %vm2608, %v5045
    %5089 = vst.msk [vmem:[#allocation3 + $0x58] sm:$0xff] %vm2608, %v5047
    %5090 = vst.msk [vmem:[#allocation3 + $0x68] sm:$0xff] %vm2608, %v5049
    %5091 = vst.msk [vmem:[#allocation3 + $0x78] sm:$0xff] %vm2608, %v5051
    %5092 = vst.msk [vmem:[#allocation3 + $0x88] sm:$0xff] %vm2608, %v5053
    %5093 = vst.msk [vmem:[#allocation3 + $0x98] sm:$0xff] %vm2608, %v5055
    %5094 = vst.msk [vmem:[#allocation3 + $0xa8] sm:$0xff] %vm2608, %v5057
    %5095 = vst.msk [vmem:[#allocation3 + $0xb8] sm:$0xff] %vm2608, %v5059
    %5096 = vst.msk [vmem:[#allocation3 + $0xc8] sm:$0xff] %vm2608, %v5061
    %5097 = vst.msk [vmem:[#allocation3 + $0xd8] sm:$0xff] %vm2608, %v5063
    %5098 = vst.msk [vmem:[#allocation3 + $0xe8] sm:$0xff] %vm2608, %v5065
    %5099 = vst.msk [vmem:[#allocation3 + $0xf8] sm:$0xff] %vm2608, %v5067
    %v5100 = vld [vmem:[#allocation2 + $0x16] sm:$0xff]
    %v5101 = vld [vmem:[#allocation2 + $0x1e] sm:$0xff]
    %v5102 = vld [vmem:[#allocation2 + $0x26] sm:$0xff]
    %v5103 = vld [vmem:[#allocation2 + $0x2e] sm:$0xff]
    %v5104 = vld [vmem:[#allocation2 + $0x36] sm:$0xff]
    %v5105 = vld [vmem:[#allocation2 + $0x3e] sm:$0xff]
    %v5106 = vld [vmem:[#allocation2 + $0x46] sm:$0xff]
    %v5107 = vld [vmem:[#allocation2 + $0x4e] sm:$0xff]
    %v5108 = vld [vmem:[#allocation2 + $0x56] sm:$0xff]
    %v5109 = vld [vmem:[#allocation2 + $0x5e] sm:$0xff]
    %v5110 = vld [vmem:[#allocation2 + $0x66] sm:$0xff]
    %v5111 = vld [vmem:[#allocation2 + $0x6e] sm:$0xff]
    %v5112 = vld [vmem:[#allocation2 + $0x76] sm:$0xff]
    %v5113 = vld [vmem:[#allocation2 + $0x7e] sm:$0xff]
    %v5114 = vld [vmem:[#allocation2 + $0x86] sm:$0xff]
    %v5115 = vld [vmem:[#allocation2 + $0x8e] sm:$0xff]
    %5132 = vrot.lane.b32.xlu0 %v5100, 42
    %v5133 = vpop.permute.xlu0 %5132
    %5134 = vrot.lane.b32.xlu0 %v5101, 42
    %v5135 = vpop.permute.xlu0 %5134
    %5136 = vrot.lane.b32.xlu0 %v5102, 42
    %v5137 = vpop.permute.xlu0 %5136
    %5138 = vrot.lane.b32.xlu0 %v5103, 42
    %v5139 = vpop.permute.xlu0 %5138
    %5140 = vrot.lane.b32.xlu0 %v5104, 42
    %v5141 = vpop.permute.xlu0 %5140
    %5142 = vrot.lane.b32.xlu0 %v5105, 42
    %v5143 = vpop.permute.xlu0 %5142
    %5144 = vrot.lane.b32.xlu0 %v5106, 42
    %v5145 = vpop.permute.xlu0 %5144
    %5146 = vrot.lane.b32.xlu0 %v5107, 42
    %v5147 = vpop.permute.xlu0 %5146
    %5148 = vrot.lane.b32.xlu0 %v5108, 42
    %v5149 = vpop.permute.xlu0 %5148
    %5150 = vrot.lane.b32.xlu0 %v5109, 42
    %v5151 = vpop.permute.xlu0 %5150
    %5152 = vrot.lane.b32.xlu0 %v5110, 42
    %v5153 = vpop.permute.xlu0 %5152
    %5154 = vrot.lane.b32.xlu0 %v5111, 42
    %v5155 = vpop.permute.xlu0 %5154
    %5156 = vrot.lane.b32.xlu0 %v5112, 42
    %v5157 = vpop.permute.xlu0 %5156
    %5158 = vrot.lane.b32.xlu0 %v5113, 42
    %v5159 = vpop.permute.xlu0 %5158
    %5160 = vrot.lane.b32.xlu0 %v5114, 42
    %v5161 = vpop.permute.xlu0 %5160
    %5162 = vrot.lane.b32.xlu0 %v5115, 42
    %v5163 = vpop.permute.xlu0 %5162
    %5180 = vst.msk [vmem:[#allocation3 + $0x8] sm:$0xff] %vm2705, %v5133
    %5181 = vst.msk [vmem:[#allocation3 + $0x18] sm:$0xff] %vm2705, %v5135
    %5182 = vst.msk [vmem:[#allocation3 + $0x28] sm:$0xff] %vm2705, %v5137
    %5183 = vst.msk [vmem:[#allocation3 + $0x38] sm:$0xff] %vm2705, %v5139
    %5184 = vst.msk [vmem:[#allocation3 + $0x48] sm:$0xff] %vm2705, %v5141
    %5185 = vst.msk [vmem:[#allocation3 + $0x58] sm:$0xff] %vm2705, %v5143
    %5186 = vst.msk [vmem:[#allocation3 + $0x68] sm:$0xff] %vm2705, %v5145
    %5187 = vst.msk [vmem:[#allocation3 + $0x78] sm:$0xff] %vm2705, %v5147
    %5188 = vst.msk [vmem:[#allocation3 + $0x88] sm:$0xff] %vm2705, %v5149
    %5189 = vst.msk [vmem:[#allocation3 + $0x98] sm:$0xff] %vm2705, %v5151
    %5190 = vst.msk [vmem:[#allocation3 + $0xa8] sm:$0xff] %vm2705, %v5153
    %5191 = vst.msk [vmem:[#allocation3 + $0xb8] sm:$0xff] %vm2705, %v5155
    %5192 = vst.msk [vmem:[#allocation3 + $0xc8] sm:$0xff] %vm2705, %v5157
    %5193 = vst.msk [vmem:[#allocation3 + $0xd8] sm:$0xff] %vm2705, %v5159
    %5194 = vst.msk [vmem:[#allocation3 + $0xe8] sm:$0xff] %vm2705, %v5161
    %5195 = vst.msk [vmem:[#allocation3 + $0xf8] sm:$0xff] %vm2705, %v5163
    %v5196 = vld [vmem:[#allocation2 + $0x17] sm:$0xff]
    %v5197 = vld [vmem:[#allocation2 + $0x1f] sm:$0xff]
    %v5198 = vld [vmem:[#allocation2 + $0x27] sm:$0xff]
    %v5199 = vld [vmem:[#allocation2 + $0x2f] sm:$0xff]
    %v5200 = vld [vmem:[#allocation2 + $0x37] sm:$0xff]
    %v5201 = vld [vmem:[#allocation2 + $0x3f] sm:$0xff]
    %v5202 = vld [vmem:[#allocation2 + $0x47] sm:$0xff]
    %v5203 = vld [vmem:[#allocation2 + $0x4f] sm:$0xff]
    %v5204 = vld [vmem:[#allocation2 + $0x57] sm:$0xff]
    %v5205 = vld [vmem:[#allocation2 + $0x5f] sm:$0xff]
    %v5206 = vld [vmem:[#allocation2 + $0x67] sm:$0xff]
    %v5207 = vld [vmem:[#allocation2 + $0x6f] sm:$0xff]
    %v5208 = vld [vmem:[#allocation2 + $0x77] sm:$0xff]
    %v5209 = vld [vmem:[#allocation2 + $0x7f] sm:$0xff]
    %v5210 = vld [vmem:[#allocation2 + $0x87] sm:$0xff]
    %v5211 = vld [vmem:[#allocation2 + $0x8f] sm:$0xff]
    %5228 = vrot.lane.b32.xlu0 %v5196, 52
    %v5229 = vpop.permute.xlu0 %5228
    %5230 = vrot.lane.b32.xlu0 %v5197, 52
    %v5231 = vpop.permute.xlu0 %5230
    %5232 = vrot.lane.b32.xlu0 %v5198, 52
    %v5233 = vpop.permute.xlu0 %5232
    %5234 = vrot.lane.b32.xlu0 %v5199, 52
    %v5235 = vpop.permute.xlu0 %5234
    %5236 = vrot.lane.b32.xlu0 %v5200, 52
    %v5237 = vpop.permute.xlu0 %5236
    %5238 = vrot.lane.b32.xlu0 %v5201, 52
    %v5239 = vpop.permute.xlu0 %5238
    %5240 = vrot.lane.b32.xlu0 %v5202, 52
    %v5241 = vpop.permute.xlu0 %5240
    %5242 = vrot.lane.b32.xlu0 %v5203, 52
    %v5243 = vpop.permute.xlu0 %5242
    %5244 = vrot.lane.b32.xlu0 %v5204, 52
    %v5245 = vpop.permute.xlu0 %5244
    %5246 = vrot.lane.b32.xlu0 %v5205, 52
    %v5247 = vpop.permute.xlu0 %5246
    %5248 = vrot.lane.b32.xlu0 %v5206, 52
    %v5249 = vpop.permute.xlu0 %5248
    %5250 = vrot.lane.b32.xlu0 %v5207, 52
    %v5251 = vpop.permute.xlu0 %5250
    %5252 = vrot.lane.b32.xlu0 %v5208, 52
    %v5253 = vpop.permute.xlu0 %5252
    %5254 = vrot.lane.b32.xlu0 %v5209, 52
    %v5255 = vpop.permute.xlu0 %5254
    %5256 = vrot.lane.b32.xlu0 %v5210, 52
    %v5257 = vpop.permute.xlu0 %5256
    %5258 = vrot.lane.b32.xlu0 %v5211, 52
    %v5259 = vpop.permute.xlu0 %5258
    %5276 = vst.msk [vmem:[#allocation3 + $0x8] sm:$0xff] %vm2802, %v5229
    %5277 = vst.msk [vmem:[#allocation3 + $0x18] sm:$0xff] %vm2802, %v5231
    %5278 = vst.msk [vmem:[#allocation3 + $0x28] sm:$0xff] %vm2802, %v5233
    %5279 = vst.msk [vmem:[#allocation3 + $0x38] sm:$0xff] %vm2802, %v5235
    %5280 = vst.msk [vmem:[#allocation3 + $0x48] sm:$0xff] %vm2802, %v5237
    %5281 = vst.msk [vmem:[#allocation3 + $0x58] sm:$0xff] %vm2802, %v5239
    %5282 = vst.msk [vmem:[#allocation3 + $0x68] sm:$0xff] %vm2802, %v5241
    %5283 = vst.msk [vmem:[#allocation3 + $0x78] sm:$0xff] %vm2802, %v5243
    %5284 = vst.msk [vmem:[#allocation3 + $0x88] sm:$0xff] %vm2802, %v5245
    %5285 = vst.msk [vmem:[#allocation3 + $0x98] sm:$0xff] %vm2802, %v5247
    %5286 = vst.msk [vmem:[#allocation3 + $0xa8] sm:$0xff] %vm2802, %v5249
    %5287 = vst.msk [vmem:[#allocation3 + $0xb8] sm:$0xff] %vm2802, %v5251
    %5288 = vst.msk [vmem:[#allocation3 + $0xc8] sm:$0xff] %vm2802, %v5253
    %5289 = vst.msk [vmem:[#allocation3 + $0xd8] sm:$0xff] %vm2802, %v5255
    %5290 = vst.msk [vmem:[#allocation3 + $0xe8] sm:$0xff] %vm2802, %v5257
    %5291 = vst.msk [vmem:[#allocation3 + $0xf8] sm:$0xff] %vm2802, %v5259
    %v5292 = vld [vmem:[#allocation2 + $0x18] sm:$0xff]
    %v5293 = vld [vmem:[#allocation2 + $0x20] sm:$0xff]
    %v5294 = vld [vmem:[#allocation2 + $0x28] sm:$0xff]
    %v5295 = vld [vmem:[#allocation2 + $0x30] sm:$0xff]
    %v5296 = vld [vmem:[#allocation2 + $0x38] sm:$0xff]
    %v5297 = vld [vmem:[#allocation2 + $0x40] sm:$0xff]
    %v5298 = vld [vmem:[#allocation2 + $0x48] sm:$0xff]
    %v5299 = vld [vmem:[#allocation2 + $0x50] sm:$0xff]
    %v5300 = vld [vmem:[#allocation2 + $0x58] sm:$0xff]
    %v5301 = vld [vmem:[#allocation2 + $0x60] sm:$0xff]
    %v5302 = vld [vmem:[#allocation2 + $0x68] sm:$0xff]
    %v5303 = vld [vmem:[#allocation2 + $0x70] sm:$0xff]
    %v5304 = vld [vmem:[#allocation2 + $0x78] sm:$0xff]
    %v5305 = vld [vmem:[#allocation2 + $0x80] sm:$0xff]
    %v5306 = vld [vmem:[#allocation2 + $0x88] sm:$0xff]
    %v5307 = vld [vmem:[#allocation2 + $0x90] sm:$0xff]
    %5324 = vrot.lane.b32.xlu0 %v5292, 62
    %v5325 = vpop.permute.xlu0 %5324
    %5326 = vrot.lane.b32.xlu0 %v5293, 62
    %v5327 = vpop.permute.xlu0 %5326
    %5328 = vrot.lane.b32.xlu0 %v5294, 62
    %v5329 = vpop.permute.xlu0 %5328
    %5330 = vrot.lane.b32.xlu0 %v5295, 62
    %v5331 = vpop.permute.xlu0 %5330
    %5332 = vrot.lane.b32.xlu0 %v5296, 62
    %v5333 = vpop.permute.xlu0 %5332
    %5334 = vrot.lane.b32.xlu0 %v5297, 62
    %v5335 = vpop.permute.xlu0 %5334
    %5336 = vrot.lane.b32.xlu0 %v5298, 62
    %v5337 = vpop.permute.xlu0 %5336
    %5338 = vrot.lane.b32.xlu0 %v5299, 62
    %v5339 = vpop.permute.xlu0 %5338
    %5340 = vrot.lane.b32.xlu0 %v5300, 62
    %v5341 = vpop.permute.xlu0 %5340
    %5342 = vrot.lane.b32.xlu0 %v5301, 62
    %v5343 = vpop.permute.xlu0 %5342
    %5344 = vrot.lane.b32.xlu0 %v5302, 62
    %v5345 = vpop.permute.xlu0 %5344
    %5346 = vrot.lane.b32.xlu0 %v5303, 62
    %v5347 = vpop.permute.xlu0 %5346
    %5348 = vrot.lane.b32.xlu0 %v5304, 62
    %v5349 = vpop.permute.xlu0 %5348
    %5350 = vrot.lane.b32.xlu0 %v5305, 62
    %v5351 = vpop.permute.xlu0 %5350
    %5352 = vrot.lane.b32.xlu0 %v5306, 62
    %v5353 = vpop.permute.xlu0 %5352
    %5354 = vrot.lane.b32.xlu0 %v5307, 62
    %v5355 = vpop.permute.xlu0 %5354
    %5372 = vst.msk [vmem:[#allocation3 + $0x8] sm:$0xff] %vm2899, %v5325
    %5373 = vst.msk [vmem:[#allocation3 + $0x18] sm:$0xff] %vm2899, %v5327
    %5374 = vst.msk [vmem:[#allocation3 + $0x28] sm:$0xff] %vm2899, %v5329
    %5375 = vst.msk [vmem:[#allocation3 + $0x38] sm:$0xff] %vm2899, %v5331
    %5376 = vst.msk [vmem:[#allocation3 + $0x48] sm:$0xff] %vm2899, %v5333
    %5377 = vst.msk [vmem:[#allocation3 + $0x58] sm:$0xff] %vm2899, %v5335
    %5378 = vst.msk [vmem:[#allocation3 + $0x68] sm:$0xff] %vm2899, %v5337
    %5379 = vst.msk [vmem:[#allocation3 + $0x78] sm:$0xff] %vm2899, %v5339
    %5380 = vst.msk [vmem:[#allocation3 + $0x88] sm:$0xff] %vm2899, %v5341
    %5381 = vst.msk [vmem:[#allocation3 + $0x98] sm:$0xff] %vm2899, %v5343
    %5382 = vst.msk [vmem:[#allocation3 + $0xa8] sm:$0xff] %vm2899, %v5345
    %5383 = vst.msk [vmem:[#allocation3 + $0xb8] sm:$0xff] %vm2899, %v5347
    %5384 = vst.msk [vmem:[#allocation3 + $0xc8] sm:$0xff] %vm2899, %v5349
    %5385 = vst.msk [vmem:[#allocation3 + $0xd8] sm:$0xff] %vm2899, %v5351
    %5386 = vst.msk [vmem:[#allocation3 + $0xe8] sm:$0xff] %vm2899, %v5353
    %5387 = vst.msk [vmem:[#allocation3 + $0xf8] sm:$0xff] %vm2899, %v5355
    %v5388 = vld [vmem:[#allocation2 + $0x19] sm:$0xff]
    %v5389 = vld [vmem:[#allocation2 + $0x21] sm:$0xff]
    %v5390 = vld [vmem:[#allocation2 + $0x29] sm:$0xff]
    %v5391 = vld [vmem:[#allocation2 + $0x31] sm:$0xff]
    %v5392 = vld [vmem:[#allocation2 + $0x39] sm:$0xff]
    %v5393 = vld [vmem:[#allocation2 + $0x41] sm:$0xff]
    %v5394 = vld [vmem:[#allocation2 + $0x49] sm:$0xff]
    %v5395 = vld [vmem:[#allocation2 + $0x51] sm:$0xff]
    %v5396 = vld [vmem:[#allocation2 + $0x59] sm:$0xff]
    %v5397 = vld [vmem:[#allocation2 + $0x61] sm:$0xff]
    %v5398 = vld [vmem:[#allocation2 + $0x69] sm:$0xff]
    %v5399 = vld [vmem:[#allocation2 + $0x71] sm:$0xff]
    %v5400 = vld [vmem:[#allocation2 + $0x79] sm:$0xff]
    %v5401 = vld [vmem:[#allocation2 + $0x81] sm:$0xff]
    %v5402 = vld [vmem:[#allocation2 + $0x89] sm:$0xff]
    %v5403 = vld [vmem:[#allocation2 + $0x91] sm:$0xff]
    %5420 = vrot.lane.b32.xlu0 %v5388, 72
    %v5421 = vpop.permute.xlu0 %5420
    %5422 = vrot.lane.b32.xlu0 %v5389, 72
    %v5423 = vpop.permute.xlu0 %5422
    %5424 = vrot.lane.b32.xlu0 %v5390, 72
    %v5425 = vpop.permute.xlu0 %5424
    %5426 = vrot.lane.b32.xlu0 %v5391, 72
    %v5427 = vpop.permute.xlu0 %5426
    %5428 = vrot.lane.b32.xlu0 %v5392, 72
    %v5429 = vpop.permute.xlu0 %5428
    %5430 = vrot.lane.b32.xlu0 %v5393, 72
    %v5431 = vpop.permute.xlu0 %5430
    %5432 = vrot.lane.b32.xlu0 %v5394, 72
    %v5433 = vpop.permute.xlu0 %5432
    %5434 = vrot.lane.b32.xlu0 %v5395, 72
    %v5435 = vpop.permute.xlu0 %5434
    %5436 = vrot.lane.b32.xlu0 %v5396, 72
    %v5437 = vpop.permute.xlu0 %5436
    %5438 = vrot.lane.b32.xlu0 %v5397, 72
    %v5439 = vpop.permute.xlu0 %5438
    %5440 = vrot.lane.b32.xlu0 %v5398, 72
    %v5441 = vpop.permute.xlu0 %5440
    %5442 = vrot.lane.b32.xlu0 %v5399, 72
    %v5443 = vpop.permute.xlu0 %5442
    %5444 = vrot.lane.b32.xlu0 %v5400, 72
    %v5445 = vpop.permute.xlu0 %5444
    %5446 = vrot.lane.b32.xlu0 %v5401, 72
    %v5447 = vpop.permute.xlu0 %5446
    %5448 = vrot.lane.b32.xlu0 %v5402, 72
    %v5449 = vpop.permute.xlu0 %5448
    %5450 = vrot.lane.b32.xlu0 %v5403, 72
    %v5451 = vpop.permute.xlu0 %5450
    %5468 = vst.msk [vmem:[#allocation3 + $0x8] sm:$0xff] %vm2996, %v5421
    %5469 = vst.msk [vmem:[#allocation3 + $0x18] sm:$0xff] %vm2996, %v5423
    %5470 = vst.msk [vmem:[#allocation3 + $0x28] sm:$0xff] %vm2996, %v5425
    %5471 = vst.msk [vmem:[#allocation3 + $0x38] sm:$0xff] %vm2996, %v5427
    %5472 = vst.msk [vmem:[#allocation3 + $0x48] sm:$0xff] %vm2996, %v5429
    %5473 = vst.msk [vmem:[#allocation3 + $0x58] sm:$0xff] %vm2996, %v5431
    %5474 = vst.msk [vmem:[#allocation3 + $0x68] sm:$0xff] %vm2996, %v5433
    %5475 = vst.msk [vmem:[#allocation3 + $0x78] sm:$0xff] %vm2996, %v5435
    %5476 = vst.msk [vmem:[#allocation3 + $0x88] sm:$0xff] %vm2996, %v5437
    %5477 = vst.msk [vmem:[#allocation3 + $0x98] sm:$0xff] %vm2996, %v5439
    %5478 = vst.msk [vmem:[#allocation3 + $0xa8] sm:$0xff] %vm2996, %v5441
    %5479 = vst.msk [vmem:[#allocation3 + $0xb8] sm:$0xff] %vm2996, %v5443
    %5480 = vst.msk [vmem:[#allocation3 + $0xc8] sm:$0xff] %vm2996, %v5445
    %5481 = vst.msk [vmem:[#allocation3 + $0xd8] sm:$0xff] %vm2996, %v5447
    %5482 = vst.msk [vmem:[#allocation3 + $0xe8] sm:$0xff] %vm2996, %v5449
    %5483 = vst.msk [vmem:[#allocation3 + $0xf8] sm:$0xff] %vm2996, %v5451
    %v5484 = vld [vmem:[#allocation2 + $0x1a] sm:$0xff]
    %v5485 = vld [vmem:[#allocation2 + $0x22] sm:$0xff]
    %v5486 = vld [vmem:[#allocation2 + $0x2a] sm:$0xff]
    %v5487 = vld [vmem:[#allocation2 + $0x32] sm:$0xff]
    %v5488 = vld [vmem:[#allocation2 + $0x3a] sm:$0xff]
    %v5489 = vld [vmem:[#allocation2 + $0x42] sm:$0xff]
    %v5490 = vld [vmem:[#allocation2 + $0x4a] sm:$0xff]
    %v5491 = vld [vmem:[#allocation2 + $0x52] sm:$0xff]
    %v5492 = vld [vmem:[#allocation2 + $0x5a] sm:$0xff]
    %v5493 = vld [vmem:[#allocation2 + $0x62] sm:$0xff]
    %v5494 = vld [vmem:[#allocation2 + $0x6a] sm:$0xff]
    %v5495 = vld [vmem:[#allocation2 + $0x72] sm:$0xff]
    %v5496 = vld [vmem:[#allocation2 + $0x7a] sm:$0xff]
    %v5497 = vld [vmem:[#allocation2 + $0x82] sm:$0xff]
    %v5498 = vld [vmem:[#allocation2 + $0x8a] sm:$0xff]
    %v5499 = vld [vmem:[#allocation2 + $0x92] sm:$0xff]
    %5516 = vrot.lane.b32.xlu0 %v5484, 82
    %v5517 = vpop.permute.xlu0 %5516
    %5518 = vrot.lane.b32.xlu0 %v5485, 82
    %v5519 = vpop.permute.xlu0 %5518
    %5520 = vrot.lane.b32.xlu0 %v5486, 82
    %v5521 = vpop.permute.xlu0 %5520
    %5522 = vrot.lane.b32.xlu0 %v5487, 82
    %v5523 = vpop.permute.xlu0 %5522
    %5524 = vrot.lane.b32.xlu0 %v5488, 82
    %v5525 = vpop.permute.xlu0 %5524
    %5526 = vrot.lane.b32.xlu0 %v5489, 82
    %v5527 = vpop.permute.xlu0 %5526
    %5528 = vrot.lane.b32.xlu0 %v5490, 82
    %v5529 = vpop.permute.xlu0 %5528
    %5530 = vrot.lane.b32.xlu0 %v5491, 82
    %v5531 = vpop.permute.xlu0 %5530
    %5532 = vrot.lane.b32.xlu0 %v5492, 82
    %v5533 = vpop.permute.xlu0 %5532
    %5534 = vrot.lane.b32.xlu0 %v5493, 82
    %v5535 = vpop.permute.xlu0 %5534
    %5536 = vrot.lane.b32.xlu0 %v5494, 82
    %v5537 = vpop.permute.xlu0 %5536
    %5538 = vrot.lane.b32.xlu0 %v5495, 82
    %v5539 = vpop.permute.xlu0 %5538
    %5540 = vrot.lane.b32.xlu0 %v5496, 82
    %v5541 = vpop.permute.xlu0 %5540
    %5542 = vrot.lane.b32.xlu0 %v5497, 82
    %v5543 = vpop.permute.xlu0 %5542
    %5544 = vrot.lane.b32.xlu0 %v5498, 82
    %v5545 = vpop.permute.xlu0 %5544
    %5546 = vrot.lane.b32.xlu0 %v5499, 82
    %v5547 = vpop.permute.xlu0 %5546
    %5564 = vst.msk [vmem:[#allocation3 + $0x8] sm:$0xff] %vm3093, %v5517
    %5565 = vst.msk [vmem:[#allocation3 + $0x18] sm:$0xff] %vm3093, %v5519
    %5566 = vst.msk [vmem:[#allocation3 + $0x28] sm:$0xff] %vm3093, %v5521
    %5567 = vst.msk [vmem:[#allocation3 + $0x38] sm:$0xff] %vm3093, %v5523
    %5568 = vst.msk [vmem:[#allocation3 + $0x48] sm:$0xff] %vm3093, %v5525
    %5569 = vst.msk [vmem:[#allocation3 + $0x58] sm:$0xff] %vm3093, %v5527
    %5570 = vst.msk [vmem:[#allocation3 + $0x68] sm:$0xff] %vm3093, %v5529
    %5571 = vst.msk [vmem:[#allocation3 + $0x78] sm:$0xff] %vm3093, %v5531
    %5572 = vst.msk [vmem:[#allocation3 + $0x88] sm:$0xff] %vm3093, %v5533
    %5573 = vst.msk [vmem:[#allocation3 + $0x98] sm:$0xff] %vm3093, %v5535
    %5574 = vst.msk [vmem:[#allocation3 + $0xa8] sm:$0xff] %vm3093, %v5537
    %5575 = vst.msk [vmem:[#allocation3 + $0xb8] sm:$0xff] %vm3093, %v5539
    %5576 = vst.msk [vmem:[#allocation3 + $0xc8] sm:$0xff] %vm3093, %v5541
    %5577 = vst.msk [vmem:[#allocation3 + $0xd8] sm:$0xff] %vm3093, %v5543
    %5578 = vst.msk [vmem:[#allocation3 + $0xe8] sm:$0xff] %vm3093, %v5545
    %5579 = vst.msk [vmem:[#allocation3 + $0xf8] sm:$0xff] %vm3093, %v5547
    %v5580 = vld [vmem:[#allocation2 + $0x1b] sm:$0xff]
    %v5581 = vld [vmem:[#allocation2 + $0x23] sm:$0xff]
    %v5582 = vld [vmem:[#allocation2 + $0x2b] sm:$0xff]
    %v5583 = vld [vmem:[#allocation2 + $0x33] sm:$0xff]
    %v5584 = vld [vmem:[#allocation2 + $0x3b] sm:$0xff]
    %v5585 = vld [vmem:[#allocation2 + $0x43] sm:$0xff]
    %v5586 = vld [vmem:[#allocation2 + $0x4b] sm:$0xff]
    %v5587 = vld [vmem:[#allocation2 + $0x53] sm:$0xff]
    %v5588 = vld [vmem:[#allocation2 + $0x5b] sm:$0xff]
    %v5589 = vld [vmem:[#allocation2 + $0x63] sm:$0xff]
    %v5590 = vld [vmem:[#allocation2 + $0x6b] sm:$0xff]
    %v5591 = vld [vmem:[#allocation2 + $0x73] sm:$0xff]
    %v5592 = vld [vmem:[#allocation2 + $0x7b] sm:$0xff]
    %v5593 = vld [vmem:[#allocation2 + $0x83] sm:$0xff]
    %v5594 = vld [vmem:[#allocation2 + $0x8b] sm:$0xff]
    %v5595 = vld [vmem:[#allocation2 + $0x93] sm:$0xff]
    %5612 = vrot.lane.b32.xlu0 %v5580, 92
    %v5613 = vpop.permute.xlu0 %5612
    %5614 = vrot.lane.b32.xlu0 %v5581, 92
    %v5615 = vpop.permute.xlu0 %5614
    %5616 = vrot.lane.b32.xlu0 %v5582, 92
    %v5617 = vpop.permute.xlu0 %5616
    %5618 = vrot.lane.b32.xlu0 %v5583, 92
    %v5619 = vpop.permute.xlu0 %5618
    %5620 = vrot.lane.b32.xlu0 %v5584, 92
    %v5621 = vpop.permute.xlu0 %5620
    %5622 = vrot.lane.b32.xlu0 %v5585, 92
    %v5623 = vpop.permute.xlu0 %5622
    %5624 = vrot.lane.b32.xlu0 %v5586, 92
    %v5625 = vpop.permute.xlu0 %5624
    %5626 = vrot.lane.b32.xlu0 %v5587, 92
    %v5627 = vpop.permute.xlu0 %5626
    %5628 = vrot.lane.b32.xlu0 %v5588, 92
    %v5629 = vpop.permute.xlu0 %5628
    %5630 = vrot.lane.b32.xlu0 %v5589, 92
    %v5631 = vpop.permute.xlu0 %5630
    %5632 = vrot.lane.b32.xlu0 %v5590, 92
    %v5633 = vpop.permute.xlu0 %5632
    %5634 = vrot.lane.b32.xlu0 %v5591, 92
    %v5635 = vpop.permute.xlu0 %5634
    %5636 = vrot.lane.b32.xlu0 %v5592, 92
    %v5637 = vpop.permute.xlu0 %5636
    %5638 = vrot.lane.b32.xlu0 %v5593, 92
    %v5639 = vpop.permute.xlu0 %5638
    %5640 = vrot.lane.b32.xlu0 %v5594, 92
    %v5641 = vpop.permute.xlu0 %5640
    %5642 = vrot.lane.b32.xlu0 %v5595, 92
    %v5643 = vpop.permute.xlu0 %5642
    %5660 = vst.msk [vmem:[#allocation3 + $0x8] sm:$0xff] %vm3190, %v5613
    %5661 = vst.msk [vmem:[#allocation3 + $0x18] sm:$0xff] %vm3190, %v5615
    %5662 = vst.msk [vmem:[#allocation3 + $0x28] sm:$0xff] %vm3190, %v5617
    %5663 = vst.msk [vmem:[#allocation3 + $0x38] sm:$0xff] %vm3190, %v5619
    %5664 = vst.msk [vmem:[#allocation3 + $0x48] sm:$0xff] %vm3190, %v5621
    %5665 = vst.msk [vmem:[#allocation3 + $0x58] sm:$0xff] %vm3190, %v5623
    %5666 = vst.msk [vmem:[#allocation3 + $0x68] sm:$0xff] %vm3190, %v5625
    %5667 = vst.msk [vmem:[#allocation3 + $0x78] sm:$0xff] %vm3190, %v5627
    %5668 = vst.msk [vmem:[#allocation3 + $0x88] sm:$0xff] %vm3190, %v5629
    %5669 = vst.msk [vmem:[#allocation3 + $0x98] sm:$0xff] %vm3190, %v5631
    %5670 = vst.msk [vmem:[#allocation3 + $0xa8] sm:$0xff] %vm3190, %v5633
    %5671 = vst.msk [vmem:[#allocation3 + $0xb8] sm:$0xff] %vm3190, %v5635
    %5672 = vst.msk [vmem:[#allocation3 + $0xc8] sm:$0xff] %vm3190, %v5637
    %5673 = vst.msk [vmem:[#allocation3 + $0xd8] sm:$0xff] %vm3190, %v5639
    %5674 = vst.msk [vmem:[#allocation3 + $0xe8] sm:$0xff] %vm3190, %v5641
    %5675 = vst.msk [vmem:[#allocation3 + $0xf8] sm:$0xff] %vm3190, %v5643
    %v5676 = vld [vmem:[#allocation3] sm:$0xff]
    %v5677 = vld [vmem:[#allocation3 + $0x8] sm:$0xff]
    %v5678 = vld [vmem:[#allocation3 + $0x10] sm:$0xff]
    %v5679 = vld [vmem:[#allocation3 + $0x18] sm:$0xff]
    %v5680 = vld [vmem:[#allocation3 + $0x20] sm:$0xff]
    %v5681 = vld [vmem:[#allocation3 + $0x28] sm:$0xff]
    %v5682 = vld [vmem:[#allocation3 + $0x30] sm:$0xff]
    %v5683 = vld [vmem:[#allocation3 + $0x38] sm:$0xff]
    %v5684 = vld [vmem:[#allocation3 + $0x40] sm:$0xff]
    %v5685 = vld [vmem:[#allocation3 + $0x48] sm:$0xff]
    %v5686 = vld [vmem:[#allocation3 + $0x50] sm:$0xff]
    %v5687 = vld [vmem:[#allocation3 + $0x58] sm:$0xff]
    %v5688 = vld [vmem:[#allocation3 + $0x60] sm:$0xff]
    %v5689 = vld [vmem:[#allocation3 + $0x68] sm:$0xff]
    %v5690 = vld [vmem:[#allocation3 + $0x70] sm:$0xff]
    %v5691 = vld [vmem:[#allocation3 + $0x78] sm:$0xff]
    %v5692 = vld [vmem:[#allocation3 + $0x80] sm:$0xff]
    %v5693 = vld [vmem:[#allocation3 + $0x88] sm:$0xff]
    %v5694 = vld [vmem:[#allocation3 + $0x90] sm:$0xff]
    %v5695 = vld [vmem:[#allocation3 + $0x98] sm:$0xff]
    %v5696 = vld [vmem:[#allocation3 + $0xa0] sm:$0xff]
    %v5697 = vld [vmem:[#allocation3 + $0xa8] sm:$0xff]
    %v5698 = vld [vmem:[#allocation3 + $0xb0] sm:$0xff]
    %v5699 = vld [vmem:[#allocation3 + $0xb8] sm:$0xff]
    %v5700 = vld [vmem:[#allocation3 + $0xc0] sm:$0xff]
    %v5701 = vld [vmem:[#allocation3 + $0xc8] sm:$0xff]
    %v5702 = vld [vmem:[#allocation3 + $0xd0] sm:$0xff]
    %v5703 = vld [vmem:[#allocation3 + $0xd8] sm:$0xff]
    %v5704 = vld [vmem:[#allocation3 + $0xe0] sm:$0xff]
    %v5705 = vld [vmem:[#allocation3 + $0xe8] sm:$0xff]
    %v5706 = vld [vmem:[#allocation3 + $0xf0] sm:$0xff]
    %v5707 = vld [vmem:[#allocation3 + $0xf8] sm:$0xff]
    %s5708 = scalar_lea.vmem %s6, 232
    %v5709 = vld [vmem:[%s5708] sm:$0xff]
    %v5710 = vld [vmem:[%s5708 + $0x8] sm:$0xff]
    %v5711 = vld [vmem:[%s5708 + $0x10] sm:$0xff]
    %v5712 = vld [vmem:[%s5708 + $0x18] sm:$0xff]
    %v5713 = vld [vmem:[%s5708 + $0x20] sm:$0xff]
    %v5714 = vld [vmem:[%s5708 + $0x28] sm:$0xff]
    %v5715 = vld [vmem:[%s5708 + $0x30] sm:$0xff]
    %v5716 = vld [vmem:[%s5708 + $0x38] sm:$0xff]
    %v5717 = vld [vmem:[%s5708 + $0x40] sm:$0xff]
    %v5718 = vld [vmem:[%s5708 + $0x48] sm:$0xff]
    %v5719 = vld [vmem:[%s5708 + $0x50] sm:$0xff]
    %v5720 = vld [vmem:[%s5708 + $0x58] sm:$0xff]
    %v5721 = vld [vmem:[%s5708 + $0x60] sm:$0xff]
    %v5722 = vld [vmem:[%s5708 + $0x68] sm:$0xff]
    %v5723 = vld [vmem:[%s5708 + $0x70] sm:$0xff]
    %v5724 = vld [vmem:[%s5708 + $0x78] sm:$0xff]
    %v5725 = vld [vmem:[%s5708 + $0x80] sm:$0xff]
    %v5726 = vld [vmem:[%s5708 + $0x88] sm:$0xff]
    %v5727 = vld [vmem:[%s5708 + $0x90] sm:$0xff]
    %v5728 = vld [vmem:[%s5708 + $0x98] sm:$0xff]
    %v5729 = vld [vmem:[%s5708 + $0xa0] sm:$0xff]
    %v5730 = vld [vmem:[%s5708 + $0xa8] sm:$0xff]
    %v5731 = vld [vmem:[%s5708 + $0xb0] sm:$0xff]
    %v5732 = vld [vmem:[%s5708 + $0xb8] sm:$0xff]
    %v5733 = vld [vmem:[%s5708 + $0xc0] sm:$0xff]
    %v5734 = vld [vmem:[%s5708 + $0xc8] sm:$0xff]
    %v5735 = vld [vmem:[%s5708 + $0xd0] sm:$0xff]
    %v5736 = vld [vmem:[%s5708 + $0xd8] sm:$0xff]
    %v5737 = vld [vmem:[%s5708 + $0xe0] sm:$0x3f]
    %s5738 = sld [smem:[#allocation8 + $0x1]]
    %v5739 = vstv %s5738
    %v5741 = vsel %vm3270, %v5677, 0
    %v5744 = vsel %vm3270, %v5679, 0
    %v5747 = vsel %vm3270, %v5681, 0
    %v5750 = vsel %vm3270, %v5683, 0
    %v5753 = vsel %vm3270, %v5685, 0
    %v5756 = vsel %vm3270, %v5687, 0
    %v5759 = vsel %vm3270, %v5689, 0
    %v5762 = vsel %vm3270, %v5691, 0
    %v5765 = vsel %vm3270, %v5693, 0
    %v5768 = vsel %vm3270, %v5695, 0
    %v5771 = vsel %vm3270, %v5697, 0
    %v5774 = vsel %vm3270, %v5699, 0
    %v5777 = vsel %vm3270, %v5701, 0
    %v5780 = vsel %vm3270, %v5703, 0
    %v5783 = vsel %vm3270, %v5705, 0
    %v5786 = vsel %vm3270, %v5707, 0
    %v5789 = vsel %vm3319, %v5737, 0
    %5791 = vmatprep.subr.mxu0 0.0
    %5792 = vmatpush1.msra.mxu0 %v5724
    %5793 = vmatprep.subr.mxu0 0.0
    %5794 = vmatpush1.msra.mxu0 %v5723
    %5795 = vmatprep.subr.mxu0 0.0
    %5796 = vmatpush1.msra.mxu0 %v5722
    %5797 = vmatprep.subr.mxu0 0.0
    %5798 = vmatpush1.msra.mxu0 %v5721
    %5799 = vmatprep.subr.mxu0 0.0
    %5800 = vmatpush1.msra.mxu0 %v5720
    %5801 = vmatprep.subr.mxu0 0.0
    %5802 = vmatpush1.msra.mxu0 %v5719
    %5803 = vmatprep.subr.mxu0 0.0
    %5804 = vmatpush1.msra.mxu0 %v5718
    %5805 = vmatprep.subr.mxu0 0.0
    %5806 = vmatpush1.msra.mxu0 %v5717
    %5807 = vmatprep.subr.mxu0 0.0
    %5808 = vmatpush1.msra.mxu0 %v5716
    %5809 = vmatprep.subr.mxu0 0.0
    %5810 = vmatpush1.msra.mxu0 %v5715
    %5811 = vmatprep.subr.mxu0 0.0
    %5812 = vmatpush1.msra.mxu0 %v5714
    %5813 = vmatprep.subr.mxu0 0.0
    %5814 = vmatpush1.msra.mxu0 %v5713
    %5815 = vmatprep.subr.mxu0 0.0
    %5816 = vmatpush1.msra.mxu0 %v5712
    %5817 = vmatprep.subr.mxu0 0.0
    %5818 = vmatpush1.msra.mxu0 %v5711
    %5819 = vmatprep.subr.mxu0 0.0
    %5820 = vmatpush1.msra.mxu0 %v5710
    %5821 = vmatprep.subr.mxu0 0.0
    %5822 = vmatpush1.msra.mxu0 %v5709
    %5823 = vmatprep.subr.mxu0 0.0
    %5824 = vmatpush2.msra.mxu0 0.0
    %5825 = vmatprep.subr.mxu0 0.0
    %5826 = vmatpush2.msra.mxu0 0.0
    %5827 = vmatprep.subr.mxu0 0.0
    %5828 = vmatpush2.msra.mxu0 0.0
    %5829 = vmatprep.subr.mxu0 0.0
    %5830 = vmatpush2.msra.mxu0 %v5789
    %5831 = vmatprep.subr.mxu0 0.0
    %5832 = vmatpush2.msra.mxu0 %v5736
    %5833 = vmatprep.subr.mxu0 0.0
    %5834 = vmatpush2.msra.mxu0 %v5735
    %5835 = vmatprep.subr.mxu0 0.0
    %5836 = vmatpush2.msra.mxu0 %v5734
    %5837 = vmatprep.subr.mxu0 0.0
    %5838 = vmatpush2.msra.mxu0 %v5733
    %5839 = vmatprep.subr.mxu0 0.0
    %5840 = vmatpush2.msra.mxu0 %v5732
    %5841 = vmatprep.subr.mxu0 0.0
    %5842 = vmatpush2.msra.mxu0 %v5731
    %5843 = vmatprep.subr.mxu0 0.0
    %5844 = vmatpush2.msra.mxu0 %v5730
    %5845 = vmatprep.subr.mxu0 0.0
    %5846 = vmatpush2.msra.mxu0 %v5729
    %5847 = vmatprep.subr.mxu0 0.0
    %5848 = vmatpush2.msra.mxu0 %v5728
    %5849 = vmatprep.subr.mxu0 0.0
    %5850 = vmatpush2.msra.mxu0 %v5727
    %5851 = vmatprep.subr.mxu0 0.0
    %5852 = vmatpush2.msra.mxu0 %v5726
    %5853 = vmatprep.subr.mxu0 0.0
    %5854 = vmatpush2.msra.mxu0 %v5725
    %5855 = vmatprep.mubr.f32.mxu0 %v5741
    %5856 = vmatmul.mubr.f32.gmra.mxu0 %v5676
    %v5857 = vpop.f32.mrf.mxu0
    %v5858 = vadd.f32 %v5739, %v5857
    %v5859 = vpop.f32.mrf.mxu0
    %5860 = vmatprep.mubr.f32.mxu0 %v5744
    %5861 = vmatmul.mubr.f32.gmra.mxu0 %v5678
    %v5862 = vpop.f32.mrf.mxu0
    %v5863 = vadd.f32 %v5739, %v5862
    %v5864 = vpop.f32.mrf.mxu0
    %5865 = vmatprep.mubr.f32.mxu0 %v5747
    %5866 = vmatmul.mubr.f32.gmra.mxu0 %v5680
    %v5867 = vpop.f32.mrf.mxu0
    %v5868 = vadd.f32 %v5739, %v5867
    %v5869 = vpop.f32.mrf.mxu0
    %5870 = vmatprep.mubr.f32.mxu0 %v5750
    %5871 = vmatmul.mubr.f32.gmra.mxu0 %v5682
    %v5872 = vpop.f32.mrf.mxu0
    %v5873 = vadd.f32 %v5739, %v5872
    %v5874 = vpop.f32.mrf.mxu0
    %5875 = vmatprep.mubr.f32.mxu0 %v5753
    %5876 = vmatmul.mubr.f32.gmra.mxu0 %v5684
    %v5877 = vpop.f32.mrf.mxu0
    %v5878 = vadd.f32 %v5739, %v5877
    %v5879 = vpop.f32.mrf.mxu0
    %5880 = vmatprep.mubr.f32.mxu0 %v5756
    %5881 = vmatmul.mubr.f32.gmra.mxu0 %v5686
    %v5882 = vpop.f32.mrf.mxu0
    %v5883 = vadd.f32 %v5739, %v5882
    %v5884 = vpop.f32.mrf.mxu0
    %5885 = vmatprep.mubr.f32.mxu0 %v5759
    %5886 = vmatmul.mubr.f32.gmra.mxu0 %v5688
    %v5887 = vpop.f32.mrf.mxu0
    %v5888 = vadd.f32 %v5739, %v5887
    %v5889 = vpop.f32.mrf.mxu0
    %5890 = vmatprep.mubr.f32.mxu0 %v5762
    %5891 = vmatmul.mubr.f32.gmra.mxu0 %v5690
    %v5892 = vpop.f32.mrf.mxu0
    %v5893 = vadd.f32 %v5739, %v5892
    %v5894 = vpop.f32.mrf.mxu0
    %5895 = vmatprep.mubr.f32.mxu0 %v5765
    %5896 = vmatmul.mubr.f32.gmra.mxu0 %v5692
    %v5897 = vpop.f32.mrf.mxu0
    %v5898 = vadd.f32 %v5739, %v5897
    %v5899 = vpop.f32.mrf.mxu0
    %5900 = vmatprep.mubr.f32.mxu0 %v5768
    %5901 = vmatmul.mubr.f32.gmra.mxu0 %v5694
    %v5902 = vpop.f32.mrf.mxu0
    %v5903 = vadd.f32 %v5739, %v5902
    %v5904 = vpop.f32.mrf.mxu0
    %5905 = vmatprep.mubr.f32.mxu0 %v5771
    %5906 = vmatmul.mubr.f32.gmra.mxu0 %v5696
    %v5907 = vpop.f32.mrf.mxu0
    %v5908 = vadd.f32 %v5739, %v5907
    %v5909 = vpop.f32.mrf.mxu0
    %5910 = vmatprep.mubr.f32.mxu0 %v5774
    %5911 = vmatmul.mubr.f32.gmra.mxu0 %v5698
    %v5912 = vpop.f32.mrf.mxu0
    %v5913 = vadd.f32 %v5739, %v5912
    %v5914 = vpop.f32.mrf.mxu0
    %5915 = vmatprep.mubr.f32.mxu0 %v5777
    %5916 = vmatmul.mubr.f32.gmra.mxu0 %v5700
    %v5917 = vpop.f32.mrf.mxu0
    %v5918 = vadd.f32 %v5739, %v5917
    %v5919 = vpop.f32.mrf.mxu0
    %5920 = vmatprep.mubr.f32.mxu0 %v5780
    %5921 = vmatmul.mubr.f32.gmra.mxu0 %v5702
    %v5922 = vpop.f32.mrf.mxu0
    %v5923 = vadd.f32 %v5739, %v5922
    %v5924 = vpop.f32.mrf.mxu0
    %5925 = vmatprep.mubr.f32.mxu0 %v5783
    %5926 = vmatmul.mubr.f32.gmra.mxu0 %v5704
    %v5927 = vpop.f32.mrf.mxu0
    %v5928 = vadd.f32 %v5739, %v5927
    %v5929 = vpop.f32.mrf.mxu0
    %5930 = vmatprep.mubr.f32.mxu0 %v5786
    %5931 = vmatmul.mubr.f32.gmra.mxu0 %v5706
    %v5932 = vpop.f32.mrf.mxu0
    %v5933 = vadd.f32 %v5739, %v5932
    %v5934 = vpop.f32.mrf.mxu0
    %5935 = vdwg.mxu0
    %v5936 = vmax.f32 %v5858, 0.0
    %v5937 = vmax.f32 %v5863, 0.0
    %v5938 = vmax.f32 %v5868, 0.0
    %v5939 = vmax.f32 %v5873, 0.0
    %v5940 = vmax.f32 %v5878, 0.0
    %v5941 = vmax.f32 %v5883, 0.0
    %v5942 = vmax.f32 %v5888, 0.0
    %v5943 = vmax.f32 %v5893, 0.0
    %v5944 = vmax.f32 %v5898, 0.0
    %v5945 = vmax.f32 %v5903, 0.0
    %v5946 = vmax.f32 %v5908, 0.0
    %v5947 = vmax.f32 %v5913, 0.0
    %v5948 = vmax.f32 %v5918, 0.0
    %v5949 = vmax.f32 %v5923, 0.0
    %v5950 = vmax.f32 %v5928, 0.0
    %v5951 = vmax.f32 %v5933, 0.0
    %v5952 = vsel %vm956, %v5936, 0.0
    %v5953 = vsel %vm957, %v5937, 0.0
    %v5954 = vsel %vm958, %v5938, 0.0
    %v5955 = vsel %vm959, %v5939, 0.0
    %v5956 = vsel %vm960, %v5940, 0.0
    %v5957 = vsel %vm961, %v5941, 0.0
    %v5958 = vsel %vm962, %v5942, 0.0
    %v5959 = vsel %vm963, %v5943, 0.0
    %v5960 = vsel %vm964, %v5944, 0.0
    %v5961 = vsel %vm965, %v5945, 0.0
    %v5962 = vsel %vm966, %v5946, 0.0
    %v5963 = vsel %vm967, %v5947, 0.0
    %v5964 = vsel %vm968, %v5948, 0.0
    %v5965 = vsel %vm969, %v5949, 0.0
    %v5966 = vsel %vm970, %v5950, 0.0
    %v5967 = vsel %vm971, %v5951, 0.0
    %5968 = vst.msk [vmem:[#allocation2 + $0x10] sm:$0xff] %vm130, %v5952
    %5969 = vst.msk [vmem:[#allocation2 + $0x18] sm:$0xff] %vm130, %v5953
    %5970 = vst.msk [vmem:[#allocation2 + $0x20] sm:$0xff] %vm130, %v5954
    %5971 = vst.msk [vmem:[#allocation2 + $0x28] sm:$0xff] %vm130, %v5955
    %5972 = vst.msk [vmem:[#allocation2 + $0x30] sm:$0xff] %vm130, %v5956
    %5973 = vst.msk [vmem:[#allocation2 + $0x38] sm:$0xff] %vm130, %v5957
    %5974 = vst.msk [vmem:[#allocation2 + $0x40] sm:$0xff] %vm130, %v5958
    %5975 = vst.msk [vmem:[#allocation2 + $0x48] sm:$0xff] %vm130, %v5959
    %5976 = vst.msk [vmem:[#allocation2 + $0x50] sm:$0xff] %vm130, %v5960
    %5977 = vst.msk [vmem:[#allocation2 + $0x58] sm:$0xff] %vm130, %v5961
    %5978 = vst.msk [vmem:[#allocation2 + $0x60] sm:$0xff] %vm130, %v5962
    %5979 = vst.msk [vmem:[#allocation2 + $0x68] sm:$0xff] %vm130, %v5963
    %5980 = vst.msk [vmem:[#allocation2 + $0x70] sm:$0xff] %vm130, %v5964
    %5981 = vst.msk [vmem:[#allocation2 + $0x78] sm:$0xff] %vm130, %v5965
    %5982 = vst.msk [vmem:[#allocation2 + $0x80] sm:$0xff] %vm130, %v5966
    %5983 = vst.msk [vmem:[#allocation2 + $0x88] sm:$0xff] %vm130, %v5967
    %v5984 = vld [vmem:[#allocation2 + $0x5] sm:$0xff]
    %v5985 = vld [vmem:[#allocation2 + $0xd] sm:$0xff]
    %v5986 = vld [vmem:[#allocation2 + $0x15] sm:$0xff]
    %v5987 = vld [vmem:[#allocation2 + $0x1d] sm:$0xff]
    %v5988 = vld [vmem:[#allocation2 + $0x25] sm:$0xff]
    %v5989 = vld [vmem:[#allocation2 + $0x2d] sm:$0xff]
    %v5990 = vld [vmem:[#allocation2 + $0x35] sm:$0xff]
    %v5991 = vld [vmem:[#allocation2 + $0x3d] sm:$0xff]
    %v5992 = vld [vmem:[#allocation2 + $0x45] sm:$0xff]
    %v5993 = vld [vmem:[#allocation2 + $0x4d] sm:$0xff]
    %v5994 = vld [vmem:[#allocation2 + $0x55] sm:$0xff]
    %v5995 = vld [vmem:[#allocation2 + $0x5d] sm:$0xff]
    %v5996 = vld [vmem:[#allocation2 + $0x65] sm:$0xff]
    %v5997 = vld [vmem:[#allocation2 + $0x6d] sm:$0xff]
    %v5998 = vld [vmem:[#allocation2 + $0x75] sm:$0xff]
    %v5999 = vld [vmem:[#allocation2 + $0x7d] sm:$0xff]
    %6000 = vst.msk [vmem:[#allocation3] sm:$0xff] %vm130, %v5984
    %6001 = vst.msk [vmem:[#allocation3 + $0x10] sm:$0xff] %vm130, %v5985
    %6002 = vst.msk [vmem:[#allocation3 + $0x20] sm:$0xff] %vm130, %v5986
    %6003 = vst.msk [vmem:[#allocation3 + $0x30] sm:$0xff] %vm130, %v5987
    %6004 = vst.msk [vmem:[#allocation3 + $0x40] sm:$0xff] %vm130, %v5988
    %6005 = vst.msk [vmem:[#allocation3 + $0x50] sm:$0xff] %vm130, %v5989
    %6006 = vst.msk [vmem:[#allocation3 + $0x60] sm:$0xff] %vm130, %v5990
    %6007 = vst.msk [vmem:[#allocation3 + $0x70] sm:$0xff] %vm130, %v5991
    %6008 = vst.msk [vmem:[#allocation3 + $0x80] sm:$0xff] %vm130, %v5992
    %6009 = vst.msk [vmem:[#allocation3 + $0x90] sm:$0xff] %vm130, %v5993
    %6010 = vst.msk [vmem:[#allocation3 + $0xa0] sm:$0xff] %vm130, %v5994
    %6011 = vst.msk [vmem:[#allocation3 + $0xb0] sm:$0xff] %vm130, %v5995
    %6012 = vst.msk [vmem:[#allocation3 + $0xc0] sm:$0xff] %vm130, %v5996
    %6013 = vst.msk [vmem:[#allocation3 + $0xd0] sm:$0xff] %vm130, %v5997
    %6014 = vst.msk [vmem:[#allocation3 + $0xe0] sm:$0xff] %vm130, %v5998
    %6015 = vst.msk [vmem:[#allocation3 + $0xf0] sm:$0xff] %vm130, %v5999
    %v6016 = vld [vmem:[#allocation2 + $0x6] sm:$0xff]
    %v6017 = vld [vmem:[#allocation2 + $0xe] sm:$0xff]
    %v6018 = vld [vmem:[#allocation2 + $0x16] sm:$0xff]
    %v6019 = vld [vmem:[#allocation2 + $0x1e] sm:$0xff]
    %v6020 = vld [vmem:[#allocation2 + $0x26] sm:$0xff]
    %v6021 = vld [vmem:[#allocation2 + $0x2e] sm:$0xff]
    %v6022 = vld [vmem:[#allocation2 + $0x36] sm:$0xff]
    %v6023 = vld [vmem:[#allocation2 + $0x3e] sm:$0xff]
    %v6024 = vld [vmem:[#allocation2 + $0x46] sm:$0xff]
    %v6025 = vld [vmem:[#allocation2 + $0x4e] sm:$0xff]
    %v6026 = vld [vmem:[#allocation2 + $0x56] sm:$0xff]
    %v6027 = vld [vmem:[#allocation2 + $0x5e] sm:$0xff]
    %v6028 = vld [vmem:[#allocation2 + $0x66] sm:$0xff]
    %v6029 = vld [vmem:[#allocation2 + $0x6e] sm:$0xff]
    %v6030 = vld [vmem:[#allocation2 + $0x76] sm:$0xff]
    %v6031 = vld [vmem:[#allocation2 + $0x7e] sm:$0xff]
    %6048 = vrot.lane.b32.xlu0 %v6016, 10
    %v6049 = vpop.permute.xlu0 %6048
    %6050 = vrot.lane.b32.xlu0 %v6017, 10
    %v6051 = vpop.permute.xlu0 %6050
    %6052 = vrot.lane.b32.xlu0 %v6018, 10
    %v6053 = vpop.permute.xlu0 %6052
    %6054 = vrot.lane.b32.xlu0 %v6019, 10
    %v6055 = vpop.permute.xlu0 %6054
    %6056 = vrot.lane.b32.xlu0 %v6020, 10
    %v6057 = vpop.permute.xlu0 %6056
    %6058 = vrot.lane.b32.xlu0 %v6021, 10
    %v6059 = vpop.permute.xlu0 %6058
    %6060 = vrot.lane.b32.xlu0 %v6022, 10
    %v6061 = vpop.permute.xlu0 %6060
    %6062 = vrot.lane.b32.xlu0 %v6023, 10
    %v6063 = vpop.permute.xlu0 %6062
    %6064 = vrot.lane.b32.xlu0 %v6024, 10
    %v6065 = vpop.permute.xlu0 %6064
    %6066 = vrot.lane.b32.xlu0 %v6025, 10
    %v6067 = vpop.permute.xlu0 %6066
    %6068 = vrot.lane.b32.xlu0 %v6026, 10
    %v6069 = vpop.permute.xlu0 %6068
    %6070 = vrot.lane.b32.xlu0 %v6027, 10
    %v6071 = vpop.permute.xlu0 %6070
    %6072 = vrot.lane.b32.xlu0 %v6028, 10
    %v6073 = vpop.permute.xlu0 %6072
    %6074 = vrot.lane.b32.xlu0 %v6029, 10
    %v6075 = vpop.permute.xlu0 %6074
    %6076 = vrot.lane.b32.xlu0 %v6030, 10
    %v6077 = vpop.permute.xlu0 %6076
    %6078 = vrot.lane.b32.xlu0 %v6031, 10
    %v6079 = vpop.permute.xlu0 %6078
    %6096 = vst.msk [vmem:[#allocation3] sm:$0xff] %vm1136, %v6049
    %6097 = vst.msk [vmem:[#allocation3 + $0x10] sm:$0xff] %vm1136, %v6051
    %6098 = vst.msk [vmem:[#allocation3 + $0x20] sm:$0xff] %vm1136, %v6053
    %6099 = vst.msk [vmem:[#allocation3 + $0x30] sm:$0xff] %vm1136, %v6055
    %6100 = vst.msk [vmem:[#allocation3 + $0x40] sm:$0xff] %vm1136, %v6057
    %6101 = vst.msk [vmem:[#allocation3 + $0x50] sm:$0xff] %vm1136, %v6059
    %6102 = vst.msk [vmem:[#allocation3 + $0x60] sm:$0xff] %vm1136, %v6061
    %6103 = vst.msk [vmem:[#allocation3 + $0x70] sm:$0xff] %vm1136, %v6063
    %6104 = vst.msk [vmem:[#allocation3 + $0x80] sm:$0xff] %vm1136, %v6065
    %6105 = vst.msk [vmem:[#allocation3 + $0x90] sm:$0xff] %vm1136, %v6067
    %6106 = vst.msk [vmem:[#allocation3 + $0xa0] sm:$0xff] %vm1136, %v6069
    %6107 = vst.msk [vmem:[#allocation3 + $0xb0] sm:$0xff] %vm1136, %v6071
    %6108 = vst.msk [vmem:[#allocation3 + $0xc0] sm:$0xff] %vm1136, %v6073
    %6109 = vst.msk [vmem:[#allocation3 + $0xd0] sm:$0xff] %vm1136, %v6075
    %6110 = vst.msk [vmem:[#allocation3 + $0xe0] sm:$0xff] %vm1136, %v6077
    %6111 = vst.msk [vmem:[#allocation3 + $0xf0] sm:$0xff] %vm1136, %v6079
    %v6112 = vld [vmem:[#allocation2 + $0x7] sm:$0xff]
    %v6113 = vld [vmem:[#allocation2 + $0xf] sm:$0xff]
    %v6114 = vld [vmem:[#allocation2 + $0x17] sm:$0xff]
    %v6115 = vld [vmem:[#allocation2 + $0x1f] sm:$0xff]
    %v6116 = vld [vmem:[#allocation2 + $0x27] sm:$0xff]
    %v6117 = vld [vmem:[#allocation2 + $0x2f] sm:$0xff]
    %v6118 = vld [vmem:[#allocation2 + $0x37] sm:$0xff]
    %v6119 = vld [vmem:[#allocation2 + $0x3f] sm:$0xff]
    %v6120 = vld [vmem:[#allocation2 + $0x47] sm:$0xff]
    %v6121 = vld [vmem:[#allocation2 + $0x4f] sm:$0xff]
    %v6122 = vld [vmem:[#allocation2 + $0x57] sm:$0xff]
    %v6123 = vld [vmem:[#allocation2 + $0x5f] sm:$0xff]
    %v6124 = vld [vmem:[#allocation2 + $0x67] sm:$0xff]
    %v6125 = vld [vmem:[#allocation2 + $0x6f] sm:$0xff]
    %v6126 = vld [vmem:[#allocation2 + $0x77] sm:$0xff]
    %v6127 = vld [vmem:[#allocation2 + $0x7f] sm:$0xff]
    %6144 = vrot.lane.b32.xlu0 %v6112, 20
    %v6145 = vpop.permute.xlu0 %6144
    %6146 = vrot.lane.b32.xlu0 %v6113, 20
    %v6147 = vpop.permute.xlu0 %6146
    %6148 = vrot.lane.b32.xlu0 %v6114, 20
    %v6149 = vpop.permute.xlu0 %6148
    %6150 = vrot.lane.b32.xlu0 %v6115, 20
    %v6151 = vpop.permute.xlu0 %6150
    %6152 = vrot.lane.b32.xlu0 %v6116, 20
    %v6153 = vpop.permute.xlu0 %6152
    %6154 = vrot.lane.b32.xlu0 %v6117, 20
    %v6155 = vpop.permute.xlu0 %6154
    %6156 = vrot.lane.b32.xlu0 %v6118, 20
    %v6157 = vpop.permute.xlu0 %6156
    %6158 = vrot.lane.b32.xlu0 %v6119, 20
    %v6159 = vpop.permute.xlu0 %6158
    %6160 = vrot.lane.b32.xlu0 %v6120, 20
    %v6161 = vpop.permute.xlu0 %6160
    %6162 = vrot.lane.b32.xlu0 %v6121, 20
    %v6163 = vpop.permute.xlu0 %6162
    %6164 = vrot.lane.b32.xlu0 %v6122, 20
    %v6165 = vpop.permute.xlu0 %6164
    %6166 = vrot.lane.b32.xlu0 %v6123, 20
    %v6167 = vpop.permute.xlu0 %6166
    %6168 = vrot.lane.b32.xlu0 %v6124, 20
    %v6169 = vpop.permute.xlu0 %6168
    %6170 = vrot.lane.b32.xlu0 %v6125, 20
    %v6171 = vpop.permute.xlu0 %6170
    %6172 = vrot.lane.b32.xlu0 %v6126, 20
    %v6173 = vpop.permute.xlu0 %6172
    %6174 = vrot.lane.b32.xlu0 %v6127, 20
    %v6175 = vpop.permute.xlu0 %6174
    %6192 = vst.msk [vmem:[#allocation3] sm:$0xff] %vm1233, %v6145
    %6193 = vst.msk [vmem:[#allocation3 + $0x10] sm:$0xff] %vm1233, %v6147
    %6194 = vst.msk [vmem:[#allocation3 + $0x20] sm:$0xff] %vm1233, %v6149
    %6195 = vst.msk [vmem:[#allocation3 + $0x30] sm:$0xff] %vm1233, %v6151
    %6196 = vst.msk [vmem:[#allocation3 + $0x40] sm:$0xff] %vm1233, %v6153
    %6197 = vst.msk [vmem:[#allocation3 + $0x50] sm:$0xff] %vm1233, %v6155
    %6198 = vst.msk [vmem:[#allocation3 + $0x60] sm:$0xff] %vm1233, %v6157
    %6199 = vst.msk [vmem:[#allocation3 + $0x70] sm:$0xff] %vm1233, %v6159
    %6200 = vst.msk [vmem:[#allocation3 + $0x80] sm:$0xff] %vm1233, %v6161
    %6201 = vst.msk [vmem:[#allocation3 + $0x90] sm:$0xff] %vm1233, %v6163
    %6202 = vst.msk [vmem:[#allocation3 + $0xa0] sm:$0xff] %vm1233, %v6165
    %6203 = vst.msk [vmem:[#allocation3 + $0xb0] sm:$0xff] %vm1233, %v6167
    %6204 = vst.msk [vmem:[#allocation3 + $0xc0] sm:$0xff] %vm1233, %v6169
    %6205 = vst.msk [vmem:[#allocation3 + $0xd0] sm:$0xff] %vm1233, %v6171
    %6206 = vst.msk [vmem:[#allocation3 + $0xe0] sm:$0xff] %vm1233, %v6173
    %6207 = vst.msk [vmem:[#allocation3 + $0xf0] sm:$0xff] %vm1233, %v6175
    %v6208 = vld [vmem:[#allocation2 + $0x8] sm:$0xff]
    %v6209 = vld [vmem:[#allocation2 + $0x10] sm:$0xff]
    %v6210 = vld [vmem:[#allocation2 + $0x18] sm:$0xff]
    %v6211 = vld [vmem:[#allocation2 + $0x20] sm:$0xff]
    %v6212 = vld [vmem:[#allocation2 + $0x28] sm:$0xff]
    %v6213 = vld [vmem:[#allocation2 + $0x30] sm:$0xff]
    %v6214 = vld [vmem:[#allocation2 + $0x38] sm:$0xff]
    %v6215 = vld [vmem:[#allocation2 + $0x40] sm:$0xff]
    %v6216 = vld [vmem:[#allocation2 + $0x48] sm:$0xff]
    %v6217 = vld [vmem:[#allocation2 + $0x50] sm:$0xff]
    %v6218 = vld [vmem:[#allocation2 + $0x58] sm:$0xff]
    %v6219 = vld [vmem:[#allocation2 + $0x60] sm:$0xff]
    %v6220 = vld [vmem:[#allocation2 + $0x68] sm:$0xff]
    %v6221 = vld [vmem:[#allocation2 + $0x70] sm:$0xff]
    %v6222 = vld [vmem:[#allocation2 + $0x78] sm:$0xff]
    %v6223 = vld [vmem:[#allocation2 + $0x80] sm:$0xff]
    %6240 = vrot.lane.b32.xlu0 %v6208, 30
    %v6241 = vpop.permute.xlu0 %6240
    %6242 = vrot.lane.b32.xlu0 %v6209, 30
    %v6243 = vpop.permute.xlu0 %6242
    %6244 = vrot.lane.b32.xlu0 %v6210, 30
    %v6245 = vpop.permute.xlu0 %6244
    %6246 = vrot.lane.b32.xlu0 %v6211, 30
    %v6247 = vpop.permute.xlu0 %6246
    %6248 = vrot.lane.b32.xlu0 %v6212, 30
    %v6249 = vpop.permute.xlu0 %6248
    %6250 = vrot.lane.b32.xlu0 %v6213, 30
    %v6251 = vpop.permute.xlu0 %6250
    %6252 = vrot.lane.b32.xlu0 %v6214, 30
    %v6253 = vpop.permute.xlu0 %6252
    %6254 = vrot.lane.b32.xlu0 %v6215, 30
    %v6255 = vpop.permute.xlu0 %6254
    %6256 = vrot.lane.b32.xlu0 %v6216, 30
    %v6257 = vpop.permute.xlu0 %6256
    %6258 = vrot.lane.b32.xlu0 %v6217, 30
    %v6259 = vpop.permute.xlu0 %6258
    %6260 = vrot.lane.b32.xlu0 %v6218, 30
    %v6261 = vpop.permute.xlu0 %6260
    %6262 = vrot.lane.b32.xlu0 %v6219, 30
    %v6263 = vpop.permute.xlu0 %6262
    %6264 = vrot.lane.b32.xlu0 %v6220, 30
    %v6265 = vpop.permute.xlu0 %6264
    %6266 = vrot.lane.b32.xlu0 %v6221, 30
    %v6267 = vpop.permute.xlu0 %6266
    %6268 = vrot.lane.b32.xlu0 %v6222, 30
    %v6269 = vpop.permute.xlu0 %6268
    %6270 = vrot.lane.b32.xlu0 %v6223, 30
    %v6271 = vpop.permute.xlu0 %6270
    %6288 = vst.msk [vmem:[#allocation3] sm:$0xff] %vm1330, %v6241
    %6289 = vst.msk [vmem:[#allocation3 + $0x10] sm:$0xff] %vm1330, %v6243
    %6290 = vst.msk [vmem:[#allocation3 + $0x20] sm:$0xff] %vm1330, %v6245
    %6291 = vst.msk [vmem:[#allocation3 + $0x30] sm:$0xff] %vm1330, %v6247
    %6292 = vst.msk [vmem:[#allocation3 + $0x40] sm:$0xff] %vm1330, %v6249
    %6293 = vst.msk [vmem:[#allocation3 + $0x50] sm:$0xff] %vm1330, %v6251
    %6294 = vst.msk [vmem:[#allocation3 + $0x60] sm:$0xff] %vm1330, %v6253
    %6295 = vst.msk [vmem:[#allocation3 + $0x70] sm:$0xff] %vm1330, %v6255
    %6296 = vst.msk [vmem:[#allocation3 + $0x80] sm:$0xff] %vm1330, %v6257
    %6297 = vst.msk [vmem:[#allocation3 + $0x90] sm:$0xff] %vm1330, %v6259
    %6298 = vst.msk [vmem:[#allocation3 + $0xa0] sm:$0xff] %vm1330, %v6261
    %6299 = vst.msk [vmem:[#allocation3 + $0xb0] sm:$0xff] %vm1330, %v6263
    %6300 = vst.msk [vmem:[#allocation3 + $0xc0] sm:$0xff] %vm1330, %v6265
    %6301 = vst.msk [vmem:[#allocation3 + $0xd0] sm:$0xff] %vm1330, %v6267
    %6302 = vst.msk [vmem:[#allocation3 + $0xe0] sm:$0xff] %vm1330, %v6269
    %6303 = vst.msk [vmem:[#allocation3 + $0xf0] sm:$0xff] %vm1330, %v6271
    %v6304 = vld [vmem:[#allocation2 + $0x9] sm:$0xff]
    %v6305 = vld [vmem:[#allocation2 + $0x11] sm:$0xff]
    %v6306 = vld [vmem:[#allocation2 + $0x19] sm:$0xff]
    %v6307 = vld [vmem:[#allocation2 + $0x21] sm:$0xff]
    %v6308 = vld [vmem:[#allocation2 + $0x29] sm:$0xff]
    %v6309 = vld [vmem:[#allocation2 + $0x31] sm:$0xff]
    %v6310 = vld [vmem:[#allocation2 + $0x39] sm:$0xff]
    %v6311 = vld [vmem:[#allocation2 + $0x41] sm:$0xff]
    %v6312 = vld [vmem:[#allocation2 + $0x49] sm:$0xff]
    %v6313 = vld [vmem:[#allocation2 + $0x51] sm:$0xff]
    %v6314 = vld [vmem:[#allocation2 + $0x59] sm:$0xff]
    %v6315 = vld [vmem:[#allocation2 + $0x61] sm:$0xff]
    %v6316 = vld [vmem:[#allocation2 + $0x69] sm:$0xff]
    %v6317 = vld [vmem:[#allocation2 + $0x71] sm:$0xff]
    %v6318 = vld [vmem:[#allocation2 + $0x79] sm:$0xff]
    %v6319 = vld [vmem:[#allocation2 + $0x81] sm:$0xff]
    %6336 = vrot.lane.b32.xlu0 %v6304, 40
    %v6337 = vpop.permute.xlu0 %6336
    %6338 = vrot.lane.b32.xlu0 %v6305, 40
    %v6339 = vpop.permute.xlu0 %6338
    %6340 = vrot.lane.b32.xlu0 %v6306, 40
    %v6341 = vpop.permute.xlu0 %6340
    %6342 = vrot.lane.b32.xlu0 %v6307, 40
    %v6343 = vpop.permute.xlu0 %6342
    %6344 = vrot.lane.b32.xlu0 %v6308, 40
    %v6345 = vpop.permute.xlu0 %6344
    %6346 = vrot.lane.b32.xlu0 %v6309, 40
    %v6347 = vpop.permute.xlu0 %6346
    %6348 = vrot.lane.b32.xlu0 %v6310, 40
    %v6349 = vpop.permute.xlu0 %6348
    %6350 = vrot.lane.b32.xlu0 %v6311, 40
    %v6351 = vpop.permute.xlu0 %6350
    %6352 = vrot.lane.b32.xlu0 %v6312, 40
    %v6353 = vpop.permute.xlu0 %6352
    %6354 = vrot.lane.b32.xlu0 %v6313, 40
    %v6355 = vpop.permute.xlu0 %6354
    %6356 = vrot.lane.b32.xlu0 %v6314, 40
    %v6357 = vpop.permute.xlu0 %6356
    %6358 = vrot.lane.b32.xlu0 %v6315, 40
    %v6359 = vpop.permute.xlu0 %6358
    %6360 = vrot.lane.b32.xlu0 %v6316, 40
    %v6361 = vpop.permute.xlu0 %6360
    %6362 = vrot.lane.b32.xlu0 %v6317, 40
    %v6363 = vpop.permute.xlu0 %6362
    %6364 = vrot.lane.b32.xlu0 %v6318, 40
    %v6365 = vpop.permute.xlu0 %6364
    %6366 = vrot.lane.b32.xlu0 %v6319, 40
    %v6367 = vpop.permute.xlu0 %6366
    %6384 = vst.msk [vmem:[#allocation3] sm:$0xff] %vm1427, %v6337
    %6385 = vst.msk [vmem:[#allocation3 + $0x10] sm:$0xff] %vm1427, %v6339
    %6386 = vst.msk [vmem:[#allocation3 + $0x20] sm:$0xff] %vm1427, %v6341
    %6387 = vst.msk [vmem:[#allocation3 + $0x30] sm:$0xff] %vm1427, %v6343
    %6388 = vst.msk [vmem:[#allocation3 + $0x40] sm:$0xff] %vm1427, %v6345
    %6389 = vst.msk [vmem:[#allocation3 + $0x50] sm:$0xff] %vm1427, %v6347
    %6390 = vst.msk [vmem:[#allocation3 + $0x60] sm:$0xff] %vm1427, %v6349
    %6391 = vst.msk [vmem:[#allocation3 + $0x70] sm:$0xff] %vm1427, %v6351
    %6392 = vst.msk [vmem:[#allocation3 + $0x80] sm:$0xff] %vm1427, %v6353
    %6393 = vst.msk [vmem:[#allocation3 + $0x90] sm:$0xff] %vm1427, %v6355
    %6394 = vst.msk [vmem:[#allocation3 + $0xa0] sm:$0xff] %vm1427, %v6357
    %6395 = vst.msk [vmem:[#allocation3 + $0xb0] sm:$0xff] %vm1427, %v6359
    %6396 = vst.msk [vmem:[#allocation3 + $0xc0] sm:$0xff] %vm1427, %v6361
    %6397 = vst.msk [vmem:[#allocation3 + $0xd0] sm:$0xff] %vm1427, %v6363
    %6398 = vst.msk [vmem:[#allocation3 + $0xe0] sm:$0xff] %vm1427, %v6365
    %6399 = vst.msk [vmem:[#allocation3 + $0xf0] sm:$0xff] %vm1427, %v6367
    %v6400 = vld [vmem:[#allocation2 + $0xa] sm:$0xff]
    %v6401 = vld [vmem:[#allocation2 + $0x12] sm:$0xff]
    %v6402 = vld [vmem:[#allocation2 + $0x1a] sm:$0xff]
    %v6403 = vld [vmem:[#allocation2 + $0x22] sm:$0xff]
    %v6404 = vld [vmem:[#allocation2 + $0x2a] sm:$0xff]
    %v6405 = vld [vmem:[#allocation2 + $0x32] sm:$0xff]
    %v6406 = vld [vmem:[#allocation2 + $0x3a] sm:$0xff]
    %v6407 = vld [vmem:[#allocation2 + $0x42] sm:$0xff]
    %v6408 = vld [vmem:[#allocation2 + $0x4a] sm:$0xff]
    %v6409 = vld [vmem:[#allocation2 + $0x52] sm:$0xff]
    %v6410 = vld [vmem:[#allocation2 + $0x5a] sm:$0xff]
    %v6411 = vld [vmem:[#allocation2 + $0x62] sm:$0xff]
    %v6412 = vld [vmem:[#allocation2 + $0x6a] sm:$0xff]
    %v6413 = vld [vmem:[#allocation2 + $0x72] sm:$0xff]
    %v6414 = vld [vmem:[#allocation2 + $0x7a] sm:$0xff]
    %v6415 = vld [vmem:[#allocation2 + $0x82] sm:$0xff]
    %6432 = vrot.lane.b32.xlu0 %v6400, 50
    %v6433 = vpop.permute.xlu0 %6432
    %6434 = vrot.lane.b32.xlu0 %v6401, 50
    %v6435 = vpop.permute.xlu0 %6434
    %6436 = vrot.lane.b32.xlu0 %v6402, 50
    %v6437 = vpop.permute.xlu0 %6436
    %6438 = vrot.lane.b32.xlu0 %v6403, 50
    %v6439 = vpop.permute.xlu0 %6438
    %6440 = vrot.lane.b32.xlu0 %v6404, 50
    %v6441 = vpop.permute.xlu0 %6440
    %6442 = vrot.lane.b32.xlu0 %v6405, 50
    %v6443 = vpop.permute.xlu0 %6442
    %6444 = vrot.lane.b32.xlu0 %v6406, 50
    %v6445 = vpop.permute.xlu0 %6444
    %6446 = vrot.lane.b32.xlu0 %v6407, 50
    %v6447 = vpop.permute.xlu0 %6446
    %6448 = vrot.lane.b32.xlu0 %v6408, 50
    %v6449 = vpop.permute.xlu0 %6448
    %6450 = vrot.lane.b32.xlu0 %v6409, 50
    %v6451 = vpop.permute.xlu0 %6450
    %6452 = vrot.lane.b32.xlu0 %v6410, 50
    %v6453 = vpop.permute.xlu0 %6452
    %6454 = vrot.lane.b32.xlu0 %v6411, 50
    %v6455 = vpop.permute.xlu0 %6454
    %6456 = vrot.lane.b32.xlu0 %v6412, 50
    %v6457 = vpop.permute.xlu0 %6456
    %6458 = vrot.lane.b32.xlu0 %v6413, 50
    %v6459 = vpop.permute.xlu0 %6458
    %6460 = vrot.lane.b32.xlu0 %v6414, 50
    %v6461 = vpop.permute.xlu0 %6460
    %6462 = vrot.lane.b32.xlu0 %v6415, 50
    %v6463 = vpop.permute.xlu0 %6462
    %6480 = vst.msk [vmem:[#allocation3] sm:$0xff] %vm1524, %v6433
    %6481 = vst.msk [vmem:[#allocation3 + $0x10] sm:$0xff] %vm1524, %v6435
    %6482 = vst.msk [vmem:[#allocation3 + $0x20] sm:$0xff] %vm1524, %v6437
    %6483 = vst.msk [vmem:[#allocation3 + $0x30] sm:$0xff] %vm1524, %v6439
    %6484 = vst.msk [vmem:[#allocation3 + $0x40] sm:$0xff] %vm1524, %v6441
    %6485 = vst.msk [vmem:[#allocation3 + $0x50] sm:$0xff] %vm1524, %v6443
    %6486 = vst.msk [vmem:[#allocation3 + $0x60] sm:$0xff] %vm1524, %v6445
    %6487 = vst.msk [vmem:[#allocation3 + $0x70] sm:$0xff] %vm1524, %v6447
    %6488 = vst.msk [vmem:[#allocation3 + $0x80] sm:$0xff] %vm1524, %v6449
    %6489 = vst.msk [vmem:[#allocation3 + $0x90] sm:$0xff] %vm1524, %v6451
    %6490 = vst.msk [vmem:[#allocation3 + $0xa0] sm:$0xff] %vm1524, %v6453
    %6491 = vst.msk [vmem:[#allocation3 + $0xb0] sm:$0xff] %vm1524, %v6455
    %6492 = vst.msk [vmem:[#allocation3 + $0xc0] sm:$0xff] %vm1524, %v6457
    %6493 = vst.msk [vmem:[#allocation3 + $0xd0] sm:$0xff] %vm1524, %v6459
    %6494 = vst.msk [vmem:[#allocation3 + $0xe0] sm:$0xff] %vm1524, %v6461
    %6495 = vst.msk [vmem:[#allocation3 + $0xf0] sm:$0xff] %vm1524, %v6463
    %v6496 = vld [vmem:[#allocation2 + $0xb] sm:$0xff]
    %v6497 = vld [vmem:[#allocation2 + $0x13] sm:$0xff]
    %v6498 = vld [vmem:[#allocation2 + $0x1b] sm:$0xff]
    %v6499 = vld [vmem:[#allocation2 + $0x23] sm:$0xff]
    %v6500 = vld [vmem:[#allocation2 + $0x2b] sm:$0xff]
    %v6501 = vld [vmem:[#allocation2 + $0x33] sm:$0xff]
    %v6502 = vld [vmem:[#allocation2 + $0x3b] sm:$0xff]
    %v6503 = vld [vmem:[#allocation2 + $0x43] sm:$0xff]
    %v6504 = vld [vmem:[#allocation2 + $0x4b] sm:$0xff]
    %v6505 = vld [vmem:[#allocation2 + $0x53] sm:$0xff]
    %v6506 = vld [vmem:[#allocation2 + $0x5b] sm:$0xff]
    %v6507 = vld [vmem:[#allocation2 + $0x63] sm:$0xff]
    %v6508 = vld [vmem:[#allocation2 + $0x6b] sm:$0xff]
    %v6509 = vld [vmem:[#allocation2 + $0x73] sm:$0xff]
    %v6510 = vld [vmem:[#allocation2 + $0x7b] sm:$0xff]
    %v6511 = vld [vmem:[#allocation2 + $0x83] sm:$0xff]
    %6528 = vrot.lane.b32.xlu0 %v6496, 60
    %v6529 = vpop.permute.xlu0 %6528
    %6530 = vrot.lane.b32.xlu0 %v6497, 60
    %v6531 = vpop.permute.xlu0 %6530
    %6532 = vrot.lane.b32.xlu0 %v6498, 60
    %v6533 = vpop.permute.xlu0 %6532
    %6534 = vrot.lane.b32.xlu0 %v6499, 60
    %v6535 = vpop.permute.xlu0 %6534
    %6536 = vrot.lane.b32.xlu0 %v6500, 60
    %v6537 = vpop.permute.xlu0 %6536
    %6538 = vrot.lane.b32.xlu0 %v6501, 60
    %v6539 = vpop.permute.xlu0 %6538
    %6540 = vrot.lane.b32.xlu0 %v6502, 60
    %v6541 = vpop.permute.xlu0 %6540
    %6542 = vrot.lane.b32.xlu0 %v6503, 60
    %v6543 = vpop.permute.xlu0 %6542
    %6544 = vrot.lane.b32.xlu0 %v6504, 60
    %v6545 = vpop.permute.xlu0 %6544
    %6546 = vrot.lane.b32.xlu0 %v6505, 60
    %v6547 = vpop.permute.xlu0 %6546
    %6548 = vrot.lane.b32.xlu0 %v6506, 60
    %v6549 = vpop.permute.xlu0 %6548
    %6550 = vrot.lane.b32.xlu0 %v6507, 60
    %v6551 = vpop.permute.xlu0 %6550
    %6552 = vrot.lane.b32.xlu0 %v6508, 60
    %v6553 = vpop.permute.xlu0 %6552
    %6554 = vrot.lane.b32.xlu0 %v6509, 60
    %v6555 = vpop.permute.xlu0 %6554
    %6556 = vrot.lane.b32.xlu0 %v6510, 60
    %v6557 = vpop.permute.xlu0 %6556
    %6558 = vrot.lane.b32.xlu0 %v6511, 60
    %v6559 = vpop.permute.xlu0 %6558
    %6576 = vst.msk [vmem:[#allocation3] sm:$0xff] %vm1621, %v6529
    %6577 = vst.msk [vmem:[#allocation3 + $0x10] sm:$0xff] %vm1621, %v6531
    %6578 = vst.msk [vmem:[#allocation3 + $0x20] sm:$0xff] %vm1621, %v6533
    %6579 = vst.msk [vmem:[#allocation3 + $0x30] sm:$0xff] %vm1621, %v6535
    %6580 = vst.msk [vmem:[#allocation3 + $0x40] sm:$0xff] %vm1621, %v6537
    %6581 = vst.msk [vmem:[#allocation3 + $0x50] sm:$0xff] %vm1621, %v6539
    %6582 = vst.msk [vmem:[#allocation3 + $0x60] sm:$0xff] %vm1621, %v6541
    %6583 = vst.msk [vmem:[#allocation3 + $0x70] sm:$0xff] %vm1621, %v6543
    %6584 = vst.msk [vmem:[#allocation3 + $0x80] sm:$0xff] %vm1621, %v6545
    %6585 = vst.msk [vmem:[#allocation3 + $0x90] sm:$0xff] %vm1621, %v6547
    %6586 = vst.msk [vmem:[#allocation3 + $0xa0] sm:$0xff] %vm1621, %v6549
    %6587 = vst.msk [vmem:[#allocation3 + $0xb0] sm:$0xff] %vm1621, %v6551
    %6588 = vst.msk [vmem:[#allocation3 + $0xc0] sm:$0xff] %vm1621, %v6553
    %6589 = vst.msk [vmem:[#allocation3 + $0xd0] sm:$0xff] %vm1621, %v6555
    %6590 = vst.msk [vmem:[#allocation3 + $0xe0] sm:$0xff] %vm1621, %v6557
    %6591 = vst.msk [vmem:[#allocation3 + $0xf0] sm:$0xff] %vm1621, %v6559
    %v6592 = vld [vmem:[#allocation2 + $0xc] sm:$0xff]
    %v6593 = vld [vmem:[#allocation2 + $0x14] sm:$0xff]
    %v6594 = vld [vmem:[#allocation2 + $0x1c] sm:$0xff]
    %v6595 = vld [vmem:[#allocation2 + $0x24] sm:$0xff]
    %v6596 = vld [vmem:[#allocation2 + $0x2c] sm:$0xff]
    %v6597 = vld [vmem:[#allocation2 + $0x34] sm:$0xff]
    %v6598 = vld [vmem:[#allocation2 + $0x3c] sm:$0xff]
    %v6599 = vld [vmem:[#allocation2 + $0x44] sm:$0xff]
    %v6600 = vld [vmem:[#allocation2 + $0x4c] sm:$0xff]
    %v6601 = vld [vmem:[#allocation2 + $0x54] sm:$0xff]
    %v6602 = vld [vmem:[#allocation2 + $0x5c] sm:$0xff]
    %v6603 = vld [vmem:[#allocation2 + $0x64] sm:$0xff]
    %v6604 = vld [vmem:[#allocation2 + $0x6c] sm:$0xff]
    %v6605 = vld [vmem:[#allocation2 + $0x74] sm:$0xff]
    %v6606 = vld [vmem:[#allocation2 + $0x7c] sm:$0xff]
    %v6607 = vld [vmem:[#allocation2 + $0x84] sm:$0xff]
    %6624 = vrot.lane.b32.xlu0 %v6592, 70
    %v6625 = vpop.permute.xlu0 %6624
    %6626 = vrot.lane.b32.xlu0 %v6593, 70
    %v6627 = vpop.permute.xlu0 %6626
    %6628 = vrot.lane.b32.xlu0 %v6594, 70
    %v6629 = vpop.permute.xlu0 %6628
    %6630 = vrot.lane.b32.xlu0 %v6595, 70
    %v6631 = vpop.permute.xlu0 %6630
    %6632 = vrot.lane.b32.xlu0 %v6596, 70
    %v6633 = vpop.permute.xlu0 %6632
    %6634 = vrot.lane.b32.xlu0 %v6597, 70
    %v6635 = vpop.permute.xlu0 %6634
    %6636 = vrot.lane.b32.xlu0 %v6598, 70
    %v6637 = vpop.permute.xlu0 %6636
    %6638 = vrot.lane.b32.xlu0 %v6599, 70
    %v6639 = vpop.permute.xlu0 %6638
    %6640 = vrot.lane.b32.xlu0 %v6600, 70
    %v6641 = vpop.permute.xlu0 %6640
    %6642 = vrot.lane.b32.xlu0 %v6601, 70
    %v6643 = vpop.permute.xlu0 %6642
    %6644 = vrot.lane.b32.xlu0 %v6602, 70
    %v6645 = vpop.permute.xlu0 %6644
    %6646 = vrot.lane.b32.xlu0 %v6603, 70
    %v6647 = vpop.permute.xlu0 %6646
    %6648 = vrot.lane.b32.xlu0 %v6604, 70
    %v6649 = vpop.permute.xlu0 %6648
    %6650 = vrot.lane.b32.xlu0 %v6605, 70
    %v6651 = vpop.permute.xlu0 %6650
    %6652 = vrot.lane.b32.xlu0 %v6606, 70
    %v6653 = vpop.permute.xlu0 %6652
    %6654 = vrot.lane.b32.xlu0 %v6607, 70
    %v6655 = vpop.permute.xlu0 %6654
    %6672 = vst.msk [vmem:[#allocation3] sm:$0xff] %vm1718, %v6625
    %6673 = vst.msk [vmem:[#allocation3 + $0x10] sm:$0xff] %vm1718, %v6627
    %6674 = vst.msk [vmem:[#allocation3 + $0x20] sm:$0xff] %vm1718, %v6629
    %6675 = vst.msk [vmem:[#allocation3 + $0x30] sm:$0xff] %vm1718, %v6631
    %6676 = vst.msk [vmem:[#allocation3 + $0x40] sm:$0xff] %vm1718, %v6633
    %6677 = vst.msk [vmem:[#allocation3 + $0x50] sm:$0xff] %vm1718, %v6635
    %6678 = vst.msk [vmem:[#allocation3 + $0x60] sm:$0xff] %vm1718, %v6637
    %6679 = vst.msk [vmem:[#allocation3 + $0x70] sm:$0xff] %vm1718, %v6639
    %6680 = vst.msk [vmem:[#allocation3 + $0x80] sm:$0xff] %vm1718, %v6641
    %6681 = vst.msk [vmem:[#allocation3 + $0x90] sm:$0xff] %vm1718, %v6643
    %6682 = vst.msk [vmem:[#allocation3 + $0xa0] sm:$0xff] %vm1718, %v6645
    %6683 = vst.msk [vmem:[#allocation3 + $0xb0] sm:$0xff] %vm1718, %v6647
    %6684 = vst.msk [vmem:[#allocation3 + $0xc0] sm:$0xff] %vm1718, %v6649
    %6685 = vst.msk [vmem:[#allocation3 + $0xd0] sm:$0xff] %vm1718, %v6651
    %6686 = vst.msk [vmem:[#allocation3 + $0xe0] sm:$0xff] %vm1718, %v6653
    %6687 = vst.msk [vmem:[#allocation3 + $0xf0] sm:$0xff] %vm1718, %v6655
    %v6688 = vld [vmem:[#allocation2 + $0xd] sm:$0xff]
    %v6689 = vld [vmem:[#allocation2 + $0x15] sm:$0xff]
    %v6690 = vld [vmem:[#allocation2 + $0x1d] sm:$0xff]
    %v6691 = vld [vmem:[#allocation2 + $0x25] sm:$0xff]
    %v6692 = vld [vmem:[#allocation2 + $0x2d] sm:$0xff]
    %v6693 = vld [vmem:[#allocation2 + $0x35] sm:$0xff]
    %v6694 = vld [vmem:[#allocation2 + $0x3d] sm:$0xff]
    %v6695 = vld [vmem:[#allocation2 + $0x45] sm:$0xff]
    %v6696 = vld [vmem:[#allocation2 + $0x4d] sm:$0xff]
    %v6697 = vld [vmem:[#allocation2 + $0x55] sm:$0xff]
    %v6698 = vld [vmem:[#allocation2 + $0x5d] sm:$0xff]
    %v6699 = vld [vmem:[#allocation2 + $0x65] sm:$0xff]
    %v6700 = vld [vmem:[#allocation2 + $0x6d] sm:$0xff]
    %v6701 = vld [vmem:[#allocation2 + $0x75] sm:$0xff]
    %v6702 = vld [vmem:[#allocation2 + $0x7d] sm:$0xff]
    %v6703 = vld [vmem:[#allocation2 + $0x85] sm:$0xff]
    %6720 = vrot.lane.b32.xlu0 %v6688, 80
    %v6721 = vpop.permute.xlu0 %6720
    %6722 = vrot.lane.b32.xlu0 %v6689, 80
    %v6723 = vpop.permute.xlu0 %6722
    %6724 = vrot.lane.b32.xlu0 %v6690, 80
    %v6725 = vpop.permute.xlu0 %6724
    %6726 = vrot.lane.b32.xlu0 %v6691, 80
    %v6727 = vpop.permute.xlu0 %6726
    %6728 = vrot.lane.b32.xlu0 %v6692, 80
    %v6729 = vpop.permute.xlu0 %6728
    %6730 = vrot.lane.b32.xlu0 %v6693, 80
    %v6731 = vpop.permute.xlu0 %6730
    %6732 = vrot.lane.b32.xlu0 %v6694, 80
    %v6733 = vpop.permute.xlu0 %6732
    %6734 = vrot.lane.b32.xlu0 %v6695, 80
    %v6735 = vpop.permute.xlu0 %6734
    %6736 = vrot.lane.b32.xlu0 %v6696, 80
    %v6737 = vpop.permute.xlu0 %6736
    %6738 = vrot.lane.b32.xlu0 %v6697, 80
    %v6739 = vpop.permute.xlu0 %6738
    %6740 = vrot.lane.b32.xlu0 %v6698, 80
    %v6741 = vpop.permute.xlu0 %6740
    %6742 = vrot.lane.b32.xlu0 %v6699, 80
    %v6743 = vpop.permute.xlu0 %6742
    %6744 = vrot.lane.b32.xlu0 %v6700, 80
    %v6745 = vpop.permute.xlu0 %6744
    %6746 = vrot.lane.b32.xlu0 %v6701, 80
    %v6747 = vpop.permute.xlu0 %6746
    %6748 = vrot.lane.b32.xlu0 %v6702, 80
    %v6749 = vpop.permute.xlu0 %6748
    %6750 = vrot.lane.b32.xlu0 %v6703, 80
    %v6751 = vpop.permute.xlu0 %6750
    %6768 = vst.msk [vmem:[#allocation3] sm:$0xff] %vm1815, %v6721
    %6769 = vst.msk [vmem:[#allocation3 + $0x10] sm:$0xff] %vm1815, %v6723
    %6770 = vst.msk [vmem:[#allocation3 + $0x20] sm:$0xff] %vm1815, %v6725
    %6771 = vst.msk [vmem:[#allocation3 + $0x30] sm:$0xff] %vm1815, %v6727
    %6772 = vst.msk [vmem:[#allocation3 + $0x40] sm:$0xff] %vm1815, %v6729
    %6773 = vst.msk [vmem:[#allocation3 + $0x50] sm:$0xff] %vm1815, %v6731
    %6774 = vst.msk [vmem:[#allocation3 + $0x60] sm:$0xff] %vm1815, %v6733
    %6775 = vst.msk [vmem:[#allocation3 + $0x70] sm:$0xff] %vm1815, %v6735
    %6776 = vst.msk [vmem:[#allocation3 + $0x80] sm:$0xff] %vm1815, %v6737
    %6777 = vst.msk [vmem:[#allocation3 + $0x90] sm:$0xff] %vm1815, %v6739
    %6778 = vst.msk [vmem:[#allocation3 + $0xa0] sm:$0xff] %vm1815, %v6741
    %6779 = vst.msk [vmem:[#allocation3 + $0xb0] sm:$0xff] %vm1815, %v6743
    %6780 = vst.msk [vmem:[#allocation3 + $0xc0] sm:$0xff] %vm1815, %v6745
    %6781 = vst.msk [vmem:[#allocation3 + $0xd0] sm:$0xff] %vm1815, %v6747
    %6782 = vst.msk [vmem:[#allocation3 + $0xe0] sm:$0xff] %vm1815, %v6749
    %6783 = vst.msk [vmem:[#allocation3 + $0xf0] sm:$0xff] %vm1815, %v6751
    %v6784 = vld [vmem:[#allocation2 + $0xe] sm:$0xff]
    %v6785 = vld [vmem:[#allocation2 + $0x16] sm:$0xff]
    %v6786 = vld [vmem:[#allocation2 + $0x1e] sm:$0xff]
    %v6787 = vld [vmem:[#allocation2 + $0x26] sm:$0xff]
    %v6788 = vld [vmem:[#allocation2 + $0x2e] sm:$0xff]
    %v6789 = vld [vmem:[#allocation2 + $0x36] sm:$0xff]
    %v6790 = vld [vmem:[#allocation2 + $0x3e] sm:$0xff]
    %v6791 = vld [vmem:[#allocation2 + $0x46] sm:$0xff]
    %v6792 = vld [vmem:[#allocation2 + $0x4e] sm:$0xff]
    %v6793 = vld [vmem:[#allocation2 + $0x56] sm:$0xff]
    %v6794 = vld [vmem:[#allocation2 + $0x5e] sm:$0xff]
    %v6795 = vld [vmem:[#allocation2 + $0x66] sm:$0xff]
    %v6796 = vld [vmem:[#allocation2 + $0x6e] sm:$0xff]
    %v6797 = vld [vmem:[#allocation2 + $0x76] sm:$0xff]
    %v6798 = vld [vmem:[#allocation2 + $0x7e] sm:$0xff]
    %v6799 = vld [vmem:[#allocation2 + $0x86] sm:$0xff]
    %6816 = vrot.lane.b32.xlu0 %v6784, 90
    %v6817 = vpop.permute.xlu0 %6816
    %6818 = vrot.lane.b32.xlu0 %v6785, 90
    %v6819 = vpop.permute.xlu0 %6818
    %6820 = vrot.lane.b32.xlu0 %v6786, 90
    %v6821 = vpop.permute.xlu0 %6820
    %6822 = vrot.lane.b32.xlu0 %v6787, 90
    %v6823 = vpop.permute.xlu0 %6822
    %6824 = vrot.lane.b32.xlu0 %v6788, 90
    %v6825 = vpop.permute.xlu0 %6824
    %6826 = vrot.lane.b32.xlu0 %v6789, 90
    %v6827 = vpop.permute.xlu0 %6826
    %6828 = vrot.lane.b32.xlu0 %v6790, 90
    %v6829 = vpop.permute.xlu0 %6828
    %6830 = vrot.lane.b32.xlu0 %v6791, 90
    %v6831 = vpop.permute.xlu0 %6830
    %6832 = vrot.lane.b32.xlu0 %v6792, 90
    %v6833 = vpop.permute.xlu0 %6832
    %6834 = vrot.lane.b32.xlu0 %v6793, 90
    %v6835 = vpop.permute.xlu0 %6834
    %6836 = vrot.lane.b32.xlu0 %v6794, 90
    %v6837 = vpop.permute.xlu0 %6836
    %6838 = vrot.lane.b32.xlu0 %v6795, 90
    %v6839 = vpop.permute.xlu0 %6838
    %6840 = vrot.lane.b32.xlu0 %v6796, 90
    %v6841 = vpop.permute.xlu0 %6840
    %6842 = vrot.lane.b32.xlu0 %v6797, 90
    %v6843 = vpop.permute.xlu0 %6842
    %6844 = vrot.lane.b32.xlu0 %v6798, 90
    %v6845 = vpop.permute.xlu0 %6844
    %6846 = vrot.lane.b32.xlu0 %v6799, 90
    %v6847 = vpop.permute.xlu0 %6846
    %6864 = vst.msk [vmem:[#allocation3] sm:$0xff] %vm1912, %v6817
    %6865 = vst.msk [vmem:[#allocation3 + $0x10] sm:$0xff] %vm1912, %v6819
    %6866 = vst.msk [vmem:[#allocation3 + $0x20] sm:$0xff] %vm1912, %v6821
    %6867 = vst.msk [vmem:[#allocation3 + $0x30] sm:$0xff] %vm1912, %v6823
    %6868 = vst.msk [vmem:[#allocation3 + $0x40] sm:$0xff] %vm1912, %v6825
    %6869 = vst.msk [vmem:[#allocation3 + $0x50] sm:$0xff] %vm1912, %v6827
    %6870 = vst.msk [vmem:[#allocation3 + $0x60] sm:$0xff] %vm1912, %v6829
    %6871 = vst.msk [vmem:[#allocation3 + $0x70] sm:$0xff] %vm1912, %v6831
    %6872 = vst.msk [vmem:[#allocation3 + $0x80] sm:$0xff] %vm1912, %v6833
    %6873 = vst.msk [vmem:[#allocation3 + $0x90] sm:$0xff] %vm1912, %v6835
    %6874 = vst.msk [vmem:[#allocation3 + $0xa0] sm:$0xff] %vm1912, %v6837
    %6875 = vst.msk [vmem:[#allocation3 + $0xb0] sm:$0xff] %vm1912, %v6839
    %6876 = vst.msk [vmem:[#allocation3 + $0xc0] sm:$0xff] %vm1912, %v6841
    %6877 = vst.msk [vmem:[#allocation3 + $0xd0] sm:$0xff] %vm1912, %v6843
    %6878 = vst.msk [vmem:[#allocation3 + $0xe0] sm:$0xff] %vm1912, %v6845
    %6879 = vst.msk [vmem:[#allocation3 + $0xf0] sm:$0xff] %vm1912, %v6847
    %v6880 = vld [vmem:[#allocation2 + $0xf] sm:$0xff]
    %v6881 = vld [vmem:[#allocation2 + $0x17] sm:$0xff]
    %v6882 = vld [vmem:[#allocation2 + $0x1f] sm:$0xff]
    %v6883 = vld [vmem:[#allocation2 + $0x27] sm:$0xff]
    %v6884 = vld [vmem:[#allocation2 + $0x2f] sm:$0xff]
    %v6885 = vld [vmem:[#allocation2 + $0x37] sm:$0xff]
    %v6886 = vld [vmem:[#allocation2 + $0x3f] sm:$0xff]
    %v6887 = vld [vmem:[#allocation2 + $0x47] sm:$0xff]
    %v6888 = vld [vmem:[#allocation2 + $0x4f] sm:$0xff]
    %v6889 = vld [vmem:[#allocation2 + $0x57] sm:$0xff]
    %v6890 = vld [vmem:[#allocation2 + $0x5f] sm:$0xff]
    %v6891 = vld [vmem:[#allocation2 + $0x67] sm:$0xff]
    %v6892 = vld [vmem:[#allocation2 + $0x6f] sm:$0xff]
    %v6893 = vld [vmem:[#allocation2 + $0x77] sm:$0xff]
    %v6894 = vld [vmem:[#allocation2 + $0x7f] sm:$0xff]
    %v6895 = vld [vmem:[#allocation2 + $0x87] sm:$0xff]
    %6912 = vrot.lane.b32.xlu0 %v6880, 100
    %v6913 = vpop.permute.xlu0 %6912
    %6914 = vrot.lane.b32.xlu0 %v6881, 100
    %v6915 = vpop.permute.xlu0 %6914
    %6916 = vrot.lane.b32.xlu0 %v6882, 100
    %v6917 = vpop.permute.xlu0 %6916
    %6918 = vrot.lane.b32.xlu0 %v6883, 100
    %v6919 = vpop.permute.xlu0 %6918
    %6920 = vrot.lane.b32.xlu0 %v6884, 100
    %v6921 = vpop.permute.xlu0 %6920
    %6922 = vrot.lane.b32.xlu0 %v6885, 100
    %v6923 = vpop.permute.xlu0 %6922
    %6924 = vrot.lane.b32.xlu0 %v6886, 100
    %v6925 = vpop.permute.xlu0 %6924
    %6926 = vrot.lane.b32.xlu0 %v6887, 100
    %v6927 = vpop.permute.xlu0 %6926
    %6928 = vrot.lane.b32.xlu0 %v6888, 100
    %v6929 = vpop.permute.xlu0 %6928
    %6930 = vrot.lane.b32.xlu0 %v6889, 100
    %v6931 = vpop.permute.xlu0 %6930
    %6932 = vrot.lane.b32.xlu0 %v6890, 100
    %v6933 = vpop.permute.xlu0 %6932
    %6934 = vrot.lane.b32.xlu0 %v6891, 100
    %v6935 = vpop.permute.xlu0 %6934
    %6936 = vrot.lane.b32.xlu0 %v6892, 100
    %v6937 = vpop.permute.xlu0 %6936
    %6938 = vrot.lane.b32.xlu0 %v6893, 100
    %v6939 = vpop.permute.xlu0 %6938
    %6940 = vrot.lane.b32.xlu0 %v6894, 100
    %v6941 = vpop.permute.xlu0 %6940
    %6942 = vrot.lane.b32.xlu0 %v6895, 100
    %v6943 = vpop.permute.xlu0 %6942
    %6960 = vst.msk [vmem:[#allocation3] sm:$0xff] %vm2009, %v6913
    %6961 = vst.msk [vmem:[#allocation3 + $0x10] sm:$0xff] %vm2009, %v6915
    %6962 = vst.msk [vmem:[#allocation3 + $0x20] sm:$0xff] %vm2009, %v6917
    %6963 = vst.msk [vmem:[#allocation3 + $0x30] sm:$0xff] %vm2009, %v6919
    %6964 = vst.msk [vmem:[#allocation3 + $0x40] sm:$0xff] %vm2009, %v6921
    %6965 = vst.msk [vmem:[#allocation3 + $0x50] sm:$0xff] %vm2009, %v6923
    %6966 = vst.msk [vmem:[#allocation3 + $0x60] sm:$0xff] %vm2009, %v6925
    %6967 = vst.msk [vmem:[#allocation3 + $0x70] sm:$0xff] %vm2009, %v6927
    %6968 = vst.msk [vmem:[#allocation3 + $0x80] sm:$0xff] %vm2009, %v6929
    %6969 = vst.msk [vmem:[#allocation3 + $0x90] sm:$0xff] %vm2009, %v6931
    %6970 = vst.msk [vmem:[#allocation3 + $0xa0] sm:$0xff] %vm2009, %v6933
    %6971 = vst.msk [vmem:[#allocation3 + $0xb0] sm:$0xff] %vm2009, %v6935
    %6972 = vst.msk [vmem:[#allocation3 + $0xc0] sm:$0xff] %vm2009, %v6937
    %6973 = vst.msk [vmem:[#allocation3 + $0xd0] sm:$0xff] %vm2009, %v6939
    %6974 = vst.msk [vmem:[#allocation3 + $0xe0] sm:$0xff] %vm2009, %v6941
    %6975 = vst.msk [vmem:[#allocation3 + $0xf0] sm:$0xff] %vm2009, %v6943
    %v6976 = vld [vmem:[#allocation2 + $0x10] sm:$0xff]
    %v6977 = vld [vmem:[#allocation2 + $0x18] sm:$0xff]
    %v6978 = vld [vmem:[#allocation2 + $0x20] sm:$0xff]
    %v6979 = vld [vmem:[#allocation2 + $0x28] sm:$0xff]
    %v6980 = vld [vmem:[#allocation2 + $0x30] sm:$0xff]
    %v6981 = vld [vmem:[#allocation2 + $0x38] sm:$0xff]
    %v6982 = vld [vmem:[#allocation2 + $0x40] sm:$0xff]
    %v6983 = vld [vmem:[#allocation2 + $0x48] sm:$0xff]
    %v6984 = vld [vmem:[#allocation2 + $0x50] sm:$0xff]
    %v6985 = vld [vmem:[#allocation2 + $0x58] sm:$0xff]
    %v6986 = vld [vmem:[#allocation2 + $0x60] sm:$0xff]
    %v6987 = vld [vmem:[#allocation2 + $0x68] sm:$0xff]
    %v6988 = vld [vmem:[#allocation2 + $0x70] sm:$0xff]
    %v6989 = vld [vmem:[#allocation2 + $0x78] sm:$0xff]
    %v6990 = vld [vmem:[#allocation2 + $0x80] sm:$0xff]
    %v6991 = vld [vmem:[#allocation2 + $0x88] sm:$0xff]
    %7008 = vrot.lane.b32.xlu0 %v6976, 110
    %v7009 = vpop.permute.xlu0 %7008
    %7010 = vrot.lane.b32.xlu0 %v6977, 110
    %v7011 = vpop.permute.xlu0 %7010
    %7012 = vrot.lane.b32.xlu0 %v6978, 110
    %v7013 = vpop.permute.xlu0 %7012
    %7014 = vrot.lane.b32.xlu0 %v6979, 110
    %v7015 = vpop.permute.xlu0 %7014
    %7016 = vrot.lane.b32.xlu0 %v6980, 110
    %v7017 = vpop.permute.xlu0 %7016
    %7018 = vrot.lane.b32.xlu0 %v6981, 110
    %v7019 = vpop.permute.xlu0 %7018
    %7020 = vrot.lane.b32.xlu0 %v6982, 110
    %v7021 = vpop.permute.xlu0 %7020
    %7022 = vrot.lane.b32.xlu0 %v6983, 110
    %v7023 = vpop.permute.xlu0 %7022
    %7024 = vrot.lane.b32.xlu0 %v6984, 110
    %v7025 = vpop.permute.xlu0 %7024
    %7026 = vrot.lane.b32.xlu0 %v6985, 110
    %v7027 = vpop.permute.xlu0 %7026
    %7028 = vrot.lane.b32.xlu0 %v6986, 110
    %v7029 = vpop.permute.xlu0 %7028
    %7030 = vrot.lane.b32.xlu0 %v6987, 110
    %v7031 = vpop.permute.xlu0 %7030
    %7032 = vrot.lane.b32.xlu0 %v6988, 110
    %v7033 = vpop.permute.xlu0 %7032
    %7034 = vrot.lane.b32.xlu0 %v6989, 110
    %v7035 = vpop.permute.xlu0 %7034
    %7036 = vrot.lane.b32.xlu0 %v6990, 110
    %v7037 = vpop.permute.xlu0 %7036
    %7038 = vrot.lane.b32.xlu0 %v6991, 110
    %v7039 = vpop.permute.xlu0 %7038
    %7056 = vst.msk [vmem:[#allocation3] sm:$0xff] %vm2106, %v7009
    %7057 = vst.msk [vmem:[#allocation3 + $0x10] sm:$0xff] %vm2106, %v7011
    %7058 = vst.msk [vmem:[#allocation3 + $0x20] sm:$0xff] %vm2106, %v7013
    %7059 = vst.msk [vmem:[#allocation3 + $0x30] sm:$0xff] %vm2106, %v7015
    %7060 = vst.msk [vmem:[#allocation3 + $0x40] sm:$0xff] %vm2106, %v7017
    %7061 = vst.msk [vmem:[#allocation3 + $0x50] sm:$0xff] %vm2106, %v7019
    %7062 = vst.msk [vmem:[#allocation3 + $0x60] sm:$0xff] %vm2106, %v7021
    %7063 = vst.msk [vmem:[#allocation3 + $0x70] sm:$0xff] %vm2106, %v7023
    %7064 = vst.msk [vmem:[#allocation3 + $0x80] sm:$0xff] %vm2106, %v7025
    %7065 = vst.msk [vmem:[#allocation3 + $0x90] sm:$0xff] %vm2106, %v7027
    %7066 = vst.msk [vmem:[#allocation3 + $0xa0] sm:$0xff] %vm2106, %v7029
    %7067 = vst.msk [vmem:[#allocation3 + $0xb0] sm:$0xff] %vm2106, %v7031
    %7068 = vst.msk [vmem:[#allocation3 + $0xc0] sm:$0xff] %vm2106, %v7033
    %7069 = vst.msk [vmem:[#allocation3 + $0xd0] sm:$0xff] %vm2106, %v7035
    %7070 = vst.msk [vmem:[#allocation3 + $0xe0] sm:$0xff] %vm2106, %v7037
    %7071 = vst.msk [vmem:[#allocation3 + $0xf0] sm:$0xff] %vm2106, %v7039
    %v7072 = vld [vmem:[#allocation2 + $0x11] sm:$0xff]
    %v7073 = vld [vmem:[#allocation2 + $0x19] sm:$0xff]
    %v7074 = vld [vmem:[#allocation2 + $0x21] sm:$0xff]
    %v7075 = vld [vmem:[#allocation2 + $0x29] sm:$0xff]
    %v7076 = vld [vmem:[#allocation2 + $0x31] sm:$0xff]
    %v7077 = vld [vmem:[#allocation2 + $0x39] sm:$0xff]
    %v7078 = vld [vmem:[#allocation2 + $0x41] sm:$0xff]
    %v7079 = vld [vmem:[#allocation2 + $0x49] sm:$0xff]
    %v7080 = vld [vmem:[#allocation2 + $0x51] sm:$0xff]
    %v7081 = vld [vmem:[#allocation2 + $0x59] sm:$0xff]
    %v7082 = vld [vmem:[#allocation2 + $0x61] sm:$0xff]
    %v7083 = vld [vmem:[#allocation2 + $0x69] sm:$0xff]
    %v7084 = vld [vmem:[#allocation2 + $0x71] sm:$0xff]
    %v7085 = vld [vmem:[#allocation2 + $0x79] sm:$0xff]
    %v7086 = vld [vmem:[#allocation2 + $0x81] sm:$0xff]
    %v7087 = vld [vmem:[#allocation2 + $0x89] sm:$0xff]
    %7104 = vrot.lane.b32.xlu0 %v7072, 120
    %v7105 = vpop.permute.xlu0 %7104
    %7106 = vrot.lane.b32.xlu0 %v7073, 120
    %v7107 = vpop.permute.xlu0 %7106
    %7108 = vrot.lane.b32.xlu0 %v7074, 120
    %v7109 = vpop.permute.xlu0 %7108
    %7110 = vrot.lane.b32.xlu0 %v7075, 120
    %v7111 = vpop.permute.xlu0 %7110
    %7112 = vrot.lane.b32.xlu0 %v7076, 120
    %v7113 = vpop.permute.xlu0 %7112
    %7114 = vrot.lane.b32.xlu0 %v7077, 120
    %v7115 = vpop.permute.xlu0 %7114
    %7116 = vrot.lane.b32.xlu0 %v7078, 120
    %v7117 = vpop.permute.xlu0 %7116
    %7118 = vrot.lane.b32.xlu0 %v7079, 120
    %v7119 = vpop.permute.xlu0 %7118
    %7120 = vrot.lane.b32.xlu0 %v7080, 120
    %v7121 = vpop.permute.xlu0 %7120
    %7122 = vrot.lane.b32.xlu0 %v7081, 120
    %v7123 = vpop.permute.xlu0 %7122
    %7124 = vrot.lane.b32.xlu0 %v7082, 120
    %v7125 = vpop.permute.xlu0 %7124
    %7126 = vrot.lane.b32.xlu0 %v7083, 120
    %v7127 = vpop.permute.xlu0 %7126
    %7128 = vrot.lane.b32.xlu0 %v7084, 120
    %v7129 = vpop.permute.xlu0 %7128
    %7130 = vrot.lane.b32.xlu0 %v7085, 120
    %v7131 = vpop.permute.xlu0 %7130
    %7132 = vrot.lane.b32.xlu0 %v7086, 120
    %v7133 = vpop.permute.xlu0 %7132
    %7134 = vrot.lane.b32.xlu0 %v7087, 120
    %v7135 = vpop.permute.xlu0 %7134
    %7152 = vst.msk [vmem:[#allocation3] sm:$0xff] %vm2203, %v7105
    %7153 = vst.msk [vmem:[#allocation3 + $0x8] sm:$0xff] %vm2205, %v7105
    %7154 = vst.msk [vmem:[#allocation3 + $0x10] sm:$0xff] %vm2203, %v7107
    %7155 = vst.msk [vmem:[#allocation3 + $0x18] sm:$0xff] %vm2205, %v7107
    %7156 = vst.msk [vmem:[#allocation3 + $0x20] sm:$0xff] %vm2203, %v7109
    %7157 = vst.msk [vmem:[#allocation3 + $0x28] sm:$0xff] %vm2205, %v7109
    %7158 = vst.msk [vmem:[#allocation3 + $0x30] sm:$0xff] %vm2203, %v7111
    %7159 = vst.msk [vmem:[#allocation3 + $0x38] sm:$0xff] %vm2205, %v7111
    %7160 = vst.msk [vmem:[#allocation3 + $0x40] sm:$0xff] %vm2203, %v7113
    %7161 = vst.msk [vmem:[#allocation3 + $0x48] sm:$0xff] %vm2205, %v7113
    %7162 = vst.msk [vmem:[#allocation3 + $0x50] sm:$0xff] %vm2203, %v7115
    %7163 = vst.msk [vmem:[#allocation3 + $0x58] sm:$0xff] %vm2205, %v7115
    %7164 = vst.msk [vmem:[#allocation3 + $0x60] sm:$0xff] %vm2203, %v7117
    %7165 = vst.msk [vmem:[#allocation3 + $0x68] sm:$0xff] %vm2205, %v7117
    %7166 = vst.msk [vmem:[#allocation3 + $0x70] sm:$0xff] %vm2203, %v7119
    %7167 = vst.msk [vmem:[#allocation3 + $0x78] sm:$0xff] %vm2205, %v7119
    %7168 = vst.msk [vmem:[#allocation3 + $0x80] sm:$0xff] %vm2203, %v7121
    %7169 = vst.msk [vmem:[#allocation3 + $0x88] sm:$0xff] %vm2205, %v7121
    %7170 = vst.msk [vmem:[#allocation3 + $0x90] sm:$0xff] %vm2203, %v7123
    %7171 = vst.msk [vmem:[#allocation3 + $0x98] sm:$0xff] %vm2205, %v7123
    %7172 = vst.msk [vmem:[#allocation3 + $0xa0] sm:$0xff] %vm2203, %v7125
    %7173 = vst.msk [vmem:[#allocation3 + $0xa8] sm:$0xff] %vm2205, %v7125
    %7174 = vst.msk [vmem:[#allocation3 + $0xb0] sm:$0xff] %vm2203, %v7127
    %7175 = vst.msk [vmem:[#allocation3 + $0xb8] sm:$0xff] %vm2205, %v7127
    %7176 = vst.msk [vmem:[#allocation3 + $0xc0] sm:$0xff] %vm2203, %v7129
    %7177 = vst.msk [vmem:[#allocation3 + $0xc8] sm:$0xff] %vm2205, %v7129
    %7178 = vst.msk [vmem:[#allocation3 + $0xd0] sm:$0xff] %vm2203, %v7131
    %7179 = vst.msk [vmem:[#allocation3 + $0xd8] sm:$0xff] %vm2205, %v7131
    %7180 = vst.msk [vmem:[#allocation3 + $0xe0] sm:$0xff] %vm2203, %v7133
    %7181 = vst.msk [vmem:[#allocation3 + $0xe8] sm:$0xff] %vm2205, %v7133
    %7182 = vst.msk [vmem:[#allocation3 + $0xf0] sm:$0xff] %vm2203, %v7135
    %7183 = vst.msk [vmem:[#allocation3 + $0xf8] sm:$0xff] %vm2205, %v7135
    %v7184 = vld [vmem:[#allocation2 + $0x12] sm:$0xff]
    %v7185 = vld [vmem:[#allocation2 + $0x1a] sm:$0xff]
    %v7186 = vld [vmem:[#allocation2 + $0x22] sm:$0xff]
    %v7187 = vld [vmem:[#allocation2 + $0x2a] sm:$0xff]
    %v7188 = vld [vmem:[#allocation2 + $0x32] sm:$0xff]
    %v7189 = vld [vmem:[#allocation2 + $0x3a] sm:$0xff]
    %v7190 = vld [vmem:[#allocation2 + $0x42] sm:$0xff]
    %v7191 = vld [vmem:[#allocation2 + $0x4a] sm:$0xff]
    %v7192 = vld [vmem:[#allocation2 + $0x52] sm:$0xff]
    %v7193 = vld [vmem:[#allocation2 + $0x5a] sm:$0xff]
    %v7194 = vld [vmem:[#allocation2 + $0x62] sm:$0xff]
    %v7195 = vld [vmem:[#allocation2 + $0x6a] sm:$0xff]
    %v7196 = vld [vmem:[#allocation2 + $0x72] sm:$0xff]
    %v7197 = vld [vmem:[#allocation2 + $0x7a] sm:$0xff]
    %v7198 = vld [vmem:[#allocation2 + $0x82] sm:$0xff]
    %v7199 = vld [vmem:[#allocation2 + $0x8a] sm:$0xff]
    %7216 = vrot.lane.b32.xlu0 %v7184, 2
    %v7217 = vpop.permute.xlu0 %7216
    %7218 = vrot.lane.b32.xlu0 %v7185, 2
    %v7219 = vpop.permute.xlu0 %7218
    %7220 = vrot.lane.b32.xlu0 %v7186, 2
    %v7221 = vpop.permute.xlu0 %7220
    %7222 = vrot.lane.b32.xlu0 %v7187, 2
    %v7223 = vpop.permute.xlu0 %7222
    %7224 = vrot.lane.b32.xlu0 %v7188, 2
    %v7225 = vpop.permute.xlu0 %7224
    %7226 = vrot.lane.b32.xlu0 %v7189, 2
    %v7227 = vpop.permute.xlu0 %7226
    %7228 = vrot.lane.b32.xlu0 %v7190, 2
    %v7229 = vpop.permute.xlu0 %7228
    %7230 = vrot.lane.b32.xlu0 %v7191, 2
    %v7231 = vpop.permute.xlu0 %7230
    %7232 = vrot.lane.b32.xlu0 %v7192, 2
    %v7233 = vpop.permute.xlu0 %7232
    %7234 = vrot.lane.b32.xlu0 %v7193, 2
    %v7235 = vpop.permute.xlu0 %7234
    %7236 = vrot.lane.b32.xlu0 %v7194, 2
    %v7237 = vpop.permute.xlu0 %7236
    %7238 = vrot.lane.b32.xlu0 %v7195, 2
    %v7239 = vpop.permute.xlu0 %7238
    %7240 = vrot.lane.b32.xlu0 %v7196, 2
    %v7241 = vpop.permute.xlu0 %7240
    %7242 = vrot.lane.b32.xlu0 %v7197, 2
    %v7243 = vpop.permute.xlu0 %7242
    %7244 = vrot.lane.b32.xlu0 %v7198, 2
    %v7245 = vpop.permute.xlu0 %7244
    %7246 = vrot.lane.b32.xlu0 %v7199, 2
    %v7247 = vpop.permute.xlu0 %7246
    %7264 = vst.msk [vmem:[#allocation3 + $0x8] sm:$0xff] %vm2317, %v7217
    %7265 = vst.msk [vmem:[#allocation3 + $0x18] sm:$0xff] %vm2317, %v7219
    %7266 = vst.msk [vmem:[#allocation3 + $0x28] sm:$0xff] %vm2317, %v7221
    %7267 = vst.msk [vmem:[#allocation3 + $0x38] sm:$0xff] %vm2317, %v7223
    %7268 = vst.msk [vmem:[#allocation3 + $0x48] sm:$0xff] %vm2317, %v7225
    %7269 = vst.msk [vmem:[#allocation3 + $0x58] sm:$0xff] %vm2317, %v7227
    %7270 = vst.msk [vmem:[#allocation3 + $0x68] sm:$0xff] %vm2317, %v7229
    %7271 = vst.msk [vmem:[#allocation3 + $0x78] sm:$0xff] %vm2317, %v7231
    %7272 = vst.msk [vmem:[#allocation3 + $0x88] sm:$0xff] %vm2317, %v7233
    %7273 = vst.msk [vmem:[#allocation3 + $0x98] sm:$0xff] %vm2317, %v7235
    %7274 = vst.msk [vmem:[#allocation3 + $0xa8] sm:$0xff] %vm2317, %v7237
    %7275 = vst.msk [vmem:[#allocation3 + $0xb8] sm:$0xff] %vm2317, %v7239
    %7276 = vst.msk [vmem:[#allocation3 + $0xc8] sm:$0xff] %vm2317, %v7241
    %7277 = vst.msk [vmem:[#allocation3 + $0xd8] sm:$0xff] %vm2317, %v7243
    %7278 = vst.msk [vmem:[#allocation3 + $0xe8] sm:$0xff] %vm2317, %v7245
    %7279 = vst.msk [vmem:[#allocation3 + $0xf8] sm:$0xff] %vm2317, %v7247
    %v7280 = vld [vmem:[#allocation2 + $0x13] sm:$0xff]
    %v7281 = vld [vmem:[#allocation2 + $0x1b] sm:$0xff]
    %v7282 = vld [vmem:[#allocation2 + $0x23] sm:$0xff]
    %v7283 = vld [vmem:[#allocation2 + $0x2b] sm:$0xff]
    %v7284 = vld [vmem:[#allocation2 + $0x33] sm:$0xff]
    %v7285 = vld [vmem:[#allocation2 + $0x3b] sm:$0xff]
    %v7286 = vld [vmem:[#allocation2 + $0x43] sm:$0xff]
    %v7287 = vld [vmem:[#allocation2 + $0x4b] sm:$0xff]
    %v7288 = vld [vmem:[#allocation2 + $0x53] sm:$0xff]
    %v7289 = vld [vmem:[#allocation2 + $0x5b] sm:$0xff]
    %v7290 = vld [vmem:[#allocation2 + $0x63] sm:$0xff]
    %v7291 = vld [vmem:[#allocation2 + $0x6b] sm:$0xff]
    %v7292 = vld [vmem:[#allocation2 + $0x73] sm:$0xff]
    %v7293 = vld [vmem:[#allocation2 + $0x7b] sm:$0xff]
    %v7294 = vld [vmem:[#allocation2 + $0x83] sm:$0xff]
    %v7295 = vld [vmem:[#allocation2 + $0x8b] sm:$0xff]
    %7312 = vrot.lane.b32.xlu0 %v7280, 12
    %v7313 = vpop.permute.xlu0 %7312
    %7314 = vrot.lane.b32.xlu0 %v7281, 12
    %v7315 = vpop.permute.xlu0 %7314
    %7316 = vrot.lane.b32.xlu0 %v7282, 12
    %v7317 = vpop.permute.xlu0 %7316
    %7318 = vrot.lane.b32.xlu0 %v7283, 12
    %v7319 = vpop.permute.xlu0 %7318
    %7320 = vrot.lane.b32.xlu0 %v7284, 12
    %v7321 = vpop.permute.xlu0 %7320
    %7322 = vrot.lane.b32.xlu0 %v7285, 12
    %v7323 = vpop.permute.xlu0 %7322
    %7324 = vrot.lane.b32.xlu0 %v7286, 12
    %v7325 = vpop.permute.xlu0 %7324
    %7326 = vrot.lane.b32.xlu0 %v7287, 12
    %v7327 = vpop.permute.xlu0 %7326
    %7328 = vrot.lane.b32.xlu0 %v7288, 12
    %v7329 = vpop.permute.xlu0 %7328
    %7330 = vrot.lane.b32.xlu0 %v7289, 12
    %v7331 = vpop.permute.xlu0 %7330
    %7332 = vrot.lane.b32.xlu0 %v7290, 12
    %v7333 = vpop.permute.xlu0 %7332
    %7334 = vrot.lane.b32.xlu0 %v7291, 12
    %v7335 = vpop.permute.xlu0 %7334
    %7336 = vrot.lane.b32.xlu0 %v7292, 12
    %v7337 = vpop.permute.xlu0 %7336
    %7338 = vrot.lane.b32.xlu0 %v7293, 12
    %v7339 = vpop.permute.xlu0 %7338
    %7340 = vrot.lane.b32.xlu0 %v7294, 12
    %v7341 = vpop.permute.xlu0 %7340
    %7342 = vrot.lane.b32.xlu0 %v7295, 12
    %v7343 = vpop.permute.xlu0 %7342
    %7360 = vst.msk [vmem:[#allocation3 + $0x8] sm:$0xff] %vm2414, %v7313
    %7361 = vst.msk [vmem:[#allocation3 + $0x18] sm:$0xff] %vm2414, %v7315
    %7362 = vst.msk [vmem:[#allocation3 + $0x28] sm:$0xff] %vm2414, %v7317
    %7363 = vst.msk [vmem:[#allocation3 + $0x38] sm:$0xff] %vm2414, %v7319
    %7364 = vst.msk [vmem:[#allocation3 + $0x48] sm:$0xff] %vm2414, %v7321
    %7365 = vst.msk [vmem:[#allocation3 + $0x58] sm:$0xff] %vm2414, %v7323
    %7366 = vst.msk [vmem:[#allocation3 + $0x68] sm:$0xff] %vm2414, %v7325
    %7367 = vst.msk [vmem:[#allocation3 + $0x78] sm:$0xff] %vm2414, %v7327
    %7368 = vst.msk [vmem:[#allocation3 + $0x88] sm:$0xff] %vm2414, %v7329
    %7369 = vst.msk [vmem:[#allocation3 + $0x98] sm:$0xff] %vm2414, %v7331
    %7370 = vst.msk [vmem:[#allocation3 + $0xa8] sm:$0xff] %vm2414, %v7333
    %7371 = vst.msk [vmem:[#allocation3 + $0xb8] sm:$0xff] %vm2414, %v7335
    %7372 = vst.msk [vmem:[#allocation3 + $0xc8] sm:$0xff] %vm2414, %v7337
    %7373 = vst.msk [vmem:[#allocation3 + $0xd8] sm:$0xff] %vm2414, %v7339
    %7374 = vst.msk [vmem:[#allocation3 + $0xe8] sm:$0xff] %vm2414, %v7341
    %7375 = vst.msk [vmem:[#allocation3 + $0xf8] sm:$0xff] %vm2414, %v7343
    %v7376 = vld [vmem:[#allocation2 + $0x14] sm:$0xff]
    %v7377 = vld [vmem:[#allocation2 + $0x1c] sm:$0xff]
    %v7378 = vld [vmem:[#allocation2 + $0x24] sm:$0xff]
    %v7379 = vld [vmem:[#allocation2 + $0x2c] sm:$0xff]
    %v7380 = vld [vmem:[#allocation2 + $0x34] sm:$0xff]
    %v7381 = vld [vmem:[#allocation2 + $0x3c] sm:$0xff]
    %v7382 = vld [vmem:[#allocation2 + $0x44] sm:$0xff]
    %v7383 = vld [vmem:[#allocation2 + $0x4c] sm:$0xff]
    %v7384 = vld [vmem:[#allocation2 + $0x54] sm:$0xff]
    %v7385 = vld [vmem:[#allocation2 + $0x5c] sm:$0xff]
    %v7386 = vld [vmem:[#allocation2 + $0x64] sm:$0xff]
    %v7387 = vld [vmem:[#allocation2 + $0x6c] sm:$0xff]
    %v7388 = vld [vmem:[#allocation2 + $0x74] sm:$0xff]
    %v7389 = vld [vmem:[#allocation2 + $0x7c] sm:$0xff]
    %v7390 = vld [vmem:[#allocation2 + $0x84] sm:$0xff]
    %v7391 = vld [vmem:[#allocation2 + $0x8c] sm:$0xff]
    %7408 = vrot.lane.b32.xlu0 %v7376, 22
    %v7409 = vpop.permute.xlu0 %7408
    %7410 = vrot.lane.b32.xlu0 %v7377, 22
    %v7411 = vpop.permute.xlu0 %7410
    %7412 = vrot.lane.b32.xlu0 %v7378, 22
    %v7413 = vpop.permute.xlu0 %7412
    %7414 = vrot.lane.b32.xlu0 %v7379, 22
    %v7415 = vpop.permute.xlu0 %7414
    %7416 = vrot.lane.b32.xlu0 %v7380, 22
    %v7417 = vpop.permute.xlu0 %7416
    %7418 = vrot.lane.b32.xlu0 %v7381, 22
    %v7419 = vpop.permute.xlu0 %7418
    %7420 = vrot.lane.b32.xlu0 %v7382, 22
    %v7421 = vpop.permute.xlu0 %7420
    %7422 = vrot.lane.b32.xlu0 %v7383, 22
    %v7423 = vpop.permute.xlu0 %7422
    %7424 = vrot.lane.b32.xlu0 %v7384, 22
    %v7425 = vpop.permute.xlu0 %7424
    %7426 = vrot.lane.b32.xlu0 %v7385, 22
    %v7427 = vpop.permute.xlu0 %7426
    %7428 = vrot.lane.b32.xlu0 %v7386, 22
    %v7429 = vpop.permute.xlu0 %7428
    %7430 = vrot.lane.b32.xlu0 %v7387, 22
    %v7431 = vpop.permute.xlu0 %7430
    %7432 = vrot.lane.b32.xlu0 %v7388, 22
    %v7433 = vpop.permute.xlu0 %7432
    %7434 = vrot.lane.b32.xlu0 %v7389, 22
    %v7435 = vpop.permute.xlu0 %7434
    %7436 = vrot.lane.b32.xlu0 %v7390, 22
    %v7437 = vpop.permute.xlu0 %7436
    %7438 = vrot.lane.b32.xlu0 %v7391, 22
    %v7439 = vpop.permute.xlu0 %7438
    %7456 = vst.msk [vmem:[#allocation3 + $0x8] sm:$0xff] %vm2511, %v7409
    %7457 = vst.msk [vmem:[#allocation3 + $0x18] sm:$0xff] %vm2511, %v7411
    %7458 = vst.msk [vmem:[#allocation3 + $0x28] sm:$0xff] %vm2511, %v7413
    %7459 = vst.msk [vmem:[#allocation3 + $0x38] sm:$0xff] %vm2511, %v7415
    %7460 = vst.msk [vmem:[#allocation3 + $0x48] sm:$0xff] %vm2511, %v7417
    %7461 = vst.msk [vmem:[#allocation3 + $0x58] sm:$0xff] %vm2511, %v7419
    %7462 = vst.msk [vmem:[#allocation3 + $0x68] sm:$0xff] %vm2511, %v7421
    %7463 = vst.msk [vmem:[#allocation3 + $0x78] sm:$0xff] %vm2511, %v7423
    %7464 = vst.msk [vmem:[#allocation3 + $0x88] sm:$0xff] %vm2511, %v7425
    %7465 = vst.msk [vmem:[#allocation3 + $0x98] sm:$0xff] %vm2511, %v7427
    %7466 = vst.msk [vmem:[#allocation3 + $0xa8] sm:$0xff] %vm2511, %v7429
    %7467 = vst.msk [vmem:[#allocation3 + $0xb8] sm:$0xff] %vm2511, %v7431
    %7468 = vst.msk [vmem:[#allocation3 + $0xc8] sm:$0xff] %vm2511, %v7433
    %7469 = vst.msk [vmem:[#allocation3 + $0xd8] sm:$0xff] %vm2511, %v7435
    %7470 = vst.msk [vmem:[#allocation3 + $0xe8] sm:$0xff] %vm2511, %v7437
    %7471 = vst.msk [vmem:[#allocation3 + $0xf8] sm:$0xff] %vm2511, %v7439
    %v7472 = vld [vmem:[#allocation2 + $0x15] sm:$0xff]
    %v7473 = vld [vmem:[#allocation2 + $0x1d] sm:$0xff]
    %v7474 = vld [vmem:[#allocation2 + $0x25] sm:$0xff]
    %v7475 = vld [vmem:[#allocation2 + $0x2d] sm:$0xff]
    %v7476 = vld [vmem:[#allocation2 + $0x35] sm:$0xff]
    %v7477 = vld [vmem:[#allocation2 + $0x3d] sm:$0xff]
    %v7478 = vld [vmem:[#allocation2 + $0x45] sm:$0xff]
    %v7479 = vld [vmem:[#allocation2 + $0x4d] sm:$0xff]
    %v7480 = vld [vmem:[#allocation2 + $0x55] sm:$0xff]
    %v7481 = vld [vmem:[#allocation2 + $0x5d] sm:$0xff]
    %v7482 = vld [vmem:[#allocation2 + $0x65] sm:$0xff]
    %v7483 = vld [vmem:[#allocation2 + $0x6d] sm:$0xff]
    %v7484 = vld [vmem:[#allocation2 + $0x75] sm:$0xff]
    %v7485 = vld [vmem:[#allocation2 + $0x7d] sm:$0xff]
    %v7486 = vld [vmem:[#allocation2 + $0x85] sm:$0xff]
    %v7487 = vld [vmem:[#allocation2 + $0x8d] sm:$0xff]
    %7504 = vrot.lane.b32.xlu0 %v7472, 32
    %v7505 = vpop.permute.xlu0 %7504
    %7506 = vrot.lane.b32.xlu0 %v7473, 32
    %v7507 = vpop.permute.xlu0 %7506
    %7508 = vrot.lane.b32.xlu0 %v7474, 32
    %v7509 = vpop.permute.xlu0 %7508
    %7510 = vrot.lane.b32.xlu0 %v7475, 32
    %v7511 = vpop.permute.xlu0 %7510
    %7512 = vrot.lane.b32.xlu0 %v7476, 32
    %v7513 = vpop.permute.xlu0 %7512
    %7514 = vrot.lane.b32.xlu0 %v7477, 32
    %v7515 = vpop.permute.xlu0 %7514
    %7516 = vrot.lane.b32.xlu0 %v7478, 32
    %v7517 = vpop.permute.xlu0 %7516
    %7518 = vrot.lane.b32.xlu0 %v7479, 32
    %v7519 = vpop.permute.xlu0 %7518
    %7520 = vrot.lane.b32.xlu0 %v7480, 32
    %v7521 = vpop.permute.xlu0 %7520
    %7522 = vrot.lane.b32.xlu0 %v7481, 32
    %v7523 = vpop.permute.xlu0 %7522
    %7524 = vrot.lane.b32.xlu0 %v7482, 32
    %v7525 = vpop.permute.xlu0 %7524
    %7526 = vrot.lane.b32.xlu0 %v7483, 32
    %v7527 = vpop.permute.xlu0 %7526
    %7528 = vrot.lane.b32.xlu0 %v7484, 32
    %v7529 = vpop.permute.xlu0 %7528
    %7530 = vrot.lane.b32.xlu0 %v7485, 32
    %v7531 = vpop.permute.xlu0 %7530
    %7532 = vrot.lane.b32.xlu0 %v7486, 32
    %v7533 = vpop.permute.xlu0 %7532
    %7534 = vrot.lane.b32.xlu0 %v7487, 32
    %v7535 = vpop.permute.xlu0 %7534
    %7552 = vst.msk [vmem:[#allocation3 + $0x8] sm:$0xff] %vm2608, %v7505
    %7553 = vst.msk [vmem:[#allocation3 + $0x18] sm:$0xff] %vm2608, %v7507
    %7554 = vst.msk [vmem:[#allocation3 + $0x28] sm:$0xff] %vm2608, %v7509
    %7555 = vst.msk [vmem:[#allocation3 + $0x38] sm:$0xff] %vm2608, %v7511
    %7556 = vst.msk [vmem:[#allocation3 + $0x48] sm:$0xff] %vm2608, %v7513
    %7557 = vst.msk [vmem:[#allocation3 + $0x58] sm:$0xff] %vm2608, %v7515
    %7558 = vst.msk [vmem:[#allocation3 + $0x68] sm:$0xff] %vm2608, %v7517
    %7559 = vst.msk [vmem:[#allocation3 + $0x78] sm:$0xff] %vm2608, %v7519
    %7560 = vst.msk [vmem:[#allocation3 + $0x88] sm:$0xff] %vm2608, %v7521
    %7561 = vst.msk [vmem:[#allocation3 + $0x98] sm:$0xff] %vm2608, %v7523
    %7562 = vst.msk [vmem:[#allocation3 + $0xa8] sm:$0xff] %vm2608, %v7525
    %7563 = vst.msk [vmem:[#allocation3 + $0xb8] sm:$0xff] %vm2608, %v7527
    %7564 = vst.msk [vmem:[#allocation3 + $0xc8] sm:$0xff] %vm2608, %v7529
    %7565 = vst.msk [vmem:[#allocation3 + $0xd8] sm:$0xff] %vm2608, %v7531
    %7566 = vst.msk [vmem:[#allocation3 + $0xe8] sm:$0xff] %vm2608, %v7533
    %7567 = vst.msk [vmem:[#allocation3 + $0xf8] sm:$0xff] %vm2608, %v7535
    %v7568 = vld [vmem:[#allocation2 + $0x16] sm:$0xff]
    %v7569 = vld [vmem:[#allocation2 + $0x1e] sm:$0xff]
    %v7570 = vld [vmem:[#allocation2 + $0x26] sm:$0xff]
    %v7571 = vld [vmem:[#allocation2 + $0x2e] sm:$0xff]
    %v7572 = vld [vmem:[#allocation2 + $0x36] sm:$0xff]
    %v7573 = vld [vmem:[#allocation2 + $0x3e] sm:$0xff]
    %v7574 = vld [vmem:[#allocation2 + $0x46] sm:$0xff]
    %v7575 = vld [vmem:[#allocation2 + $0x4e] sm:$0xff]
    %v7576 = vld [vmem:[#allocation2 + $0x56] sm:$0xff]
    %v7577 = vld [vmem:[#allocation2 + $0x5e] sm:$0xff]
    %v7578 = vld [vmem:[#allocation2 + $0x66] sm:$0xff]
    %v7579 = vld [vmem:[#allocation2 + $0x6e] sm:$0xff]
    %v7580 = vld [vmem:[#allocation2 + $0x76] sm:$0xff]
    %v7581 = vld [vmem:[#allocation2 + $0x7e] sm:$0xff]
    %v7582 = vld [vmem:[#allocation2 + $0x86] sm:$0xff]
    %v7583 = vld [vmem:[#allocation2 + $0x8e] sm:$0xff]
    %7600 = vrot.lane.b32.xlu0 %v7568, 42
    %v7601 = vpop.permute.xlu0 %7600
    %7602 = vrot.lane.b32.xlu0 %v7569, 42
    %v7603 = vpop.permute.xlu0 %7602
    %7604 = vrot.lane.b32.xlu0 %v7570, 42
    %v7605 = vpop.permute.xlu0 %7604
    %7606 = vrot.lane.b32.xlu0 %v7571, 42
    %v7607 = vpop.permute.xlu0 %7606
    %7608 = vrot.lane.b32.xlu0 %v7572, 42
    %v7609 = vpop.permute.xlu0 %7608
    %7610 = vrot.lane.b32.xlu0 %v7573, 42
    %v7611 = vpop.permute.xlu0 %7610
    %7612 = vrot.lane.b32.xlu0 %v7574, 42
    %v7613 = vpop.permute.xlu0 %7612
    %7614 = vrot.lane.b32.xlu0 %v7575, 42
    %v7615 = vpop.permute.xlu0 %7614
    %7616 = vrot.lane.b32.xlu0 %v7576, 42
    %v7617 = vpop.permute.xlu0 %7616
    %7618 = vrot.lane.b32.xlu0 %v7577, 42
    %v7619 = vpop.permute.xlu0 %7618
    %7620 = vrot.lane.b32.xlu0 %v7578, 42
    %v7621 = vpop.permute.xlu0 %7620
    %7622 = vrot.lane.b32.xlu0 %v7579, 42
    %v7623 = vpop.permute.xlu0 %7622
    %7624 = vrot.lane.b32.xlu0 %v7580, 42
    %v7625 = vpop.permute.xlu0 %7624
    %7626 = vrot.lane.b32.xlu0 %v7581, 42
    %v7627 = vpop.permute.xlu0 %7626
    %7628 = vrot.lane.b32.xlu0 %v7582, 42
    %v7629 = vpop.permute.xlu0 %7628
    %7630 = vrot.lane.b32.xlu0 %v7583, 42
    %v7631 = vpop.permute.xlu0 %7630
    %7648 = vst.msk [vmem:[#allocation3 + $0x8] sm:$0xff] %vm2705, %v7601
    %7649 = vst.msk [vmem:[#allocation3 + $0x18] sm:$0xff] %vm2705, %v7603
    %7650 = vst.msk [vmem:[#allocation3 + $0x28] sm:$0xff] %vm2705, %v7605
    %7651 = vst.msk [vmem:[#allocation3 + $0x38] sm:$0xff] %vm2705, %v7607
    %7652 = vst.msk [vmem:[#allocation3 + $0x48] sm:$0xff] %vm2705, %v7609
    %7653 = vst.msk [vmem:[#allocation3 + $0x58] sm:$0xff] %vm2705, %v7611
    %7654 = vst.msk [vmem:[#allocation3 + $0x68] sm:$0xff] %vm2705, %v7613
    %7655 = vst.msk [vmem:[#allocation3 + $0x78] sm:$0xff] %vm2705, %v7615
    %7656 = vst.msk [vmem:[#allocation3 + $0x88] sm:$0xff] %vm2705, %v7617
    %7657 = vst.msk [vmem:[#allocation3 + $0x98] sm:$0xff] %vm2705, %v7619
    %7658 = vst.msk [vmem:[#allocation3 + $0xa8] sm:$0xff] %vm2705, %v7621
    %7659 = vst.msk [vmem:[#allocation3 + $0xb8] sm:$0xff] %vm2705, %v7623
    %7660 = vst.msk [vmem:[#allocation3 + $0xc8] sm:$0xff] %vm2705, %v7625
    %7661 = vst.msk [vmem:[#allocation3 + $0xd8] sm:$0xff] %vm2705, %v7627
    %7662 = vst.msk [vmem:[#allocation3 + $0xe8] sm:$0xff] %vm2705, %v7629
    %7663 = vst.msk [vmem:[#allocation3 + $0xf8] sm:$0xff] %vm2705, %v7631
    %v7664 = vld [vmem:[#allocation2 + $0x17] sm:$0xff]
    %v7665 = vld [vmem:[#allocation2 + $0x1f] sm:$0xff]
    %v7666 = vld [vmem:[#allocation2 + $0x27] sm:$0xff]
    %v7667 = vld [vmem:[#allocation2 + $0x2f] sm:$0xff]
    %v7668 = vld [vmem:[#allocation2 + $0x37] sm:$0xff]
    %v7669 = vld [vmem:[#allocation2 + $0x3f] sm:$0xff]
    %v7670 = vld [vmem:[#allocation2 + $0x47] sm:$0xff]
    %v7671 = vld [vmem:[#allocation2 + $0x4f] sm:$0xff]
    %v7672 = vld [vmem:[#allocation2 + $0x57] sm:$0xff]
    %v7673 = vld [vmem:[#allocation2 + $0x5f] sm:$0xff]
    %v7674 = vld [vmem:[#allocation2 + $0x67] sm:$0xff]
    %v7675 = vld [vmem:[#allocation2 + $0x6f] sm:$0xff]
    %v7676 = vld [vmem:[#allocation2 + $0x77] sm:$0xff]
    %v7677 = vld [vmem:[#allocation2 + $0x7f] sm:$0xff]
    %v7678 = vld [vmem:[#allocation2 + $0x87] sm:$0xff]
    %v7679 = vld [vmem:[#allocation2 + $0x8f] sm:$0xff]
    %7696 = vrot.lane.b32.xlu0 %v7664, 52
    %v7697 = vpop.permute.xlu0 %7696
    %7698 = vrot.lane.b32.xlu0 %v7665, 52
    %v7699 = vpop.permute.xlu0 %7698
    %7700 = vrot.lane.b32.xlu0 %v7666, 52
    %v7701 = vpop.permute.xlu0 %7700
    %7702 = vrot.lane.b32.xlu0 %v7667, 52
    %v7703 = vpop.permute.xlu0 %7702
    %7704 = vrot.lane.b32.xlu0 %v7668, 52
    %v7705 = vpop.permute.xlu0 %7704
    %7706 = vrot.lane.b32.xlu0 %v7669, 52
    %v7707 = vpop.permute.xlu0 %7706
    %7708 = vrot.lane.b32.xlu0 %v7670, 52
    %v7709 = vpop.permute.xlu0 %7708
    %7710 = vrot.lane.b32.xlu0 %v7671, 52
    %v7711 = vpop.permute.xlu0 %7710
    %7712 = vrot.lane.b32.xlu0 %v7672, 52
    %v7713 = vpop.permute.xlu0 %7712
    %7714 = vrot.lane.b32.xlu0 %v7673, 52
    %v7715 = vpop.permute.xlu0 %7714
    %7716 = vrot.lane.b32.xlu0 %v7674, 52
    %v7717 = vpop.permute.xlu0 %7716
    %7718 = vrot.lane.b32.xlu0 %v7675, 52
    %v7719 = vpop.permute.xlu0 %7718
    %7720 = vrot.lane.b32.xlu0 %v7676, 52
    %v7721 = vpop.permute.xlu0 %7720
    %7722 = vrot.lane.b32.xlu0 %v7677, 52
    %v7723 = vpop.permute.xlu0 %7722
    %7724 = vrot.lane.b32.xlu0 %v7678, 52
    %v7725 = vpop.permute.xlu0 %7724
    %7726 = vrot.lane.b32.xlu0 %v7679, 52
    %v7727 = vpop.permute.xlu0 %7726
    %7744 = vst.msk [vmem:[#allocation3 + $0x8] sm:$0xff] %vm2802, %v7697
    %7745 = vst.msk [vmem:[#allocation3 + $0x18] sm:$0xff] %vm2802, %v7699
    %7746 = vst.msk [vmem:[#allocation3 + $0x28] sm:$0xff] %vm2802, %v7701
    %7747 = vst.msk [vmem:[#allocation3 + $0x38] sm:$0xff] %vm2802, %v7703
    %7748 = vst.msk [vmem:[#allocation3 + $0x48] sm:$0xff] %vm2802, %v7705
    %7749 = vst.msk [vmem:[#allocation3 + $0x58] sm:$0xff] %vm2802, %v7707
    %7750 = vst.msk [vmem:[#allocation3 + $0x68] sm:$0xff] %vm2802, %v7709
    %7751 = vst.msk [vmem:[#allocation3 + $0x78] sm:$0xff] %vm2802, %v7711
    %7752 = vst.msk [vmem:[#allocation3 + $0x88] sm:$0xff] %vm2802, %v7713
    %7753 = vst.msk [vmem:[#allocation3 + $0x98] sm:$0xff] %vm2802, %v7715
    %7754 = vst.msk [vmem:[#allocation3 + $0xa8] sm:$0xff] %vm2802, %v7717
    %7755 = vst.msk [vmem:[#allocation3 + $0xb8] sm:$0xff] %vm2802, %v7719
    %7756 = vst.msk [vmem:[#allocation3 + $0xc8] sm:$0xff] %vm2802, %v7721
    %7757 = vst.msk [vmem:[#allocation3 + $0xd8] sm:$0xff] %vm2802, %v7723
    %7758 = vst.msk [vmem:[#allocation3 + $0xe8] sm:$0xff] %vm2802, %v7725
    %7759 = vst.msk [vmem:[#allocation3 + $0xf8] sm:$0xff] %vm2802, %v7727
    %v7760 = vld [vmem:[#allocation2 + $0x18] sm:$0xff]
    %v7761 = vld [vmem:[#allocation2 + $0x20] sm:$0xff]
    %v7762 = vld [vmem:[#allocation2 + $0x28] sm:$0xff]
    %v7763 = vld [vmem:[#allocation2 + $0x30] sm:$0xff]
    %v7764 = vld [vmem:[#allocation2 + $0x38] sm:$0xff]
    %v7765 = vld [vmem:[#allocation2 + $0x40] sm:$0xff]
    %v7766 = vld [vmem:[#allocation2 + $0x48] sm:$0xff]
    %v7767 = vld [vmem:[#allocation2 + $0x50] sm:$0xff]
    %v7768 = vld [vmem:[#allocation2 + $0x58] sm:$0xff]
    %v7769 = vld [vmem:[#allocation2 + $0x60] sm:$0xff]
    %v7770 = vld [vmem:[#allocation2 + $0x68] sm:$0xff]
    %v7771 = vld [vmem:[#allocation2 + $0x70] sm:$0xff]
    %v7772 = vld [vmem:[#allocation2 + $0x78] sm:$0xff]
    %v7773 = vld [vmem:[#allocation2 + $0x80] sm:$0xff]
    %v7774 = vld [vmem:[#allocation2 + $0x88] sm:$0xff]
    %v7775 = vld [vmem:[#allocation2 + $0x90] sm:$0xff]
    %7792 = vrot.lane.b32.xlu0 %v7760, 62
    %v7793 = vpop.permute.xlu0 %7792
    %7794 = vrot.lane.b32.xlu0 %v7761, 62
    %v7795 = vpop.permute.xlu0 %7794
    %7796 = vrot.lane.b32.xlu0 %v7762, 62
    %v7797 = vpop.permute.xlu0 %7796
    %7798 = vrot.lane.b32.xlu0 %v7763, 62
    %v7799 = vpop.permute.xlu0 %7798
    %7800 = vrot.lane.b32.xlu0 %v7764, 62
    %v7801 = vpop.permute.xlu0 %7800
    %7802 = vrot.lane.b32.xlu0 %v7765, 62
    %v7803 = vpop.permute.xlu0 %7802
    %7804 = vrot.lane.b32.xlu0 %v7766, 62
    %v7805 = vpop.permute.xlu0 %7804
    %7806 = vrot.lane.b32.xlu0 %v7767, 62
    %v7807 = vpop.permute.xlu0 %7806
    %7808 = vrot.lane.b32.xlu0 %v7768, 62
    %v7809 = vpop.permute.xlu0 %7808
    %7810 = vrot.lane.b32.xlu0 %v7769, 62
    %v7811 = vpop.permute.xlu0 %7810
    %7812 = vrot.lane.b32.xlu0 %v7770, 62
    %v7813 = vpop.permute.xlu0 %7812
    %7814 = vrot.lane.b32.xlu0 %v7771, 62
    %v7815 = vpop.permute.xlu0 %7814
    %7816 = vrot.lane.b32.xlu0 %v7772, 62
    %v7817 = vpop.permute.xlu0 %7816
    %7818 = vrot.lane.b32.xlu0 %v7773, 62
    %v7819 = vpop.permute.xlu0 %7818
    %7820 = vrot.lane.b32.xlu0 %v7774, 62
    %v7821 = vpop.permute.xlu0 %7820
    %7822 = vrot.lane.b32.xlu0 %v7775, 62
    %v7823 = vpop.permute.xlu0 %7822
    %7840 = vst.msk [vmem:[#allocation3 + $0x8] sm:$0xff] %vm2899, %v7793
    %7841 = vst.msk [vmem:[#allocation3 + $0x18] sm:$0xff] %vm2899, %v7795
    %7842 = vst.msk [vmem:[#allocation3 + $0x28] sm:$0xff] %vm2899, %v7797
    %7843 = vst.msk [vmem:[#allocation3 + $0x38] sm:$0xff] %vm2899, %v7799
    %7844 = vst.msk [vmem:[#allocation3 + $0x48] sm:$0xff] %vm2899, %v7801
    %7845 = vst.msk [vmem:[#allocation3 + $0x58] sm:$0xff] %vm2899, %v7803
    %7846 = vst.msk [vmem:[#allocation3 + $0x68] sm:$0xff] %vm2899, %v7805
    %7847 = vst.msk [vmem:[#allocation3 + $0x78] sm:$0xff] %vm2899, %v7807
    %7848 = vst.msk [vmem:[#allocation3 + $0x88] sm:$0xff] %vm2899, %v7809
    %7849 = vst.msk [vmem:[#allocation3 + $0x98] sm:$0xff] %vm2899, %v7811
    %7850 = vst.msk [vmem:[#allocation3 + $0xa8] sm:$0xff] %vm2899, %v7813
    %7851 = vst.msk [vmem:[#allocation3 + $0xb8] sm:$0xff] %vm2899, %v7815
    %7852 = vst.msk [vmem:[#allocation3 + $0xc8] sm:$0xff] %vm2899, %v7817
    %7853 = vst.msk [vmem:[#allocation3 + $0xd8] sm:$0xff] %vm2899, %v7819
    %7854 = vst.msk [vmem:[#allocation3 + $0xe8] sm:$0xff] %vm2899, %v7821
    %7855 = vst.msk [vmem:[#allocation3 + $0xf8] sm:$0xff] %vm2899, %v7823
    %v7856 = vld [vmem:[#allocation2 + $0x19] sm:$0xff]
    %v7857 = vld [vmem:[#allocation2 + $0x21] sm:$0xff]
    %v7858 = vld [vmem:[#allocation2 + $0x29] sm:$0xff]
    %v7859 = vld [vmem:[#allocation2 + $0x31] sm:$0xff]
    %v7860 = vld [vmem:[#allocation2 + $0x39] sm:$0xff]
    %v7861 = vld [vmem:[#allocation2 + $0x41] sm:$0xff]
    %v7862 = vld [vmem:[#allocation2 + $0x49] sm:$0xff]
    %v7863 = vld [vmem:[#allocation2 + $0x51] sm:$0xff]
    %v7864 = vld [vmem:[#allocation2 + $0x59] sm:$0xff]
    %v7865 = vld [vmem:[#allocation2 + $0x61] sm:$0xff]
    %v7866 = vld [vmem:[#allocation2 + $0x69] sm:$0xff]
    %v7867 = vld [vmem:[#allocation2 + $0x71] sm:$0xff]
    %v7868 = vld [vmem:[#allocation2 + $0x79] sm:$0xff]
    %v7869 = vld [vmem:[#allocation2 + $0x81] sm:$0xff]
    %v7870 = vld [vmem:[#allocation2 + $0x89] sm:$0xff]
    %v7871 = vld [vmem:[#allocation2 + $0x91] sm:$0xff]
    %7888 = vrot.lane.b32.xlu0 %v7856, 72
    %v7889 = vpop.permute.xlu0 %7888
    %7890 = vrot.lane.b32.xlu0 %v7857, 72
    %v7891 = vpop.permute.xlu0 %7890
    %7892 = vrot.lane.b32.xlu0 %v7858, 72
    %v7893 = vpop.permute.xlu0 %7892
    %7894 = vrot.lane.b32.xlu0 %v7859, 72
    %v7895 = vpop.permute.xlu0 %7894
    %7896 = vrot.lane.b32.xlu0 %v7860, 72
    %v7897 = vpop.permute.xlu0 %7896
    %7898 = vrot.lane.b32.xlu0 %v7861, 72
    %v7899 = vpop.permute.xlu0 %7898
    %7900 = vrot.lane.b32.xlu0 %v7862, 72
    %v7901 = vpop.permute.xlu0 %7900
    %7902 = vrot.lane.b32.xlu0 %v7863, 72
    %v7903 = vpop.permute.xlu0 %7902
    %7904 = vrot.lane.b32.xlu0 %v7864, 72
    %v7905 = vpop.permute.xlu0 %7904
    %7906 = vrot.lane.b32.xlu0 %v7865, 72
    %v7907 = vpop.permute.xlu0 %7906
    %7908 = vrot.lane.b32.xlu0 %v7866, 72
    %v7909 = vpop.permute.xlu0 %7908
    %7910 = vrot.lane.b32.xlu0 %v7867, 72
    %v7911 = vpop.permute.xlu0 %7910
    %7912 = vrot.lane.b32.xlu0 %v7868, 72
    %v7913 = vpop.permute.xlu0 %7912
    %7914 = vrot.lane.b32.xlu0 %v7869, 72
    %v7915 = vpop.permute.xlu0 %7914
    %7916 = vrot.lane.b32.xlu0 %v7870, 72
    %v7917 = vpop.permute.xlu0 %7916
    %7918 = vrot.lane.b32.xlu0 %v7871, 72
    %v7919 = vpop.permute.xlu0 %7918
    %7936 = vst.msk [vmem:[#allocation3 + $0x8] sm:$0xff] %vm2996, %v7889
    %7937 = vst.msk [vmem:[#allocation3 + $0x18] sm:$0xff] %vm2996, %v7891
    %7938 = vst.msk [vmem:[#allocation3 + $0x28] sm:$0xff] %vm2996, %v7893
    %7939 = vst.msk [vmem:[#allocation3 + $0x38] sm:$0xff] %vm2996, %v7895
    %7940 = vst.msk [vmem:[#allocation3 + $0x48] sm:$0xff] %vm2996, %v7897
    %7941 = vst.msk [vmem:[#allocation3 + $0x58] sm:$0xff] %vm2996, %v7899
    %7942 = vst.msk [vmem:[#allocation3 + $0x68] sm:$0xff] %vm2996, %v7901
    %7943 = vst.msk [vmem:[#allocation3 + $0x78] sm:$0xff] %vm2996, %v7903
    %7944 = vst.msk [vmem:[#allocation3 + $0x88] sm:$0xff] %vm2996, %v7905
    %7945 = vst.msk [vmem:[#allocation3 + $0x98] sm:$0xff] %vm2996, %v7907
    %7946 = vst.msk [vmem:[#allocation3 + $0xa8] sm:$0xff] %vm2996, %v7909
    %7947 = vst.msk [vmem:[#allocation3 + $0xb8] sm:$0xff] %vm2996, %v7911
    %7948 = vst.msk [vmem:[#allocation3 + $0xc8] sm:$0xff] %vm2996, %v7913
    %7949 = vst.msk [vmem:[#allocation3 + $0xd8] sm:$0xff] %vm2996, %v7915
    %7950 = vst.msk [vmem:[#allocation3 + $0xe8] sm:$0xff] %vm2996, %v7917
    %7951 = vst.msk [vmem:[#allocation3 + $0xf8] sm:$0xff] %vm2996, %v7919
    %v7952 = vld [vmem:[#allocation2 + $0x1a] sm:$0xff]
    %v7953 = vld [vmem:[#allocation2 + $0x22] sm:$0xff]
    %v7954 = vld [vmem:[#allocation2 + $0x2a] sm:$0xff]
    %v7955 = vld [vmem:[#allocation2 + $0x32] sm:$0xff]
    %v7956 = vld [vmem:[#allocation2 + $0x3a] sm:$0xff]
    %v7957 = vld [vmem:[#allocation2 + $0x42] sm:$0xff]
    %v7958 = vld [vmem:[#allocation2 + $0x4a] sm:$0xff]
    %v7959 = vld [vmem:[#allocation2 + $0x52] sm:$0xff]
    %v7960 = vld [vmem:[#allocation2 + $0x5a] sm:$0xff]
    %v7961 = vld [vmem:[#allocation2 + $0x62] sm:$0xff]
    %v7962 = vld [vmem:[#allocation2 + $0x6a] sm:$0xff]
    %v7963 = vld [vmem:[#allocation2 + $0x72] sm:$0xff]
    %v7964 = vld [vmem:[#allocation2 + $0x7a] sm:$0xff]
    %v7965 = vld [vmem:[#allocation2 + $0x82] sm:$0xff]
    %v7966 = vld [vmem:[#allocation2 + $0x8a] sm:$0xff]
    %v7967 = vld [vmem:[#allocation2 + $0x92] sm:$0xff]
    %7984 = vrot.lane.b32.xlu0 %v7952, 82
    %v7985 = vpop.permute.xlu0 %7984
    %7986 = vrot.lane.b32.xlu0 %v7953, 82
    %v7987 = vpop.permute.xlu0 %7986
    %7988 = vrot.lane.b32.xlu0 %v7954, 82
    %v7989 = vpop.permute.xlu0 %7988
    %7990 = vrot.lane.b32.xlu0 %v7955, 82
    %v7991 = vpop.permute.xlu0 %7990
    %7992 = vrot.lane.b32.xlu0 %v7956, 82
    %v7993 = vpop.permute.xlu0 %7992
    %7994 = vrot.lane.b32.xlu0 %v7957, 82
    %v7995 = vpop.permute.xlu0 %7994
    %7996 = vrot.lane.b32.xlu0 %v7958, 82
    %v7997 = vpop.permute.xlu0 %7996
    %7998 = vrot.lane.b32.xlu0 %v7959, 82
    %v7999 = vpop.permute.xlu0 %7998
    %8000 = vrot.lane.b32.xlu0 %v7960, 82
    %v8001 = vpop.permute.xlu0 %8000
    %8002 = vrot.lane.b32.xlu0 %v7961, 82
    %v8003 = vpop.permute.xlu0 %8002
    %8004 = vrot.lane.b32.xlu0 %v7962, 82
    %v8005 = vpop.permute.xlu0 %8004
    %8006 = vrot.lane.b32.xlu0 %v7963, 82
    %v8007 = vpop.permute.xlu0 %8006
    %8008 = vrot.lane.b32.xlu0 %v7964, 82
    %v8009 = vpop.permute.xlu0 %8008
    %8010 = vrot.lane.b32.xlu0 %v7965, 82
    %v8011 = vpop.permute.xlu0 %8010
    %8012 = vrot.lane.b32.xlu0 %v7966, 82
    %v8013 = vpop.permute.xlu0 %8012
    %8014 = vrot.lane.b32.xlu0 %v7967, 82
    %v8015 = vpop.permute.xlu0 %8014
    %8032 = vst.msk [vmem:[#allocation3 + $0x8] sm:$0xff] %vm3093, %v7985
    %8033 = vst.msk [vmem:[#allocation3 + $0x18] sm:$0xff] %vm3093, %v7987
    %8034 = vst.msk [vmem:[#allocation3 + $0x28] sm:$0xff] %vm3093, %v7989
    %8035 = vst.msk [vmem:[#allocation3 + $0x38] sm:$0xff] %vm3093, %v7991
    %8036 = vst.msk [vmem:[#allocation3 + $0x48] sm:$0xff] %vm3093, %v7993
    %8037 = vst.msk [vmem:[#allocation3 + $0x58] sm:$0xff] %vm3093, %v7995
    %8038 = vst.msk [vmem:[#allocation3 + $0x68] sm:$0xff] %vm3093, %v7997
    %8039 = vst.msk [vmem:[#allocation3 + $0x78] sm:$0xff] %vm3093, %v7999
    %8040 = vst.msk [vmem:[#allocation3 + $0x88] sm:$0xff] %vm3093, %v8001
    %8041 = vst.msk [vmem:[#allocation3 + $0x98] sm:$0xff] %vm3093, %v8003
    %8042 = vst.msk [vmem:[#allocation3 + $0xa8] sm:$0xff] %vm3093, %v8005
    %8043 = vst.msk [vmem:[#allocation3 + $0xb8] sm:$0xff] %vm3093, %v8007
    %8044 = vst.msk [vmem:[#allocation3 + $0xc8] sm:$0xff] %vm3093, %v8009
    %8045 = vst.msk [vmem:[#allocation3 + $0xd8] sm:$0xff] %vm3093, %v8011
    %8046 = vst.msk [vmem:[#allocation3 + $0xe8] sm:$0xff] %vm3093, %v8013
    %8047 = vst.msk [vmem:[#allocation3 + $0xf8] sm:$0xff] %vm3093, %v8015
    %v8048 = vld [vmem:[#allocation2 + $0x1b] sm:$0xff]
    %v8049 = vld [vmem:[#allocation2 + $0x23] sm:$0xff]
    %v8050 = vld [vmem:[#allocation2 + $0x2b] sm:$0xff]
    %v8051 = vld [vmem:[#allocation2 + $0x33] sm:$0xff]
    %v8052 = vld [vmem:[#allocation2 + $0x3b] sm:$0xff]
    %v8053 = vld [vmem:[#allocation2 + $0x43] sm:$0xff]
    %v8054 = vld [vmem:[#allocation2 + $0x4b] sm:$0xff]
    %v8055 = vld [vmem:[#allocation2 + $0x53] sm:$0xff]
    %v8056 = vld [vmem:[#allocation2 + $0x5b] sm:$0xff]
    %v8057 = vld [vmem:[#allocation2 + $0x63] sm:$0xff]
    %v8058 = vld [vmem:[#allocation2 + $0x6b] sm:$0xff]
    %v8059 = vld [vmem:[#allocation2 + $0x73] sm:$0xff]
    %v8060 = vld [vmem:[#allocation2 + $0x7b] sm:$0xff]
    %v8061 = vld [vmem:[#allocation2 + $0x83] sm:$0xff]
    %v8062 = vld [vmem:[#allocation2 + $0x8b] sm:$0xff]
    %v8063 = vld [vmem:[#allocation2 + $0x93] sm:$0xff]
    %8080 = vrot.lane.b32.xlu0 %v8048, 92
    %v8081 = vpop.permute.xlu0 %8080
    %8082 = vrot.lane.b32.xlu0 %v8049, 92
    %v8083 = vpop.permute.xlu0 %8082
    %8084 = vrot.lane.b32.xlu0 %v8050, 92
    %v8085 = vpop.permute.xlu0 %8084
    %8086 = vrot.lane.b32.xlu0 %v8051, 92
    %v8087 = vpop.permute.xlu0 %8086
    %8088 = vrot.lane.b32.xlu0 %v8052, 92
    %v8089 = vpop.permute.xlu0 %8088
    %8090 = vrot.lane.b32.xlu0 %v8053, 92
    %v8091 = vpop.permute.xlu0 %8090
    %8092 = vrot.lane.b32.xlu0 %v8054, 92
    %v8093 = vpop.permute.xlu0 %8092
    %8094 = vrot.lane.b32.xlu0 %v8055, 92
    %v8095 = vpop.permute.xlu0 %8094
    %8096 = vrot.lane.b32.xlu0 %v8056, 92
    %v8097 = vpop.permute.xlu0 %8096
    %8098 = vrot.lane.b32.xlu0 %v8057, 92
    %v8099 = vpop.permute.xlu0 %8098
    %8100 = vrot.lane.b32.xlu0 %v8058, 92
    %v8101 = vpop.permute.xlu0 %8100
    %8102 = vrot.lane.b32.xlu0 %v8059, 92
    %v8103 = vpop.permute.xlu0 %8102
    %8104 = vrot.lane.b32.xlu0 %v8060, 92
    %v8105 = vpop.permute.xlu0 %8104
    %8106 = vrot.lane.b32.xlu0 %v8061, 92
    %v8107 = vpop.permute.xlu0 %8106
    %8108 = vrot.lane.b32.xlu0 %v8062, 92
    %v8109 = vpop.permute.xlu0 %8108
    %8110 = vrot.lane.b32.xlu0 %v8063, 92
    %v8111 = vpop.permute.xlu0 %8110
    %8128 = vst.msk [vmem:[#allocation3 + $0x8] sm:$0xff] %vm3190, %v8081
    %8129 = vst.msk [vmem:[#allocation3 + $0x18] sm:$0xff] %vm3190, %v8083
    %8130 = vst.msk [vmem:[#allocation3 + $0x28] sm:$0xff] %vm3190, %v8085
    %8131 = vst.msk [vmem:[#allocation3 + $0x38] sm:$0xff] %vm3190, %v8087
    %8132 = vst.msk [vmem:[#allocation3 + $0x48] sm:$0xff] %vm3190, %v8089
    %8133 = vst.msk [vmem:[#allocation3 + $0x58] sm:$0xff] %vm3190, %v8091
    %8134 = vst.msk [vmem:[#allocation3 + $0x68] sm:$0xff] %vm3190, %v8093
    %8135 = vst.msk [vmem:[#allocation3 + $0x78] sm:$0xff] %vm3190, %v8095
    %8136 = vst.msk [vmem:[#allocation3 + $0x88] sm:$0xff] %vm3190, %v8097
    %8137 = vst.msk [vmem:[#allocation3 + $0x98] sm:$0xff] %vm3190, %v8099
    %8138 = vst.msk [vmem:[#allocation3 + $0xa8] sm:$0xff] %vm3190, %v8101
    %8139 = vst.msk [vmem:[#allocation3 + $0xb8] sm:$0xff] %vm3190, %v8103
    %8140 = vst.msk [vmem:[#allocation3 + $0xc8] sm:$0xff] %vm3190, %v8105
    %8141 = vst.msk [vmem:[#allocation3 + $0xd8] sm:$0xff] %vm3190, %v8107
    %8142 = vst.msk [vmem:[#allocation3 + $0xe8] sm:$0xff] %vm3190, %v8109
    %8143 = vst.msk [vmem:[#allocation3 + $0xf8] sm:$0xff] %vm3190, %v8111
    %v8144 = vld [vmem:[#allocation3] sm:$0xff]
    %v8145 = vld [vmem:[#allocation3 + $0x8] sm:$0xff]
    %v8146 = vld [vmem:[#allocation3 + $0x10] sm:$0xff]
    %v8147 = vld [vmem:[#allocation3 + $0x18] sm:$0xff]
    %v8148 = vld [vmem:[#allocation3 + $0x20] sm:$0xff]
    %v8149 = vld [vmem:[#allocation3 + $0x28] sm:$0xff]
    %v8150 = vld [vmem:[#allocation3 + $0x30] sm:$0xff]
    %v8151 = vld [vmem:[#allocation3 + $0x38] sm:$0xff]
    %v8152 = vld [vmem:[#allocation3 + $0x40] sm:$0xff]
    %v8153 = vld [vmem:[#allocation3 + $0x48] sm:$0xff]
    %v8154 = vld [vmem:[#allocation3 + $0x50] sm:$0xff]
    %v8155 = vld [vmem:[#allocation3 + $0x58] sm:$0xff]
    %v8156 = vld [vmem:[#allocation3 + $0x60] sm:$0xff]
    %v8157 = vld [vmem:[#allocation3 + $0x68] sm:$0xff]
    %v8158 = vld [vmem:[#allocation3 + $0x70] sm:$0xff]
    %v8159 = vld [vmem:[#allocation3 + $0x78] sm:$0xff]
    %v8160 = vld [vmem:[#allocation3 + $0x80] sm:$0xff]
    %v8161 = vld [vmem:[#allocation3 + $0x88] sm:$0xff]
    %v8162 = vld [vmem:[#allocation3 + $0x90] sm:$0xff]
    %v8163 = vld [vmem:[#allocation3 + $0x98] sm:$0xff]
    %v8164 = vld [vmem:[#allocation3 + $0xa0] sm:$0xff]
    %v8165 = vld [vmem:[#allocation3 + $0xa8] sm:$0xff]
    %v8166 = vld [vmem:[#allocation3 + $0xb0] sm:$0xff]
    %v8167 = vld [vmem:[#allocation3 + $0xb8] sm:$0xff]
    %v8168 = vld [vmem:[#allocation3 + $0xc0] sm:$0xff]
    %v8169 = vld [vmem:[#allocation3 + $0xc8] sm:$0xff]
    %v8170 = vld [vmem:[#allocation3 + $0xd0] sm:$0xff]
    %v8171 = vld [vmem:[#allocation3 + $0xd8] sm:$0xff]
    %v8172 = vld [vmem:[#allocation3 + $0xe0] sm:$0xff]
    %v8173 = vld [vmem:[#allocation3 + $0xe8] sm:$0xff]
    %v8174 = vld [vmem:[#allocation3 + $0xf0] sm:$0xff]
    %v8175 = vld [vmem:[#allocation3 + $0xf8] sm:$0xff]
    %s8176 = scalar_lea.vmem %s6, 464
    %v8177 = vld [vmem:[%s8176] sm:$0xff]
    %v8178 = vld [vmem:[%s8176 + $0x8] sm:$0xff]
    %v8179 = vld [vmem:[%s8176 + $0x10] sm:$0xff]
    %v8180 = vld [vmem:[%s8176 + $0x18] sm:$0xff]
    %v8181 = vld [vmem:[%s8176 + $0x20] sm:$0xff]
    %v8182 = vld [vmem:[%s8176 + $0x28] sm:$0xff]
    %v8183 = vld [vmem:[%s8176 + $0x30] sm:$0xff]
    %v8184 = vld [vmem:[%s8176 + $0x38] sm:$0xff]
    %v8185 = vld [vmem:[%s8176 + $0x40] sm:$0xff]
    %v8186 = vld [vmem:[%s8176 + $0x48] sm:$0xff]
    %v8187 = vld [vmem:[%s8176 + $0x50] sm:$0xff]
    %v8188 = vld [vmem:[%s8176 + $0x58] sm:$0xff]
    %v8189 = vld [vmem:[%s8176 + $0x60] sm:$0xff]
    %v8190 = vld [vmem:[%s8176 + $0x68] sm:$0xff]
    %v8191 = vld [vmem:[%s8176 + $0x70] sm:$0xff]
    %v8192 = vld [vmem:[%s8176 + $0x78] sm:$0xff]
    %v8193 = vld [vmem:[%s8176 + $0x80] sm:$0xff]
    %v8194 = vld [vmem:[%s8176 + $0x88] sm:$0xff]
    %v8195 = vld [vmem:[%s8176 + $0x90] sm:$0xff]
    %v8196 = vld [vmem:[%s8176 + $0x98] sm:$0xff]
    %v8197 = vld [vmem:[%s8176 + $0xa0] sm:$0xff]
    %v8198 = vld [vmem:[%s8176 + $0xa8] sm:$0xff]
    %v8199 = vld [vmem:[%s8176 + $0xb0] sm:$0xff]
    %v8200 = vld [vmem:[%s8176 + $0xb8] sm:$0xff]
    %v8201 = vld [vmem:[%s8176 + $0xc0] sm:$0xff]
    %v8202 = vld [vmem:[%s8176 + $0xc8] sm:$0xff]
    %v8203 = vld [vmem:[%s8176 + $0xd0] sm:$0xff]
    %v8204 = vld [vmem:[%s8176 + $0xd8] sm:$0xff]
    %v8205 = vld [vmem:[%s8176 + $0xe0] sm:$0x3f]
    %s8206 = sld [smem:[#allocation8 + $0x2]]
    %v8207 = vstv %s8206
    %v8209 = vsel %vm3270, %v8145, 0
    %v8212 = vsel %vm3270, %v8147, 0
    %v8215 = vsel %vm3270, %v8149, 0
    %v8218 = vsel %vm3270, %v8151, 0
    %v8221 = vsel %vm3270, %v8153, 0
    %v8224 = vsel %vm3270, %v8155, 0
    %v8227 = vsel %vm3270, %v8157, 0
    %v8230 = vsel %vm3270, %v8159, 0
    %v8233 = vsel %vm3270, %v8161, 0
    %v8236 = vsel %vm3270, %v8163, 0
    %v8239 = vsel %vm3270, %v8165, 0
    %v8242 = vsel %vm3270, %v8167, 0
    %v8245 = vsel %vm3270, %v8169, 0
    %v8248 = vsel %vm3270, %v8171, 0
    %v8251 = vsel %vm3270, %v8173, 0
    %v8254 = vsel %vm3270, %v8175, 0
    %v8257 = vsel %vm3319, %v8205, 0
    %8259 = vmatprep.subr.mxu0 0.0
    %8260 = vmatpush1.msra.mxu0 %v8192
    %8261 = vmatprep.subr.mxu0 0.0
    %8262 = vmatpush1.msra.mxu0 %v8191
    %8263 = vmatprep.subr.mxu0 0.0
    %8264 = vmatpush1.msra.mxu0 %v8190
    %8265 = vmatprep.subr.mxu0 0.0
    %8266 = vmatpush1.msra.mxu0 %v8189
    %8267 = vmatprep.subr.mxu0 0.0
    %8268 = vmatpush1.msra.mxu0 %v8188
    %8269 = vmatprep.subr.mxu0 0.0
    %8270 = vmatpush1.msra.mxu0 %v8187
    %8271 = vmatprep.subr.mxu0 0.0
    %8272 = vmatpush1.msra.mxu0 %v8186
    %8273 = vmatprep.subr.mxu0 0.0
    %8274 = vmatpush1.msra.mxu0 %v8185
    %8275 = vmatprep.subr.mxu0 0.0
    %8276 = vmatpush1.msra.mxu0 %v8184
    %8277 = vmatprep.subr.mxu0 0.0
    %8278 = vmatpush1.msra.mxu0 %v8183
    %8279 = vmatprep.subr.mxu0 0.0
    %8280 = vmatpush1.msra.mxu0 %v8182
    %8281 = vmatprep.subr.mxu0 0.0
    %8282 = vmatpush1.msra.mxu0 %v8181
    %8283 = vmatprep.subr.mxu0 0.0
    %8284 = vmatpush1.msra.mxu0 %v8180
    %8285 = vmatprep.subr.mxu0 0.0
    %8286 = vmatpush1.msra.mxu0 %v8179
    %8287 = vmatprep.subr.mxu0 0.0
    %8288 = vmatpush1.msra.mxu0 %v8178
    %8289 = vmatprep.subr.mxu0 0.0
    %8290 = vmatpush1.msra.mxu0 %v8177
    %8291 = vmatprep.subr.mxu0 0.0
    %8292 = vmatpush2.msra.mxu0 0.0
    %8293 = vmatprep.subr.mxu0 0.0
    %8294 = vmatpush2.msra.mxu0 0.0
    %8295 = vmatprep.subr.mxu0 0.0
    %8296 = vmatpush2.msra.mxu0 0.0
    %8297 = vmatprep.subr.mxu0 0.0
    %8298 = vmatpush2.msra.mxu0 %v8257
    %8299 = vmatprep.subr.mxu0 0.0
    %8300 = vmatpush2.msra.mxu0 %v8204
    %8301 = vmatprep.subr.mxu0 0.0
    %8302 = vmatpush2.msra.mxu0 %v8203
    %8303 = vmatprep.subr.mxu0 0.0
    %8304 = vmatpush2.msra.mxu0 %v8202
    %8305 = vmatprep.subr.mxu0 0.0
    %8306 = vmatpush2.msra.mxu0 %v8201
    %8307 = vmatprep.subr.mxu0 0.0
    %8308 = vmatpush2.msra.mxu0 %v8200
    %8309 = vmatprep.subr.mxu0 0.0
    %8310 = vmatpush2.msra.mxu0 %v8199
    %8311 = vmatprep.subr.mxu0 0.0
    %8312 = vmatpush2.msra.mxu0 %v8198
    %8313 = vmatprep.subr.mxu0 0.0
    %8314 = vmatpush2.msra.mxu0 %v8197
    %8315 = vmatprep.subr.mxu0 0.0
    %8316 = vmatpush2.msra.mxu0 %v8196
    %8317 = vmatprep.subr.mxu0 0.0
    %8318 = vmatpush2.msra.mxu0 %v8195
    %8319 = vmatprep.subr.mxu0 0.0
    %8320 = vmatpush2.msra.mxu0 %v8194
    %8321 = vmatprep.subr.mxu0 0.0
    %8322 = vmatpush2.msra.mxu0 %v8193
    %8323 = vmatprep.mubr.f32.mxu0 %v8209
    %8324 = vmatmul.mubr.f32.gmra.mxu0 %v8144
    %v8325 = vpop.f32.mrf.mxu0
    %v8326 = vadd.f32 %v8207, %v8325
    %v8327 = vpop.f32.mrf.mxu0
    %8328 = vmatprep.mubr.f32.mxu0 %v8212
    %8329 = vmatmul.mubr.f32.gmra.mxu0 %v8146
    %v8330 = vpop.f32.mrf.mxu0
    %v8331 = vadd.f32 %v8207, %v8330
    %v8332 = vpop.f32.mrf.mxu0
    %8333 = vmatprep.mubr.f32.mxu0 %v8215
    %8334 = vmatmul.mubr.f32.gmra.mxu0 %v8148
    %v8335 = vpop.f32.mrf.mxu0
    %v8336 = vadd.f32 %v8207, %v8335
    %v8337 = vpop.f32.mrf.mxu0
    %8338 = vmatprep.mubr.f32.mxu0 %v8218
    %8339 = vmatmul.mubr.f32.gmra.mxu0 %v8150
    %v8340 = vpop.f32.mrf.mxu0
    %v8341 = vadd.f32 %v8207, %v8340
    %v8342 = vpop.f32.mrf.mxu0
    %8343 = vmatprep.mubr.f32.mxu0 %v8221
    %8344 = vmatmul.mubr.f32.gmra.mxu0 %v8152
    %v8345 = vpop.f32.mrf.mxu0
    %v8346 = vadd.f32 %v8207, %v8345
    %v8347 = vpop.f32.mrf.mxu0
    %8348 = vmatprep.mubr.f32.mxu0 %v8224
    %8349 = vmatmul.mubr.f32.gmra.mxu0 %v8154
    %v8350 = vpop.f32.mrf.mxu0
    %v8351 = vadd.f32 %v8207, %v8350
    %v8352 = vpop.f32.mrf.mxu0
    %8353 = vmatprep.mubr.f32.mxu0 %v8227
    %8354 = vmatmul.mubr.f32.gmra.mxu0 %v8156
    %v8355 = vpop.f32.mrf.mxu0
    %v8356 = vadd.f32 %v8207, %v8355
    %v8357 = vpop.f32.mrf.mxu0
    %8358 = vmatprep.mubr.f32.mxu0 %v8230
    %8359 = vmatmul.mubr.f32.gmra.mxu0 %v8158
    %v8360 = vpop.f32.mrf.mxu0
    %v8361 = vadd.f32 %v8207, %v8360
    %v8362 = vpop.f32.mrf.mxu0
    %8363 = vmatprep.mubr.f32.mxu0 %v8233
    %8364 = vmatmul.mubr.f32.gmra.mxu0 %v8160
    %v8365 = vpop.f32.mrf.mxu0
    %v8366 = vadd.f32 %v8207, %v8365
    %v8367 = vpop.f32.mrf.mxu0
    %8368 = vmatprep.mubr.f32.mxu0 %v8236
    %8369 = vmatmul.mubr.f32.gmra.mxu0 %v8162
    %v8370 = vpop.f32.mrf.mxu0
    %v8371 = vadd.f32 %v8207, %v8370
    %v8372 = vpop.f32.mrf.mxu0
    %8373 = vmatprep.mubr.f32.mxu0 %v8239
    %8374 = vmatmul.mubr.f32.gmra.mxu0 %v8164
    %v8375 = vpop.f32.mrf.mxu0
    %v8376 = vadd.f32 %v8207, %v8375
    %v8377 = vpop.f32.mrf.mxu0
    %8378 = vmatprep.mubr.f32.mxu0 %v8242
    %8379 = vmatmul.mubr.f32.gmra.mxu0 %v8166
    %v8380 = vpop.f32.mrf.mxu0
    %v8381 = vadd.f32 %v8207, %v8380
    %v8382 = vpop.f32.mrf.mxu0
    %8383 = vmatprep.mubr.f32.mxu0 %v8245
    %8384 = vmatmul.mubr.f32.gmra.mxu0 %v8168
    %v8385 = vpop.f32.mrf.mxu0
    %v8386 = vadd.f32 %v8207, %v8385
    %v8387 = vpop.f32.mrf.mxu0
    %8388 = vmatprep.mubr.f32.mxu0 %v8248
    %8389 = vmatmul.mubr.f32.gmra.mxu0 %v8170
    %v8390 = vpop.f32.mrf.mxu0
    %v8391 = vadd.f32 %v8207, %v8390
    %v8392 = vpop.f32.mrf.mxu0
    %8393 = vmatprep.mubr.f32.mxu0 %v8251
    %8394 = vmatmul.mubr.f32.gmra.mxu0 %v8172
    %v8395 = vpop.f32.mrf.mxu0
    %v8396 = vadd.f32 %v8207, %v8395
    %v8397 = vpop.f32.mrf.mxu0
    %8398 = vmatprep.mubr.f32.mxu0 %v8254
    %8399 = vmatmul.mubr.f32.gmra.mxu0 %v8174
    %v8400 = vpop.f32.mrf.mxu0
    %v8401 = vadd.f32 %v8207, %v8400
    %v8402 = vpop.f32.mrf.mxu0
    %8403 = vdwg.mxu0
    %v8404 = vmax.f32 %v8326, 0.0
    %v8405 = vmax.f32 %v8331, 0.0
    %v8406 = vmax.f32 %v8336, 0.0
    %v8407 = vmax.f32 %v8341, 0.0
    %v8408 = vmax.f32 %v8346, 0.0
    %v8409 = vmax.f32 %v8351, 0.0
    %v8410 = vmax.f32 %v8356, 0.0
    %v8411 = vmax.f32 %v8361, 0.0
    %v8412 = vmax.f32 %v8366, 0.0
    %v8413 = vmax.f32 %v8371, 0.0
    %v8414 = vmax.f32 %v8376, 0.0
    %v8415 = vmax.f32 %v8381, 0.0
    %v8416 = vmax.f32 %v8386, 0.0
    %v8417 = vmax.f32 %v8391, 0.0
    %v8418 = vmax.f32 %v8396, 0.0
    %v8419 = vmax.f32 %v8401, 0.0
    %v8420 = vsel %vm956, %v8404, 0.0
    %v8421 = vsel %vm957, %v8405, 0.0
    %v8422 = vsel %vm958, %v8406, 0.0
    %v8423 = vsel %vm959, %v8407, 0.0
    %v8424 = vsel %vm960, %v8408, 0.0
    %v8425 = vsel %vm961, %v8409, 0.0
    %v8426 = vsel %vm962, %v8410, 0.0
    %v8427 = vsel %vm963, %v8411, 0.0
    %v8428 = vsel %vm964, %v8412, 0.0
    %v8429 = vsel %vm965, %v8413, 0.0
    %v8430 = vsel %vm966, %v8414, 0.0
    %v8431 = vsel %vm967, %v8415, 0.0
    %v8432 = vsel %vm968, %v8416, 0.0
    %v8433 = vsel %vm969, %v8417, 0.0
    %v8434 = vsel %vm970, %v8418, 0.0
    %v8435 = vsel %vm971, %v8419, 0.0
    %v8437 = vsel %vm130, %v946, 0
    %v8440 = vsel %vm155, %v69, 0
    %8442 = vmatprep.subr.mxu0 0.0
    %8443 = vmatpush1.msra.mxu0 0.0
    %8444 = vmatprep.subr.mxu0 0.0
    %8445 = vmatpush1.msra.mxu0 0.0
    %8446 = vmatprep.subr.mxu0 0.0
    %8447 = vmatpush1.msra.mxu0 0.0
    %8448 = vmatprep.subr.mxu0 0.0
    %8449 = vmatpush1.msra.mxu0 0.0
    %8450 = vmatprep.subr.mxu0 0.0
    %8451 = vmatpush1.msra.mxu0 0.0
    %8452 = vmatprep.subr.mxu0 0.0
    %8453 = vmatpush1.msra.mxu0 0.0
    %8454 = vmatprep.subr.mxu0 0.0
    %8455 = vmatpush1.msra.mxu0 0.0
    %8456 = vmatprep.subr.mxu0 0.0
    %8457 = vmatpush1.msra.mxu0 0.0
    %8458 = vmatprep.subr.mxu0 0.0
    %8459 = vmatpush1.msra.mxu0 0.0
    %8460 = vmatprep.subr.mxu0 0.0
    %8461 = vmatpush1.msra.mxu0 0.0
    %8462 = vmatprep.subr.mxu0 0.0
    %8463 = vmatpush1.msra.mxu0 0.0
    %8464 = vmatprep.subr.mxu0 0.0
    %8465 = vmatpush1.msra.mxu0 0.0
    %8466 = vmatprep.subr.mxu0 0.0
    %8467 = vmatpush1.msra.mxu0 0.0
    %8468 = vmatprep.subr.mxu0 0.0
    %8469 = vmatpush1.msra.mxu0 0.0
    %8470 = vmatprep.subr.mxu0 0.0
    %8471 = vmatpush1.msra.mxu0 %v8440
    %8472 = vmatprep.subr.mxu0 0.0
    %8473 = vmatpush1.msra.mxu0 %v68
    %8474 = vmatprep.subr.mxu0 0.0
    %8475 = vmatpush2.msra.mxu0 0.0
    %8476 = vmatprep.subr.mxu0 0.0
    %8477 = vmatpush2.msra.mxu0 0.0
    %8478 = vmatprep.subr.mxu0 0.0
    %8479 = vmatpush2.msra.mxu0 0.0
    %8480 = vmatprep.subr.mxu0 0.0
    %8481 = vmatpush2.msra.mxu0 0.0
    %8482 = vmatprep.subr.mxu0 0.0
    %8483 = vmatpush2.msra.mxu0 0.0
    %8484 = vmatprep.subr.mxu0 0.0
    %8485 = vmatpush2.msra.mxu0 0.0
    %8486 = vmatprep.subr.mxu0 0.0
    %8487 = vmatpush2.msra.mxu0 0.0
    %8488 = vmatprep.subr.mxu0 0.0
    %8489 = vmatpush2.msra.mxu0 0.0
    %8490 = vmatprep.subr.mxu0 0.0
    %8491 = vmatpush2.msra.mxu0 0.0
    %8492 = vmatprep.subr.mxu0 0.0
    %8493 = vmatpush2.msra.mxu0 0.0
    %8494 = vmatprep.subr.mxu0 0.0
    %8495 = vmatpush2.msra.mxu0 0.0
    %8496 = vmatprep.subr.mxu0 0.0
    %8497 = vmatpush2.msra.mxu0 0.0
    %8498 = vmatprep.subr.mxu0 0.0
    %8499 = vmatpush2.msra.mxu0 0.0
    %8500 = vmatprep.subr.mxu0 0.0
    %8501 = vmatpush2.msra.mxu0 0.0
    %8502 = vmatprep.subr.mxu0 0.0
    %8503 = vmatpush2.msra.mxu0 0.0
    %8504 = vmatprep.subr.mxu0 0.0
    %8505 = vmatpush2.msra.mxu0 0.0
    %8506 = vmatprep.mubr.f32.mxu0 0.0
    %8507 = vmatmul.mubr.f32.gmra.mxu0 %v8437
    %v8508 = vpop.f32.mrf.mxu0
    %v8509 = vadd.f32 %v70, %v8508
    %v8510 = vpop.f32.mrf.mxu0
    %8511 = vdwg.mxu0
    %v8512 = vmax.f32 %v8509, 0.0
    %v8513 = vlaneseq
    %v8514 = vshrl.u32 %v8513, 7
    %v8515 = vsub.s32 0, %v8514
    %v8516 = vrot.slane %v70, %v8515
    %v8518 = vsel %vm130, %v8420, 0
    %v8521 = vsel %vm130, %v8421, 0
    %v8524 = vsel %vm130, %v8422, 0
    %v8527 = vsel %vm130, %v8423, 0
    %v8530 = vsel %vm130, %v8424, 0
    %v8533 = vsel %vm130, %v8425, 0
    %v8536 = vsel %vm130, %v8426, 0
    %v8539 = vsel %vm130, %v8427, 0
    %v8542 = vsel %vm130, %v8428, 0
    %v8545 = vsel %vm130, %v8429, 0
    %v8548 = vsel %vm130, %v8430, 0
    %v8551 = vsel %vm130, %v8431, 0
    %v8554 = vsel %vm130, %v8432, 0
    %v8557 = vsel %vm130, %v8433, 0
    %v8560 = vsel %vm130, %v8434, 0
    %v8563 = vsel %vm130, %v8435, 0
    %8565 = vmatprep.subr.mxu0 0.0
    %8566 = vmatpush1.msra.mxu0 0.0
    %8567 = vmatprep.subr.mxu0 0.0
    %8568 = vmatpush1.msra.mxu0 0.0
    %8569 = vmatprep.subr.mxu0 0.0
    %8570 = vmatpush1.msra.mxu0 0.0
    %8571 = vmatprep.subr.mxu0 0.0
    %8572 = vmatpush1.msra.mxu0 0.0
    %8573 = vmatprep.subr.mxu0 0.0
    %8574 = vmatpush1.msra.mxu0 0.0
    %8575 = vmatprep.subr.mxu0 0.0
    %8576 = vmatpush1.msra.mxu0 0.0
    %8577 = vmatprep.subr.mxu0 0.0
    %8578 = vmatpush1.msra.mxu0 0.0
    %8579 = vmatprep.subr.mxu0 0.0
    %8580 = vmatpush1.msra.mxu0 0.0
    %8581 = vmatprep.subr.mxu0 0.0
    %8582 = vmatpush1.msra.mxu0 0.0
    %8583 = vmatprep.subr.mxu0 0.0
    %8584 = vmatpush1.msra.mxu0 0.0
    %8585 = vmatprep.subr.mxu0 0.0
    %8586 = vmatpush1.msra.mxu0 0.0
    %8587 = vmatprep.subr.mxu0 0.0
    %8588 = vmatpush1.msra.mxu0 0.0
    %8589 = vmatprep.subr.mxu0 0.0
    %8590 = vmatpush1.msra.mxu0 0.0
    %8591 = vmatprep.subr.mxu0 0.0
    %8592 = vmatpush1.msra.mxu0 0.0
    %8593 = vmatprep.subr.mxu0 0.0
    %8594 = vmatpush1.msra.mxu0 %v8440
    %8595 = vmatprep.subr.mxu0 0.0
    %8596 = vmatpush1.msra.mxu0 %v68
    %8597 = vmatprep.subr.mxu0 0.0
    %8598 = vmatpush2.msra.mxu0 0.0
    %8599 = vmatprep.subr.mxu0 0.0
    %8600 = vmatpush2.msra.mxu0 0.0
    %8601 = vmatprep.subr.mxu0 0.0
    %8602 = vmatpush2.msra.mxu0 0.0
    %8603 = vmatprep.subr.mxu0 0.0
    %8604 = vmatpush2.msra.mxu0 0.0
    %8605 = vmatprep.subr.mxu0 0.0
    %8606 = vmatpush2.msra.mxu0 0.0
    %8607 = vmatprep.subr.mxu0 0.0
    %8608 = vmatpush2.msra.mxu0 0.0
    %8609 = vmatprep.subr.mxu0 0.0
    %8610 = vmatpush2.msra.mxu0 0.0
    %8611 = vmatprep.subr.mxu0 0.0
    %8612 = vmatpush2.msra.mxu0 0.0
    %8613 = vmatprep.subr.mxu0 0.0
    %8614 = vmatpush2.msra.mxu0 0.0
    %8615 = vmatprep.subr.mxu0 0.0
    %8616 = vmatpush2.msra.mxu0 0.0
    %8617 = vmatprep.subr.mxu0 0.0
    %8618 = vmatpush2.msra.mxu0 0.0
    %8619 = vmatprep.subr.mxu0 0.0
    %8620 = vmatpush2.msra.mxu0 0.0
    %8621 = vmatprep.subr.mxu0 0.0
    %8622 = vmatpush2.msra.mxu0 0.0
    %8623 = vmatprep.subr.mxu0 0.0
    %8624 = vmatpush2.msra.mxu0 0.0
    %8625 = vmatprep.subr.mxu0 0.0
    %8626 = vmatpush2.msra.mxu0 0.0
    %8627 = vmatprep.subr.mxu0 0.0
    %8628 = vmatpush2.msra.mxu0 0.0
    %8629 = vmatprep.mubr.f32.mxu0 0.0
    %8630 = vmatmul.mubr.f32.gmra.mxu0 %v8518
    %v8631 = vpop.f32.mrf.mxu0
    %v8632 = vadd.f32 %v8516, %v8631
    %v8633 = vpop.f32.mrf.mxu0
    %8634 = vmatprep.mubr.f32.mxu0 0.0
    %8635 = vmatmul.mubr.f32.gmra.mxu0 %v8521
    %v8636 = vpop.f32.mrf.mxu0
    %v8637 = vadd.f32 %v8516, %v8636
    %v8638 = vpop.f32.mrf.mxu0
    %8639 = vmatprep.mubr.f32.mxu0 0.0
    %8640 = vmatmul.mubr.f32.gmra.mxu0 %v8524
    %v8641 = vpop.f32.mrf.mxu0
    %v8642 = vadd.f32 %v8516, %v8641
    %v8643 = vpop.f32.mrf.mxu0
    %8644 = vmatprep.mubr.f32.mxu0 0.0
    %8645 = vmatmul.mubr.f32.gmra.mxu0 %v8527
    %v8646 = vpop.f32.mrf.mxu0
    %v8647 = vadd.f32 %v8516, %v8646
    %v8648 = vpop.f32.mrf.mxu0
    %8649 = vmatprep.mubr.f32.mxu0 0.0
    %8650 = vmatmul.mubr.f32.gmra.mxu0 %v8530
    %v8651 = vpop.f32.mrf.mxu0
    %v8652 = vadd.f32 %v8516, %v8651
    %v8653 = vpop.f32.mrf.mxu0
    %8654 = vmatprep.mubr.f32.mxu0 0.0
    %8655 = vmatmul.mubr.f32.gmra.mxu0 %v8533
    %v8656 = vpop.f32.mrf.mxu0
    %v8657 = vadd.f32 %v8516, %v8656
    %v8658 = vpop.f32.mrf.mxu0
    %8659 = vmatprep.mubr.f32.mxu0 0.0
    %8660 = vmatmul.mubr.f32.gmra.mxu0 %v8536
    %v8661 = vpop.f32.mrf.mxu0
    %v8662 = vadd.f32 %v8516, %v8661
    %v8663 = vpop.f32.mrf.mxu0
    %8664 = vmatprep.mubr.f32.mxu0 0.0
    %8665 = vmatmul.mubr.f32.gmra.mxu0 %v8539
    %v8666 = vpop.f32.mrf.mxu0
    %v8667 = vadd.f32 %v8516, %v8666
    %v8668 = vpop.f32.mrf.mxu0
    %8669 = vmatprep.mubr.f32.mxu0 0.0
    %8670 = vmatmul.mubr.f32.gmra.mxu0 %v8542
    %v8671 = vpop.f32.mrf.mxu0
    %v8672 = vadd.f32 %v8516, %v8671
    %v8673 = vpop.f32.mrf.mxu0
    %8674 = vmatprep.mubr.f32.mxu0 0.0
    %8675 = vmatmul.mubr.f32.gmra.mxu0 %v8545
    %v8676 = vpop.f32.mrf.mxu0
    %v8677 = vadd.f32 %v8516, %v8676
    %v8678 = vpop.f32.mrf.mxu0
    %8679 = vmatprep.mubr.f32.mxu0 0.0
    %8680 = vmatmul.mubr.f32.gmra.mxu0 %v8548
    %v8681 = vpop.f32.mrf.mxu0
    %v8682 = vadd.f32 %v8516, %v8681
    %v8683 = vpop.f32.mrf.mxu0
    %8684 = vmatprep.mubr.f32.mxu0 0.0
    %8685 = vmatmul.mubr.f32.gmra.mxu0 %v8551
    %v8686 = vpop.f32.mrf.mxu0
    %v8687 = vadd.f32 %v8516, %v8686
    %v8688 = vpop.f32.mrf.mxu0
    %8689 = vmatprep.mubr.f32.mxu0 0.0
    %8690 = vmatmul.mubr.f32.gmra.mxu0 %v8554
    %v8691 = vpop.f32.mrf.mxu0
    %v8692 = vadd.f32 %v8516, %v8691
    %v8693 = vpop.f32.mrf.mxu0
    %8694 = vmatprep.mubr.f32.mxu0 0.0
    %8695 = vmatmul.mubr.f32.gmra.mxu0 %v8557
    %v8696 = vpop.f32.mrf.mxu0
    %v8697 = vadd.f32 %v8516, %v8696
    %v8698 = vpop.f32.mrf.mxu0
    %8699 = vmatprep.mubr.f32.mxu0 0.0
    %8700 = vmatmul.mubr.f32.gmra.mxu0 %v8560
    %v8701 = vpop.f32.mrf.mxu0
    %v8702 = vadd.f32 %v8516, %v8701
    %v8703 = vpop.f32.mrf.mxu0
    %8704 = vmatprep.mubr.f32.mxu0 0.0
    %8705 = vmatmul.mubr.f32.gmra.mxu0 %v8563
    %v8706 = vpop.f32.mrf.mxu0
    %v8707 = vadd.f32 %v8516, %v8706
    %v8708 = vpop.f32.mrf.mxu0
    %8709 = vdwg.mxu0
    %v8710 = vmax.f32 %v8632, 0.0
    %v8711 = vmax.f32 %v8637, 0.0
    %v8712 = vmax.f32 %v8642, 0.0
    %v8713 = vmax.f32 %v8647, 0.0
    %v8714 = vmax.f32 %v8652, 0.0
    %v8715 = vmax.f32 %v8657, 0.0
    %v8716 = vmax.f32 %v8662, 0.0
    %v8717 = vmax.f32 %v8667, 0.0
    %v8718 = vmax.f32 %v8672, 0.0
    %v8719 = vmax.f32 %v8677, 0.0
    %v8720 = vmax.f32 %v8682, 0.0
    %v8721 = vmax.f32 %v8687, 0.0
    %v8722 = vmax.f32 %v8692, 0.0
    %v8723 = vmax.f32 %v8697, 0.0
    %v8724 = vmax.f32 %v8702, 0.0
    %v8725 = vmax.f32 %v8707, 0.0
    %v8726 = vsel %vm956, %v8710, 0.0
    %v8727 = vsel %vm957, %v8711, 0.0
    %v8728 = vsel %vm958, %v8712, 0.0
    %v8729 = vsel %vm959, %v8713, 0.0
    %v8730 = vsel %vm960, %v8714, 0.0
    %v8731 = vsel %vm961, %v8715, 0.0
    %v8732 = vsel %vm962, %v8716, 0.0
    %v8733 = vsel %vm963, %v8717, 0.0
    %v8734 = vsel %vm964, %v8718, 0.0
    %v8735 = vsel %vm965, %v8719, 0.0
    %v8736 = vsel %vm966, %v8720, 0.0
    %v8737 = vsel %vm967, %v8721, 0.0
    %v8738 = vsel %vm968, %v8722, 0.0
    %v8739 = vsel %vm969, %v8723, 0.0
    %v8740 = vsel %vm970, %v8724, 0.0
    %v8741 = vsel %vm971, %v8725, 0.0
    %v8743 = vsel %vm130, %v8512, 0
    %v8746 = vsel %vm130, %v8726, 0
    %v8749 = vsel %vm130, %v8727, 0
    %v8752 = vsel %vm130, %v8728, 0
    %v8755 = vsel %vm130, %v8729, 0
    %v8758 = vsel %vm130, %v8730, 0
    %v8761 = vsel %vm130, %v8731, 0
    %v8764 = vsel %vm130, %v8732, 0
    %v8767 = vsel %vm130, %v8733, 0
    %v8770 = vsel %vm130, %v8734, 0
    %v8773 = vsel %vm130, %v8735, 0
    %v8776 = vsel %vm130, %v8736, 0
    %v8779 = vsel %vm130, %v8737, 0
    %v8782 = vsel %vm130, %v8738, 0
    %v8785 = vsel %vm130, %v8739, 0
    %v8788 = vsel %vm130, %v8740, 0
    %v8791 = vsel %vm130, %v8741, 0
    %8793 = vmatprep.subr.mxu0 0.0
    %8794 = vmatpush1.xpose.msra.mxu0 %v8791
    %8795 = vmatprep.subr.mxu0 0.0
    %8796 = vmatpush1.xpose.msra.mxu0 %v8788
    %8797 = vmatprep.subr.mxu0 0.0
    %8798 = vmatpush1.xpose.msra.mxu0 %v8785
    %8799 = vmatprep.subr.mxu0 0.0
    %8800 = vmatpush1.xpose.msra.mxu0 %v8782
    %8801 = vmatprep.subr.mxu0 0.0
    %8802 = vmatpush1.xpose.msra.mxu0 %v8779
    %8803 = vmatprep.subr.mxu0 0.0
    %8804 = vmatpush1.xpose.msra.mxu0 %v8776
    %8805 = vmatprep.subr.mxu0 0.0
    %8806 = vmatpush1.xpose.msra.mxu0 %v8773
    %8807 = vmatprep.subr.mxu0 0.0
    %8808 = vmatpush1.xpose.msra.mxu0 %v8770
    %8809 = vmatprep.subr.mxu0 0.0
    %8810 = vmatpush1.xpose.msra.mxu0 %v8767
    %8811 = vmatprep.subr.mxu0 0.0
    %8812 = vmatpush1.xpose.msra.mxu0 %v8764
    %8813 = vmatprep.subr.mxu0 0.0
    %8814 = vmatpush1.xpose.msra.mxu0 %v8761
    %8815 = vmatprep.subr.mxu0 0.0
    %8816 = vmatpush1.xpose.msra.mxu0 %v8758
    %8817 = vmatprep.subr.mxu0 0.0
    %8818 = vmatpush1.xpose.msra.mxu0 %v8755
    %8819 = vmatprep.subr.mxu0 0.0
    %8820 = vmatpush1.xpose.msra.mxu0 %v8752
    %8821 = vmatprep.subr.mxu0 0.0
    %8822 = vmatpush1.xpose.msra.mxu0 %v8749
    %8823 = vmatprep.subr.mxu0 0.0
    %8824 = vmatpush1.xpose.msra.mxu0 %v8746
    %8825 = vmatprep.subr.mxu0 0.0
    %8826 = vmatpush2.xpose.msra.mxu0 0.0
    %8827 = vmatprep.subr.mxu0 0.0
    %8828 = vmatpush2.xpose.msra.mxu0 0.0
    %8829 = vmatprep.subr.mxu0 0.0
    %8830 = vmatpush2.xpose.msra.mxu0 0.0
    %8831 = vmatprep.subr.mxu0 0.0
    %8832 = vmatpush2.xpose.msra.mxu0 0.0
    %8833 = vmatprep.subr.mxu0 0.0
    %8834 = vmatpush2.xpose.msra.mxu0 0.0
    %8835 = vmatprep.subr.mxu0 0.0
    %8836 = vmatpush2.xpose.msra.mxu0 0.0
    %8837 = vmatprep.subr.mxu0 0.0
    %8838 = vmatpush2.xpose.msra.mxu0 0.0
    %8839 = vmatprep.subr.mxu0 0.0
    %8840 = vmatpush2.xpose.msra.mxu0 0.0
    %8841 = vmatprep.subr.mxu0 0.0
    %8842 = vmatpush2.xpose.msra.mxu0 0.0
    %8843 = vmatprep.subr.mxu0 0.0
    %8844 = vmatpush2.xpose.msra.mxu0 0.0
    %8845 = vmatprep.subr.mxu0 0.0
    %8846 = vmatpush2.xpose.msra.mxu0 0.0
    %8847 = vmatprep.subr.mxu0 0.0
    %8848 = vmatpush2.xpose.msra.mxu0 0.0
    %8849 = vmatprep.subr.mxu0 0.0
    %8850 = vmatpush2.xpose.msra.mxu0 0.0
    %8851 = vmatprep.subr.mxu0 0.0
    %8852 = vmatpush2.xpose.msra.mxu0 0.0
    %8853 = vmatprep.subr.mxu0 0.0
    %8854 = vmatpush2.xpose.msra.mxu0 0.0
    %8855 = vmatprep.subr.mxu0 0.0
    %8856 = vmatpush2.xpose.msra.mxu0 0.0
    %8857 = vmatprep.mubr.f32.mxu0 0.0
    %8858 = vmatmul.mubr.f32.gmra.mxu0 %v8743
    %v8859 = vpop.f32.mrf.mxu0
    %v8860 = vadd.f32 0.0, %v8859
    %v8861 = vpop.f32.mrf.mxu0
    %8862 = vdwg.mxu0
    %v8863 = vtanh.pop %v8860
    %8864 = vmatprep.subr.mxu0 0.0
    %8865 = vmatpush1.msra.mxu0 %v8741
    %8866 = vmatprep.subr.mxu0 0.0
    %8867 = vmatpush1.msra.mxu0 %v8740
    %8868 = vmatprep.subr.mxu0 0.0
    %8869 = vmatpush1.msra.mxu0 %v8739
    %8870 = vmatprep.subr.mxu0 0.0
    %8871 = vmatpush1.msra.mxu0 %v8738
    %8872 = vmatprep.subr.mxu0 0.0
    %8873 = vmatpush1.msra.mxu0 %v8737
    %8874 = vmatprep.subr.mxu0 0.0
    %8875 = vmatpush1.msra.mxu0 %v8736
    %8876 = vmatprep.subr.mxu0 0.0
    %8877 = vmatpush1.msra.mxu0 %v8735
    %8878 = vmatprep.subr.mxu0 0.0
    %8879 = vmatpush1.msra.mxu0 %v8734
    %8880 = vmatprep.subr.mxu0 0.0
    %8881 = vmatpush1.msra.mxu0 %v8733
    %8882 = vmatprep.subr.mxu0 0.0
    %8883 = vmatpush1.msra.mxu0 %v8732
    %8884 = vmatprep.subr.mxu0 0.0
    %8885 = vmatpush1.msra.mxu0 %v8731
    %8886 = vmatprep.subr.mxu0 0.0
    %8887 = vmatpush1.msra.mxu0 %v8730
    %8888 = vmatprep.subr.mxu0 0.0
    %8889 = vmatpush1.msra.mxu0 %v8729
    %8890 = vmatprep.subr.mxu0 0.0
    %8891 = vmatpush1.msra.mxu0 %v8728
    %8892 = vmatprep.subr.mxu0 0.0
    %8893 = vmatpush1.msra.mxu0 %v8727
    %8894 = vmatprep.subr.mxu0 0.0
    %8895 = vmatpush1.msra.mxu0 %v8726
    %8896 = vmatprep.subr.mxu0 0.0
    %8897 = vmatpush2.msra.mxu0 0.0
    %8898 = vmatprep.subr.mxu0 0.0
    %8899 = vmatpush2.msra.mxu0 0.0
    %8900 = vmatprep.subr.mxu0 0.0
    %8901 = vmatpush2.msra.mxu0 0.0
    %8902 = vmatprep.subr.mxu0 0.0
    %8903 = vmatpush2.msra.mxu0 0.0
    %8904 = vmatprep.subr.mxu0 0.0
    %8905 = vmatpush2.msra.mxu0 0.0
    %8906 = vmatprep.subr.mxu0 0.0
    %8907 = vmatpush2.msra.mxu0 0.0
    %8908 = vmatprep.subr.mxu0 0.0
    %8909 = vmatpush2.msra.mxu0 0.0
    %8910 = vmatprep.subr.mxu0 0.0
    %8911 = vmatpush2.msra.mxu0 0.0
    %8912 = vmatprep.subr.mxu0 0.0
    %8913 = vmatpush2.msra.mxu0 0.0
    %8914 = vmatprep.subr.mxu0 0.0
    %8915 = vmatpush2.msra.mxu0 0.0
    %8916 = vmatprep.subr.mxu0 0.0
    %8917 = vmatpush2.msra.mxu0 0.0
    %8918 = vmatprep.subr.mxu0 0.0
    %8919 = vmatpush2.msra.mxu0 0.0
    %8920 = vmatprep.subr.mxu0 0.0
    %8921 = vmatpush2.msra.mxu0 0.0
    %8922 = vmatprep.subr.mxu0 0.0
    %8923 = vmatpush2.msra.mxu0 0.0
    %8924 = vmatprep.subr.mxu0 0.0
    %8925 = vmatpush2.msra.mxu0 0.0
    %8926 = vmatprep.subr.mxu0 0.0
    %8927 = vmatpush2.msra.mxu0 0.0
    %8928 = vmatprep.mubr.f32.mxu0 0.0
    %8929 = vmatmul.mubr.f32.gmra.mxu0 %v8863
    %v8930 = vpop.f32.mrf.mxu0
    %v8931 = vadd.f32 0.0, %v8930
    %v8932 = vpop.f32.mrf.mxu0
    %8933 = vdwg.mxu0
    %v8936 = vrot.slane %v72, 2
    %v8937 = vrot.slane %v73, 2
    %v8938 = vsel %vm3319, %v8936, %v8937
    %v8941 = vsel %vm130, %v8931, 0
    %v8943 = vsel %vm155, %v8937, 0
    %8945 = vmatprep.subr.mxu0 0.0
    %8946 = vmatpush1.msra.mxu0 0.0
    %8947 = vmatprep.subr.mxu0 0.0
    %8948 = vmatpush1.msra.mxu0 0.0
    %8949 = vmatprep.subr.mxu0 0.0
    %8950 = vmatpush1.msra.mxu0 0.0
    %8951 = vmatprep.subr.mxu0 0.0
    %8952 = vmatpush1.msra.mxu0 0.0
    %8953 = vmatprep.subr.mxu0 0.0
    %8954 = vmatpush1.msra.mxu0 0.0
    %8955 = vmatprep.subr.mxu0 0.0
    %8956 = vmatpush1.msra.mxu0 0.0
    %8957 = vmatprep.subr.mxu0 0.0
    %8958 = vmatpush1.msra.mxu0 0.0
    %8959 = vmatprep.subr.mxu0 0.0
    %8960 = vmatpush1.msra.mxu0 0.0
    %8961 = vmatprep.subr.mxu0 0.0
    %8962 = vmatpush1.msra.mxu0 0.0
    %8963 = vmatprep.subr.mxu0 0.0
    %8964 = vmatpush1.msra.mxu0 0.0
    %8965 = vmatprep.subr.mxu0 0.0
    %8966 = vmatpush1.msra.mxu0 0.0
    %8967 = vmatprep.subr.mxu0 0.0
    %8968 = vmatpush1.msra.mxu0 0.0
    %8969 = vmatprep.subr.mxu0 0.0
    %8970 = vmatpush1.msra.mxu0 0.0
    %8971 = vmatprep.subr.mxu0 0.0
    %8972 = vmatpush1.msra.mxu0 0.0
    %8973 = vmatprep.subr.mxu0 0.0
    %8974 = vmatpush1.msra.mxu0 %v8943
    %8975 = vmatprep.subr.mxu0 0.0
    %8976 = vmatpush1.msra.mxu0 %v8938
    %8977 = vmatprep.subr.mxu0 0.0
    %8978 = vmatpush2.msra.mxu0 0.0
    %8979 = vmatprep.subr.mxu0 0.0
    %8980 = vmatpush2.msra.mxu0 0.0
    %8981 = vmatprep.subr.mxu0 0.0
    %8982 = vmatpush2.msra.mxu0 0.0
    %8983 = vmatprep.subr.mxu0 0.0
    %8984 = vmatpush2.msra.mxu0 0.0
    %8985 = vmatprep.subr.mxu0 0.0
    %8986 = vmatpush2.msra.mxu0 0.0
    %8987 = vmatprep.subr.mxu0 0.0
    %8988 = vmatpush2.msra.mxu0 0.0
    %8989 = vmatprep.subr.mxu0 0.0
    %8990 = vmatpush2.msra.mxu0 0.0
    %8991 = vmatprep.subr.mxu0 0.0
    %8992 = vmatpush2.msra.mxu0 0.0
    %8993 = vmatprep.subr.mxu0 0.0
    %8994 = vmatpush2.msra.mxu0 0.0
    %8995 = vmatprep.subr.mxu0 0.0
    %8996 = vmatpush2.msra.mxu0 0.0
    %8997 = vmatprep.subr.mxu0 0.0
    %8998 = vmatpush2.msra.mxu0 0.0
    %8999 = vmatprep.subr.mxu0 0.0
    %9000 = vmatpush2.msra.mxu0 0.0
    %9001 = vmatprep.subr.mxu0 0.0
    %9002 = vmatpush2.msra.mxu0 0.0
    %9003 = vmatprep.subr.mxu0 0.0
    %9004 = vmatpush2.msra.mxu0 0.0
    %9005 = vmatprep.subr.mxu0 0.0
    %9006 = vmatpush2.msra.mxu0 0.0
    %9007 = vmatprep.subr.mxu0 0.0
    %9008 = vmatpush2.msra.mxu0 0.0
    %9009 = vmatprep.mubr.f32.mxu0 0.0
    %9010 = vmatmul.mubr.f32.gmra.mxu0 %v8941
    %v9011 = vpop.f32.mrf.mxu0
    %v9012 = vadd.f32 0.0, %v9011
    %v9013 = vpop.f32.mrf.mxu0
    %9014 = vdwg.mxu0
    %v9015 = vsel %vm155, %v72, 0
    %9017 = vmatprep.subr.mxu0 0.0
    %9018 = vmatpush1.msra.mxu0 0.0
    %9019 = vmatprep.subr.mxu0 0.0
    %9020 = vmatpush1.msra.mxu0 0.0
    %9021 = vmatprep.subr.mxu0 0.0
    %9022 = vmatpush1.msra.mxu0 0.0
    %9023 = vmatprep.subr.mxu0 0.0
    %9024 = vmatpush1.msra.mxu0 0.0
    %9025 = vmatprep.subr.mxu0 0.0
    %9026 = vmatpush1.msra.mxu0 0.0
    %9027 = vmatprep.subr.mxu0 0.0
    %9028 = vmatpush1.msra.mxu0 0.0
    %9029 = vmatprep.subr.mxu0 0.0
    %9030 = vmatpush1.msra.mxu0 0.0
    %9031 = vmatprep.subr.mxu0 0.0
    %9032 = vmatpush1.msra.mxu0 0.0
    %9033 = vmatprep.subr.mxu0 0.0
    %9034 = vmatpush1.msra.mxu0 0.0
    %9035 = vmatprep.subr.mxu0 0.0
    %9036 = vmatpush1.msra.mxu0 0.0
    %9037 = vmatprep.subr.mxu0 0.0
    %9038 = vmatpush1.msra.mxu0 0.0
    %9039 = vmatprep.subr.mxu0 0.0
    %9040 = vmatpush1.msra.mxu0 0.0
    %9041 = vmatprep.subr.mxu0 0.0
    %9042 = vmatpush1.msra.mxu0 0.0
    %9043 = vmatprep.subr.mxu0 0.0
    %9044 = vmatpush1.msra.mxu0 0.0
    %9045 = vmatprep.subr.mxu0 0.0
    %9046 = vmatpush1.msra.mxu0 %v9015
    %9047 = vmatprep.subr.mxu0 0.0
    %9048 = vmatpush1.msra.mxu0 %v71
    %9049 = vmatprep.subr.mxu0 0.0
    %9050 = vmatpush2.msra.mxu0 0.0
    %9051 = vmatprep.subr.mxu0 0.0
    %9052 = vmatpush2.msra.mxu0 0.0
    %9053 = vmatprep.subr.mxu0 0.0
    %9054 = vmatpush2.msra.mxu0 0.0
    %9055 = vmatprep.subr.mxu0 0.0
    %9056 = vmatpush2.msra.mxu0 0.0
    %9057 = vmatprep.subr.mxu0 0.0
    %9058 = vmatpush2.msra.mxu0 0.0
    %9059 = vmatprep.subr.mxu0 0.0
    %9060 = vmatpush2.msra.mxu0 0.0
    %9061 = vmatprep.subr.mxu0 0.0
    %9062 = vmatpush2.msra.mxu0 0.0
    %9063 = vmatprep.subr.mxu0 0.0
    %9064 = vmatpush2.msra.mxu0 0.0
    %9065 = vmatprep.subr.mxu0 0.0
    %9066 = vmatpush2.msra.mxu0 0.0
    %9067 = vmatprep.subr.mxu0 0.0
    %9068 = vmatpush2.msra.mxu0 0.0
    %9069 = vmatprep.subr.mxu0 0.0
    %9070 = vmatpush2.msra.mxu0 0.0
    %9071 = vmatprep.subr.mxu0 0.0
    %9072 = vmatpush2.msra.mxu0 0.0
    %9073 = vmatprep.subr.mxu0 0.0
    %9074 = vmatpush2.msra.mxu0 0.0
    %9075 = vmatprep.subr.mxu0 0.0
    %9076 = vmatpush2.msra.mxu0 0.0
    %9077 = vmatprep.subr.mxu0 0.0
    %9078 = vmatpush2.msra.mxu0 0.0
    %9079 = vmatprep.subr.mxu0 0.0
    %9080 = vmatpush2.msra.mxu0 0.0
    %9081 = vmatprep.mubr.f32.mxu0 0.0
    %9082 = vmatmul.mubr.f32.gmra.mxu0 %v8437
    %v9083 = vpop.f32.mrf.mxu0
    %v9084 = vadd.f32 %v9012, %v9083
    %v9085 = vpop.f32.mrf.mxu0
    %9086 = vdwg.mxu0
    %v9087 = vadd.f32 %v9084, %v80
    %v9088 = vmax.f32 %v9087, 0.0
    %vm9089 = vcmask 162816
    %v9091 = vsel %vm9089, %v9088, 0
    %vm9093 = vcmask 1043456
    %v9095 = vsel %vm9093, %v76, 0
    %9097 = vmatprep.subr.mxu0 0.0
    %9098 = vmatpush1.msra.mxu0 0.0
    %9099 = vmatprep.subr.mxu0 0.0
    %9100 = vmatpush1.msra.mxu0 0.0
    %9101 = vmatprep.subr.mxu0 0.0
    %9102 = vmatpush1.msra.mxu0 0.0
    %9103 = vmatprep.subr.mxu0 0.0
    %9104 = vmatpush1.msra.mxu0 0.0
    %9105 = vmatprep.subr.mxu0 0.0
    %9106 = vmatpush1.msra.mxu0 0.0
    %9107 = vmatprep.subr.mxu0 0.0
    %9108 = vmatpush1.msra.mxu0 0.0
    %9109 = vmatprep.subr.mxu0 0.0
    %9110 = vmatpush1.msra.mxu0 0.0
    %9111 = vmatprep.subr.mxu0 0.0
    %9112 = vmatpush1.msra.mxu0 0.0
    %9113 = vmatprep.subr.mxu0 0.0
    %9114 = vmatpush1.msra.mxu0 0.0
    %9115 = vmatprep.subr.mxu0 0.0
    %9116 = vmatpush1.msra.mxu0 0.0
    %9117 = vmatprep.subr.mxu0 0.0
    %9118 = vmatpush1.msra.mxu0 0.0
    %9119 = vmatprep.subr.mxu0 0.0
    %9120 = vmatpush1.msra.mxu0 0.0
    %9121 = vmatprep.subr.mxu0 0.0
    %9122 = vmatpush1.msra.mxu0 0.0
    %9123 = vmatprep.subr.mxu0 0.0
    %9124 = vmatpush1.msra.mxu0 %v9095
    %9125 = vmatprep.subr.mxu0 0.0
    %9126 = vmatpush1.msra.mxu0 %v75
    %9127 = vmatprep.subr.mxu0 0.0
    %9128 = vmatpush1.msra.mxu0 %v74
    %9129 = vmatprep.subr.mxu0 0.0
    %9130 = vmatpush2.msra.mxu0 0.0
    %9131 = vmatprep.subr.mxu0 0.0
    %9132 = vmatpush2.msra.mxu0 0.0
    %9133 = vmatprep.subr.mxu0 0.0
    %9134 = vmatpush2.msra.mxu0 0.0
    %9135 = vmatprep.subr.mxu0 0.0
    %9136 = vmatpush2.msra.mxu0 0.0
    %9137 = vmatprep.subr.mxu0 0.0
    %9138 = vmatpush2.msra.mxu0 0.0
    %9139 = vmatprep.subr.mxu0 0.0
    %9140 = vmatpush2.msra.mxu0 0.0
    %9141 = vmatprep.subr.mxu0 0.0
    %9142 = vmatpush2.msra.mxu0 0.0
    %9143 = vmatprep.subr.mxu0 0.0
    %9144 = vmatpush2.msra.mxu0 0.0
    %9145 = vmatprep.subr.mxu0 0.0
    %9146 = vmatpush2.msra.mxu0 0.0
    %9147 = vmatprep.subr.mxu0 0.0
    %9148 = vmatpush2.msra.mxu0 0.0
    %9149 = vmatprep.subr.mxu0 0.0
    %9150 = vmatpush2.msra.mxu0 0.0
    %9151 = vmatprep.subr.mxu0 0.0
    %9152 = vmatpush2.msra.mxu0 0.0
    %9153 = vmatprep.subr.mxu0 0.0
    %9154 = vmatpush2.msra.mxu0 0.0
    %9155 = vmatprep.subr.mxu0 0.0
    %9156 = vmatpush2.msra.mxu0 0.0
    %9157 = vmatprep.subr.mxu0 0.0
    %9158 = vmatpush2.msra.mxu0 0.0
    %9159 = vmatprep.subr.mxu0 0.0
    %9160 = vmatpush2.msra.mxu0 0.0
    %9161 = vmatprep.mubr.f32.mxu0 0.0
    %9162 = vmatmul.mubr.f32.gmra.mxu0 %v9091
    %v9163 = vpop.f32.mrf.mxu0
    %v9164 = vadd.f32 %v81, %v9163
    %v9165 = vpop.f32.mrf.mxu0
    %9166 = vdwg.mxu0
    %v9167 = vmax.f32 %v9164, 0.0
    %v9169 = vsel %vm9089, %v9167, 0
    %v9172 = vsel %vm9093, %v79, 0
    %9174 = vmatprep.subr.mxu0 0.0
    %9175 = vmatpush1.msra.mxu0 0.0
    %9176 = vmatprep.subr.mxu0 0.0
    %9177 = vmatpush1.msra.mxu0 0.0
    %9178 = vmatprep.subr.mxu0 0.0
    %9179 = vmatpush1.msra.mxu0 0.0
    %9180 = vmatprep.subr.mxu0 0.0
    %9181 = vmatpush1.msra.mxu0 0.0
    %9182 = vmatprep.subr.mxu0 0.0
    %9183 = vmatpush1.msra.mxu0 0.0
    %9184 = vmatprep.subr.mxu0 0.0
    %9185 = vmatpush1.msra.mxu0 0.0
    %9186 = vmatprep.subr.mxu0 0.0
    %9187 = vmatpush1.msra.mxu0 0.0
    %9188 = vmatprep.subr.mxu0 0.0
    %9189 = vmatpush1.msra.mxu0 0.0
    %9190 = vmatprep.subr.mxu0 0.0
    %9191 = vmatpush1.msra.mxu0 0.0
    %9192 = vmatprep.subr.mxu0 0.0
    %9193 = vmatpush1.msra.mxu0 0.0
    %9194 = vmatprep.subr.mxu0 0.0
    %9195 = vmatpush1.msra.mxu0 0.0
    %9196 = vmatprep.subr.mxu0 0.0
    %9197 = vmatpush1.msra.mxu0 0.0
    %9198 = vmatprep.subr.mxu0 0.0
    %9199 = vmatpush1.msra.mxu0 0.0
    %9200 = vmatprep.subr.mxu0 0.0
    %9201 = vmatpush1.msra.mxu0 %v9172
    %9202 = vmatprep.subr.mxu0 0.0
    %9203 = vmatpush1.msra.mxu0 %v78
    %9204 = vmatprep.subr.mxu0 0.0
    %9205 = vmatpush1.msra.mxu0 %v77
    %9206 = vmatprep.subr.mxu0 0.0
    %9207 = vmatpush2.msra.mxu0 0.0
    %9208 = vmatprep.subr.mxu0 0.0
    %9209 = vmatpush2.msra.mxu0 0.0
    %9210 = vmatprep.subr.mxu0 0.0
    %9211 = vmatpush2.msra.mxu0 0.0
    %9212 = vmatprep.subr.mxu0 0.0
    %9213 = vmatpush2.msra.mxu0 0.0
    %9214 = vmatprep.subr.mxu0 0.0
    %9215 = vmatpush2.msra.mxu0 0.0
    %9216 = vmatprep.subr.mxu0 0.0
    %9217 = vmatpush2.msra.mxu0 0.0
    %9218 = vmatprep.subr.mxu0 0.0
    %9219 = vmatpush2.msra.mxu0 0.0
    %9220 = vmatprep.subr.mxu0 0.0
    %9221 = vmatpush2.msra.mxu0 0.0
    %9222 = vmatprep.subr.mxu0 0.0
    %9223 = vmatpush2.msra.mxu0 0.0
    %9224 = vmatprep.subr.mxu0 0.0
    %9225 = vmatpush2.msra.mxu0 0.0
    %9226 = vmatprep.subr.mxu0 0.0
    %9227 = vmatpush2.msra.mxu0 0.0
    %9228 = vmatprep.subr.mxu0 0.0
    %9229 = vmatpush2.msra.mxu0 0.0
    %9230 = vmatprep.subr.mxu0 0.0
    %9231 = vmatpush2.msra.mxu0 0.0
    %9232 = vmatprep.subr.mxu0 0.0
    %9233 = vmatpush2.msra.mxu0 0.0
    %9234 = vmatprep.subr.mxu0 0.0
    %9235 = vmatpush2.msra.mxu0 0.0
    %9236 = vmatprep.subr.mxu0 0.0
    %9237 = vmatpush2.msra.mxu0 0.0
    %9238 = vmatprep.mubr.f32.mxu0 0.0
    %9239 = vmatmul.mubr.f32.gmra.mxu0 %v9169
    %v9240 = vpop.f32.mrf.mxu0
    %v9241 = vadd.f32 %v82, %v9240
    %v9242 = vpop.f32.mrf.mxu0
    %9243 = vdwg.mxu0
    %v9244 = vmax.f32 %v9241, 0.0
    %v9245 = vmul.f32 %v9244, %v83
    %vm9246 = vcmask 155648
    %v9247 = vsel %vm9246, %v9245, 0.0
    %9248 = vadd.xlane.f32.xlu0 %v9247
    %v9249 = vpop.xlane.xlu0 %9248
    %s9250 = sld [smem:[#allocation8 + $0x3]]
    %v9251 = vstv %s9250
    %v9252 = vadd.f32 %v9249, %v9251
    %v9253 = vxor.u32 %v9252, 2147483648
    %v9254 = vmul.f32 %v9253, 1.442695
    %v9255 = vpow.pop %v9254
    %v9256 = vadd.f32 %v9255, 1.0
    %v9257 = vrcp.pop %v9256
    %v9258 = vmul.f32 1.0, %v9257
    %vm9259 = vcmask 0
    %9260 = vst.msk [vmem:[#allocation10] sm:$0x1] %vm9259, %v9258
    // Predicated region
    $region42: #{_forward_padded.1} parent=1 // pred_check
      _
    $region43: #{_forward_padded.1} parent=1 // pred_check_branch
      %9262 = sbr.rel (0) target = $region45
    $region44: #{_forward_padded.1} parent=1 // pred_region
      %s9264 = ssub.s32 16, 16
      %9265 = vsyncadd [#allocation6], %s9264
      %s9267 = sshll.u32 [#allocation10], 4
      %s9268 = int_to_ptr.vmem [resolvable:$true] %s9267
      %9270 = dma.vmem_to_hbm [thread:$0]  %s9268, 16, %s8, [#allocation6]
    $region45: #{_forward_padded.1} parent=1 // pred_fallthru
      _
    // Predicated region
    $region46: #{_forward_padded.1} parent=1 // pred_check
      _
    $region47: #{_forward_padded.1} parent=1 // pred_check_branch
      %9272 = sbr.rel (0) target = $region49
    $region48: #{_forward_padded.1} parent=1 // pred_region
      %9273 = dma.done [#allocation6], 16
    $region49: #{_forward_padded.1} parent=1 // pred_fallthru
      _
    %9274 = vsyncpa [#allocation6], 1
    %9275 = vsyncpa [#allocation7], 1
    %9276 = vsyncpa [#allocation9], 1

</llo_original>
